<compile_context>
chip_gen: v5e
topology: v5e:2x2
jax: 0.10.0
libtpu: 0.0.40
codegen_flags: <defaults>
</compile_context>

<pallas_src>
import numpy as np
import jax
import jax.numpy as jnp
from jax import lax
from jax.experimental import pallas as pl
from jax.experimental.pallas import tpu as pltpu  # noqa: F401  (TPU backend import)

# ----------------------------- model dimensions -----------------------------
X_IND = 4        # node feature dim
EDGE_IND = 5     # edge feature dim
U_IND = 6        # global feature dim
POS_IND = 3      # positional-embedding dim (== 3 -> Pmlp branch is taken)
HS = 16          # hs == x_hs == e_hs
P_HS = 8         # positional embedding output dim
NUM_KERNELS = 32     # RBF centers per filter (C)
N_FILTERS = 64       # RBFANN filters in RBFAModel (F)
ATT_HS = 2 * HS      # attention_size in RBFAModel (H2 = 32)

E_IND = X_IND * 2 + EDGE_IND + U_IND + POS_IND * 3   # 28
N_IND = X_IND + HS + U_IND + POS_IND                 # 29
N_BASE = X_IND + POS_IND + U_IND                     # 13  (Nmlp input minus agg_e)
G_IND = U_IND + 2 * HS                               # 38

N_NODES = 16
N_EDGES = 32
N_GRAPHS = 2

BN_EPS = 1e-5
LN_EPS = 1e-5


# =============================== the fused kernel ============================
def enpg_kernel(
    # ---- data (precomputed index-dependent tensors) ----
    e_in_ref,     # [E, 28]   concat([x[row], x[col], e_attr, pe[row], pe[col], pe[col]-pe[row], u[batch[row]]])
    segT_ref,     # [N, E]    one-hot(col)        -> scatter_add(e_out, col)
    nbase_ref,    # [N, 13]   concat([x, posemb, u[batch]])
    pos_ref,      # [N, 3]
    maskT_ref,    # [B, N]    graph one-hot       -> scatter_add over batch
    mask_ref,     # [N, B]
    u_ref,        # [B, 6]
    # ---- Emlp (BN folded) ----
    we1_ref, be1_ref, we2_ref, be2_ref,
    # ---- Nmlp (first-layer weight split: base | agg_e; both BNs folded) ----
    wn1a_ref, wn1b_ref, bn1_ref, wn2_ref, bn2_ref,
    # ---- Pmlp (BN folded) ----
    wp1_ref, bp1_ref, wp2_ref, bp2_ref,
    # ---- RBFANN filter bank (all 64 filters packed f-major on the lane axis) ----
    w1c_ref,      # [HS, F*H2]
    b1r_ref,      # [1,  F*H2]
    ctc_ref,      # [3,  F*C]    centers (coordinate-major)
    iw2_ref,      # [1,  F*C]    1 / widths**2
    war_ref,      # [1,  F*H2]   attention.W weight, flattened
    bar_ref,      # [1,  F*C]    attention.W bias, repeated over centers
    w2s_ref,      # [HS, F*H2]   x2 weight, output-feature-major rows
    b2t_ref,      # [HS, F]
    lgt_ref,      # [HS, F]      LayerNorm gamma (transposed)
    lbt_ref,      # [HS, F]      LayerNorm beta  (transposed)
    w3t_ref,      # [HS, F]      x3 weight (transposed)
    b3r_ref,      # [1,  F]
    s32_ref,      # [F*32, F]    0/1 group-sum matrix
    e32_ref,      # [F, F*32]    its transpose (group expand)
    # ---- RBFAmlp (both BNs folded) ----
    wm1_ref, bm1_ref, wm2_ref, bm2_ref,
    # ---- Gmlp (first-layer weight split: u | u_new | agg_n; BN folded) ----
    wg1a_ref, wg1b_ref, wg1c_ref, bg1_ref, wg2_ref, bg2_ref,
    # ---- outputs ----
    n_out_ref,    # [N, HS]
    e_out_ref,    # [E, HS]
    u_out_ref,    # [B, HS]
    p_out_ref,    # [N, P_HS]
):
    f32 = jnp.float32

    # ------------------------------ Emlp -------------------------------------
    # Linear -> BN(eval, folded) -> ReLU -> Dropout(eval=id) -> Linear
    h = jnp.dot(e_in_ref[...], we1_ref[...], preferred_element_type=f32) + be1_ref[...]
    h = jnp.maximum(h, 0.0)
    e_out = jnp.dot(h, we2_ref[...], preferred_element_type=f32) + be2_ref[...]
    e_out_ref[...] = e_out.astype(e_out_ref.dtype)

    # scatter_add(e_out, col, dim_size=N) as a one-hot matmul (stays in VMEM)
    agg_e = jnp.dot(segT_ref[...], e_out, preferred_element_type=f32)          # [N, HS]

    # ------------------------------ Nmlp -------------------------------------
    h = (jnp.dot(nbase_ref[...], wn1a_ref[...], preferred_element_type=f32)
         + jnp.dot(agg_e, wn1b_ref[...], preferred_element_type=f32)
         + bn1_ref[...])
    h = jnp.maximum(h, 0.0)
    n_out = jnp.dot(h, wn2_ref[...], preferred_element_type=f32) + bn2_ref[...]
    n_out_ref[...] = n_out.astype(n_out_ref.dtype)

    # ------------------------------ Pmlp (pos_ind == 3 branch) ---------------
    pos = pos_ref[...]
    h = jnp.dot(pos, wp1_ref[...], preferred_element_type=f32) + bp1_ref[...]
    h = jnp.maximum(h, 0.0)
    p_out = jnp.dot(h, wp2_ref[...], preferred_element_type=f32) + bp2_ref[...]
    p_out_ref[...] = p_out.astype(p_out_ref.dtype)

    # --------------------- RBFANN filter bank (64 filters, batched) ----------
    maskT = maskT_ref[...]                  # [B, N]
    mask_nb = mask_ref[...]                 # [N, B]
    s32 = s32_ref[...]                      # [F*32, F]
    e32 = e32_ref[...]                      # [F, F*32]

    # per-filter x1 Linear:  x1f[n, f*H2+h] = x1_f(n_out[n])[h]
    x1f = jnp.dot(n_out, w1c_ref[...], preferred_element_type=f32) + b1r_ref[...]   # [N, F*H2]

    # gaussian_rbf for all filters: dist^2 = |p|^2 + |c|^2 - 2 p.c  (single matmul)
    ct = ctc_ref[...]                                                    # [3, F*C]
    pos_sq = pos[:, 0:1] ** 2 + pos[:, 1:2] ** 2 + pos[:, 2:3] ** 2      # [N, 1]
    csq = ct[0:1, :] ** 2 + ct[1:2, :] ** 2 + ct[2:3, :] ** 2            # [1, F*C]
    pd = jnp.dot(pos, ct, preferred_element_type=f32)                    # [N, F*C]
    d2 = jnp.maximum(pos_sq + csq - 2.0 * pd, 0.0)
    rbff = jnp.exp(-jnp.sqrt(d2) * iw2_ref[...])                         # [N, F*C]

    # attention scores: wsc[b, f, c] = sum_n mask[n,b] * rbf[n,f,c] * (x1_f[n] . wa_f) + ba_f
    s_nf = jnp.dot(x1f * war_ref[...], s32, preferred_element_type=f32)  # [N, F]
    s_x = jnp.dot(s_nf, e32, preferred_element_type=f32)                 # [N, F*C]
    wsc = jnp.dot(maskT, rbff * s_x, preferred_element_type=f32) + bar_ref[...]   # [B, F*C]

    # softmax over centers within each filter group (per-row shift is exact per group)
    ew = jnp.exp(wsc - jnp.max(wsc, axis=-1, keepdims=True))
    den = jnp.dot(ew, s32, preferred_element_type=f32)                   # [B, F]
    attn = ew / jnp.dot(den, e32, preferred_element_type=f32)            # [B, F*C]

    w2s = w2s_ref[...]
    b2t = b2t_ref[...]
    lgt = lgt_ref[...]
    lbt = lbt_ref[...]
    w3t = w3t_ref[...]
    b3r = b3r_ref[...]

    ys = []
    for gb in range(maskT.shape[0]):        # static loop over graphs (B == 2)
        # A[n, f] = sum_c attn[gb, f, c] * rbf[n, f, c]
        a_nf = jnp.dot(rbff * attn[gb:gb + 1, :], s32, preferred_element_type=f32)   # [N, F]
        wn = a_nf * mask_nb[:, gb:gb + 1]                                             # [N, F]
        wnx = jnp.dot(wn, e32, preferred_element_type=f32)                            # [N, F*H2]
        # agg[f, h] = sum_c attn * feat = sum_n wn[n,f] * x1f[n,f,h]
        aggf = jnp.sum(x1f * wnx, axis=0, keepdims=True)                              # [1, F*H2]
        # per-filter x2 Linear, result laid out [HS (sublane), F (lane)]
        hb = jnp.dot(w2s * aggf, s32, preferred_element_type=f32) + b2t               # [HS, F]
        hb = jnp.where(hb > 0, hb, 0.2 * hb)                                          # LeakyReLU(0.2)
        # LayerNorm over the HS features of each filter
        mu = jnp.mean(hb, axis=0, keepdims=True)                                      # [1, F]
        var = jnp.mean((hb - mu) ** 2, axis=0, keepdims=True)                         # [1, F]
        hn = (hb - mu) * lax.rsqrt(var + LN_EPS) * lgt + lbt                          # [HS, F]
        # per-filter x3 Linear -> one scalar per filter, lane-dense row [1, F]
        ys.append(jnp.sum(hn * w3t, axis=0, keepdims=True) + b3r)
    rbf_raw = jnp.concatenate(ys, axis=0)                                             # [B, F]

    # ------------------------------ RBFAmlp ----------------------------------
    h = jnp.dot(rbf_raw, wm1_ref[...], preferred_element_type=f32) + bm1_ref[...]
    h = jnp.where(h > 0, h, 0.2 * h)                                                  # LeakyReLU(0.2)
    u_new = jnp.dot(h, wm2_ref[...], preferred_element_type=f32) + bm2_ref[...]       # [B, HS]

    # ------------------------------ Gmlp -------------------------------------
    agg_n = jnp.dot(maskT, n_out, preferred_element_type=f32)                         # [B, HS]
    h = (jnp.dot(u_ref[...], wg1a_ref[...], preferred_element_type=f32)
         + jnp.dot(u_new, wg1b_ref[...], preferred_element_type=f32)
         + jnp.dot(agg_n, wg1c_ref[...], preferred_element_type=f32)
         + bg1_ref[...])
    h = jnp.maximum(h, 0.0)
    u_out = jnp.dot(h, wg2_ref[...], preferred_element_type=f32) + bg2_ref[...]
    u_out_ref[...] = u_out.astype(u_out_ref.dtype)


# ================================ forward ====================================
def enpg_forward(packed, x, edge_index, edge_attr, pos, posemb, u, batch):
    n = x.shape[0]
    nb = u.shape[0]
    row, col = edge_index[0], edge_index[1]
    u_node = u[batch]                                                    # [N, U_IND]

    # index-dependent gathers / concats (plain JAX, fused by XLA; results feed the kernel)
    e_in = jnp.concatenate(
        [x[row], x[col], edge_attr, posemb[row], posemb[col],
         posemb[col] - posemb[row], u_node[row]], axis=-1)               # [E, 28]
    segT = (col[None, :] == jnp.arange(n)[:, None]).astype(x.dtype)      # [N, E]
    nbase = jnp.concatenate([x, posemb, u_node], axis=1)                 # [N, 13]
    mask_nb = (batch[:, None] == jnp.arange(nb)[None, :]).astype(x.dtype)   # [N, B]
    maskT = (jnp.arange(nb)[:, None] == batch[None, :]).astype(x.dtype)     # [B, N]

    return pl.pallas_call(
        enpg_kernel,
        out_shape=(
            jax.ShapeDtypeStruct((n, HS), x.dtype),                      # n_out
            jax.ShapeDtypeStruct((e_in.shape[0], HS), x.dtype),          # e_out
            jax.ShapeDtypeStruct((nb, HS), x.dtype),                     # u_out
            jax.ShapeDtypeStruct((n, P_HS), x.dtype),                    # posemb_new
        ),
    )(e_in, segT, nbase, pos, maskT, mask_nb, u, *packed)


# ============================ parameter builders =============================
def _linear(key, din, dout):
    kw, kb = jax.random.split(key)
    bound = 1.0 / np.sqrt(din)
    w = jax.random.uniform(kw, (din, dout), jnp.float32, -bound, bound)
    b = jax.random.uniform(kb, (1, dout), jnp.float32, -bound, bound)
    return w, b


def _fold_bn(w, b, gamma, beta, mean, var):
    """Fold an eval-mode BatchNorm1d into the preceding Linear (general form:
    works for trained running stats too; here called with fresh-init stats)."""
    scale = gamma / jnp.sqrt(var + BN_EPS)
    shift = beta - mean * scale
    return w * scale, b * scale + shift


def _mlp_params(key, din, dh, dout, bn2):
    """Linear -> BN -> (Leaky)ReLU -> Dropout -> Linear [-> BN], BNs folded."""
    k1, k2 = jax.random.split(key)
    w1, b1 = _linear(k1, din, dh)
    w1, b1 = _fold_bn(w1, b1, jnp.ones(dh), jnp.zeros(dh), jnp.zeros(dh), jnp.ones(dh))
    w2, b2 = _linear(k2, dh, dout)
    if bn2:
        w2, b2 = _fold_bn(w2, b2, jnp.ones(dout), jnp.zeros(dout),
                          jnp.zeros(dout), jnp.ones(dout))
    return w1, b1, w2, b2


def _rbfa_packed(key):
    """Pack all 64 RBFANN filters, flattened filter-major onto the lane axis."""
    F, C, H2, H = N_FILTERS, NUM_KERNELS, ATT_HS, HS
    ks = jax.random.split(key, 9)
    b_hs = 1.0 / np.sqrt(H)
    b_h2 = 1.0 / np.sqrt(H2)
    w1 = jax.random.uniform(ks[0], (F, H, H2), jnp.float32, -b_hs, b_hs)     # x1 Linear(HS, 2HS)
    b1 = jax.random.uniform(ks[1], (F, H2), jnp.float32, -b_hs, b_hs)
    centers = jax.random.normal(ks[2], (F, C, 3), jnp.float32)
    widths = jnp.ones((F, C), jnp.float32)
    wa = jax.random.uniform(ks[3], (F, H2), jnp.float32, -b_h2, b_h2)        # attention.W Linear(2HS, 1)
    ba = jax.random.uniform(ks[4], (F,), jnp.float32, -b_h2, b_h2)
    w2 = jax.random.uniform(ks[5], (F, H2, H), jnp.float32, -b_h2, b_h2)     # x2 Linear(2HS, HS)
    b2 = jax.random.uniform(ks[6], (F, H), jnp.float32, -b_h2, b_h2)
    ln_g = jnp.ones((F, H), jnp.float32)
    ln_b = jnp.zeros((F, H), jnp.float32)
    w3 = jax.random.uniform(ks[7], (F, H), jnp.float32, -b_hs, b_hs)         # x3 Linear(HS, 1)
    b3 = jax.random.uniform(ks[8], (F,), jnp.float32, -b_hs, b_hs)

    w1cat = jnp.transpose(w1, (1, 0, 2)).reshape(H, F * H2)      # [HS, F*H2]
    b1rep = b1.reshape(1, F * H2)
    ctcat = jnp.transpose(centers, (2, 0, 1)).reshape(3, F * C)  # [3, F*C]
    iw2 = (1.0 / (widths * widths)).reshape(1, F * C)            # exp(-dist / widths**2)
    warep = wa.reshape(1, F * H2)
    barep = jnp.repeat(ba[:, None], C, axis=1).reshape(1, F * C)
    w2stack = jnp.transpose(w2, (2, 0, 1)).reshape(H, F * H2)    # [HS, F*H2]
    b2t = b2.T                                                   # [HS, F]
    lgt = ln_g.T
    lbt = ln_b.T
    w3t = w3.T                                                   # [HS, F]
    b3row = b3.reshape(1, F)
    sum32 = jnp.repeat(jnp.eye(F, dtype=jnp.float32), C, axis=0)  # [F*32, F] group-sum
    exp32 = sum32.T                                               # [F, F*32] group-expand
    return (w1cat, b1rep, ctcat, iw2, warep, barep,
            w2stack, b2t, lgt, lbt, w3t, b3row, sum32, exp32)


def init_enpg_packed(key):
    ks = jax.random.split(key, 6)
    # Emlp: Linear(28,16) -> BN -> ReLU -> Dropout -> Linear(16,16)
    we1, be1, we2, be2 = _mlp_params(ks[0], E_IND, HS, HS, bn2=False)
    # Nmlp: Linear(29,16) -> BN -> ReLU -> Dropout -> Linear(16,16) -> BN
    wn1, bn1, wn2, bn2 = _mlp_params(ks[1], N_IND, HS, HS, bn2=True)
    wn1a, wn1b = wn1[:N_BASE], wn1[N_BASE:]
    # Pmlp: Linear(3,8) -> BN -> ReLU -> Dropout -> Linear(8,8)
    wp1, bp1, wp2, bp2 = _mlp_params(ks[2], POS_IND, P_HS, P_HS, bn2=False)
    # RBFA filter bank
    rbfa = _rbfa_packed(ks[3])
    # RBFAModel.mlp: Linear(64,16) -> BN -> LeakyReLU(0.2) -> Dropout -> Linear(16,16) -> BN
    wm1, bm1, wm2, bm2 = _mlp_params(ks[4], N_FILTERS, HS, HS, bn2=True)
    # Gmlp: Linear(38,16) -> BN -> ReLU -> Dropout -> Linear(16,16)
    wg1, bg1, wg2, bg2 = _mlp_params(ks[5], G_IND, HS, HS, bn2=False)
    wg1a, wg1b, wg1c = wg1[:U_IND], wg1[U_IND:U_IND + HS], wg1[U_IND + HS:]
    # TODO(synk): EnhancedRBFModel (RBFBlock), RBFNN, AttentionModule, EPmlp and
    # GaussianKernel are constructed in the PyTorch __init__ but never used in
    # ENPGModel.forward (pos_ind == 3 path) -> omitted.
    return (we1, be1, we2, be2,
            wn1a, wn1b, bn1, wn2, bn2,
            wp1, bp1, wp2, bp2,
            *rbfa,
            wm1, bm1, wm2, bm2,
            wg1a, wg1b, wg1c, bg1, wg2, bg2)


# ================================== main =====================================
if __name__ == "__main__":
    key = jax.random.PRNGKey(0)
    k_par, kx, ke, kp, kpe, ku, kr1, kr2, kc1, kc2 = jax.random.split(key, 10)

    packed = init_enpg_packed(k_par)

    x = jax.random.normal(kx, (N_NODES, X_IND), jnp.float32)
    edge_attr = jax.random.normal(ke, (N_EDGES, EDGE_IND), jnp.float32)
    pos = jax.random.normal(kp, (N_NODES, 3), jnp.float32)
    posemb = jax.random.normal(kpe, (N_NODES, POS_IND), jnp.float32)
    u = jax.random.normal(ku, (N_GRAPHS, U_IND), jnp.float32)
    batch = jnp.concatenate(
        [jnp.zeros(N_NODES // 2, jnp.int32), jnp.ones(N_NODES // 2, jnp.int32)])

    # edges kept within each graph
    half_e = N_EDGES // 2
    row = jnp.concatenate([jax.random.randint(kr1, (half_e,), 0, N_NODES // 2),
                           jax.random.randint(kr2, (half_e,), N_NODES // 2, N_NODES)])
    col = jnp.concatenate([jax.random.randint(kc1, (half_e,), 0, N_NODES // 2),
                           jax.random.randint(kc2, (half_e,), N_NODES // 2, N_NODES)])
    edge_index = jnp.stack([row, col]).astype(jnp.int32)

    fwd = jax.jit(enpg_forward)
    n_out, e_out, u_out, posemb_out = fwd(packed, x, edge_index, edge_attr,
                                          pos, posemb, u, batch)
    jax.block_until_ready((n_out, e_out, u_out, posemb_out))

    assert n_out.shape == (N_NODES, HS)
    assert e_out.shape == (N_EDGES, HS)
    assert u_out.shape == (N_GRAPHS, HS)
    assert posemb_out.shape == (N_NODES, P_HS)
    assert all(bool(jnp.all(jnp.isfinite(t))) for t in (n_out, e_out, u_out, posemb_out))
    print("KERNEL_OK")
</pallas_src>

<mosaic_0001>
module attributes {stable_mosaic.version = 11 : i64} {
  func.func @enpg_kernel(%arg0: memref<32x28xf32, #tpu.memory_space<vmem>>, %arg1: memref<16x32xf32, #tpu.memory_space<vmem>>, %arg2: memref<16x13xf32, #tpu.memory_space<vmem>>, %arg3: memref<16x3xf32, #tpu.memory_space<vmem>>, %arg4: memref<2x16xf32, #tpu.memory_space<vmem>>, %arg5: memref<16x2xf32, #tpu.memory_space<vmem>>, %arg6: memref<2x6xf32, #tpu.memory_space<vmem>>, %arg7: memref<28x16xf32, #tpu.memory_space<vmem>>, %arg8: memref<1x16xf32, #tpu.memory_space<vmem>>, %arg9: memref<16x16xf32, #tpu.memory_space<vmem>>, %arg10: memref<1x16xf32, #tpu.memory_space<vmem>>, %arg11: memref<13x16xf32, #tpu.memory_space<vmem>>, %arg12: memref<16x16xf32, #tpu.memory_space<vmem>>, %arg13: memref<1x16xf32, #tpu.memory_space<vmem>>, %arg14: memref<16x16xf32, #tpu.memory_space<vmem>>, %arg15: memref<1x16xf32, #tpu.memory_space<vmem>>, %arg16: memref<3x8xf32, #tpu.memory_space<vmem>>, %arg17: memref<1x8xf32, #tpu.memory_space<vmem>>, %arg18: memref<8x8xf32, #tpu.memory_space<vmem>>, %arg19: memref<1x8xf32, #tpu.memory_space<vmem>>, %arg20: memref<16x2048xf32, #tpu.memory_space<vmem>>, %arg21: memref<1x2048xf32, #tpu.memory_space<vmem>>, %arg22: memref<3x2048xf32, #tpu.memory_space<vmem>>, %arg23: memref<1x2048xf32, #tpu.memory_space<vmem>>, %arg24: memref<1x2048xf32, #tpu.memory_space<vmem>>, %arg25: memref<1x2048xf32, #tpu.memory_space<vmem>>, %arg26: memref<16x2048xf32, #tpu.memory_space<vmem>>, %arg27: memref<16x64xf32, #tpu.memory_space<vmem>>, %arg28: memref<16x64xf32, #tpu.memory_space<vmem>>, %arg29: memref<16x64xf32, #tpu.memory_space<vmem>>, %arg30: memref<16x64xf32, #tpu.memory_space<vmem>>, %arg31: memref<1x64xf32, #tpu.memory_space<vmem>>, %arg32: memref<2048x64xf32, #tpu.memory_space<vmem>>, %arg33: memref<64x2048xf32, #tpu.memory_space<vmem>>, %arg34: memref<64x16xf32, #tpu.memory_space<vmem>>, %arg35: memref<1x16xf32, #tpu.memory_space<vmem>>, %arg36: memref<16x16xf32, #tpu.memory_space<vmem>>, %arg37: memref<1x16xf32, #tpu.memory_space<vmem>>, %arg38: memref<6x16xf32, #tpu.memory_space<vmem>>, %arg39: memref<16x16xf32, #tpu.memory_space<vmem>>, %arg40: memref<16x16xf32, #tpu.memory_space<vmem>>, %arg41: memref<1x16xf32, #tpu.memory_space<vmem>>, %arg42: memref<16x16xf32, #tpu.memory_space<vmem>>, %arg43: memref<1x16xf32, #tpu.memory_space<vmem>>, %arg44: memref<16x16xf32, #tpu.memory_space<vmem>>, %arg45: memref<32x16xf32, #tpu.memory_space<vmem>>, %arg46: memref<2x16xf32, #tpu.memory_space<vmem>>, %arg47: memref<16x8xf32, #tpu.memory_space<vmem>>) attributes {dimension_semantics = [], scalar_prefetch = 0 : i64, scratch_operands = 0 : i64, tpu.core_type = #tpu.core_type<tc>} {
    %c0 = arith.constant 0 : index
    %c0_0 = arith.constant 0 : index
    %0 = vector.load %arg0[%c0, %c0_0] : memref<32x28xf32, #tpu.memory_space<vmem>>, vector<32x28xf32>
    %c0_1 = arith.constant 0 : index
    %c0_2 = arith.constant 0 : index
    %1 = vector.load %arg7[%c0_1, %c0_2] : memref<28x16xf32, #tpu.memory_space<vmem>>, vector<28x16xf32>
    %cst = arith.constant dense<0.000000e+00> : vector<32x16xf32>
    %2 = tpu.matmul %0, %1, %cst {dimension_numbers = #tpu.dot_dimension_numbers<[1], [0], [0], [1], [0, 0, 1, 1], [], []>} : vector<32x28xf32>, vector<28x16xf32>, vector<32x16xf32> -> vector<32x16xf32>
    %c0_3 = arith.constant 0 : index
    %c0_4 = arith.constant 0 : index
    %3 = vector.load %arg8[%c0_3, %c0_4] : memref<1x16xf32, #tpu.memory_space<vmem>>, vector<1x16xf32>
    %4 = vector.broadcast %3 : vector<1x16xf32> to vector<32x16xf32>
    %5 = arith.addf %2, %4 : vector<32x16xf32>
    %cst_5 = arith.constant 0.000000e+00 : f32
    %6 = vector.broadcast %cst_5 : f32 to vector<32x16xf32>
    %7 = arith.maximumf %5, %6 : vector<32x16xf32>
    %c0_6 = arith.constant 0 : index
    %c0_7 = arith.constant 0 : index
    %8 = vector.load %arg9[%c0_6, %c0_7] : memref<16x16xf32, #tpu.memory_space<vmem>>, vector<16x16xf32>
    %cst_8 = arith.constant dense<0.000000e+00> : vector<32x16xf32>
    %9 = tpu.matmul %7, %8, %cst_8 {dimension_numbers = #tpu.dot_dimension_numbers<[1], [0], [0], [1], [0, 0, 1, 1], [], []>} : vector<32x16xf32>, vector<16x16xf32>, vector<32x16xf32> -> vector<32x16xf32>
    %c0_9 = arith.constant 0 : index
    %c0_10 = arith.constant 0 : index
    %10 = vector.load %arg10[%c0_9, %c0_10] : memref<1x16xf32, #tpu.memory_space<vmem>>, vector<1x16xf32>
    %11 = vector.broadcast %10 : vector<1x16xf32> to vector<32x16xf32>
    %12 = arith.addf %9, %11 : vector<32x16xf32>
    %c0_11 = arith.constant 0 : index
    %c0_12 = arith.constant 0 : index
    %13 = vector.load %arg45[%c0_11, %c0_12] : memref<32x16xf32, #tpu.memory_space<vmem>>, vector<32x16xf32>
    tpu.vector_store %arg45[%c0_11, %c0_12], %12 {strides = array<i32>} : memref<32x16xf32, #tpu.memory_space<vmem>>, vector<32x16xf32>,
    %c0_13 = arith.constant 0 : index
    %c0_14 = arith.constant 0 : index
    %14 = vector.load %arg1[%c0_13, %c0_14] : memref<16x32xf32, #tpu.memory_space<vmem>>, vector<16x32xf32>
    %cst_15 = arith.constant dense<0.000000e+00> : vector<16x16xf32>
    %15 = tpu.matmul %14, %12, %cst_15 {dimension_numbers = #tpu.dot_dimension_numbers<[1], [0], [0], [1], [0, 0, 1, 1], [], []>} : vector<16x32xf32>, vector<32x16xf32>, vector<16x16xf32> -> vector<16x16xf32>
    %c0_16 = arith.constant 0 : index
    %c0_17 = arith.constant 0 : index
    %16 = vector.load %arg2[%c0_16, %c0_17] : memref<16x13xf32, #tpu.memory_space<vmem>>, vector<16x13xf32>
    %c0_18 = arith.constant 0 : index
    %c0_19 = arith.constant 0 : index
    %17 = vector.load %arg11[%c0_18, %c0_19] : memref<13x16xf32, #tpu.memory_space<vmem>>, vector<13x16xf32>
    %cst_20 = arith.constant dense<0.000000e+00> : vector<16x16xf32>
    %18 = tpu.matmul %16, %17, %cst_20 {dimension_numbers = #tpu.dot_dimension_numbers<[1], [0], [0], [1], [0, 0, 1, 1], [], []>} : vector<16x13xf32>, vector<13x16xf32>, vector<16x16xf32> -> vector<16x16xf32>
    %c0_21 = arith.constant 0 : index
    %c0_22 = arith.constant 0 : index
    %19 = vector.load %arg12[%c0_21, %c0_22] : memref<16x16xf32, #tpu.memory_space<vmem>>, vector<16x16xf32>
    %cst_23 = arith.constant dense<0.000000e+00> : vector<16x16xf32>
    %20 = tpu.matmul %15, %19, %cst_23 {dimension_numbers = #tpu.dot_dimension_numbers<[1], [0], [0], [1], [0, 0, 1, 1], [], []>} : vector<16x16xf32>, vector<16x16xf32>, vector<16x16xf32> -> vector<16x16xf32>
    %21 = arith.addf %18, %20 : vector<16x16xf32>
    %c0_24 = arith.constant 0 : index
    %c0_25 = arith.constant 0 : index
    %22 = vector.load %arg13[%c0_24, %c0_25] : memref<1x16xf32, #tpu.memory_space<vmem>>, vector<1x16xf32>
    %23 = vector.broadcast %22 : vector<1x16xf32> to vector<16x16xf32>
    %24 = arith.addf %21, %23 : vector<16x16xf32>
    %cst_26 = arith.constant 0.000000e+00 : f32
    %25 = vector.broadcast %cst_26 : f32 to vector<16x16xf32>
    %26 = arith.maximumf %24, %25 : vector<16x16xf32>
    %c0_27 = arith.constant 0 : index
    %c0_28 = arith.constant 0 : index
    %27 = vector.load %arg14[%c0_27, %c0_28] : memref<16x16xf32, #tpu.memory_space<vmem>>, vector<16x16xf32>
    %cst_29 = arith.constant dense<0.000000e+00> : vector<16x16xf32>
    %28 = tpu.matmul %26, %27, %cst_29 {dimension_numbers = #tpu.dot_dimension_numbers<[1], [0], [0], [1], [0, 0, 1, 1], [], []>} : vector<16x16xf32>, vector<16x16xf32>, vector<16x16xf32> -> vector<16x16xf32>
    %c0_30 = arith.constant 0 : index
    %c0_31 = arith.constant 0 : index
    %29 = vector.load %arg15[%c0_30, %c0_31] : memref<1x16xf32, #tpu.memory_space<vmem>>, vector<1x16xf32>
    %30 = vector.broadcast %29 : vector<1x16xf32> to vector<16x16xf32>
    %31 = arith.addf %28, %30 : vector<16x16xf32>
    %c0_32 = arith.constant 0 : index
    %c0_33 = arith.constant 0 : index
    %32 = vector.load %arg44[%c0_32, %c0_33] : memref<16x16xf32, #tpu.memory_space<vmem>>, vector<16x16xf32>
    tpu.vector_store %arg44[%c0_32, %c0_33], %31 {strides = array<i32>} : memref<16x16xf32, #tpu.memory_space<vmem>>, vector<16x16xf32>,
    %c0_34 = arith.constant 0 : index
    %c0_35 = arith.constant 0 : index
    %33 = vector.load %arg3[%c0_34, %c0_35] : memref<16x3xf32, #tpu.memory_space<vmem>>, vector<16x3xf32>
    %c0_36 = arith.constant 0 : index
    %c0_37 = arith.constant 0 : index
    %34 = vector.load %arg16[%c0_36, %c0_37] : memref<3x8xf32, #tpu.memory_space<vmem>>, vector<3x8xf32>
    %cst_38 = arith.constant dense<0.000000e+00> : vector<16x8xf32>
    %35 = tpu.matmul %33, %34, %cst_38 {dimension_numbers = #tpu.dot_dimension_numbers<[1], [0], [0], [1], [0, 0, 1, 1], [], []>} : vector<16x3xf32>, vector<3x8xf32>, vector<16x8xf32> -> vector<16x8xf32>
    %c0_39 = arith.constant 0 : index
    %c0_40 = arith.constant 0 : index
    %36 = vector.load %arg17[%c0_39, %c0_40] : memref<1x8xf32, #tpu.memory_space<vmem>>, vector<1x8xf32>
    %37 = vector.broadcast %36 : vector<1x8xf32> to vector<16x8xf32>
    %38 = arith.addf %35, %37 : vector<16x8xf32>
    %cst_41 = arith.constant 0.000000e+00 : f32
    %39 = vector.broadcast %cst_41 : f32 to vector<16x8xf32>
    %40 = arith.maximumf %38, %39 : vector<16x8xf32>
    %c0_42 = arith.constant 0 : index
    %c0_43 = arith.constant 0 : index
    %41 = vector.load %arg18[%c0_42, %c0_43] : memref<8x8xf32, #tpu.memory_space<vmem>>, vector<8x8xf32>
    %cst_44 = arith.constant dense<0.000000e+00> : vector<16x8xf32>
    %42 = tpu.matmul %40, %41, %cst_44 {dimension_numbers = #tpu.dot_dimension_numbers<[1], [0], [0], [1], [0, 0, 1, 1], [], []>} : vector<16x8xf32>, vector<8x8xf32>, vector<16x8xf32> -> vector<16x8xf32>
    %c0_45 = arith.constant 0 : index
    %c0_46 = arith.constant 0 : index
    %43 = vector.load %arg19[%c0_45, %c0_46] : memref<1x8xf32, #tpu.memory_space<vmem>>, vector<1x8xf32>
    %44 = vector.broadcast %43 : vector<1x8xf32> to vector<16x8xf32>
    %45 = arith.addf %42, %44 : vector<16x8xf32>
    %c0_47 = arith.constant 0 : index
    %c0_48 = arith.constant 0 : index
    %46 = vector.load %arg47[%c0_47, %c0_48] : memref<16x8xf32, #tpu.memory_space<vmem>>, vector<16x8xf32>
    tpu.vector_store %arg47[%c0_47, %c0_48], %45 {strides = array<i32>} : memref<16x8xf32, #tpu.memory_space<vmem>>, vector<16x8xf32>,
    %c0_49 = arith.constant 0 : index
    %c0_50 = arith.constant 0 : index
    %47 = vector.load %arg4[%c0_49, %c0_50] : memref<2x16xf32, #tpu.memory_space<vmem>>, vector<2x16xf32>
    %c0_51 = arith.constant 0 : index
    %c0_52 = arith.constant 0 : index
    %48 = vector.load %arg5[%c0_51, %c0_52] : memref<16x2xf32, #tpu.memory_space<vmem>>, vector<16x2xf32>
    %c0_53 = arith.constant 0 : index
    %c0_54 = arith.constant 0 : index
    %49 = vector.load %arg32[%c0_53, %c0_54] : memref<2048x64xf32, #tpu.memory_space<vmem>>, vector<2048x64xf32>
    %c0_55 = arith.constant 0 : index
    %c0_56 = arith.constant 0 : index
    %50 = vector.load %arg33[%c0_55, %c0_56] : memref<64x2048xf32, #tpu.memory_space<vmem>>, vector<64x2048xf32>
    %c0_57 = arith.constant 0 : index
    %c0_58 = arith.constant 0 : index
    %51 = vector.load %arg20[%c0_57, %c0_58] : memref<16x2048xf32, #tpu.memory_space<vmem>>, vector<16x2048xf32>
    %cst_59 = arith.constant dense<0.000000e+00> : vector<16x2048xf32>
    %52 = tpu.matmul %31, %51, %cst_59 {dimension_numbers = #tpu.dot_dimension_numbers<[1], [0], [0], [1], [0, 0, 1, 1], [], []>} : vector<16x16xf32>, vector<16x2048xf32>, vector<16x2048xf32> -> vector<16x2048xf32>
    %c0_60 = arith.constant 0 : index
    %c0_61 = arith.constant 0 : index
    %53 = vector.load %arg21[%c0_60, %c0_61] : memref<1x2048xf32, #tpu.memory_space<vmem>>, vector<1x2048xf32>
    %54 = vector.broadcast %53 : vector<1x2048xf32> to vector<16x2048xf32>
    %55 = arith.addf %52, %54 : vector<16x2048xf32>
    %c0_62 = arith.constant 0 : index
    %c0_63 = arith.constant 0 : index
    %56 = vector.load %arg22[%c0_62, %c0_63] : memref<3x2048xf32, #tpu.memory_space<vmem>>, vector<3x2048xf32>
    %57 = vector.extract_strided_slice %33 {offsets = [0, 0], sizes = [16, 1], strides = [1, 1]} : vector<16x3xf32> to vector<16x1xf32>
    %58 = arith.mulf %57, %57 : vector<16x1xf32>
    %59 = vector.extract_strided_slice %33 {offsets = [0, 1], sizes = [16, 1], strides = [1, 1]} : vector<16x3xf32> to vector<16x1xf32>
    %60 = arith.mulf %59, %59 : vector<16x1xf32>
    %61 = arith.addf %58, %60 : vector<16x1xf32>
    %62 = vector.extract_strided_slice %33 {offsets = [0, 2], sizes = [16, 1], strides = [1, 1]} : vector<16x3xf32> to vector<16x1xf32>
    %63 = arith.mulf %62, %62 : vector<16x1xf32>
    %64 = arith.addf %61, %63 : vector<16x1xf32>
    %65 = vector.extract_strided_slice %56 {offsets = [0, 0], sizes = [1, 2048], strides = [1, 1]} : vector<3x2048xf32> to vector<1x2048xf32>
    %66 = arith.mulf %65, %65 : vector<1x2048xf32>
    %67 = vector.extract_strided_slice %56 {offsets = [1, 0], sizes = [1, 2048], strides = [1, 1]} : vector<3x2048xf32> to vector<1x2048xf32>
    %68 = arith.mulf %67, %67 : vector<1x2048xf32>
    %69 = arith.addf %66, %68 : vector<1x2048xf32>
    %70 = vector.extract_strided_slice %56 {offsets = [2, 0], sizes = [1, 2048], strides = [1, 1]} : vector<3x2048xf32> to vector<1x2048xf32>
    %71 = arith.mulf %70, %70 : vector<1x2048xf32>
    %72 = arith.addf %69, %71 : vector<1x2048xf32>
    %cst_64 = arith.constant dense<0.000000e+00> : vector<16x2048xf32>
    %73 = tpu.matmul %33, %56, %cst_64 {dimension_numbers = #tpu.dot_dimension_numbers<[1], [0], [0], [1], [0, 0, 1, 1], [], []>} : vector<16x3xf32>, vector<3x2048xf32>, vector<16x2048xf32> -> vector<16x2048xf32>
    %74 = vector.broadcast %64 : vector<16x1xf32> to vector<16x2048xf32>
    %75 = vector.broadcast %72 : vector<1x2048xf32> to vector<16x2048xf32>
    %76 = arith.addf %74, %75 : vector<16x2048xf32>
    %cst_65 = arith.constant 2.000000e+00 : f32
    %77 = vector.broadcast %cst_65 : f32 to vector<16x2048xf32>
    %78 = arith.mulf %77, %73 : vector<16x2048xf32>
    %79 = arith.subf %76, %78 : vector<16x2048xf32>
    %cst_66 = arith.constant 0.000000e+00 : f32
    %80 = vector.broadcast %cst_66 : f32 to vector<16x2048xf32>
    %81 = arith.maximumf %79, %80 : vector<16x2048xf32>
    %82 = math.sqrt %81 : vector<16x2048xf32>
    %cst_67 = arith.constant 0.000000e+00 : f32
    %83 = vector.broadcast %cst_67 : f32 to vector<16x2048xf32>
    %84 = arith.subf %83, %82 : vector<16x2048xf32>
    %c0_68 = arith.constant 0 : index
    %c0_69 = arith.constant 0 : index
    %85 = vector.load %arg23[%c0_68, %c0_69] : memref<1x2048xf32, #tpu.memory_space<vmem>>, vector<1x2048xf32>
    %86 = vector.broadcast %85 : vector<1x2048xf32> to vector<16x2048xf32>
    %87 = arith.mulf %84, %86 : vector<16x2048xf32>
    %88 = math.exp %87 : vector<16x2048xf32>
    %c0_70 = arith.constant 0 : index
    %c0_71 = arith.constant 0 : index
    %89 = vector.load %arg24[%c0_70, %c0_71] : memref<1x2048xf32, #tpu.memory_space<vmem>>, vector<1x2048xf32>
    %90 = vector.broadcast %89 : vector<1x2048xf32> to vector<16x2048xf32>
    %91 = arith.mulf %55, %90 : vector<16x2048xf32>
    %cst_72 = arith.constant dense<0.000000e+00> : vector<16x64xf32>
    %92 = tpu.matmul %91, %49, %cst_72 {dimension_numbers = #tpu.dot_dimension_numbers<[1], [0], [0], [1], [0, 0, 1, 1], [], []>} : vector<16x2048xf32>, vector<2048x64xf32>, vector<16x64xf32> -> vector<16x64xf32>
    %cst_73 = arith.constant dense<0.000000e+00> : vector<16x2048xf32>
    %93 = tpu.matmul %92, %50, %cst_73 {dimension_numbers = #tpu.dot_dimension_numbers<[1], [0], [0], [1], [0, 0, 1, 1], [], []>} : vector<16x64xf32>, vector<64x2048xf32>, vector<16x2048xf32> -> vector<16x2048xf32>
    %94 = arith.mulf %88, %93 : vector<16x2048xf32>
    %cst_74 = arith.constant dense<0.000000e+00> : vector<2x2048xf32>
    %95 = tpu.matmul %47, %94, %cst_74 {dimension_numbers = #tpu.dot_dimension_numbers<[1], [0], [0], [1], [0, 0, 1, 1], [], []>} : vector<2x16xf32>, vector<16x2048xf32>, vector<2x2048xf32> -> vector<2x2048xf32>
    %c0_75 = arith.constant 0 : index
    %c0_76 = arith.constant 0 : index
    %96 = vector.load %arg25[%c0_75, %c0_76] : memref<1x2048xf32, #tpu.memory_space<vmem>>, vector<1x2048xf32>
    %97 = vector.broadcast %96 : vector<1x2048xf32> to vector<2x2048xf32>
    %98 = arith.addf %95, %97 : vector<2x2048xf32>
    %cst_77 = arith.constant dense<0xFF800000> : vector<2xf32>
    %99 = vector.multi_reduction <maximumf>, %98, %cst_77 [1] : vector<2x2048xf32> to vector<2xf32>
    %100 = vector.shape_cast %99 : vector<2xf32> to vector<2x1xf32>
    %101 = vector.broadcast %100 : vector<2x1xf32> to vector<2x2048xf32>
    %102 = arith.subf %98, %101 : vector<2x2048xf32>
    %103 = math.exp %102 : vector<2x2048xf32>
    %cst_78 = arith.constant dense<0.000000e+00> : vector<2x64xf32>
    %104 = tpu.matmul %103, %49, %cst_78 {dimension_numbers = #tpu.dot_dimension_numbers<[1], [0], [0], [1], [0, 0, 1, 1], [], []>} : vector<2x2048xf32>, vector<2048x64xf32>, vector<2x64xf32> -> vector<2x64xf32>
    %cst_79 = arith.constant dense<0.000000e+00> : vector<2x2048xf32>
    %105 = tpu.matmul %104, %50, %cst_79 {dimension_numbers = #tpu.dot_dimension_numbers<[1], [0], [0], [1], [0, 0, 1, 1], [], []>} : vector<2x64xf32>, vector<64x2048xf32>, vector<2x2048xf32> -> vector<2x2048xf32>
    %106 = arith.divf %103, %105 : vector<2x2048xf32>
    %c0_80 = arith.constant 0 : index
    %c0_81 = arith.constant 0 : index
    %107 = vector.load %arg26[%c0_80, %c0_81] : memref<16x2048xf32, #tpu.memory_space<vmem>>, vector<16x2048xf32>
    %c0_82 = arith.constant 0 : index
    %c0_83 = arith.constant 0 : index
    %108 = vector.load %arg27[%c0_82, %c0_83] : memref<16x64xf32, #tpu.memory_space<vmem>>, vector<16x64xf32>
    %c0_84 = arith.constant 0 : index
    %c0_85 = arith.constant 0 : index
    %109 = vector.load %arg28[%c0_84, %c0_85] : memref<16x64xf32, #tpu.memory_space<vmem>>, vector<16x64xf32>
    %c0_86 = arith.constant 0 : index
    %c0_87 = arith.constant 0 : index
    %110 = vector.load %arg29[%c0_86, %c0_87] : memref<16x64xf32, #tpu.memory_space<vmem>>, vector<16x64xf32>
    %c0_88 = arith.constant 0 : index
    %c0_89 = arith.constant 0 : index
    %111 = vector.load %arg30[%c0_88, %c0_89] : memref<16x64xf32, #tpu.memory_space<vmem>>, vector<16x64xf32>
    %c0_90 = arith.constant 0 : index
    %c0_91 = arith.constant 0 : index
    %112 = vector.load %arg31[%c0_90, %c0_91] : memref<1x64xf32, #tpu.memory_space<vmem>>, vector<1x64xf32>
    %113 = vector.extract_strided_slice %106 {offsets = [0, 0], sizes = [1, 2048], strides = [1, 1]} : vector<2x2048xf32> to vector<1x2048xf32>
    %114 = vector.broadcast %113 : vector<1x2048xf32> to vector<16x2048xf32>
    %115 = arith.mulf %88, %114 : vector<16x2048xf32>
    %cst_92 = arith.constant dense<0.000000e+00> : vector<16x64xf32>
    %116 = tpu.matmul %115, %49, %cst_92 {dimension_numbers = #tpu.dot_dimension_numbers<[1], [0], [0], [1], [0, 0, 1, 1], [], []>} : vector<16x2048xf32>, vector<2048x64xf32>, vector<16x64xf32> -> vector<16x64xf32>
    %117 = vector.extract_strided_slice %48 {offsets = [0, 0], sizes = [16, 1], strides = [1, 1]} : vector<16x2xf32> to vector<16x1xf32>
    %118 = vector.broadcast %117 : vector<16x1xf32> to vector<16x64xf32>
    %119 = arith.mulf %116, %118 : vector<16x64xf32>
    %cst_93 = arith.constant dense<0.000000e+00> : vector<16x2048xf32>
    %120 = tpu.matmul %119, %50, %cst_93 {dimension_numbers = #tpu.dot_dimension_numbers<[1], [0], [0], [1], [0, 0, 1, 1], [], []>} : vector<16x64xf32>, vector<64x2048xf32>, vector<16x2048xf32> -> vector<16x2048xf32>
    %121 = arith.mulf %55, %120 : vector<16x2048xf32>
    %cst_94 = arith.constant dense<0.000000e+00> : vector<2048xf32>
    %122 = vector.multi_reduction <add>, %121, %cst_94 [0] : vector<16x2048xf32> to vector<2048xf32>
    %123 = vector.shape_cast %122 : vector<2048xf32> to vector<1x2048xf32>
    %124 = vector.broadcast %123 : vector<1x2048xf32> to vector<16x2048xf32>
    %125 = arith.mulf %107, %124 : vector<16x2048xf32>
    %cst_95 = arith.constant dense<0.000000e+00> : vector<16x64xf32>
    %126 = tpu.matmul %125, %49, %cst_95 {dimension_numbers = #tpu.dot_dimension_numbers<[1], [0], [0], [1], [0, 0, 1, 1], [], []>} : vector<16x2048xf32>, vector<2048x64xf32>, vector<16x64xf32> -> vector<16x64xf32>
    %127 = arith.addf %126, %108 : vector<16x64xf32>
    %cst_96 = arith.constant 0.000000e+00 : f32
    %128 = vector.broadcast %cst_96 : f32 to vector<16x64xf32>
    %129 = arith.cmpf ogt, %127, %128 : vector<16x64xf32>
    %cst_97 = arith.constant 2.000000e-01 : f32
    %130 = vector.broadcast %cst_97 : f32 to vector<16x64xf32>
    %131 = arith.mulf %130, %127 : vector<16x64xf32>
    %132 = arith.select %129, %127, %131 : vector<16x64xi1>, vector<16x64xf32>
    %cst_98 = arith.constant dense<0.000000e+00> : vector<64xf32>
    %133 = vector.multi_reduction <add>, %132, %cst_98 [0] : vector<16x64xf32> to vector<64xf32>
    %134 = vector.shape_cast %133 : vector<64xf32> to vector<1x64xf32>
    %cst_99 = arith.constant 1.600000e+01 : f32
    %135 = vector.broadcast %cst_99 : f32 to vector<1x64xf32>
    %136 = arith.divf %134, %135 : vector<1x64xf32>
    %137 = vector.broadcast %136 : vector<1x64xf32> to vector<16x64xf32>
    %138 = arith.subf %132, %137 : vector<16x64xf32>
    %139 = arith.mulf %138, %138 : vector<16x64xf32>
    %cst_100 = arith.constant dense<0.000000e+00> : vector<64xf32>
    %140 = vector.multi_reduction <add>, %139, %cst_100 [0] : vector<16x64xf32> to vector<64xf32>
    %141 = vector.shape_cast %140 : vector<64xf32> to vector<1x64xf32>
    %cst_101 = arith.constant 1.600000e+01 : f32
    %142 = vector.broadcast %cst_101 : f32 to vector<1x64xf32>
    %143 = arith.divf %141, %142 : vector<1x64xf32>
    %144 = vector.broadcast %136 : vector<1x64xf32> to vector<16x64xf32>
    %145 = arith.subf %132, %144 : vector<16x64xf32>
    %cst_102 = arith.constant 9.99999974E-6 : f32
    %146 = vector.broadcast %cst_102 : f32 to vector<1x64xf32>
    %147 = arith.addf %143, %146 : vector<1x64xf32>
    %148 = math.rsqrt %147 : vector<1x64xf32>
    %149 = vector.broadcast %148 : vector<1x64xf32> to vector<16x64xf32>
    %150 = arith.mulf %145, %149 : vector<16x64xf32>
    %151 = arith.mulf %150, %109 : vector<16x64xf32>
    %152 = arith.addf %151, %110 : vector<16x64xf32>
    %153 = arith.mulf %152, %111 : vector<16x64xf32>
    %cst_103 = arith.constant dense<0.000000e+00> : vector<64xf32>
    %154 = vector.multi_reduction <add>, %153, %cst_103 [0] : vector<16x64xf32> to vector<64xf32>
    %155 = vector.shape_cast %154 : vector<64xf32> to vector<1x64xf32>
    %156 = arith.addf %155, %112 : vector<1x64xf32>
    %157 = vector.extract_strided_slice %106 {offsets = [1, 0], sizes = [1, 2048], strides = [1, 1]} : vector<2x2048xf32> to vector<1x2048xf32>
    %158 = vector.broadcast %157 : vector<1x2048xf32> to vector<16x2048xf32>
    %159 = arith.mulf %88, %158 : vector<16x2048xf32>
    %cst_104 = arith.constant dense<0.000000e+00> : vector<16x64xf32>
    %160 = tpu.matmul %159, %49, %cst_104 {dimension_numbers = #tpu.dot_dimension_numbers<[1], [0], [0], [1], [0, 0, 1, 1], [], []>} : vector<16x2048xf32>, vector<2048x64xf32>, vector<16x64xf32> -> vector<16x64xf32>
    %161 = vector.extract_strided_slice %48 {offsets = [0, 1], sizes = [16, 1], strides = [1, 1]} : vector<16x2xf32> to vector<16x1xf32>
    %162 = vector.broadcast %161 : vector<16x1xf32> to vector<16x64xf32>
    %163 = arith.mulf %160, %162 : vector<16x64xf32>
    %cst_105 = arith.constant dense<0.000000e+00> : vector<16x2048xf32>
    %164 = tpu.matmul %163, %50, %cst_105 {dimension_numbers = #tpu.dot_dimension_numbers<[1], [0], [0], [1], [0, 0, 1, 1], [], []>} : vector<16x64xf32>, vector<64x2048xf32>, vector<16x2048xf32> -> vector<16x2048xf32>
    %165 = arith.mulf %55, %164 : vector<16x2048xf32>
    %cst_106 = arith.constant dense<0.000000e+00> : vector<2048xf32>
    %166 = vector.multi_reduction <add>, %165, %cst_106 [0] : vector<16x2048xf32> to vector<2048xf32>
    %167 = vector.shape_cast %166 : vector<2048xf32> to vector<1x2048xf32>
    %168 = vector.broadcast %167 : vector<1x2048xf32> to vector<16x2048xf32>
    %169 = arith.mulf %107, %168 : vector<16x2048xf32>
    %cst_107 = arith.constant dense<0.000000e+00> : vector<16x64xf32>
    %170 = tpu.matmul %169, %49, %cst_107 {dimension_numbers = #tpu.dot_dimension_numbers<[1], [0], [0], [1], [0, 0, 1, 1], [], []>} : vector<16x2048xf32>, vector<2048x64xf32>, vector<16x64xf32> -> vector<16x64xf32>
    %171 = arith.addf %170, %108 : vector<16x64xf32>
    %cst_108 = arith.constant 0.000000e+00 : f32
    %172 = vector.broadcast %cst_108 : f32 to vector<16x64xf32>
    %173 = arith.cmpf ogt, %171, %172 : vector<16x64xf32>
    %cst_109 = arith.constant 2.000000e-01 : f32
    %174 = vector.broadcast %cst_109 : f32 to vector<16x64xf32>
    %175 = arith.mulf %174, %171 : vector<16x64xf32>
    %176 = arith.select %173, %171, %175 : vector<16x64xi1>, vector<16x64xf32>
    %cst_110 = arith.constant dense<0.000000e+00> : vector<64xf32>
    %177 = vector.multi_reduction <add>, %176, %cst_110 [0] : vector<16x64xf32> to vector<64xf32>
    %178 = vector.shape_cast %177 : vector<64xf32> to vector<1x64xf32>
    %cst_111 = arith.constant 1.600000e+01 : f32
    %179 = vector.broadcast %cst_111 : f32 to vector<1x64xf32>
    %180 = arith.divf %178, %179 : vector<1x64xf32>
    %181 = vector.broadcast %180 : vector<1x64xf32> to vector<16x64xf32>
    %182 = arith.subf %176, %181 : vector<16x64xf32>
    %183 = arith.mulf %182, %182 : vector<16x64xf32>
    %cst_112 = arith.constant dense<0.000000e+00> : vector<64xf32>
    %184 = vector.multi_reduction <add>, %183, %cst_112 [0] : vector<16x64xf32> to vector<64xf32>
    %185 = vector.shape_cast %184 : vector<64xf32> to vector<1x64xf32>
    %cst_113 = arith.constant 1.600000e+01 : f32
    %186 = vector.broadcast %cst_113 : f32 to vector<1x64xf32>
    %187 = arith.divf %185, %186 : vector<1x64xf32>
    %188 = vector.broadcast %180 : vector<1x64xf32> to vector<16x64xf32>
    %189 = arith.subf %176, %188 : vector<16x64xf32>
    %cst_114 = arith.constant 9.99999974E-6 : f32
    %190 = vector.broadcast %cst_114 : f32 to vector<1x64xf32>
    %191 = arith.addf %187, %190 : vector<1x64xf32>
    %192 = math.rsqrt %191 : vector<1x64xf32>
    %193 = vector.broadcast %192 : vector<1x64xf32> to vector<16x64xf32>
    %194 = arith.mulf %189, %193 : vector<16x64xf32>
    %195 = arith.mulf %194, %109 : vector<16x64xf32>
    %196 = arith.addf %195, %110 : vector<16x64xf32>
    %197 = arith.mulf %196, %111 : vector<16x64xf32>
    %cst_115 = arith.constant dense<0.000000e+00> : vector<64xf32>
    %198 = vector.multi_reduction <add>, %197, %cst_115 [0] : vector<16x64xf32> to vector<64xf32>
    %199 = vector.shape_cast %198 : vector<64xf32> to vector<1x64xf32>
    %200 = arith.addf %199, %112 : vector<1x64xf32>
    %201 = tpu.concatenate %156, %200 in 0 : vector<1x64xf32>, vector<1x64xf32> -> vector<2x64xf32>
    %c0_116 = arith.constant 0 : index
    %c0_117 = arith.constant 0 : index
    %202 = vector.load %arg34[%c0_116, %c0_117] : memref<64x16xf32, #tpu.memory_space<vmem>>, vector<64x16xf32>
    %cst_118 = arith.constant dense<0.000000e+00> : vector<2x16xf32>
    %203 = tpu.matmul %201, %202, %cst_118 {dimension_numbers = #tpu.dot_dimension_numbers<[1], [0], [0], [1], [0, 0, 1, 1], [], []>} : vector<2x64xf32>, vector<64x16xf32>, vector<2x16xf32> -> vector<2x16xf32>
    %c0_119 = arith.constant 0 : index
    %c0_120 = arith.constant 0 : index
    %204 = vector.load %arg35[%c0_119, %c0_120] : memref<1x16xf32, #tpu.memory_space<vmem>>, vector<1x16xf32>
    %205 = vector.broadcast %204 : vector<1x16xf32> to vector<2x16xf32>
    %206 = arith.addf %203, %205 : vector<2x16xf32>
    %cst_121 = arith.constant 0.000000e+00 : f32
    %207 = vector.broadcast %cst_121 : f32 to vector<2x16xf32>
    %208 = arith.cmpf ogt, %206, %207 : vector<2x16xf32>
    %cst_122 = arith.constant 2.000000e-01 : f32
    %209 = vector.broadcast %cst_122 : f32 to vector<2x16xf32>
    %210 = arith.mulf %209, %206 : vector<2x16xf32>
    %211 = arith.select %208, %206, %210 : vector<2x16xi1>, vector<2x16xf32>
    %c0_123 = arith.constant 0 : index
    %c0_124 = arith.constant 0 : index
    %212 = vector.load %arg36[%c0_123, %c0_124] : memref<16x16xf32, #tpu.memory_space<vmem>>, vector<16x16xf32>
    %cst_125 = arith.constant dense<0.000000e+00> : vector<2x16xf32>
    %213 = tpu.matmul %211, %212, %cst_125 {dimension_numbers = #tpu.dot_dimension_numbers<[1], [0], [0], [1], [0, 0, 1, 1], [], []>} : vector<2x16xf32>, vector<16x16xf32>, vector<2x16xf32> -> vector<2x16xf32>
    %c0_126 = arith.constant 0 : index
    %c0_127 = arith.constant 0 : index
    %214 = vector.load %arg37[%c0_126, %c0_127] : memref<1x16xf32, #tpu.memory_space<vmem>>, vector<1x16xf32>
    %215 = vector.broadcast %214 : vector<1x16xf32> to vector<2x16xf32>
    %216 = arith.addf %213, %215 : vector<2x16xf32>
    %cst_128 = arith.constant dense<0.000000e+00> : vector<2x16xf32>
    %217 = tpu.matmul %47, %31, %cst_128 {dimension_numbers = #tpu.dot_dimension_numbers<[1], [0], [0], [1], [0, 0, 1, 1], [], []>} : vector<2x16xf32>, vector<16x16xf32>, vector<2x16xf32> -> vector<2x16xf32>
    %c0_129 = arith.constant 0 : index
    %c0_130 = arith.constant 0 : index
    %218 = vector.load %arg6[%c0_129, %c0_130] : memref<2x6xf32, #tpu.memory_space<vmem>>, vector<2x6xf32>
    %c0_131 = arith.constant 0 : index
    %c0_132 = arith.constant 0 : index
    %219 = vector.load %arg38[%c0_131, %c0_132] : memref<6x16xf32, #tpu.memory_space<vmem>>, vector<6x16xf32>
    %cst_133 = arith.constant dense<0.000000e+00> : vector<2x16xf32>
    %220 = tpu.matmul %218, %219, %cst_133 {dimension_numbers = #tpu.dot_dimension_numbers<[1], [0], [0], [1], [0, 0, 1, 1], [], []>} : vector<2x6xf32>, vector<6x16xf32>, vector<2x16xf32> -> vector<2x16xf32>
    %c0_134 = arith.constant 0 : index
    %c0_135 = arith.constant 0 : index
    %221 = vector.load %arg39[%c0_134, %c0_135] : memref<16x16xf32, #tpu.memory_space<vmem>>, vector<16x16xf32>
    %cst_136 = arith.constant dense<0.000000e+00> : vector<2x16xf32>
    %222 = tpu.matmul %216, %221, %cst_136 {dimension_numbers = #tpu.dot_dimension_numbers<[1], [0], [0], [1], [0, 0, 1, 1], [], []>} : vector<2x16xf32>, vector<16x16xf32>, vector<2x16xf32> -> vector<2x16xf32>
    %223 = arith.addf %220, %222 : vector<2x16xf32>
    %c0_137 = arith.constant 0 : index
    %c0_138 = arith.constant 0 : index
    %224 = vector.load %arg40[%c0_137, %c0_138] : memref<16x16xf32, #tpu.memory_space<vmem>>, vector<16x16xf32>
    %cst_139 = arith.constant dense<0.000000e+00> : vector<2x16xf32>
    %225 = tpu.matmul %217, %224, %cst_139 {dimension_numbers = #tpu.dot_dimension_numbers<[1], [0], [0], [1], [0, 0, 1, 1], [], []>} : vector<2x16xf32>, vector<16x16xf32>, vector<2x16xf32> -> vector<2x16xf32>
    %226 = arith.addf %223, %225 : vector<2x16xf32>
    %c0_140 = arith.constant 0 : index
    %c0_141 = arith.constant 0 : index
    %227 = vector.load %arg41[%c0_140, %c0_141] : memref<1x16xf32, #tpu.memory_space<vmem>>, vector<1x16xf32>
    %228 = vector.broadcast %227 : vector<1x16xf32> to vector<2x16xf32>
    %229 = arith.addf %226, %228 : vector<2x16xf32>
    %cst_142 = arith.constant 0.000000e+00 : f32
    %230 = vector.broadcast %cst_142 : f32 to vector<2x16xf32>
    %231 = arith.maximumf %229, %230 : vector<2x16xf32>
    %c0_143 = arith.constant 0 : index
    %c0_144 = arith.constant 0 : index
    %232 = vector.load %arg42[%c0_143, %c0_144] : memref<16x16xf32, #tpu.memory_space<vmem>>, vector<16x16xf32>
    %cst_145 = arith.constant dense<0.000000e+00> : vector<2x16xf32>
    %233 = tpu.matmul %231, %232, %cst_145 {dimension_numbers = #tpu.dot_dimension_numbers<[1], [0], [0], [1], [0, 0, 1, 1], [], []>} : vector<2x16xf32>, vector<16x16xf32>, vector<2x16xf32> -> vector<2x16xf32>
    %c0_146 = arith.constant 0 : index
    %c0_147 = arith.constant 0 : index
    %234 = vector.load %arg43[%c0_146, %c0_147] : memref<1x16xf32, #tpu.memory_space<vmem>>, vector<1x16xf32>
    %235 = vector.broadcast %234 : vector<1x16xf32> to vector<2x16xf32>
    %236 = arith.addf %233, %235 : vector<2x16xf32>
    %c0_148 = arith.constant 0 : index
    %c0_149 = arith.constant 0 : index
    %237 = vector.load %arg46[%c0_148, %c0_149] : memref<2x16xf32, #tpu.memory_space<vmem>>, vector<2x16xf32>
    tpu.vector_store %arg46[%c0_148, %c0_149], %236 {strides = array<i32>} : memref<2x16xf32, #tpu.memory_space<vmem>>, vector<2x16xf32>,
    return
  }
}

</mosaic_0001>

<llo_original>
// kernel: sub.1
$region0: #{sub.1}
  #allocation0 [shape = 's32[1]{0}', space=sflag, size = 0x4, scoped, tag = 'scoped memory for sub.1']
  %s0 = inlined_call_operand.vmem [shape: f32[32,3], index: 0, kind: input, shape index: {}]
  %s1 = inlined_call_operand.vmem [shape: f32[32,3], index: 1, kind: input, shape index: {}]
  %s2 = inlined_call_operand.vmem [shape: f32[32,3], index: 2, kind: output, shape index: {}]
  %v3 = vld [vmem:[%s0] sm:$0xff]
  %v4 = vld [vmem:[%s1] sm:$0xff]
  %5 = xla_tuple %v3, %v4
  %6 = xla_tuple %5
  %v7 = vsub.f32 %v3, %v4
  %8 = xla_tuple %v7
  %9 = vst [vmem:[%s2] sm:$0xff] %v7
  %s10 = scalar_lea.vmem %s0, 8
  %v11 = vld [vmem:[%s10] sm:$0xff]
  %s12 = scalar_lea.vmem %s1, 8
  %v13 = vld [vmem:[%s12] sm:$0xff]
  %14 = xla_tuple %v11, %v13
  %15 = xla_tuple %14
  %v16 = vsub.f32 %v11, %v13
  %17 = xla_tuple %v16
  %s18 = scalar_lea.vmem %s2, 8
  %19 = vst [vmem:[%s18] sm:$0xff] %v16
  %s20 = scalar_lea.vmem %s0, 16
  %v21 = vld [vmem:[%s20] sm:$0xff]
  %s22 = scalar_lea.vmem %s1, 16
  %v23 = vld [vmem:[%s22] sm:$0xff]
  %24 = xla_tuple %v21, %v23
  %25 = xla_tuple %24
  %v26 = vsub.f32 %v21, %v23
  %27 = xla_tuple %v26
  %s28 = scalar_lea.vmem %s2, 16
  %29 = vst [vmem:[%s28] sm:$0xff] %v26
  %s30 = scalar_lea.vmem %s0, 24
  %v31 = vld [vmem:[%s30] sm:$0xff]
  %s32 = scalar_lea.vmem %s1, 24
  %v33 = vld [vmem:[%s32] sm:$0xff]
  %34 = xla_tuple %v31, %v33
  %35 = xla_tuple %34
  %v36 = vsub.f32 %v31, %v33
  %37 = xla_tuple %v36
  %s38 = scalar_lea.vmem %s2, 24
  %39 = vst [vmem:[%s38] sm:$0xff] %v36

// kernel: enpg_forward.1
$region0: #{enpg_forward.1}
  #allocation0 [shape = 'u32[]', space=smem, size = 0x4, offset = 0x4, fixed_abs, tag = 'smem constant byte address 0x4 - core index']
  #allocation1 [shape = 'u32[72,128]{1,0:T(1,128)}', space=vmem, size = 0x9000, scoped, tag = 'internal scratch']
  %s0 = inlined_call_operand.smem [shape: u32[48], index: -1, kind: input, shape index: {}]
  %s1 = sld [smem:[%s0]]
  %s2 = scalar_lea.smem %s0, 1
  %s3 = sld [smem:[%s2]]
  %s4 = scalar_lea.smem %s0, 2
  %s5 = sld [smem:[%s4]]
  %s6 = scalar_lea.smem %s0, 3
  %s7 = sld [smem:[%s6]]
  %s8 = scalar_lea.smem %s0, 4
  %s9 = sld [smem:[%s8]]
  %s10 = scalar_lea.smem %s0, 5
  %s11 = sld [smem:[%s10]]
  %s12 = scalar_lea.smem %s0, 6
  %s13 = sld [smem:[%s12]]
  %s14 = scalar_lea.smem %s0, 7
  %s15 = sld [smem:[%s14]]
  %s16 = scalar_lea.smem %s0, 8
  %s17 = sld [smem:[%s16]]
  %s18 = scalar_lea.smem %s0, 9
  %s19 = sld [smem:[%s18]]
  %s20 = scalar_lea.smem %s0, 10
  %s21 = sld [smem:[%s20]]
  %s22 = scalar_lea.smem %s0, 11
  %s23 = sld [smem:[%s22]]
  %s24 = scalar_lea.smem %s0, 12
  %s25 = sld [smem:[%s24]]
  %s26 = scalar_lea.smem %s0, 13
  %s27 = sld [smem:[%s26]]
  %s28 = scalar_lea.smem %s0, 14
  %s29 = sld [smem:[%s28]]
  %s30 = scalar_lea.smem %s0, 15
  %s31 = sld [smem:[%s30]]
  %s32 = scalar_lea.smem %s0, 16
  %s33 = sld [smem:[%s32]]
  %s34 = scalar_lea.smem %s0, 17
  %s35 = sld [smem:[%s34]]
  %s36 = scalar_lea.smem %s0, 18
  %s37 = sld [smem:[%s36]]
  %s38 = scalar_lea.smem %s0, 19
  %s39 = sld [smem:[%s38]]
  %s40 = scalar_lea.smem %s0, 20
  %s41 = sld [smem:[%s40]]
  %s42 = scalar_lea.smem %s0, 21
  %s43 = sld [smem:[%s42]]
  %s44 = scalar_lea.smem %s0, 22
  %s45 = sld [smem:[%s44]]
  %s46 = scalar_lea.smem %s0, 23
  %s47 = sld [smem:[%s46]]
  %s48 = scalar_lea.smem %s0, 24
  %s49 = sld [smem:[%s48]]
  %s50 = scalar_lea.smem %s0, 25
  %s51 = sld [smem:[%s50]]
  %s52 = scalar_lea.smem %s0, 26
  %s53 = sld [smem:[%s52]]
  %s54 = scalar_lea.smem %s0, 27
  %s55 = sld [smem:[%s54]]
  %s56 = scalar_lea.smem %s0, 28
  %s57 = sld [smem:[%s56]]
  %s58 = scalar_lea.smem %s0, 29
  %s59 = sld [smem:[%s58]]
  %s60 = scalar_lea.smem %s0, 30
  %s61 = sld [smem:[%s60]]
  %s62 = scalar_lea.smem %s0, 31
  %s63 = sld [smem:[%s62]]
  %s64 = scalar_lea.smem %s0, 32
  %s65 = sld [smem:[%s64]]
  %s66 = scalar_lea.smem %s0, 33
  %s67 = sld [smem:[%s66]]
  %s68 = scalar_lea.smem %s0, 34
  %s69 = sld [smem:[%s68]]
  %s70 = scalar_lea.smem %s0, 35
  %s71 = sld [smem:[%s70]]
  %s72 = scalar_lea.smem %s0, 36
  %s73 = sld [smem:[%s72]]
  %s74 = scalar_lea.smem %s0, 37
  %s75 = sld [smem:[%s74]]
  %s76 = scalar_lea.smem %s0, 38
  %s77 = sld [smem:[%s76]]
  %s78 = scalar_lea.smem %s0, 39
  %s79 = sld [smem:[%s78]]
  %s80 = scalar_lea.smem %s0, 40
  %s81 = sld [smem:[%s80]]
  %s82 = scalar_lea.smem %s0, 41
  %s83 = sld [smem:[%s82]]
  %s84 = scalar_lea.smem %s0, 42
  %s85 = sld [smem:[%s84]]
  %s86 = scalar_lea.smem %s0, 43
  %s87 = sld [smem:[%s86]]
  %s88 = scalar_lea.smem %s0, 44
  %s89 = sld [smem:[%s88]]
  %s90 = scalar_lea.smem %s0, 45
  %s91 = sld [smem:[%s90]]
  %s92 = scalar_lea.smem %s0, 46
  %s93 = sld [smem:[%s92]]
  %s94 = scalar_lea.smem %s0, 47
  %s95 = sld [smem:[%s94]]
  %96 = xla_tuple %s89, %s91, %s93, %s95
  %s97 = sld [smem:[#allocation0]]
  $region210: #{enpg_forward.1} parent=0
    _
  %s99 = ssub.s32 1, %s97
  %s100 = scalar_select 0, %s99, %s97
  $region1: #{enpg_forward.1} parent=0
    #allocation2 [shape = 'u8[8192]{0}', space=vmem, size = 0x2000, scoped, tag = 'output window, operand 0, single buffered']
    #allocation3 [shape = 's32[1]{0}', space=sflag, size = 0x4, scoped, tag = 'scoped memory for enpg_forward.1']
    #allocation4 [shape = 'u8[1024]{0}', space=vmem, size = 0x400, scoped, tag = 'output window, operand 2, single buffered']
    #allocation5 [shape = 's32[1]{0}', space=sflag, size = 0x4, scoped, tag = 'scoped memory for enpg_forward.1']
    %101 = vsyncpa [#allocation3], 0
    %102 = vsyncpa [#allocation5], 0
    // Predicated region
    $region2: #{enpg_forward.1} parent=1 // pred_check
      _
    $region3: #{enpg_forward.1} parent=1 // pred_check_branch
      %104 = sbr.rel (0) target = $region5
    $region4: #{enpg_forward.1} parent=1 // pred_region
      _
    $region5: #{enpg_forward.1} parent=1 // pred_fallthru
      _
    // Predicated region
    $region6: #{enpg_forward.1} parent=1 // pred_check
      _
    $region7: #{enpg_forward.1} parent=1 // pred_check_branch
      %106 = sbr.rel (0) target = $region9
    $region8: #{enpg_forward.1} parent=1 // pred_region
      _
    $region9: #{enpg_forward.1} parent=1 // pred_fallthru
      _
    // Predicated region
    $region10: #{enpg_forward.1} parent=1 // pred_check
      _
    $region11: #{enpg_forward.1} parent=1 // pred_check_branch
      %108 = sbr.rel (0) target = $region13
    $region12: #{enpg_forward.1} parent=1 // pred_region
      _
    $region13: #{enpg_forward.1} parent=1 // pred_fallthru
      _
    // Predicated region
    $region14: #{enpg_forward.1} parent=1 // pred_check
      _
    $region15: #{enpg_forward.1} parent=1 // pred_check_branch
      %110 = sbr.rel (0) target = $region17
    $region16: #{enpg_forward.1} parent=1 // pred_region
      _
    $region17: #{enpg_forward.1} parent=1 // pred_fallthru
      _
    // Predicated region
    $region18: #{enpg_forward.1} parent=1 // pred_check
      _
    $region19: #{enpg_forward.1} parent=1 // pred_check_branch
      %112 = sbr.rel (0) target = $region21
    $region20: #{enpg_forward.1} parent=1 // pred_region
      _
    $region21: #{enpg_forward.1} parent=1 // pred_fallthru
      _
    // Predicated region
    $region22: #{enpg_forward.1} parent=1 // pred_check
      _
    $region23: #{enpg_forward.1} parent=1 // pred_check_branch
      %114 = sbr.rel (0) target = $region25
    $region24: #{enpg_forward.1} parent=1 // pred_region
      _
    $region25: #{enpg_forward.1} parent=1 // pred_fallthru
      _
    // Predicated region
    $region26: #{enpg_forward.1} parent=1 // pred_check
      _
    $region27: #{enpg_forward.1} parent=1 // pred_check_branch
      %116 = sbr.rel (0) target = $region29
    $region28: #{enpg_forward.1} parent=1 // pred_region
      _
    $region29: #{enpg_forward.1} parent=1 // pred_fallthru
      _
    // Predicated region
    $region30: #{enpg_forward.1} parent=1 // pred_check
      _
    $region31: #{enpg_forward.1} parent=1 // pred_check_branch
      %118 = sbr.rel (0) target = $region33
    $region32: #{enpg_forward.1} parent=1 // pred_region
      _
    $region33: #{enpg_forward.1} parent=1 // pred_fallthru
      _
    // Predicated region
    $region34: #{enpg_forward.1} parent=1 // pred_check
      _
    $region35: #{enpg_forward.1} parent=1 // pred_check_branch
      %120 = sbr.rel (0) target = $region37
    $region36: #{enpg_forward.1} parent=1 // pred_region
      _
    $region37: #{enpg_forward.1} parent=1 // pred_fallthru
      _
    // Predicated region
    $region38: #{enpg_forward.1} parent=1 // pred_check
      _
    $region39: #{enpg_forward.1} parent=1 // pred_check_branch
      %122 = sbr.rel (0) target = $region41
    $region40: #{enpg_forward.1} parent=1 // pred_region
      _
    $region41: #{enpg_forward.1} parent=1 // pred_fallthru
      _
    // Predicated region
    $region42: #{enpg_forward.1} parent=1 // pred_check
      _
    $region43: #{enpg_forward.1} parent=1 // pred_check_branch
      %124 = sbr.rel (0) target = $region45
    $region44: #{enpg_forward.1} parent=1 // pred_region
      _
    $region45: #{enpg_forward.1} parent=1 // pred_fallthru
      _
    // Predicated region
    $region46: #{enpg_forward.1} parent=1 // pred_check
      _
    $region47: #{enpg_forward.1} parent=1 // pred_check_branch
      %126 = sbr.rel (0) target = $region49
    $region48: #{enpg_forward.1} parent=1 // pred_region
      _
    $region49: #{enpg_forward.1} parent=1 // pred_fallthru
      _
    // Predicated region
    $region50: #{enpg_forward.1} parent=1 // pred_check
      _
    $region51: #{enpg_forward.1} parent=1 // pred_check_branch
      %128 = sbr.rel (0) target = $region53
    $region52: #{enpg_forward.1} parent=1 // pred_region
      _
    $region53: #{enpg_forward.1} parent=1 // pred_fallthru
      _
    // Predicated region
    $region54: #{enpg_forward.1} parent=1 // pred_check
      _
    $region55: #{enpg_forward.1} parent=1 // pred_check_branch
      %130 = sbr.rel (0) target = $region57
    $region56: #{enpg_forward.1} parent=1 // pred_region
      _
    $region57: #{enpg_forward.1} parent=1 // pred_fallthru
      _
    // Predicated region
    $region58: #{enpg_forward.1} parent=1 // pred_check
      _
    $region59: #{enpg_forward.1} parent=1 // pred_check_branch
      %132 = sbr.rel (0) target = $region61
    $region60: #{enpg_forward.1} parent=1 // pred_region
      _
    $region61: #{enpg_forward.1} parent=1 // pred_fallthru
      _
    // Predicated region
    $region62: #{enpg_forward.1} parent=1 // pred_check
      _
    $region63: #{enpg_forward.1} parent=1 // pred_check_branch
      %134 = sbr.rel (0) target = $region65
    $region64: #{enpg_forward.1} parent=1 // pred_region
      _
    $region65: #{enpg_forward.1} parent=1 // pred_fallthru
      _
    // Predicated region
    $region66: #{enpg_forward.1} parent=1 // pred_check
      _
    $region67: #{enpg_forward.1} parent=1 // pred_check_branch
      %136 = sbr.rel (0) target = $region69
    $region68: #{enpg_forward.1} parent=1 // pred_region
      _
    $region69: #{enpg_forward.1} parent=1 // pred_fallthru
      _
    // Predicated region
    $region70: #{enpg_forward.1} parent=1 // pred_check
      _
    $region71: #{enpg_forward.1} parent=1 // pred_check_branch
      %138 = sbr.rel (0) target = $region73
    $region72: #{enpg_forward.1} parent=1 // pred_region
      _
    $region73: #{enpg_forward.1} parent=1 // pred_fallthru
      _
    // Predicated region
    $region74: #{enpg_forward.1} parent=1 // pred_check
      _
    $region75: #{enpg_forward.1} parent=1 // pred_check_branch
      %140 = sbr.rel (0) target = $region77
    $region76: #{enpg_forward.1} parent=1 // pred_region
      _
    $region77: #{enpg_forward.1} parent=1 // pred_fallthru
      _
    // Predicated region
    $region78: #{enpg_forward.1} parent=1 // pred_check
      _
    $region79: #{enpg_forward.1} parent=1 // pred_check_branch
      %142 = sbr.rel (0) target = $region81
    $region80: #{enpg_forward.1} parent=1 // pred_region
      _
    $region81: #{enpg_forward.1} parent=1 // pred_fallthru
      _
    // Predicated region
    $region82: #{enpg_forward.1} parent=1 // pred_check
      _
    $region83: #{enpg_forward.1} parent=1 // pred_check_branch
      %144 = sbr.rel (0) target = $region85
    $region84: #{enpg_forward.1} parent=1 // pred_region
      _
    $region85: #{enpg_forward.1} parent=1 // pred_fallthru
      _
    // Predicated region
    $region86: #{enpg_forward.1} parent=1 // pred_check
      _
    $region87: #{enpg_forward.1} parent=1 // pred_check_branch
      %146 = sbr.rel (0) target = $region89
    $region88: #{enpg_forward.1} parent=1 // pred_region
      _
    $region89: #{enpg_forward.1} parent=1 // pred_fallthru
      _
    // Predicated region
    $region90: #{enpg_forward.1} parent=1 // pred_check
      _
    $region91: #{enpg_forward.1} parent=1 // pred_check_branch
      %148 = sbr.rel (0) target = $region93
    $region92: #{enpg_forward.1} parent=1 // pred_region
      _
    $region93: #{enpg_forward.1} parent=1 // pred_fallthru
      _
    // Predicated region
    $region94: #{enpg_forward.1} parent=1 // pred_check
      _
    $region95: #{enpg_forward.1} parent=1 // pred_check_branch
      %150 = sbr.rel (0) target = $region97
    $region96: #{enpg_forward.1} parent=1 // pred_region
      _
    $region97: #{enpg_forward.1} parent=1 // pred_fallthru
      _
    // Predicated region
    $region98: #{enpg_forward.1} parent=1 // pred_check
      _
    $region99: #{enpg_forward.1} parent=1 // pred_check_branch
      %152 = sbr.rel (0) target = $region101
    $region100: #{enpg_forward.1} parent=1 // pred_region
      _
    $region101: #{enpg_forward.1} parent=1 // pred_fallthru
      _
    // Predicated region
    $region102: #{enpg_forward.1} parent=1 // pred_check
      _
    $region103: #{enpg_forward.1} parent=1 // pred_check_branch
      %154 = sbr.rel (0) target = $region105
    $region104: #{enpg_forward.1} parent=1 // pred_region
      _
    $region105: #{enpg_forward.1} parent=1 // pred_fallthru
      _
    // Predicated region
    $region106: #{enpg_forward.1} parent=1 // pred_check
      _
    $region107: #{enpg_forward.1} parent=1 // pred_check_branch
      %156 = sbr.rel (0) target = $region109
    $region108: #{enpg_forward.1} parent=1 // pred_region
      _
    $region109: #{enpg_forward.1} parent=1 // pred_fallthru
      _
    // Predicated region
    $region110: #{enpg_forward.1} parent=1 // pred_check
      _
    $region111: #{enpg_forward.1} parent=1 // pred_check_branch
      %158 = sbr.rel (0) target = $region113
    $region112: #{enpg_forward.1} parent=1 // pred_region
      _
    $region113: #{enpg_forward.1} parent=1 // pred_fallthru
      _
    // Predicated region
    $region114: #{enpg_forward.1} parent=1 // pred_check
      _
    $region115: #{enpg_forward.1} parent=1 // pred_check_branch
      %160 = sbr.rel (0) target = $region117
    $region116: #{enpg_forward.1} parent=1 // pred_region
      _
    $region117: #{enpg_forward.1} parent=1 // pred_fallthru
      _
    // Predicated region
    $region118: #{enpg_forward.1} parent=1 // pred_check
      _
    $region119: #{enpg_forward.1} parent=1 // pred_check_branch
      %162 = sbr.rel (0) target = $region121
    $region120: #{enpg_forward.1} parent=1 // pred_region
      _
    $region121: #{enpg_forward.1} parent=1 // pred_fallthru
      _
    // Predicated region
    $region122: #{enpg_forward.1} parent=1 // pred_check
      _
    $region123: #{enpg_forward.1} parent=1 // pred_check_branch
      %164 = sbr.rel (0) target = $region125
    $region124: #{enpg_forward.1} parent=1 // pred_region
      _
    $region125: #{enpg_forward.1} parent=1 // pred_fallthru
      _
    // Predicated region
    $region126: #{enpg_forward.1} parent=1 // pred_check
      _
    $region127: #{enpg_forward.1} parent=1 // pred_check_branch
      %166 = sbr.rel (0) target = $region129
    $region128: #{enpg_forward.1} parent=1 // pred_region
      _
    $region129: #{enpg_forward.1} parent=1 // pred_fallthru
      _
    // Predicated region
    $region130: #{enpg_forward.1} parent=1 // pred_check
      _
    $region131: #{enpg_forward.1} parent=1 // pred_check_branch
      %168 = sbr.rel (0) target = $region133
    $region132: #{enpg_forward.1} parent=1 // pred_region
      _
    $region133: #{enpg_forward.1} parent=1 // pred_fallthru
      _
    // Predicated region
    $region134: #{enpg_forward.1} parent=1 // pred_check
      _
    $region135: #{enpg_forward.1} parent=1 // pred_check_branch
      %170 = sbr.rel (0) target = $region137
    $region136: #{enpg_forward.1} parent=1 // pred_region
      _
    $region137: #{enpg_forward.1} parent=1 // pred_fallthru
      _
    // Predicated region
    $region138: #{enpg_forward.1} parent=1 // pred_check
      _
    $region139: #{enpg_forward.1} parent=1 // pred_check_branch
      %172 = sbr.rel (0) target = $region141
    $region140: #{enpg_forward.1} parent=1 // pred_region
      _
    $region141: #{enpg_forward.1} parent=1 // pred_fallthru
      _
    // Predicated region
    $region142: #{enpg_forward.1} parent=1 // pred_check
      _
    $region143: #{enpg_forward.1} parent=1 // pred_check_branch
      %174 = sbr.rel (0) target = $region145
    $region144: #{enpg_forward.1} parent=1 // pred_region
      _
    $region145: #{enpg_forward.1} parent=1 // pred_fallthru
      _
    // Predicated region
    $region146: #{enpg_forward.1} parent=1 // pred_check
      _
    $region147: #{enpg_forward.1} parent=1 // pred_check_branch
      %176 = sbr.rel (0) target = $region149
    $region148: #{enpg_forward.1} parent=1 // pred_region
      _
    $region149: #{enpg_forward.1} parent=1 // pred_fallthru
      _
    // Predicated region
    $region150: #{enpg_forward.1} parent=1 // pred_check
      _
    $region151: #{enpg_forward.1} parent=1 // pred_check_branch
      %178 = sbr.rel (0) target = $region153
    $region152: #{enpg_forward.1} parent=1 // pred_region
      _
    $region153: #{enpg_forward.1} parent=1 // pred_fallthru
      _
    // Predicated region
    $region154: #{enpg_forward.1} parent=1 // pred_check
      _
    $region155: #{enpg_forward.1} parent=1 // pred_check_branch
      %180 = sbr.rel (0) target = $region157
    $region156: #{enpg_forward.1} parent=1 // pred_region
      _
    $region157: #{enpg_forward.1} parent=1 // pred_fallthru
      _
    // Predicated region
    $region158: #{enpg_forward.1} parent=1 // pred_check
      _
    $region159: #{enpg_forward.1} parent=1 // pred_check_branch
      %182 = sbr.rel (0) target = $region161
    $region160: #{enpg_forward.1} parent=1 // pred_region
      _
    $region161: #{enpg_forward.1} parent=1 // pred_fallthru
      _
    // Predicated region
    $region162: #{enpg_forward.1} parent=1 // pred_check
      _
    $region163: #{enpg_forward.1} parent=1 // pred_check_branch
      %184 = sbr.rel (0) target = $region165
    $region164: #{enpg_forward.1} parent=1 // pred_region
      _
    $region165: #{enpg_forward.1} parent=1 // pred_fallthru
      _
    // Predicated region
    $region166: #{enpg_forward.1} parent=1 // pred_check
      _
    $region167: #{enpg_forward.1} parent=1 // pred_check_branch
      %186 = sbr.rel (0) target = $region169
    $region168: #{enpg_forward.1} parent=1 // pred_region
      _
    $region169: #{enpg_forward.1} parent=1 // pred_fallthru
      _
    // Predicated region
    $region170: #{enpg_forward.1} parent=1 // pred_check
      _
    $region171: #{enpg_forward.1} parent=1 // pred_check_branch
      %188 = sbr.rel (0) target = $region173
    $region172: #{enpg_forward.1} parent=1 // pred_region
      _
    $region173: #{enpg_forward.1} parent=1 // pred_fallthru
      _
    // Predicated region
    $region174: #{enpg_forward.1} parent=1 // pred_check
      _
    $region175: #{enpg_forward.1} parent=1 // pred_check_branch
      %190 = sbr.rel (0) target = $region177
    $region176: #{enpg_forward.1} parent=1 // pred_region
      _
    $region177: #{enpg_forward.1} parent=1 // pred_fallthru
      _
    %v191 = vld [vmem:[%s1] sm:$0xff]
    %v192 = vld [vmem:[%s1 + $0x8] sm:$0xff]
    %v193 = vld [vmem:[%s1 + $0x10] sm:$0xff]
    %v194 = vld [vmem:[%s1 + $0x18] sm:$0xff]
    %v195 = vld [vmem:[%s15] sm:$0xff]
    %v196 = vld [vmem:[%s15 + $0x8] sm:$0xff]
    %v197 = vld [vmem:[%s15 + $0x10] sm:$0xff]
    %v198 = vld [vmem:[%s15 + $0x18] sm:$0xf]
    %v199 = vld [vmem:[%s17] sm:$0x1]
    %v201 = vperm.slane %v199, 0
    %vm203 = vcmask 228352
    %v205 = vsel %vm203, %v191, 0
    %v208 = vsel %vm203, %v192, 0
    %v211 = vsel %vm203, %v193, 0
    %v214 = vsel %vm203, %v194, 0
    %vm216 = vcmask 1043456
    %v218 = vsel %vm216, %v198, 0
    %220 = vmatpush.msra.mxu0 0.0
    %221 = vmatpush.msra.mxu0 0.0
    %222 = vmatpush.msra.mxu0 0.0
    %223 = vmatpush.msra.mxu0 0.0
    %224 = vmatpush.msra.mxu0 0.0
    %225 = vmatpush.msra.mxu0 0.0
    %226 = vmatpush.msra.mxu0 0.0
    %227 = vmatpush.msra.mxu0 0.0
    %228 = vmatpush.msra.mxu0 0.0
    %229 = vmatpush.msra.mxu0 0.0
    %230 = vmatpush.msra.mxu0 0.0
    %231 = vmatpush.msra.mxu0 0.0
    %232 = vmatpush.msra.mxu0 %v218
    %233 = vmatpush.msra.mxu0 %v197
    %234 = vmatpush.msra.mxu0 %v196
    %235 = vmatpush.msra.mxu0 %v195
    %236 = vmatmul.f32.gmra.mxu0 %v205
    %v237 = vpop.f32.mrf.mxu0
    %v238 = vadd.f32 %v201, %v237
    %239 = vmatmul.f32.gmra.mxu0 %v208
    %v240 = vpop.f32.mrf.mxu0
    %v241 = vadd.f32 %v201, %v240
    %242 = vmatmul.f32.gmra.mxu0 %v211
    %v243 = vpop.f32.mrf.mxu0
    %v244 = vadd.f32 %v201, %v243
    %245 = vmatmul.f32.gmra.mxu0 %v214
    %v246 = vpop.f32.mrf.mxu0
    %v247 = vadd.f32 %v201, %v246
    %248 = vdwg.mxu0
    %v249 = vmax.f32 %v238, 0.0
    %v250 = vmax.f32 %v241, 0.0
    %v251 = vmax.f32 %v244, 0.0
    %v252 = vmax.f32 %v247, 0.0
    %v253 = vld [vmem:[%s19] sm:$0xff]
    %v254 = vld [vmem:[%s19 + $0x8] sm:$0xff]
    %v255 = vld [vmem:[%s21] sm:$0x1]
    %v257 = vperm.slane %v255, 0
    %vm259 = vcmask 130048
    %v261 = vsel %vm259, %v249, 0
    %v264 = vsel %vm259, %v250, 0
    %v267 = vsel %vm259, %v251, 0
    %v270 = vsel %vm259, %v252, 0
    %272 = vmatpush.msra.mxu0 0.0
    %273 = vmatpush.msra.mxu0 0.0
    %274 = vmatpush.msra.mxu0 0.0
    %275 = vmatpush.msra.mxu0 0.0
    %276 = vmatpush.msra.mxu0 0.0
    %277 = vmatpush.msra.mxu0 0.0
    %278 = vmatpush.msra.mxu0 0.0
    %279 = vmatpush.msra.mxu0 0.0
    %280 = vmatpush.msra.mxu0 0.0
    %281 = vmatpush.msra.mxu0 0.0
    %282 = vmatpush.msra.mxu0 0.0
    %283 = vmatpush.msra.mxu0 0.0
    %284 = vmatpush.msra.mxu0 0.0
    %285 = vmatpush.msra.mxu0 0.0
    %286 = vmatpush.msra.mxu0 %v254
    %287 = vmatpush.msra.mxu0 %v253
    %288 = vmatmul.f32.gmra.mxu0 %v261
    %v289 = vpop.f32.mrf.mxu0
    %v290 = vadd.f32 %v257, %v289
    %291 = vmatmul.f32.gmra.mxu0 %v264
    %v292 = vpop.f32.mrf.mxu0
    %v293 = vadd.f32 %v257, %v292
    %294 = vmatmul.f32.gmra.mxu0 %v267
    %v295 = vpop.f32.mrf.mxu0
    %v296 = vadd.f32 %v257, %v295
    %297 = vmatmul.f32.gmra.mxu0 %v270
    %v298 = vpop.f32.mrf.mxu0
    %v299 = vadd.f32 %v257, %v298
    %300 = vdwg.mxu0
    %301 = vst.msk [vmem:[%s91] sm:$0xff] %vm259, %v290
    %302 = vst.msk [vmem:[%s91 + $0x8] sm:$0xff] %vm259, %v293
    %303 = vst.msk [vmem:[%s91 + $0x10] sm:$0xff] %vm259, %v296
    %304 = vst.msk [vmem:[%s91 + $0x18] sm:$0xff] %vm259, %v299
    %v305 = vld [vmem:[%s3] sm:$0xff]
    %v306 = vld [vmem:[%s3 + $0x8] sm:$0xff]
    %vm307 = vcmask 261120
    %v309 = vsel %vm307, %v305, 0
    %v312 = vsel %vm307, %v306, 0
    %314 = vmatpush.msra.mxu0 0.0
    %315 = vmatpush.msra.mxu0 0.0
    %316 = vmatpush.msra.mxu0 0.0
    %317 = vmatpush.msra.mxu0 0.0
    %318 = vmatpush.msra.mxu0 0.0
    %319 = vmatpush.msra.mxu0 0.0
    %320 = vmatpush.msra.mxu0 0.0
    %321 = vmatpush.msra.mxu0 0.0
    %322 = vmatpush.msra.mxu0 0.0
    %323 = vmatpush.msra.mxu0 0.0
    %324 = vmatpush.msra.mxu0 0.0
    %325 = vmatpush.msra.mxu0 0.0
    %326 = vmatpush.msra.mxu0 %v299
    %327 = vmatpush.msra.mxu0 %v296
    %328 = vmatpush.msra.mxu0 %v293
    %329 = vmatpush.msra.mxu0 %v290
    %330 = vmatmul.f32.gmra.mxu0 %v309
    %v331 = vpop.f32.mrf.mxu0
    %v332 = vadd.f32 0.0, %v331
    %333 = vmatmul.f32.gmra.mxu0 %v312
    %v334 = vpop.f32.mrf.mxu0
    %v335 = vadd.f32 0.0, %v334
    %336 = vdwg.mxu0
    %v337 = vld [vmem:[%s5] sm:$0xff]
    %v338 = vld [vmem:[%s5 + $0x8] sm:$0xff]
    %v339 = vld [vmem:[%s23] sm:$0xff]
    %v340 = vld [vmem:[%s23 + $0x8] sm:$0x1f]
    %v341 = vld [vmem:[%s25] sm:$0xff]
    %v342 = vld [vmem:[%s25 + $0x8] sm:$0xff]
    %v344 = vsel %vm259, %v332, 0
    %v347 = vsel %vm259, %v335, 0
    %349 = vmatpush.msra.mxu0 0.0
    %350 = vmatpush.msra.mxu0 0.0
    %351 = vmatpush.msra.mxu0 0.0
    %352 = vmatpush.msra.mxu0 0.0
    %353 = vmatpush.msra.mxu0 0.0
    %354 = vmatpush.msra.mxu0 0.0
    %355 = vmatpush.msra.mxu0 0.0
    %356 = vmatpush.msra.mxu0 0.0
    %357 = vmatpush.msra.mxu0 0.0
    %358 = vmatpush.msra.mxu0 0.0
    %359 = vmatpush.msra.mxu0 0.0
    %360 = vmatpush.msra.mxu0 0.0
    %361 = vmatpush.msra.mxu0 0.0
    %362 = vmatpush.msra.mxu0 0.0
    %363 = vmatpush.msra.mxu0 %v342
    %364 = vmatpush.msra.mxu0 %v341
    %365 = vmatmul.f32.gmra.mxu0 %v344
    %v366 = vpop.f32.mrf.mxu0
    %v367 = vadd.f32 0.0, %v366
    %368 = vmatmul.f32.gmra.mxu0 %v347
    %v369 = vpop.f32.mrf.mxu0
    %v370 = vadd.f32 0.0, %v369
    %371 = vdwg.mxu0
    %vm372 = vcmask 105472
    %v374 = vsel %vm372, %v337, 0
    %v377 = vsel %vm372, %v338, 0
    %vm379 = vcmask 1044480
    %v381 = vsel %vm379, %v340, 0
    %383 = vmatpush.msra.mxu0 0.0
    %384 = vmatpush.msra.mxu0 0.0
    %385 = vmatpush.msra.mxu0 0.0
    %386 = vmatpush.msra.mxu0 0.0
    %387 = vmatpush.msra.mxu0 0.0
    %388 = vmatpush.msra.mxu0 0.0
    %389 = vmatpush.msra.mxu0 0.0
    %390 = vmatpush.msra.mxu0 0.0
    %391 = vmatpush.msra.mxu0 0.0
    %392 = vmatpush.msra.mxu0 0.0
    %393 = vmatpush.msra.mxu0 0.0
    %394 = vmatpush.msra.mxu0 0.0
    %395 = vmatpush.msra.mxu0 0.0
    %396 = vmatpush.msra.mxu0 0.0
    %397 = vmatpush.msra.mxu0 %v381
    %398 = vmatpush.msra.mxu0 %v339
    %399 = vmatmul.f32.gmra.mxu0 %v374
    %v400 = vpop.f32.mrf.mxu0
    %v401 = vadd.f32 %v367, %v400
    %402 = vmatmul.f32.gmra.mxu0 %v377
    %v403 = vpop.f32.mrf.mxu0
    %v404 = vadd.f32 %v370, %v403
    %405 = vdwg.mxu0
    %v406 = vld [vmem:[%s27] sm:$0x1]
    %v408 = vperm.slane %v406, 0
    %v410 = vadd.f32 %v401, %v408
    %v411 = vadd.f32 %v404, %v408
    %v412 = vmax.f32 %v410, 0.0
    %v413 = vmax.f32 %v411, 0.0
    %v414 = vld [vmem:[%s29] sm:$0xff]
    %v415 = vld [vmem:[%s29 + $0x8] sm:$0xff]
    %v416 = vld [vmem:[%s31] sm:$0x1]
    %v418 = vperm.slane %v416, 0
    %v421 = vsel %vm259, %v412, 0
    %v424 = vsel %vm259, %v413, 0
    %426 = vmatpush.msra.mxu0 0.0
    %427 = vmatpush.msra.mxu0 0.0
    %428 = vmatpush.msra.mxu0 0.0
    %429 = vmatpush.msra.mxu0 0.0
    %430 = vmatpush.msra.mxu0 0.0
    %431 = vmatpush.msra.mxu0 0.0
    %432 = vmatpush.msra.mxu0 0.0
    %433 = vmatpush.msra.mxu0 0.0
    %434 = vmatpush.msra.mxu0 0.0
    %435 = vmatpush.msra.mxu0 0.0
    %436 = vmatpush.msra.mxu0 0.0
    %437 = vmatpush.msra.mxu0 0.0
    %438 = vmatpush.msra.mxu0 0.0
    %439 = vmatpush.msra.mxu0 0.0
    %440 = vmatpush.msra.mxu0 %v415
    %441 = vmatpush.msra.mxu0 %v414
    %442 = vmatmul.f32.gmra.mxu0 %v421
    %v443 = vpop.f32.mrf.mxu0
    %v444 = vadd.f32 %v418, %v443
    %445 = vmatmul.f32.gmra.mxu0 %v424
    %v446 = vpop.f32.mrf.mxu0
    %v447 = vadd.f32 %v418, %v446
    %448 = vdwg.mxu0
    %449 = vst.msk [vmem:[#allocation2] sm:$0xff] %vm259, %v444
    %450 = vst.msk [vmem:[#allocation2 + $0x8] sm:$0xff] %vm259, %v447
    %v451 = vld [vmem:[%s7] sm:$0xff]
    %v452 = vld [vmem:[%s7 + $0x8] sm:$0xff]
    %v453 = vld [vmem:[%s33] sm:$0x7]
    %v454 = vld [vmem:[%s35] sm:$0x1]
    %v456 = vperm.slane %v454, 0
    %vm458 = vcmask 23552
    %v460 = vsel %vm458, %v451, 0
    %v463 = vsel %vm458, %v452, 0
    %vm465 = vcmask 1042432
    %v467 = vsel %vm465, %v453, 0
    %469 = vmatpush.msra.mxu0 0.0
    %470 = vmatpush.msra.mxu0 0.0
    %471 = vmatpush.msra.mxu0 0.0
    %472 = vmatpush.msra.mxu0 0.0
    %473 = vmatpush.msra.mxu0 0.0
    %474 = vmatpush.msra.mxu0 0.0
    %475 = vmatpush.msra.mxu0 0.0
    %476 = vmatpush.msra.mxu0 0.0
    %477 = vmatpush.msra.mxu0 0.0
    %478 = vmatpush.msra.mxu0 0.0
    %479 = vmatpush.msra.mxu0 0.0
    %480 = vmatpush.msra.mxu0 0.0
    %481 = vmatpush.msra.mxu0 0.0
    %482 = vmatpush.msra.mxu0 0.0
    %483 = vmatpush.msra.mxu0 0.0
    %484 = vmatpush.msra.mxu0 %v467
    %485 = vmatmul.f32.gmra.mxu0 %v460
    %v486 = vpop.f32.mrf.mxu0
    %v487 = vadd.f32 %v456, %v486
    %488 = vmatmul.f32.gmra.mxu0 %v463
    %v489 = vpop.f32.mrf.mxu0
    %v490 = vadd.f32 %v456, %v489
    %491 = vdwg.mxu0
    %v492 = vmax.f32 %v487, 0.0
    %v493 = vmax.f32 %v490, 0.0
    %v494 = vld [vmem:[%s37] sm:$0xff]
    %v495 = vld [vmem:[%s39] sm:$0x1]
    %v497 = vperm.slane %v495, 0
    %vm499 = vcmask 64512
    %v501 = vsel %vm499, %v492, 0
    %v504 = vsel %vm499, %v493, 0
    %506 = vmatpush.msra.mxu0 0.0
    %507 = vmatpush.msra.mxu0 0.0
    %508 = vmatpush.msra.mxu0 0.0
    %509 = vmatpush.msra.mxu0 0.0
    %510 = vmatpush.msra.mxu0 0.0
    %511 = vmatpush.msra.mxu0 0.0
    %512 = vmatpush.msra.mxu0 0.0
    %513 = vmatpush.msra.mxu0 0.0
    %514 = vmatpush.msra.mxu0 0.0
    %515 = vmatpush.msra.mxu0 0.0
    %516 = vmatpush.msra.mxu0 0.0
    %517 = vmatpush.msra.mxu0 0.0
    %518 = vmatpush.msra.mxu0 0.0
    %519 = vmatpush.msra.mxu0 0.0
    %520 = vmatpush.msra.mxu0 0.0
    %521 = vmatpush.msra.mxu0 %v494
    %522 = vmatmul.f32.gmra.mxu0 %v501
    %v523 = vpop.f32.mrf.mxu0
    %v524 = vadd.f32 %v497, %v523
    %525 = vmatmul.f32.gmra.mxu0 %v504
    %v526 = vpop.f32.mrf.mxu0
    %v527 = vadd.f32 %v497, %v526
    %528 = vdwg.mxu0
    %529 = vst.msk [vmem:[%s95] sm:$0xff] %vm499, %v524
    %530 = vst.msk [vmem:[%s95 + $0x8] sm:$0xff] %vm499, %v527
    %v531 = vld [vmem:[%s9] sm:$0x3]
    %v532 = vld [vmem:[%s11] sm:$0xff]
    %v533 = vld [vmem:[%s11 + $0x8] sm:$0xff]
    %v534 = vld [vmem:[%s65] sm:$0xff]
    %v535 = vld [vmem:[%s65 + $0x8] sm:$0xff]
    %v536 = vld [vmem:[%s65 + $0x10] sm:$0xff]
    %v537 = vld [vmem:[%s65 + $0x18] sm:$0xff]
    %v538 = vld [vmem:[%s65 + $0x20] sm:$0xff]
    %v539 = vld [vmem:[%s65 + $0x28] sm:$0xff]
    %v540 = vld [vmem:[%s65 + $0x30] sm:$0xff]
    %v541 = vld [vmem:[%s65 + $0x38] sm:$0xff]
    %v542 = vld [vmem:[%s65 + $0x40] sm:$0xff]
    %v543 = vld [vmem:[%s65 + $0x48] sm:$0xff]
    %v544 = vld [vmem:[%s65 + $0x50] sm:$0xff]
    %v545 = vld [vmem:[%s65 + $0x58] sm:$0xff]
    %v546 = vld [vmem:[%s65 + $0x60] sm:$0xff]
    %v547 = vld [vmem:[%s65 + $0x68] sm:$0xff]
    %v548 = vld [vmem:[%s65 + $0x70] sm:$0xff]
    %v549 = vld [vmem:[%s65 + $0x78] sm:$0xff]
    %v550 = vld [vmem:[%s65 + $0x80] sm:$0xff]
    %v551 = vld [vmem:[%s65 + $0x88] sm:$0xff]
    %v552 = vld [vmem:[%s65 + $0x90] sm:$0xff]
    %v553 = vld [vmem:[%s65 + $0x98] sm:$0xff]
    %v554 = vld [vmem:[%s65 + $0xa0] sm:$0xff]
    %v555 = vld [vmem:[%s65 + $0xa8] sm:$0xff]
    %v556 = vld [vmem:[%s65 + $0xb0] sm:$0xff]
    %v557 = vld [vmem:[%s65 + $0xb8] sm:$0xff]
    %v558 = vld [vmem:[%s65 + $0xc0] sm:$0xff]
    %v559 = vld [vmem:[%s65 + $0xc8] sm:$0xff]
    %v560 = vld [vmem:[%s65 + $0xd0] sm:$0xff]
    %v561 = vld [vmem:[%s65 + $0xd8] sm:$0xff]
    %v562 = vld [vmem:[%s65 + $0xe0] sm:$0xff]
    %v563 = vld [vmem:[%s65 + $0xe8] sm:$0xff]
    %v564 = vld [vmem:[%s65 + $0xf0] sm:$0xff]
    %v565 = vld [vmem:[%s65 + $0xf8] sm:$0xff]
    %v566 = vld [vmem:[%s65 + $0x100] sm:$0xff]
    %v567 = vld [vmem:[%s65 + $0x108] sm:$0xff]
    %v568 = vld [vmem:[%s65 + $0x110] sm:$0xff]
    %v569 = vld [vmem:[%s65 + $0x118] sm:$0xff]
    %v570 = vld [vmem:[%s65 + $0x120] sm:$0xff]
    %v571 = vld [vmem:[%s65 + $0x128] sm:$0xff]
    %v572 = vld [vmem:[%s65 + $0x130] sm:$0xff]
    %v573 = vld [vmem:[%s65 + $0x138] sm:$0xff]
    %v574 = vld [vmem:[%s65 + $0x140] sm:$0xff]
    %v575 = vld [vmem:[%s65 + $0x148] sm:$0xff]
    %v576 = vld [vmem:[%s65 + $0x150] sm:$0xff]
    %v577 = vld [vmem:[%s65 + $0x158] sm:$0xff]
    %v578 = vld [vmem:[%s65 + $0x160] sm:$0xff]
    %v579 = vld [vmem:[%s65 + $0x168] sm:$0xff]
    %v580 = vld [vmem:[%s65 + $0x170] sm:$0xff]
    %v581 = vld [vmem:[%s65 + $0x178] sm:$0xff]
    %v582 = vld [vmem:[%s65 + $0x180] sm:$0xff]
    %v583 = vld [vmem:[%s65 + $0x188] sm:$0xff]
    %v584 = vld [vmem:[%s65 + $0x190] sm:$0xff]
    %v585 = vld [vmem:[%s65 + $0x198] sm:$0xff]
    %v586 = vld [vmem:[%s65 + $0x1a0] sm:$0xff]
    %v587 = vld [vmem:[%s65 + $0x1a8] sm:$0xff]
    %v588 = vld [vmem:[%s65 + $0x1b0] sm:$0xff]
    %v589 = vld [vmem:[%s65 + $0x1b8] sm:$0xff]
    %v590 = vld [vmem:[%s65 + $0x1c0] sm:$0xff]
    %v591 = vld [vmem:[%s65 + $0x1c8] sm:$0xff]
    %v592 = vld [vmem:[%s65 + $0x1d0] sm:$0xff]
    %v593 = vld [vmem:[%s65 + $0x1d8] sm:$0xff]
    %v594 = vld [vmem:[%s65 + $0x1e0] sm:$0xff]
    %v595 = vld [vmem:[%s65 + $0x1e8] sm:$0xff]
    %v596 = vld [vmem:[%s65 + $0x1f0] sm:$0xff]
    %v597 = vld [vmem:[%s65 + $0x1f8] sm:$0xff]
    %v598 = vld [vmem:[%s65 + $0x200] sm:$0xff]
    %v599 = vld [vmem:[%s65 + $0x208] sm:$0xff]
    %v600 = vld [vmem:[%s65 + $0x210] sm:$0xff]
    %v601 = vld [vmem:[%s65 + $0x218] sm:$0xff]
    %v602 = vld [vmem:[%s65 + $0x220] sm:$0xff]
    %v603 = vld [vmem:[%s65 + $0x228] sm:$0xff]
    %v604 = vld [vmem:[%s65 + $0x230] sm:$0xff]
    %v605 = vld [vmem:[%s65 + $0x238] sm:$0xff]
    %v606 = vld [vmem:[%s65 + $0x240] sm:$0xff]
    %v607 = vld [vmem:[%s65 + $0x248] sm:$0xff]
    %v608 = vld [vmem:[%s65 + $0x250] sm:$0xff]
    %v609 = vld [vmem:[%s65 + $0x258] sm:$0xff]
    %v610 = vld [vmem:[%s65 + $0x260] sm:$0xff]
    %v611 = vld [vmem:[%s65 + $0x268] sm:$0xff]
    %v612 = vld [vmem:[%s65 + $0x270] sm:$0xff]
    %v613 = vld [vmem:[%s65 + $0x278] sm:$0xff]
    %v614 = vld [vmem:[%s65 + $0x280] sm:$0xff]
    %v615 = vld [vmem:[%s65 + $0x288] sm:$0xff]
    %v616 = vld [vmem:[%s65 + $0x290] sm:$0xff]
    %v617 = vld [vmem:[%s65 + $0x298] sm:$0xff]
    %v618 = vld [vmem:[%s65 + $0x2a0] sm:$0xff]
    %v619 = vld [vmem:[%s65 + $0x2a8] sm:$0xff]
    %v620 = vld [vmem:[%s65 + $0x2b0] sm:$0xff]
    %v621 = vld [vmem:[%s65 + $0x2b8] sm:$0xff]
    %v622 = vld [vmem:[%s65 + $0x2c0] sm:$0xff]
    %v623 = vld [vmem:[%s65 + $0x2c8] sm:$0xff]
    %v624 = vld [vmem:[%s65 + $0x2d0] sm:$0xff]
    %v625 = vld [vmem:[%s65 + $0x2d8] sm:$0xff]
    %v626 = vld [vmem:[%s65 + $0x2e0] sm:$0xff]
    %v627 = vld [vmem:[%s65 + $0x2e8] sm:$0xff]
    %v628 = vld [vmem:[%s65 + $0x2f0] sm:$0xff]
    %v629 = vld [vmem:[%s65 + $0x2f8] sm:$0xff]
    %v630 = vld [vmem:[%s65 + $0x300] sm:$0xff]
    %v631 = vld [vmem:[%s65 + $0x308] sm:$0xff]
    %v632 = vld [vmem:[%s65 + $0x310] sm:$0xff]
    %v633 = vld [vmem:[%s65 + $0x318] sm:$0xff]
    %v634 = vld [vmem:[%s65 + $0x320] sm:$0xff]
    %v635 = vld [vmem:[%s65 + $0x328] sm:$0xff]
    %v636 = vld [vmem:[%s65 + $0x330] sm:$0xff]
    %v637 = vld [vmem:[%s65 + $0x338] sm:$0xff]
    %v638 = vld [vmem:[%s65 + $0x340] sm:$0xff]
    %v639 = vld [vmem:[%s65 + $0x348] sm:$0xff]
    %v640 = vld [vmem:[%s65 + $0x350] sm:$0xff]
    %v641 = vld [vmem:[%s65 + $0x358] sm:$0xff]
    %v642 = vld [vmem:[%s65 + $0x360] sm:$0xff]
    %v643 = vld [vmem:[%s65 + $0x368] sm:$0xff]
    %v644 = vld [vmem:[%s65 + $0x370] sm:$0xff]
    %v645 = vld [vmem:[%s65 + $0x378] sm:$0xff]
    %v646 = vld [vmem:[%s65 + $0x380] sm:$0xff]
    %v647 = vld [vmem:[%s65 + $0x388] sm:$0xff]
    %v648 = vld [vmem:[%s65 + $0x390] sm:$0xff]
    %v649 = vld [vmem:[%s65 + $0x398] sm:$0xff]
    %v650 = vld [vmem:[%s65 + $0x3a0] sm:$0xff]
    %v651 = vld [vmem:[%s65 + $0x3a8] sm:$0xff]
    %v652 = vld [vmem:[%s65 + $0x3b0] sm:$0xff]
    %v653 = vld [vmem:[%s65 + $0x3b8] sm:$0xff]
    %v654 = vld [vmem:[%s65 + $0x3c0] sm:$0xff]
    %v655 = vld [vmem:[%s65 + $0x3c8] sm:$0xff]
    %v656 = vld [vmem:[%s65 + $0x3d0] sm:$0xff]
    %v657 = vld [vmem:[%s65 + $0x3d8] sm:$0xff]
    %v658 = vld [vmem:[%s65 + $0x3e0] sm:$0xff]
    %v659 = vld [vmem:[%s65 + $0x3e8] sm:$0xff]
    %v660 = vld [vmem:[%s65 + $0x3f0] sm:$0xff]
    %v661 = vld [vmem:[%s65 + $0x3f8] sm:$0xff]
    %v662 = vld [vmem:[%s65 + $0x400] sm:$0xff]
    %v663 = vld [vmem:[%s65 + $0x408] sm:$0xff]
    %v664 = vld [vmem:[%s65 + $0x410] sm:$0xff]
    %v665 = vld [vmem:[%s65 + $0x418] sm:$0xff]
    %v666 = vld [vmem:[%s65 + $0x420] sm:$0xff]
    %v667 = vld [vmem:[%s65 + $0x428] sm:$0xff]
    %v668 = vld [vmem:[%s65 + $0x430] sm:$0xff]
    %v669 = vld [vmem:[%s65 + $0x438] sm:$0xff]
    %v670 = vld [vmem:[%s65 + $0x440] sm:$0xff]
    %v671 = vld [vmem:[%s65 + $0x448] sm:$0xff]
    %v672 = vld [vmem:[%s65 + $0x450] sm:$0xff]
    %v673 = vld [vmem:[%s65 + $0x458] sm:$0xff]
    %v674 = vld [vmem:[%s65 + $0x460] sm:$0xff]
    %v675 = vld [vmem:[%s65 + $0x468] sm:$0xff]
    %v676 = vld [vmem:[%s65 + $0x470] sm:$0xff]
    %v677 = vld [vmem:[%s65 + $0x478] sm:$0xff]
    %v678 = vld [vmem:[%s65 + $0x480] sm:$0xff]
    %v679 = vld [vmem:[%s65 + $0x488] sm:$0xff]
    %v680 = vld [vmem:[%s65 + $0x490] sm:$0xff]
    %v681 = vld [vmem:[%s65 + $0x498] sm:$0xff]
    %v682 = vld [vmem:[%s65 + $0x4a0] sm:$0xff]
    %v683 = vld [vmem:[%s65 + $0x4a8] sm:$0xff]
    %v684 = vld [vmem:[%s65 + $0x4b0] sm:$0xff]
    %v685 = vld [vmem:[%s65 + $0x4b8] sm:$0xff]
    %v686 = vld [vmem:[%s65 + $0x4c0] sm:$0xff]
    %v687 = vld [vmem:[%s65 + $0x4c8] sm:$0xff]
    %v688 = vld [vmem:[%s65 + $0x4d0] sm:$0xff]
    %v689 = vld [vmem:[%s65 + $0x4d8] sm:$0xff]
    %v690 = vld [vmem:[%s65 + $0x4e0] sm:$0xff]
    %v691 = vld [vmem:[%s65 + $0x4e8] sm:$0xff]
    %v692 = vld [vmem:[%s65 + $0x4f0] sm:$0xff]
    %v693 = vld [vmem:[%s65 + $0x4f8] sm:$0xff]
    %v694 = vld [vmem:[%s65 + $0x500] sm:$0xff]
    %v695 = vld [vmem:[%s65 + $0x508] sm:$0xff]
    %v696 = vld [vmem:[%s65 + $0x510] sm:$0xff]
    %v697 = vld [vmem:[%s65 + $0x518] sm:$0xff]
    %v698 = vld [vmem:[%s65 + $0x520] sm:$0xff]
    %v699 = vld [vmem:[%s65 + $0x528] sm:$0xff]
    %v700 = vld [vmem:[%s65 + $0x530] sm:$0xff]
    %v701 = vld [vmem:[%s65 + $0x538] sm:$0xff]
    %v702 = vld [vmem:[%s65 + $0x540] sm:$0xff]
    %v703 = vld [vmem:[%s65 + $0x548] sm:$0xff]
    %v704 = vld [vmem:[%s65 + $0x550] sm:$0xff]
    %v705 = vld [vmem:[%s65 + $0x558] sm:$0xff]
    %v706 = vld [vmem:[%s65 + $0x560] sm:$0xff]
    %v707 = vld [vmem:[%s65 + $0x568] sm:$0xff]
    %v708 = vld [vmem:[%s65 + $0x570] sm:$0xff]
    %v709 = vld [vmem:[%s65 + $0x578] sm:$0xff]
    %v710 = vld [vmem:[%s65 + $0x580] sm:$0xff]
    %v711 = vld [vmem:[%s65 + $0x588] sm:$0xff]
    %v712 = vld [vmem:[%s65 + $0x590] sm:$0xff]
    %v713 = vld [vmem:[%s65 + $0x598] sm:$0xff]
    %v714 = vld [vmem:[%s65 + $0x5a0] sm:$0xff]
    %v715 = vld [vmem:[%s65 + $0x5a8] sm:$0xff]
    %v716 = vld [vmem:[%s65 + $0x5b0] sm:$0xff]
    %v717 = vld [vmem:[%s65 + $0x5b8] sm:$0xff]
    %v718 = vld [vmem:[%s65 + $0x5c0] sm:$0xff]
    %v719 = vld [vmem:[%s65 + $0x5c8] sm:$0xff]
    %v720 = vld [vmem:[%s65 + $0x5d0] sm:$0xff]
    %v721 = vld [vmem:[%s65 + $0x5d8] sm:$0xff]
    %v722 = vld [vmem:[%s65 + $0x5e0] sm:$0xff]
    %v723 = vld [vmem:[%s65 + $0x5e8] sm:$0xff]
    %v724 = vld [vmem:[%s65 + $0x5f0] sm:$0xff]
    %v725 = vld [vmem:[%s65 + $0x5f8] sm:$0xff]
    %v726 = vld [vmem:[%s65 + $0x600] sm:$0xff]
    %v727 = vld [vmem:[%s65 + $0x608] sm:$0xff]
    %v728 = vld [vmem:[%s65 + $0x610] sm:$0xff]
    %v729 = vld [vmem:[%s65 + $0x618] sm:$0xff]
    %v730 = vld [vmem:[%s65 + $0x620] sm:$0xff]
    %v731 = vld [vmem:[%s65 + $0x628] sm:$0xff]
    %v732 = vld [vmem:[%s65 + $0x630] sm:$0xff]
    %v733 = vld [vmem:[%s65 + $0x638] sm:$0xff]
    %v734 = vld [vmem:[%s65 + $0x640] sm:$0xff]
    %v735 = vld [vmem:[%s65 + $0x648] sm:$0xff]
    %v736 = vld [vmem:[%s65 + $0x650] sm:$0xff]
    %v737 = vld [vmem:[%s65 + $0x658] sm:$0xff]
    %v738 = vld [vmem:[%s65 + $0x660] sm:$0xff]
    %v739 = vld [vmem:[%s65 + $0x668] sm:$0xff]
    %v740 = vld [vmem:[%s65 + $0x670] sm:$0xff]
    %v741 = vld [vmem:[%s65 + $0x678] sm:$0xff]
    %v742 = vld [vmem:[%s65 + $0x680] sm:$0xff]
    %v743 = vld [vmem:[%s65 + $0x688] sm:$0xff]
    %v744 = vld [vmem:[%s65 + $0x690] sm:$0xff]
    %v745 = vld [vmem:[%s65 + $0x698] sm:$0xff]
    %v746 = vld [vmem:[%s65 + $0x6a0] sm:$0xff]
    %v747 = vld [vmem:[%s65 + $0x6a8] sm:$0xff]
    %v748 = vld [vmem:[%s65 + $0x6b0] sm:$0xff]
    %v749 = vld [vmem:[%s65 + $0x6b8] sm:$0xff]
    %v750 = vld [vmem:[%s65 + $0x6c0] sm:$0xff]
    %v751 = vld [vmem:[%s65 + $0x6c8] sm:$0xff]
    %v752 = vld [vmem:[%s65 + $0x6d0] sm:$0xff]
    %v753 = vld [vmem:[%s65 + $0x6d8] sm:$0xff]
    %v754 = vld [vmem:[%s65 + $0x6e0] sm:$0xff]
    %v755 = vld [vmem:[%s65 + $0x6e8] sm:$0xff]
    %v756 = vld [vmem:[%s65 + $0x6f0] sm:$0xff]
    %v757 = vld [vmem:[%s65 + $0x6f8] sm:$0xff]
    %v758 = vld [vmem:[%s65 + $0x700] sm:$0xff]
    %v759 = vld [vmem:[%s65 + $0x708] sm:$0xff]
    %v760 = vld [vmem:[%s65 + $0x710] sm:$0xff]
    %v761 = vld [vmem:[%s65 + $0x718] sm:$0xff]
    %v762 = vld [vmem:[%s65 + $0x720] sm:$0xff]
    %v763 = vld [vmem:[%s65 + $0x728] sm:$0xff]
    %v764 = vld [vmem:[%s65 + $0x730] sm:$0xff]
    %v765 = vld [vmem:[%s65 + $0x738] sm:$0xff]
    %v766 = vld [vmem:[%s65 + $0x740] sm:$0xff]
    %v767 = vld [vmem:[%s65 + $0x748] sm:$0xff]
    %v768 = vld [vmem:[%s65 + $0x750] sm:$0xff]
    %v769 = vld [vmem:[%s65 + $0x758] sm:$0xff]
    %v770 = vld [vmem:[%s65 + $0x760] sm:$0xff]
    %v771 = vld [vmem:[%s65 + $0x768] sm:$0xff]
    %v772 = vld [vmem:[%s65 + $0x770] sm:$0xff]
    %v773 = vld [vmem:[%s65 + $0x778] sm:$0xff]
    %v774 = vld [vmem:[%s65 + $0x780] sm:$0xff]
    %v775 = vld [vmem:[%s65 + $0x788] sm:$0xff]
    %v776 = vld [vmem:[%s65 + $0x790] sm:$0xff]
    %v777 = vld [vmem:[%s65 + $0x798] sm:$0xff]
    %v778 = vld [vmem:[%s65 + $0x7a0] sm:$0xff]
    %v779 = vld [vmem:[%s65 + $0x7a8] sm:$0xff]
    %v780 = vld [vmem:[%s65 + $0x7b0] sm:$0xff]
    %v781 = vld [vmem:[%s65 + $0x7b8] sm:$0xff]
    %v782 = vld [vmem:[%s65 + $0x7c0] sm:$0xff]
    %v783 = vld [vmem:[%s65 + $0x7c8] sm:$0xff]
    %v784 = vld [vmem:[%s65 + $0x7d0] sm:$0xff]
    %v785 = vld [vmem:[%s65 + $0x7d8] sm:$0xff]
    %v786 = vld [vmem:[%s65 + $0x7e0] sm:$0xff]
    %v787 = vld [vmem:[%s65 + $0x7e8] sm:$0xff]
    %v788 = vld [vmem:[%s65 + $0x7f0] sm:$0xff]
    %v789 = vld [vmem:[%s65 + $0x7f8] sm:$0xff]
    %v790 = vld [vmem:[%s67] sm:$0xff]
    %v791 = vld [vmem:[%s67 + $0x8] sm:$0xff]
    %v792 = vld [vmem:[%s67 + $0x10] sm:$0xff]
    %v793 = vld [vmem:[%s67 + $0x18] sm:$0xff]
    %v794 = vld [vmem:[%s67 + $0x20] sm:$0xff]
    %v795 = vld [vmem:[%s67 + $0x28] sm:$0xff]
    %v796 = vld [vmem:[%s67 + $0x30] sm:$0xff]
    %v797 = vld [vmem:[%s67 + $0x38] sm:$0xff]
    %v798 = vld [vmem:[%s67 + $0x40] sm:$0xff]
    %v799 = vld [vmem:[%s67 + $0x48] sm:$0xff]
    %v800 = vld [vmem:[%s67 + $0x50] sm:$0xff]
    %v801 = vld [vmem:[%s67 + $0x58] sm:$0xff]
    %v802 = vld [vmem:[%s67 + $0x60] sm:$0xff]
    %v803 = vld [vmem:[%s67 + $0x68] sm:$0xff]
    %v804 = vld [vmem:[%s67 + $0x70] sm:$0xff]
    %v805 = vld [vmem:[%s67 + $0x78] sm:$0xff]
    %v806 = vld [vmem:[%s67 + $0x80] sm:$0xff]
    %v807 = vld [vmem:[%s67 + $0x88] sm:$0xff]
    %v808 = vld [vmem:[%s67 + $0x90] sm:$0xff]
    %v809 = vld [vmem:[%s67 + $0x98] sm:$0xff]
    %v810 = vld [vmem:[%s67 + $0xa0] sm:$0xff]
    %v811 = vld [vmem:[%s67 + $0xa8] sm:$0xff]
    %v812 = vld [vmem:[%s67 + $0xb0] sm:$0xff]
    %v813 = vld [vmem:[%s67 + $0xb8] sm:$0xff]
    %v814 = vld [vmem:[%s67 + $0xc0] sm:$0xff]
    %v815 = vld [vmem:[%s67 + $0xc8] sm:$0xff]
    %v816 = vld [vmem:[%s67 + $0xd0] sm:$0xff]
    %v817 = vld [vmem:[%s67 + $0xd8] sm:$0xff]
    %v818 = vld [vmem:[%s67 + $0xe0] sm:$0xff]
    %v819 = vld [vmem:[%s67 + $0xe8] sm:$0xff]
    %v820 = vld [vmem:[%s67 + $0xf0] sm:$0xff]
    %v821 = vld [vmem:[%s67 + $0xf8] sm:$0xff]
    %v822 = vld [vmem:[%s67 + $0x100] sm:$0xff]
    %v823 = vld [vmem:[%s67 + $0x108] sm:$0xff]
    %v824 = vld [vmem:[%s67 + $0x110] sm:$0xff]
    %v825 = vld [vmem:[%s67 + $0x118] sm:$0xff]
    %v826 = vld [vmem:[%s67 + $0x120] sm:$0xff]
    %v827 = vld [vmem:[%s67 + $0x128] sm:$0xff]
    %v828 = vld [vmem:[%s67 + $0x130] sm:$0xff]
    %v829 = vld [vmem:[%s67 + $0x138] sm:$0xff]
    %v830 = vld [vmem:[%s67 + $0x140] sm:$0xff]
    %v831 = vld [vmem:[%s67 + $0x148] sm:$0xff]
    %v832 = vld [vmem:[%s67 + $0x150] sm:$0xff]
    %v833 = vld [vmem:[%s67 + $0x158] sm:$0xff]
    %v834 = vld [vmem:[%s67 + $0x160] sm:$0xff]
    %v835 = vld [vmem:[%s67 + $0x168] sm:$0xff]
    %v836 = vld [vmem:[%s67 + $0x170] sm:$0xff]
    %v837 = vld [vmem:[%s67 + $0x178] sm:$0xff]
    %v838 = vld [vmem:[%s67 + $0x180] sm:$0xff]
    %v839 = vld [vmem:[%s67 + $0x188] sm:$0xff]
    %v840 = vld [vmem:[%s67 + $0x190] sm:$0xff]
    %v841 = vld [vmem:[%s67 + $0x198] sm:$0xff]
    %v842 = vld [vmem:[%s67 + $0x1a0] sm:$0xff]
    %v843 = vld [vmem:[%s67 + $0x1a8] sm:$0xff]
    %v844 = vld [vmem:[%s67 + $0x1b0] sm:$0xff]
    %v845 = vld [vmem:[%s67 + $0x1b8] sm:$0xff]
    %v846 = vld [vmem:[%s67 + $0x1c0] sm:$0xff]
    %v847 = vld [vmem:[%s67 + $0x1c8] sm:$0xff]
    %v848 = vld [vmem:[%s67 + $0x1d0] sm:$0xff]
    %v849 = vld [vmem:[%s67 + $0x1d8] sm:$0xff]
    %v850 = vld [vmem:[%s67 + $0x1e0] sm:$0xff]
    %v851 = vld [vmem:[%s67 + $0x1e8] sm:$0xff]
    %v852 = vld [vmem:[%s67 + $0x1f0] sm:$0xff]
    %v853 = vld [vmem:[%s67 + $0x1f8] sm:$0xff]
    %v854 = vld [vmem:[%s67 + $0x200] sm:$0xff]
    %v855 = vld [vmem:[%s67 + $0x208] sm:$0xff]
    %v856 = vld [vmem:[%s67 + $0x210] sm:$0xff]
    %v857 = vld [vmem:[%s67 + $0x218] sm:$0xff]
    %v858 = vld [vmem:[%s67 + $0x220] sm:$0xff]
    %v859 = vld [vmem:[%s67 + $0x228] sm:$0xff]
    %v860 = vld [vmem:[%s67 + $0x230] sm:$0xff]
    %v861 = vld [vmem:[%s67 + $0x238] sm:$0xff]
    %v862 = vld [vmem:[%s67 + $0x240] sm:$0xff]
    %v863 = vld [vmem:[%s67 + $0x248] sm:$0xff]
    %v864 = vld [vmem:[%s67 + $0x250] sm:$0xff]
    %v865 = vld [vmem:[%s67 + $0x258] sm:$0xff]
    %v866 = vld [vmem:[%s67 + $0x260] sm:$0xff]
    %v867 = vld [vmem:[%s67 + $0x268] sm:$0xff]
    %v868 = vld [vmem:[%s67 + $0x270] sm:$0xff]
    %v869 = vld [vmem:[%s67 + $0x278] sm:$0xff]
    %v870 = vld [vmem:[%s67 + $0x280] sm:$0xff]
    %v871 = vld [vmem:[%s67 + $0x288] sm:$0xff]
    %v872 = vld [vmem:[%s67 + $0x290] sm:$0xff]
    %v873 = vld [vmem:[%s67 + $0x298] sm:$0xff]
    %v874 = vld [vmem:[%s67 + $0x2a0] sm:$0xff]
    %v875 = vld [vmem:[%s67 + $0x2a8] sm:$0xff]
    %v876 = vld [vmem:[%s67 + $0x2b0] sm:$0xff]
    %v877 = vld [vmem:[%s67 + $0x2b8] sm:$0xff]
    %v878 = vld [vmem:[%s67 + $0x2c0] sm:$0xff]
    %v879 = vld [vmem:[%s67 + $0x2c8] sm:$0xff]
    %v880 = vld [vmem:[%s67 + $0x2d0] sm:$0xff]
    %v881 = vld [vmem:[%s67 + $0x2d8] sm:$0xff]
    %v882 = vld [vmem:[%s67 + $0x2e0] sm:$0xff]
    %v883 = vld [vmem:[%s67 + $0x2e8] sm:$0xff]
    %v884 = vld [vmem:[%s67 + $0x2f0] sm:$0xff]
    %v885 = vld [vmem:[%s67 + $0x2f8] sm:$0xff]
    %v886 = vld [vmem:[%s67 + $0x300] sm:$0xff]
    %v887 = vld [vmem:[%s67 + $0x308] sm:$0xff]
    %v888 = vld [vmem:[%s67 + $0x310] sm:$0xff]
    %v889 = vld [vmem:[%s67 + $0x318] sm:$0xff]
    %v890 = vld [vmem:[%s67 + $0x320] sm:$0xff]
    %v891 = vld [vmem:[%s67 + $0x328] sm:$0xff]
    %v892 = vld [vmem:[%s67 + $0x330] sm:$0xff]
    %v893 = vld [vmem:[%s67 + $0x338] sm:$0xff]
    %v894 = vld [vmem:[%s67 + $0x340] sm:$0xff]
    %v895 = vld [vmem:[%s67 + $0x348] sm:$0xff]
    %v896 = vld [vmem:[%s67 + $0x350] sm:$0xff]
    %v897 = vld [vmem:[%s67 + $0x358] sm:$0xff]
    %v898 = vld [vmem:[%s67 + $0x360] sm:$0xff]
    %v899 = vld [vmem:[%s67 + $0x368] sm:$0xff]
    %v900 = vld [vmem:[%s67 + $0x370] sm:$0xff]
    %v901 = vld [vmem:[%s67 + $0x378] sm:$0xff]
    %v902 = vld [vmem:[%s67 + $0x380] sm:$0xff]
    %v903 = vld [vmem:[%s67 + $0x388] sm:$0xff]
    %v904 = vld [vmem:[%s67 + $0x390] sm:$0xff]
    %v905 = vld [vmem:[%s67 + $0x398] sm:$0xff]
    %v906 = vld [vmem:[%s67 + $0x3a0] sm:$0xff]
    %v907 = vld [vmem:[%s67 + $0x3a8] sm:$0xff]
    %v908 = vld [vmem:[%s67 + $0x3b0] sm:$0xff]
    %v909 = vld [vmem:[%s67 + $0x3b8] sm:$0xff]
    %v910 = vld [vmem:[%s67 + $0x3c0] sm:$0xff]
    %v911 = vld [vmem:[%s67 + $0x3c8] sm:$0xff]
    %v912 = vld [vmem:[%s67 + $0x3d0] sm:$0xff]
    %v913 = vld [vmem:[%s67 + $0x3d8] sm:$0xff]
    %v914 = vld [vmem:[%s67 + $0x3e0] sm:$0xff]
    %v915 = vld [vmem:[%s67 + $0x3e8] sm:$0xff]
    %v916 = vld [vmem:[%s67 + $0x3f0] sm:$0xff]
    %v917 = vld [vmem:[%s67 + $0x3f8] sm:$0xff]
    %v918 = vld [vmem:[%s41] sm:$0xff]
    %v919 = vld [vmem:[%s41 + $0x8] sm:$0xff]
    %v920 = vld [vmem:[%s41 + $0x10] sm:$0xff]
    %v921 = vld [vmem:[%s41 + $0x18] sm:$0xff]
    %v922 = vld [vmem:[%s41 + $0x20] sm:$0xff]
    %v923 = vld [vmem:[%s41 + $0x28] sm:$0xff]
    %v924 = vld [vmem:[%s41 + $0x30] sm:$0xff]
    %v925 = vld [vmem:[%s41 + $0x38] sm:$0xff]
    %v926 = vld [vmem:[%s41 + $0x40] sm:$0xff]
    %v927 = vld [vmem:[%s41 + $0x48] sm:$0xff]
    %v928 = vld [vmem:[%s41 + $0x50] sm:$0xff]
    %v929 = vld [vmem:[%s41 + $0x58] sm:$0xff]
    %v930 = vld [vmem:[%s41 + $0x60] sm:$0xff]
    %v931 = vld [vmem:[%s41 + $0x68] sm:$0xff]
    %v932 = vld [vmem:[%s41 + $0x70] sm:$0xff]
    %v933 = vld [vmem:[%s41 + $0x78] sm:$0xff]
    %v934 = vld [vmem:[%s41 + $0x80] sm:$0xff]
    %v935 = vld [vmem:[%s41 + $0x88] sm:$0xff]
    %v936 = vld [vmem:[%s41 + $0x90] sm:$0xff]
    %v937 = vld [vmem:[%s41 + $0x98] sm:$0xff]
    %v938 = vld [vmem:[%s41 + $0xa0] sm:$0xff]
    %v939 = vld [vmem:[%s41 + $0xa8] sm:$0xff]
    %v940 = vld [vmem:[%s41 + $0xb0] sm:$0xff]
    %v941 = vld [vmem:[%s41 + $0xb8] sm:$0xff]
    %v942 = vld [vmem:[%s41 + $0xc0] sm:$0xff]
    %v943 = vld [vmem:[%s41 + $0xc8] sm:$0xff]
    %v944 = vld [vmem:[%s41 + $0xd0] sm:$0xff]
    %v945 = vld [vmem:[%s41 + $0xd8] sm:$0xff]
    %v946 = vld [vmem:[%s41 + $0xe0] sm:$0xff]
    %v947 = vld [vmem:[%s41 + $0xe8] sm:$0xff]
    %v948 = vld [vmem:[%s41 + $0xf0] sm:$0xff]
    %v949 = vld [vmem:[%s41 + $0xf8] sm:$0xff]
    %v950 = vld [vmem:[%s43] sm:$0xff]
    %v951 = vld [vmem:[%s43 + $0x8] sm:$0xff]
    %v954 = vperm.slane %v950, 0
    %v955 = vperm.slane %v950, 1
    %v956 = vperm.slane %v950, 2
    %v957 = vperm.slane %v950, 3
    %v958 = vperm.slane %v950, 4
    %v959 = vperm.slane %v950, 5
    %v960 = vperm.slane %v950, 6
    %v961 = vperm.slane %v950, 7
    %v962 = vperm.slane %v951, 0
    %v963 = vperm.slane %v951, 1
    %v964 = vperm.slane %v951, 2
    %v965 = vperm.slane %v951, 3
    %v966 = vperm.slane %v951, 4
    %v967 = vperm.slane %v951, 5
    %v968 = vperm.slane %v951, 6
    %v969 = vperm.slane %v951, 7
    %v987 = vsel %vm259, %v444, 0
    %v990 = vsel %vm259, %v447, 0
    %992 = vmatpush.msra.mxu0 0.0
    %993 = vmatpush.msra.mxu0 0.0
    %994 = vmatpush.msra.mxu0 0.0
    %995 = vmatpush.msra.mxu0 0.0
    %996 = vmatpush.msra.mxu0 0.0
    %997 = vmatpush.msra.mxu0 0.0
    %998 = vmatpush.msra.mxu0 0.0
    %999 = vmatpush.msra.mxu0 0.0
    %1000 = vmatpush.msra.mxu0 0.0
    %1001 = vmatpush.msra.mxu0 0.0
    %1002 = vmatpush.msra.mxu0 0.0
    %1003 = vmatpush.msra.mxu0 0.0
    %1004 = vmatpush.msra.mxu0 0.0
    %1005 = vmatpush.msra.mxu0 0.0
    %1006 = vmatpush.msra.mxu0 %v934
    %1007 = vmatpush.msra.mxu0 %v918
    %1008 = vmatmul.f32.gmra.mxu0 %v987
    %v1009 = vpop.f32.mrf.mxu0
    %v1010 = vadd.f32 %v954, %v1009
    %1011 = vmatmul.f32.gmra.mxu0 %v990
    %v1012 = vpop.f32.mrf.mxu0
    %v1013 = vadd.f32 %v954, %v1012
    %1014 = vdwg.mxu0
    %1015 = vmatpush.msra.mxu0 0.0
    %1016 = vmatpush.msra.mxu0 0.0
    %1017 = vmatpush.msra.mxu0 0.0
    %1018 = vmatpush.msra.mxu0 0.0
    %1019 = vmatpush.msra.mxu0 0.0
    %1020 = vmatpush.msra.mxu0 0.0
    %1021 = vmatpush.msra.mxu0 0.0
    %1022 = vmatpush.msra.mxu0 0.0
    %1023 = vmatpush.msra.mxu0 0.0
    %1024 = vmatpush.msra.mxu0 0.0
    %1025 = vmatpush.msra.mxu0 0.0
    %1026 = vmatpush.msra.mxu0 0.0
    %1027 = vmatpush.msra.mxu0 0.0
    %1028 = vmatpush.msra.mxu0 0.0
    %1029 = vmatpush.msra.mxu0 %v935
    %1030 = vmatpush.msra.mxu0 %v919
    %1031 = vmatmul.f32.gmra.mxu0 %v987
    %v1032 = vpop.f32.mrf.mxu0
    %v1033 = vadd.f32 %v955, %v1032
    %1034 = vmatmul.f32.gmra.mxu0 %v990
    %v1035 = vpop.f32.mrf.mxu0
    %v1036 = vadd.f32 %v955, %v1035
    %1037 = vdwg.mxu0
    %1038 = vmatpush.msra.mxu0 0.0
    %1039 = vmatpush.msra.mxu0 0.0
    %1040 = vmatpush.msra.mxu0 0.0
    %1041 = vmatpush.msra.mxu0 0.0
    %1042 = vmatpush.msra.mxu0 0.0
    %1043 = vmatpush.msra.mxu0 0.0
    %1044 = vmatpush.msra.mxu0 0.0
    %1045 = vmatpush.msra.mxu0 0.0
    %1046 = vmatpush.msra.mxu0 0.0
    %1047 = vmatpush.msra.mxu0 0.0
    %1048 = vmatpush.msra.mxu0 0.0
    %1049 = vmatpush.msra.mxu0 0.0
    %1050 = vmatpush.msra.mxu0 0.0
    %1051 = vmatpush.msra.mxu0 0.0
    %1052 = vmatpush.msra.mxu0 %v936
    %1053 = vmatpush.msra.mxu0 %v920
    %1054 = vmatmul.f32.gmra.mxu0 %v987
    %v1055 = vpop.f32.mrf.mxu0
    %v1056 = vadd.f32 %v956, %v1055
    %1057 = vmatmul.f32.gmra.mxu0 %v990
    %v1058 = vpop.f32.mrf.mxu0
    %v1059 = vadd.f32 %v956, %v1058
    %1060 = vdwg.mxu0
    %1061 = vmatpush.msra.mxu0 0.0
    %1062 = vmatpush.msra.mxu0 0.0
    %1063 = vmatpush.msra.mxu0 0.0
    %1064 = vmatpush.msra.mxu0 0.0
    %1065 = vmatpush.msra.mxu0 0.0
    %1066 = vmatpush.msra.mxu0 0.0
    %1067 = vmatpush.msra.mxu0 0.0
    %1068 = vmatpush.msra.mxu0 0.0
    %1069 = vmatpush.msra.mxu0 0.0
    %1070 = vmatpush.msra.mxu0 0.0
    %1071 = vmatpush.msra.mxu0 0.0
    %1072 = vmatpush.msra.mxu0 0.0
    %1073 = vmatpush.msra.mxu0 0.0
    %1074 = vmatpush.msra.mxu0 0.0
    %1075 = vmatpush.msra.mxu0 %v937
    %1076 = vmatpush.msra.mxu0 %v921
    %1077 = vmatmul.f32.gmra.mxu0 %v987
    %v1078 = vpop.f32.mrf.mxu0
    %v1079 = vadd.f32 %v957, %v1078
    %1080 = vmatmul.f32.gmra.mxu0 %v990
    %v1081 = vpop.f32.mrf.mxu0
    %v1082 = vadd.f32 %v957, %v1081
    %1083 = vdwg.mxu0
    %1084 = vmatpush.msra.mxu0 0.0
    %1085 = vmatpush.msra.mxu0 0.0
    %1086 = vmatpush.msra.mxu0 0.0
    %1087 = vmatpush.msra.mxu0 0.0
    %1088 = vmatpush.msra.mxu0 0.0
    %1089 = vmatpush.msra.mxu0 0.0
    %1090 = vmatpush.msra.mxu0 0.0
    %1091 = vmatpush.msra.mxu0 0.0
    %1092 = vmatpush.msra.mxu0 0.0
    %1093 = vmatpush.msra.mxu0 0.0
    %1094 = vmatpush.msra.mxu0 0.0
    %1095 = vmatpush.msra.mxu0 0.0
    %1096 = vmatpush.msra.mxu0 0.0
    %1097 = vmatpush.msra.mxu0 0.0
    %1098 = vmatpush.msra.mxu0 %v938
    %1099 = vmatpush.msra.mxu0 %v922
    %1100 = vmatmul.f32.gmra.mxu0 %v987
    %v1101 = vpop.f32.mrf.mxu0
    %v1102 = vadd.f32 %v958, %v1101
    %1103 = vmatmul.f32.gmra.mxu0 %v990
    %v1104 = vpop.f32.mrf.mxu0
    %v1105 = vadd.f32 %v958, %v1104
    %1106 = vdwg.mxu0
    %1107 = vmatpush.msra.mxu0 0.0
    %1108 = vmatpush.msra.mxu0 0.0
    %1109 = vmatpush.msra.mxu0 0.0
    %1110 = vmatpush.msra.mxu0 0.0
    %1111 = vmatpush.msra.mxu0 0.0
    %1112 = vmatpush.msra.mxu0 0.0
    %1113 = vmatpush.msra.mxu0 0.0
    %1114 = vmatpush.msra.mxu0 0.0
    %1115 = vmatpush.msra.mxu0 0.0
    %1116 = vmatpush.msra.mxu0 0.0
    %1117 = vmatpush.msra.mxu0 0.0
    %1118 = vmatpush.msra.mxu0 0.0
    %1119 = vmatpush.msra.mxu0 0.0
    %1120 = vmatpush.msra.mxu0 0.0
    %1121 = vmatpush.msra.mxu0 %v939
    %1122 = vmatpush.msra.mxu0 %v923
    %1123 = vmatmul.f32.gmra.mxu0 %v987
    %v1124 = vpop.f32.mrf.mxu0
    %v1125 = vadd.f32 %v959, %v1124
    %1126 = vmatmul.f32.gmra.mxu0 %v990
    %v1127 = vpop.f32.mrf.mxu0
    %v1128 = vadd.f32 %v959, %v1127
    %1129 = vdwg.mxu0
    %1130 = vmatpush.msra.mxu0 0.0
    %1131 = vmatpush.msra.mxu0 0.0
    %1132 = vmatpush.msra.mxu0 0.0
    %1133 = vmatpush.msra.mxu0 0.0
    %1134 = vmatpush.msra.mxu0 0.0
    %1135 = vmatpush.msra.mxu0 0.0
    %1136 = vmatpush.msra.mxu0 0.0
    %1137 = vmatpush.msra.mxu0 0.0
    %1138 = vmatpush.msra.mxu0 0.0
    %1139 = vmatpush.msra.mxu0 0.0
    %1140 = vmatpush.msra.mxu0 0.0
    %1141 = vmatpush.msra.mxu0 0.0
    %1142 = vmatpush.msra.mxu0 0.0
    %1143 = vmatpush.msra.mxu0 0.0
    %1144 = vmatpush.msra.mxu0 %v940
    %1145 = vmatpush.msra.mxu0 %v924
    %1146 = vmatmul.f32.gmra.mxu0 %v987
    %v1147 = vpop.f32.mrf.mxu0
    %v1148 = vadd.f32 %v960, %v1147
    %1149 = vmatmul.f32.gmra.mxu0 %v990
    %v1150 = vpop.f32.mrf.mxu0
    %v1151 = vadd.f32 %v960, %v1150
    %1152 = vdwg.mxu0
    %1153 = vmatpush.msra.mxu0 0.0
    %1154 = vmatpush.msra.mxu0 0.0
    %1155 = vmatpush.msra.mxu0 0.0
    %1156 = vmatpush.msra.mxu0 0.0
    %1157 = vmatpush.msra.mxu0 0.0
    %1158 = vmatpush.msra.mxu0 0.0
    %1159 = vmatpush.msra.mxu0 0.0
    %1160 = vmatpush.msra.mxu0 0.0
    %1161 = vmatpush.msra.mxu0 0.0
    %1162 = vmatpush.msra.mxu0 0.0
    %1163 = vmatpush.msra.mxu0 0.0
    %1164 = vmatpush.msra.mxu0 0.0
    %1165 = vmatpush.msra.mxu0 0.0
    %1166 = vmatpush.msra.mxu0 0.0
    %1167 = vmatpush.msra.mxu0 %v941
    %1168 = vmatpush.msra.mxu0 %v925
    %1169 = vmatmul.f32.gmra.mxu0 %v987
    %v1170 = vpop.f32.mrf.mxu0
    %v1171 = vadd.f32 %v961, %v1170
    %1172 = vmatmul.f32.gmra.mxu0 %v990
    %v1173 = vpop.f32.mrf.mxu0
    %v1174 = vadd.f32 %v961, %v1173
    %1175 = vdwg.mxu0
    %1176 = vmatpush.msra.mxu0 0.0
    %1177 = vmatpush.msra.mxu0 0.0
    %1178 = vmatpush.msra.mxu0 0.0
    %1179 = vmatpush.msra.mxu0 0.0
    %1180 = vmatpush.msra.mxu0 0.0
    %1181 = vmatpush.msra.mxu0 0.0
    %1182 = vmatpush.msra.mxu0 0.0
    %1183 = vmatpush.msra.mxu0 0.0
    %1184 = vmatpush.msra.mxu0 0.0
    %1185 = vmatpush.msra.mxu0 0.0
    %1186 = vmatpush.msra.mxu0 0.0
    %1187 = vmatpush.msra.mxu0 0.0
    %1188 = vmatpush.msra.mxu0 0.0
    %1189 = vmatpush.msra.mxu0 0.0
    %1190 = vmatpush.msra.mxu0 %v942
    %1191 = vmatpush.msra.mxu0 %v926
    %1192 = vmatmul.f32.gmra.mxu0 %v987
    %v1193 = vpop.f32.mrf.mxu0
    %v1194 = vadd.f32 %v962, %v1193
    %1195 = vmatmul.f32.gmra.mxu0 %v990
    %v1196 = vpop.f32.mrf.mxu0
    %v1197 = vadd.f32 %v962, %v1196
    %1198 = vdwg.mxu0
    %1199 = vmatpush.msra.mxu0 0.0
    %1200 = vmatpush.msra.mxu0 0.0
    %1201 = vmatpush.msra.mxu0 0.0
    %1202 = vmatpush.msra.mxu0 0.0
    %1203 = vmatpush.msra.mxu0 0.0
    %1204 = vmatpush.msra.mxu0 0.0
    %1205 = vmatpush.msra.mxu0 0.0
    %1206 = vmatpush.msra.mxu0 0.0
    %1207 = vmatpush.msra.mxu0 0.0
    %1208 = vmatpush.msra.mxu0 0.0
    %1209 = vmatpush.msra.mxu0 0.0
    %1210 = vmatpush.msra.mxu0 0.0
    %1211 = vmatpush.msra.mxu0 0.0
    %1212 = vmatpush.msra.mxu0 0.0
    %1213 = vmatpush.msra.mxu0 %v943
    %1214 = vmatpush.msra.mxu0 %v927
    %1215 = vmatmul.f32.gmra.mxu0 %v987
    %v1216 = vpop.f32.mrf.mxu0
    %v1217 = vadd.f32 %v963, %v1216
    %1218 = vmatmul.f32.gmra.mxu0 %v990
    %v1219 = vpop.f32.mrf.mxu0
    %v1220 = vadd.f32 %v963, %v1219
    %1221 = vdwg.mxu0
    %1222 = vmatpush.msra.mxu0 0.0
    %1223 = vmatpush.msra.mxu0 0.0
    %1224 = vmatpush.msra.mxu0 0.0
    %1225 = vmatpush.msra.mxu0 0.0
    %1226 = vmatpush.msra.mxu0 0.0
    %1227 = vmatpush.msra.mxu0 0.0
    %1228 = vmatpush.msra.mxu0 0.0
    %1229 = vmatpush.msra.mxu0 0.0
    %1230 = vmatpush.msra.mxu0 0.0
    %1231 = vmatpush.msra.mxu0 0.0
    %1232 = vmatpush.msra.mxu0 0.0
    %1233 = vmatpush.msra.mxu0 0.0
    %1234 = vmatpush.msra.mxu0 0.0
    %1235 = vmatpush.msra.mxu0 0.0
    %1236 = vmatpush.msra.mxu0 %v944
    %1237 = vmatpush.msra.mxu0 %v928
    %1238 = vmatmul.f32.gmra.mxu0 %v987
    %v1239 = vpop.f32.mrf.mxu0
    %v1240 = vadd.f32 %v964, %v1239
    %1241 = vmatmul.f32.gmra.mxu0 %v990
    %v1242 = vpop.f32.mrf.mxu0
    %v1243 = vadd.f32 %v964, %v1242
    %1244 = vdwg.mxu0
    %1245 = vmatpush.msra.mxu0 0.0
    %1246 = vmatpush.msra.mxu0 0.0
    %1247 = vmatpush.msra.mxu0 0.0
    %1248 = vmatpush.msra.mxu0 0.0
    %1249 = vmatpush.msra.mxu0 0.0
    %1250 = vmatpush.msra.mxu0 0.0
    %1251 = vmatpush.msra.mxu0 0.0
    %1252 = vmatpush.msra.mxu0 0.0
    %1253 = vmatpush.msra.mxu0 0.0
    %1254 = vmatpush.msra.mxu0 0.0
    %1255 = vmatpush.msra.mxu0 0.0
    %1256 = vmatpush.msra.mxu0 0.0
    %1257 = vmatpush.msra.mxu0 0.0
    %1258 = vmatpush.msra.mxu0 0.0
    %1259 = vmatpush.msra.mxu0 %v945
    %1260 = vmatpush.msra.mxu0 %v929
    %1261 = vmatmul.f32.gmra.mxu0 %v987
    %v1262 = vpop.f32.mrf.mxu0
    %v1263 = vadd.f32 %v965, %v1262
    %1264 = vmatmul.f32.gmra.mxu0 %v990
    %v1265 = vpop.f32.mrf.mxu0
    %v1266 = vadd.f32 %v965, %v1265
    %1267 = vdwg.mxu0
    %1268 = vmatpush.msra.mxu0 0.0
    %1269 = vmatpush.msra.mxu0 0.0
    %1270 = vmatpush.msra.mxu0 0.0
    %1271 = vmatpush.msra.mxu0 0.0
    %1272 = vmatpush.msra.mxu0 0.0
    %1273 = vmatpush.msra.mxu0 0.0
    %1274 = vmatpush.msra.mxu0 0.0
    %1275 = vmatpush.msra.mxu0 0.0
    %1276 = vmatpush.msra.mxu0 0.0
    %1277 = vmatpush.msra.mxu0 0.0
    %1278 = vmatpush.msra.mxu0 0.0
    %1279 = vmatpush.msra.mxu0 0.0
    %1280 = vmatpush.msra.mxu0 0.0
    %1281 = vmatpush.msra.mxu0 0.0
    %1282 = vmatpush.msra.mxu0 %v946
    %1283 = vmatpush.msra.mxu0 %v930
    %1284 = vmatmul.f32.gmra.mxu0 %v987
    %v1285 = vpop.f32.mrf.mxu0
    %v1286 = vadd.f32 %v966, %v1285
    %1287 = vmatmul.f32.gmra.mxu0 %v990
    %v1288 = vpop.f32.mrf.mxu0
    %v1289 = vadd.f32 %v966, %v1288
    %1290 = vdwg.mxu0
    %1291 = vmatpush.msra.mxu0 0.0
    %1292 = vmatpush.msra.mxu0 0.0
    %1293 = vmatpush.msra.mxu0 0.0
    %1294 = vmatpush.msra.mxu0 0.0
    %1295 = vmatpush.msra.mxu0 0.0
    %1296 = vmatpush.msra.mxu0 0.0
    %1297 = vmatpush.msra.mxu0 0.0
    %1298 = vmatpush.msra.mxu0 0.0
    %1299 = vmatpush.msra.mxu0 0.0
    %1300 = vmatpush.msra.mxu0 0.0
    %1301 = vmatpush.msra.mxu0 0.0
    %1302 = vmatpush.msra.mxu0 0.0
    %1303 = vmatpush.msra.mxu0 0.0
    %1304 = vmatpush.msra.mxu0 0.0
    %1305 = vmatpush.msra.mxu0 %v947
    %1306 = vmatpush.msra.mxu0 %v931
    %1307 = vmatmul.f32.gmra.mxu0 %v987
    %v1308 = vpop.f32.mrf.mxu0
    %v1309 = vadd.f32 %v967, %v1308
    %1310 = vmatmul.f32.gmra.mxu0 %v990
    %v1311 = vpop.f32.mrf.mxu0
    %v1312 = vadd.f32 %v967, %v1311
    %1313 = vdwg.mxu0
    %1314 = vmatpush.msra.mxu0 0.0
    %1315 = vmatpush.msra.mxu0 0.0
    %1316 = vmatpush.msra.mxu0 0.0
    %1317 = vmatpush.msra.mxu0 0.0
    %1318 = vmatpush.msra.mxu0 0.0
    %1319 = vmatpush.msra.mxu0 0.0
    %1320 = vmatpush.msra.mxu0 0.0
    %1321 = vmatpush.msra.mxu0 0.0
    %1322 = vmatpush.msra.mxu0 0.0
    %1323 = vmatpush.msra.mxu0 0.0
    %1324 = vmatpush.msra.mxu0 0.0
    %1325 = vmatpush.msra.mxu0 0.0
    %1326 = vmatpush.msra.mxu0 0.0
    %1327 = vmatpush.msra.mxu0 0.0
    %1328 = vmatpush.msra.mxu0 %v948
    %1329 = vmatpush.msra.mxu0 %v932
    %1330 = vmatmul.f32.gmra.mxu0 %v987
    %v1331 = vpop.f32.mrf.mxu0
    %v1332 = vadd.f32 %v968, %v1331
    %1333 = vmatmul.f32.gmra.mxu0 %v990
    %v1334 = vpop.f32.mrf.mxu0
    %v1335 = vadd.f32 %v968, %v1334
    %1336 = vdwg.mxu0
    %1337 = vmatpush.msra.mxu0 0.0
    %1338 = vmatpush.msra.mxu0 0.0
    %1339 = vmatpush.msra.mxu0 0.0
    %1340 = vmatpush.msra.mxu0 0.0
    %1341 = vmatpush.msra.mxu0 0.0
    %1342 = vmatpush.msra.mxu0 0.0
    %1343 = vmatpush.msra.mxu0 0.0
    %1344 = vmatpush.msra.mxu0 0.0
    %1345 = vmatpush.msra.mxu0 0.0
    %1346 = vmatpush.msra.mxu0 0.0
    %1347 = vmatpush.msra.mxu0 0.0
    %1348 = vmatpush.msra.mxu0 0.0
    %1349 = vmatpush.msra.mxu0 0.0
    %1350 = vmatpush.msra.mxu0 0.0
    %1351 = vmatpush.msra.mxu0 %v949
    %1352 = vmatpush.msra.mxu0 %v933
    %1353 = vmatmul.f32.gmra.mxu0 %v987
    %v1354 = vpop.f32.mrf.mxu0
    %v1355 = vadd.f32 %v969, %v1354
    %1356 = vmatmul.f32.gmra.mxu0 %v990
    %v1357 = vpop.f32.mrf.mxu0
    %v1358 = vadd.f32 %v969, %v1357
    %1359 = vdwg.mxu0
    %v1360 = vld [vmem:[%s45] sm:$0x77]
    %v1361 = vld [vmem:[%s45 + $0x8] sm:$0x77]
    %v1362 = vld [vmem:[%s45 + $0x10] sm:$0x77]
    %v1363 = vld [vmem:[%s45 + $0x18] sm:$0x77]
    %v1364 = vld [vmem:[%s45 + $0x20] sm:$0x77]
    %v1365 = vld [vmem:[%s45 + $0x28] sm:$0x77]
    %v1366 = vld [vmem:[%s45 + $0x30] sm:$0x77]
    %v1367 = vld [vmem:[%s45 + $0x38] sm:$0x77]
    %v1368 = vmul.f32 %v451, %v451
    %v1369 = vmul.f32 %v452, %v452
    %1372 = vrot.lane.b32.xlu0 %v1368, 127
    %v1373 = vpop.permute.xlu0 %1372
    %1374 = vrot.lane.b32.xlu0 %v1369, 127
    %v1375 = vpop.permute.xlu0 %1374
    %v1378 = vadd.f32 %v1368, %v1373
    %v1379 = vadd.f32 %v1369, %v1375
    %1380 = vrot.lane.b32.xlu0 %v1368, 126
    %v1381 = vpop.permute.xlu0 %1380
    %1382 = vrot.lane.b32.xlu0 %v1369, 126
    %v1383 = vpop.permute.xlu0 %1382
    %v1386 = vadd.f32 %v1378, %v1381
    %v1387 = vadd.f32 %v1379, %v1383
    %v1388 = vmul.f32 %v1360, %v1360
    %v1389 = vmul.f32 %v1361, %v1361
    %v1390 = vmul.f32 %v1362, %v1362
    %v1391 = vmul.f32 %v1363, %v1363
    %v1392 = vmul.f32 %v1364, %v1364
    %v1393 = vmul.f32 %v1365, %v1365
    %v1394 = vmul.f32 %v1366, %v1366
    %v1395 = vmul.f32 %v1367, %v1367
    %v1404 = vrot.slane %v1388, 5
    %v1405 = vrot.slane %v1404, 4
    %v1406 = vrot.slane %v1389, 5
    %v1407 = vrot.slane %v1406, 4
    %v1408 = vrot.slane %v1390, 5
    %v1409 = vrot.slane %v1408, 4
    %v1410 = vrot.slane %v1391, 5
    %v1411 = vrot.slane %v1410, 4
    %v1412 = vrot.slane %v1392, 5
    %v1413 = vrot.slane %v1412, 4
    %v1414 = vrot.slane %v1393, 5
    %v1415 = vrot.slane %v1414, 4
    %v1416 = vrot.slane %v1394, 5
    %v1417 = vrot.slane %v1416, 4
    %v1418 = vrot.slane %v1395, 5
    %v1419 = vrot.slane %v1418, 4
    %v1428 = vadd.f32 %v1388, %v1405
    %v1429 = vadd.f32 %v1389, %v1407
    %v1430 = vadd.f32 %v1390, %v1409
    %v1431 = vadd.f32 %v1391, %v1411
    %v1432 = vadd.f32 %v1392, %v1413
    %v1433 = vadd.f32 %v1393, %v1415
    %v1434 = vadd.f32 %v1394, %v1417
    %v1435 = vadd.f32 %v1395, %v1419
    %v1436 = vrot.slane %v1388, 6
    %v1437 = vrot.slane %v1436, 4
    %v1438 = vrot.slane %v1389, 6
    %v1439 = vrot.slane %v1438, 4
    %v1440 = vrot.slane %v1390, 6
    %v1441 = vrot.slane %v1440, 4
    %v1442 = vrot.slane %v1391, 6
    %v1443 = vrot.slane %v1442, 4
    %v1444 = vrot.slane %v1392, 6
    %v1445 = vrot.slane %v1444, 4
    %v1446 = vrot.slane %v1393, 6
    %v1447 = vrot.slane %v1446, 4
    %v1448 = vrot.slane %v1394, 6
    %v1449 = vrot.slane %v1448, 4
    %v1450 = vrot.slane %v1395, 6
    %v1451 = vrot.slane %v1450, 4
    %v1460 = vadd.f32 %v1428, %v1437
    %v1461 = vadd.f32 %v1429, %v1439
    %v1462 = vadd.f32 %v1430, %v1441
    %v1463 = vadd.f32 %v1431, %v1443
    %v1464 = vadd.f32 %v1432, %v1445
    %v1465 = vadd.f32 %v1433, %v1447
    %v1466 = vadd.f32 %v1434, %v1449
    %v1467 = vadd.f32 %v1435, %v1451
    %1476 = vst [vmem:[#allocation1] ss:$2 sm:$0xff] %v1360
    %s1477 = scalar_lea.vmem [#allocation1], 16
    %1478 = vst [vmem:[%s1477] ss:$2 sm:$0xff] %v1361
    %s1479 = scalar_lea.vmem [#allocation1], 32
    %1480 = vst [vmem:[%s1479] ss:$2 sm:$0xff] %v1362
    %s1481 = scalar_lea.vmem [#allocation1], 48
    %1482 = vst [vmem:[%s1481] ss:$2 sm:$0xff] %v1363
    %v1483 = vld.sshfl [vmem:[#allocation1] sm:$0xff pattern:$0x75316420]
    %v1484 = vld.sshfl [vmem:[#allocation1 + $0x8] sm:$0xff pattern:$0x75316420]
    %v1485 = vld.sshfl [vmem:[#allocation1 + $0x10] sm:$0xff pattern:$0x75316420]
    %v1486 = vld.sshfl [vmem:[#allocation1 + $0x18] sm:$0xff pattern:$0x75316420]
    %v1487 = vld.sshfl [vmem:[#allocation1 + $0x20] sm:$0xff pattern:$0x75316420]
    %v1488 = vld.sshfl [vmem:[#allocation1 + $0x28] sm:$0xff pattern:$0x75316420]
    %v1489 = vld.sshfl [vmem:[#allocation1 + $0x30] sm:$0xff pattern:$0x75316420]
    %v1490 = vld.sshfl [vmem:[#allocation1 + $0x38] sm:$0xff pattern:$0x75316420]
    %1491 = vst [vmem:[#allocation1] ss:$2 sm:$0xff] %v1364
    %1492 = vst [vmem:[%s1477] ss:$2 sm:$0xff] %v1365
    %1493 = vst [vmem:[%s1479] ss:$2 sm:$0xff] %v1366
    %1494 = vst [vmem:[%s1481] ss:$2 sm:$0xff] %v1367
    %v1495 = vld.sshfl [vmem:[#allocation1] sm:$0xff pattern:$0x75316420]
    %v1496 = vld.sshfl [vmem:[#allocation1 + $0x8] sm:$0xff pattern:$0x75316420]
    %v1497 = vld.sshfl [vmem:[#allocation1 + $0x10] sm:$0xff pattern:$0x75316420]
    %v1498 = vld.sshfl [vmem:[#allocation1 + $0x18] sm:$0xff pattern:$0x75316420]
    %v1499 = vld.sshfl [vmem:[#allocation1 + $0x20] sm:$0xff pattern:$0x75316420]
    %v1500 = vld.sshfl [vmem:[#allocation1 + $0x28] sm:$0xff pattern:$0x75316420]
    %v1501 = vld.sshfl [vmem:[#allocation1 + $0x30] sm:$0xff pattern:$0x75316420]
    %v1502 = vld.sshfl [vmem:[#allocation1 + $0x38] sm:$0xff pattern:$0x75316420]
    %v1503 = vsel %vm465, %v1483, 0
    %v1505 = vsel %vm465, %v1484, 0
    %v1507 = vsel %vm465, %v1485, 0
    %v1509 = vsel %vm465, %v1486, 0
    %v1511 = vsel %vm465, %v1487, 0
    %v1513 = vsel %vm465, %v1488, 0
    %v1515 = vsel %vm465, %v1489, 0
    %v1517 = vsel %vm465, %v1490, 0
    %v1519 = vsel %vm465, %v1495, 0
    %v1521 = vsel %vm465, %v1496, 0
    %v1523 = vsel %vm465, %v1497, 0
    %v1525 = vsel %vm465, %v1498, 0
    %v1527 = vsel %vm465, %v1499, 0
    %v1529 = vsel %vm465, %v1500, 0
    %v1531 = vsel %vm465, %v1501, 0
    %v1533 = vsel %vm465, %v1502, 0
    %1535 = vmatpush.msra.mxu0 0.0
    %1536 = vmatpush.msra.mxu0 0.0
    %1537 = vmatpush.msra.mxu0 0.0
    %1538 = vmatpush.msra.mxu0 0.0
    %1539 = vmatpush.msra.mxu0 0.0
    %1540 = vmatpush.msra.mxu0 0.0
    %1541 = vmatpush.msra.mxu0 0.0
    %1542 = vmatpush.msra.mxu0 0.0
    %1543 = vmatpush.msra.mxu0 0.0
    %1544 = vmatpush.msra.mxu0 0.0
    %1545 = vmatpush.msra.mxu0 0.0
    %1546 = vmatpush.msra.mxu0 0.0
    %1547 = vmatpush.msra.mxu0 0.0
    %1548 = vmatpush.msra.mxu0 0.0
    %1549 = vmatpush.msra.mxu0 0.0
    %1550 = vmatpush.msra.mxu0 %v1503
    %1551 = vmatmul.f32.gmra.mxu0 %v460
    %v1552 = vpop.f32.mrf.mxu0
    %v1553 = vadd.f32 0.0, %v1552
    %1554 = vmatmul.f32.gmra.mxu0 %v463
    %v1555 = vpop.f32.mrf.mxu0
    %v1556 = vadd.f32 0.0, %v1555
    %1557 = vdwg.mxu0
    %1558 = vmatpush.msra.mxu0 0.0
    %1559 = vmatpush.msra.mxu0 0.0
    %1560 = vmatpush.msra.mxu0 0.0
    %1561 = vmatpush.msra.mxu0 0.0
    %1562 = vmatpush.msra.mxu0 0.0
    %1563 = vmatpush.msra.mxu0 0.0
    %1564 = vmatpush.msra.mxu0 0.0
    %1565 = vmatpush.msra.mxu0 0.0
    %1566 = vmatpush.msra.mxu0 0.0
    %1567 = vmatpush.msra.mxu0 0.0
    %1568 = vmatpush.msra.mxu0 0.0
    %1569 = vmatpush.msra.mxu0 0.0
    %1570 = vmatpush.msra.mxu0 0.0
    %1571 = vmatpush.msra.mxu0 0.0
    %1572 = vmatpush.msra.mxu0 0.0
    %1573 = vmatpush.msra.mxu0 %v1505
    %1574 = vmatmul.f32.gmra.mxu0 %v460
    %v1575 = vpop.f32.mrf.mxu0
    %v1576 = vadd.f32 0.0, %v1575
    %1577 = vmatmul.f32.gmra.mxu0 %v463
    %v1578 = vpop.f32.mrf.mxu0
    %v1579 = vadd.f32 0.0, %v1578
    %1580 = vdwg.mxu0
    %1581 = vmatpush.msra.mxu0 0.0
    %1582 = vmatpush.msra.mxu0 0.0
    %1583 = vmatpush.msra.mxu0 0.0
    %1584 = vmatpush.msra.mxu0 0.0
    %1585 = vmatpush.msra.mxu0 0.0
    %1586 = vmatpush.msra.mxu0 0.0
    %1587 = vmatpush.msra.mxu0 0.0
    %1588 = vmatpush.msra.mxu0 0.0
    %1589 = vmatpush.msra.mxu0 0.0
    %1590 = vmatpush.msra.mxu0 0.0
    %1591 = vmatpush.msra.mxu0 0.0
    %1592 = vmatpush.msra.mxu0 0.0
    %1593 = vmatpush.msra.mxu0 0.0
    %1594 = vmatpush.msra.mxu0 0.0
    %1595 = vmatpush.msra.mxu0 0.0
    %1596 = vmatpush.msra.mxu0 %v1507
    %1597 = vmatmul.f32.gmra.mxu0 %v460
    %v1598 = vpop.f32.mrf.mxu0
    %v1599 = vadd.f32 0.0, %v1598
    %1600 = vmatmul.f32.gmra.mxu0 %v463
    %v1601 = vpop.f32.mrf.mxu0
    %v1602 = vadd.f32 0.0, %v1601
    %1603 = vdwg.mxu0
    %1604 = vmatpush.msra.mxu0 0.0
    %1605 = vmatpush.msra.mxu0 0.0
    %1606 = vmatpush.msra.mxu0 0.0
    %1607 = vmatpush.msra.mxu0 0.0
    %1608 = vmatpush.msra.mxu0 0.0
    %1609 = vmatpush.msra.mxu0 0.0
    %1610 = vmatpush.msra.mxu0 0.0
    %1611 = vmatpush.msra.mxu0 0.0
    %1612 = vmatpush.msra.mxu0 0.0
    %1613 = vmatpush.msra.mxu0 0.0
    %1614 = vmatpush.msra.mxu0 0.0
    %1615 = vmatpush.msra.mxu0 0.0
    %1616 = vmatpush.msra.mxu0 0.0
    %1617 = vmatpush.msra.mxu0 0.0
    %1618 = vmatpush.msra.mxu0 0.0
    %1619 = vmatpush.msra.mxu0 %v1509
    %1620 = vmatmul.f32.gmra.mxu0 %v460
    %v1621 = vpop.f32.mrf.mxu0
    %v1622 = vadd.f32 0.0, %v1621
    %1623 = vmatmul.f32.gmra.mxu0 %v463
    %v1624 = vpop.f32.mrf.mxu0
    %v1625 = vadd.f32 0.0, %v1624
    %1626 = vdwg.mxu0
    %1627 = vmatpush.msra.mxu0 0.0
    %1628 = vmatpush.msra.mxu0 0.0
    %1629 = vmatpush.msra.mxu0 0.0
    %1630 = vmatpush.msra.mxu0 0.0
    %1631 = vmatpush.msra.mxu0 0.0
    %1632 = vmatpush.msra.mxu0 0.0
    %1633 = vmatpush.msra.mxu0 0.0
    %1634 = vmatpush.msra.mxu0 0.0
    %1635 = vmatpush.msra.mxu0 0.0
    %1636 = vmatpush.msra.mxu0 0.0
    %1637 = vmatpush.msra.mxu0 0.0
    %1638 = vmatpush.msra.mxu0 0.0
    %1639 = vmatpush.msra.mxu0 0.0
    %1640 = vmatpush.msra.mxu0 0.0
    %1641 = vmatpush.msra.mxu0 0.0
    %1642 = vmatpush.msra.mxu0 %v1511
    %1643 = vmatmul.f32.gmra.mxu0 %v460
    %v1644 = vpop.f32.mrf.mxu0
    %v1645 = vadd.f32 0.0, %v1644
    %1646 = vmatmul.f32.gmra.mxu0 %v463
    %v1647 = vpop.f32.mrf.mxu0
    %v1648 = vadd.f32 0.0, %v1647
    %1649 = vdwg.mxu0
    %1650 = vmatpush.msra.mxu0 0.0
    %1651 = vmatpush.msra.mxu0 0.0
    %1652 = vmatpush.msra.mxu0 0.0
    %1653 = vmatpush.msra.mxu0 0.0
    %1654 = vmatpush.msra.mxu0 0.0
    %1655 = vmatpush.msra.mxu0 0.0
    %1656 = vmatpush.msra.mxu0 0.0
    %1657 = vmatpush.msra.mxu0 0.0
    %1658 = vmatpush.msra.mxu0 0.0
    %1659 = vmatpush.msra.mxu0 0.0
    %1660 = vmatpush.msra.mxu0 0.0
    %1661 = vmatpush.msra.mxu0 0.0
    %1662 = vmatpush.msra.mxu0 0.0
    %1663 = vmatpush.msra.mxu0 0.0
    %1664 = vmatpush.msra.mxu0 0.0
    %1665 = vmatpush.msra.mxu0 %v1513
    %1666 = vmatmul.f32.gmra.mxu0 %v460
    %v1667 = vpop.f32.mrf.mxu0
    %v1668 = vadd.f32 0.0, %v1667
    %1669 = vmatmul.f32.gmra.mxu0 %v463
    %v1670 = vpop.f32.mrf.mxu0
    %v1671 = vadd.f32 0.0, %v1670
    %1672 = vdwg.mxu0
    %1673 = vmatpush.msra.mxu0 0.0
    %1674 = vmatpush.msra.mxu0 0.0
    %1675 = vmatpush.msra.mxu0 0.0
    %1676 = vmatpush.msra.mxu0 0.0
    %1677 = vmatpush.msra.mxu0 0.0
    %1678 = vmatpush.msra.mxu0 0.0
    %1679 = vmatpush.msra.mxu0 0.0
    %1680 = vmatpush.msra.mxu0 0.0
    %1681 = vmatpush.msra.mxu0 0.0
    %1682 = vmatpush.msra.mxu0 0.0
    %1683 = vmatpush.msra.mxu0 0.0
    %1684 = vmatpush.msra.mxu0 0.0
    %1685 = vmatpush.msra.mxu0 0.0
    %1686 = vmatpush.msra.mxu0 0.0
    %1687 = vmatpush.msra.mxu0 0.0
    %1688 = vmatpush.msra.mxu0 %v1515
    %1689 = vmatmul.f32.gmra.mxu0 %v460
    %v1690 = vpop.f32.mrf.mxu0
    %v1691 = vadd.f32 0.0, %v1690
    %1692 = vmatmul.f32.gmra.mxu0 %v463
    %v1693 = vpop.f32.mrf.mxu0
    %v1694 = vadd.f32 0.0, %v1693
    %1695 = vdwg.mxu0
    %1696 = vmatpush.msra.mxu0 0.0
    %1697 = vmatpush.msra.mxu0 0.0
    %1698 = vmatpush.msra.mxu0 0.0
    %1699 = vmatpush.msra.mxu0 0.0
    %1700 = vmatpush.msra.mxu0 0.0
    %1701 = vmatpush.msra.mxu0 0.0
    %1702 = vmatpush.msra.mxu0 0.0
    %1703 = vmatpush.msra.mxu0 0.0
    %1704 = vmatpush.msra.mxu0 0.0
    %1705 = vmatpush.msra.mxu0 0.0
    %1706 = vmatpush.msra.mxu0 0.0
    %1707 = vmatpush.msra.mxu0 0.0
    %1708 = vmatpush.msra.mxu0 0.0
    %1709 = vmatpush.msra.mxu0 0.0
    %1710 = vmatpush.msra.mxu0 0.0
    %1711 = vmatpush.msra.mxu0 %v1517
    %1712 = vmatmul.f32.gmra.mxu0 %v460
    %v1713 = vpop.f32.mrf.mxu0
    %v1714 = vadd.f32 0.0, %v1713
    %1715 = vmatmul.f32.gmra.mxu0 %v463
    %v1716 = vpop.f32.mrf.mxu0
    %v1717 = vadd.f32 0.0, %v1716
    %1718 = vdwg.mxu0
    %1719 = vmatpush.msra.mxu0 0.0
    %1720 = vmatpush.msra.mxu0 0.0
    %1721 = vmatpush.msra.mxu0 0.0
    %1722 = vmatpush.msra.mxu0 0.0
    %1723 = vmatpush.msra.mxu0 0.0
    %1724 = vmatpush.msra.mxu0 0.0
    %1725 = vmatpush.msra.mxu0 0.0
    %1726 = vmatpush.msra.mxu0 0.0
    %1727 = vmatpush.msra.mxu0 0.0
    %1728 = vmatpush.msra.mxu0 0.0
    %1729 = vmatpush.msra.mxu0 0.0
    %1730 = vmatpush.msra.mxu0 0.0
    %1731 = vmatpush.msra.mxu0 0.0
    %1732 = vmatpush.msra.mxu0 0.0
    %1733 = vmatpush.msra.mxu0 0.0
    %1734 = vmatpush.msra.mxu0 %v1519
    %1735 = vmatmul.f32.gmra.mxu0 %v460
    %v1736 = vpop.f32.mrf.mxu0
    %v1737 = vadd.f32 0.0, %v1736
    %1738 = vmatmul.f32.gmra.mxu0 %v463
    %v1739 = vpop.f32.mrf.mxu0
    %v1740 = vadd.f32 0.0, %v1739
    %1741 = vdwg.mxu0
    %1742 = vmatpush.msra.mxu0 0.0
    %1743 = vmatpush.msra.mxu0 0.0
    %1744 = vmatpush.msra.mxu0 0.0
    %1745 = vmatpush.msra.mxu0 0.0
    %1746 = vmatpush.msra.mxu0 0.0
    %1747 = vmatpush.msra.mxu0 0.0
    %1748 = vmatpush.msra.mxu0 0.0
    %1749 = vmatpush.msra.mxu0 0.0
    %1750 = vmatpush.msra.mxu0 0.0
    %1751 = vmatpush.msra.mxu0 0.0
    %1752 = vmatpush.msra.mxu0 0.0
    %1753 = vmatpush.msra.mxu0 0.0
    %1754 = vmatpush.msra.mxu0 0.0
    %1755 = vmatpush.msra.mxu0 0.0
    %1756 = vmatpush.msra.mxu0 0.0
    %1757 = vmatpush.msra.mxu0 %v1521
    %1758 = vmatmul.f32.gmra.mxu0 %v460
    %v1759 = vpop.f32.mrf.mxu0
    %v1760 = vadd.f32 0.0, %v1759
    %1761 = vmatmul.f32.gmra.mxu0 %v463
    %v1762 = vpop.f32.mrf.mxu0
    %v1763 = vadd.f32 0.0, %v1762
    %1764 = vdwg.mxu0
    %1765 = vmatpush.msra.mxu0 0.0
    %1766 = vmatpush.msra.mxu0 0.0
    %1767 = vmatpush.msra.mxu0 0.0
    %1768 = vmatpush.msra.mxu0 0.0
    %1769 = vmatpush.msra.mxu0 0.0
    %1770 = vmatpush.msra.mxu0 0.0
    %1771 = vmatpush.msra.mxu0 0.0
    %1772 = vmatpush.msra.mxu0 0.0
    %1773 = vmatpush.msra.mxu0 0.0
    %1774 = vmatpush.msra.mxu0 0.0
    %1775 = vmatpush.msra.mxu0 0.0
    %1776 = vmatpush.msra.mxu0 0.0
    %1777 = vmatpush.msra.mxu0 0.0
    %1778 = vmatpush.msra.mxu0 0.0
    %1779 = vmatpush.msra.mxu0 0.0
    %1780 = vmatpush.msra.mxu0 %v1523
    %1781 = vmatmul.f32.gmra.mxu0 %v460
    %v1782 = vpop.f32.mrf.mxu0
    %v1783 = vadd.f32 0.0, %v1782
    %1784 = vmatmul.f32.gmra.mxu0 %v463
    %v1785 = vpop.f32.mrf.mxu0
    %v1786 = vadd.f32 0.0, %v1785
    %1787 = vdwg.mxu0
    %1788 = vmatpush.msra.mxu0 0.0
    %1789 = vmatpush.msra.mxu0 0.0
    %1790 = vmatpush.msra.mxu0 0.0
    %1791 = vmatpush.msra.mxu0 0.0
    %1792 = vmatpush.msra.mxu0 0.0
    %1793 = vmatpush.msra.mxu0 0.0
    %1794 = vmatpush.msra.mxu0 0.0
    %1795 = vmatpush.msra.mxu0 0.0
    %1796 = vmatpush.msra.mxu0 0.0
    %1797 = vmatpush.msra.mxu0 0.0
    %1798 = vmatpush.msra.mxu0 0.0
    %1799 = vmatpush.msra.mxu0 0.0
    %1800 = vmatpush.msra.mxu0 0.0
    %1801 = vmatpush.msra.mxu0 0.0
    %1802 = vmatpush.msra.mxu0 0.0
    %1803 = vmatpush.msra.mxu0 %v1525
    %1804 = vmatmul.f32.gmra.mxu0 %v460
    %v1805 = vpop.f32.mrf.mxu0
    %v1806 = vadd.f32 0.0, %v1805
    %1807 = vmatmul.f32.gmra.mxu0 %v463
    %v1808 = vpop.f32.mrf.mxu0
    %v1809 = vadd.f32 0.0, %v1808
    %1810 = vdwg.mxu0
    %1811 = vmatpush.msra.mxu0 0.0
    %1812 = vmatpush.msra.mxu0 0.0
    %1813 = vmatpush.msra.mxu0 0.0
    %1814 = vmatpush.msra.mxu0 0.0
    %1815 = vmatpush.msra.mxu0 0.0
    %1816 = vmatpush.msra.mxu0 0.0
    %1817 = vmatpush.msra.mxu0 0.0
    %1818 = vmatpush.msra.mxu0 0.0
    %1819 = vmatpush.msra.mxu0 0.0
    %1820 = vmatpush.msra.mxu0 0.0
    %1821 = vmatpush.msra.mxu0 0.0
    %1822 = vmatpush.msra.mxu0 0.0
    %1823 = vmatpush.msra.mxu0 0.0
    %1824 = vmatpush.msra.mxu0 0.0
    %1825 = vmatpush.msra.mxu0 0.0
    %1826 = vmatpush.msra.mxu0 %v1527
    %1827 = vmatmul.f32.gmra.mxu0 %v460
    %v1828 = vpop.f32.mrf.mxu0
    %v1829 = vadd.f32 0.0, %v1828
    %1830 = vmatmul.f32.gmra.mxu0 %v463
    %v1831 = vpop.f32.mrf.mxu0
    %v1832 = vadd.f32 0.0, %v1831
    %1833 = vdwg.mxu0
    %1834 = vmatpush.msra.mxu0 0.0
    %1835 = vmatpush.msra.mxu0 0.0
    %1836 = vmatpush.msra.mxu0 0.0
    %1837 = vmatpush.msra.mxu0 0.0
    %1838 = vmatpush.msra.mxu0 0.0
    %1839 = vmatpush.msra.mxu0 0.0
    %1840 = vmatpush.msra.mxu0 0.0
    %1841 = vmatpush.msra.mxu0 0.0
    %1842 = vmatpush.msra.mxu0 0.0
    %1843 = vmatpush.msra.mxu0 0.0
    %1844 = vmatpush.msra.mxu0 0.0
    %1845 = vmatpush.msra.mxu0 0.0
    %1846 = vmatpush.msra.mxu0 0.0
    %1847 = vmatpush.msra.mxu0 0.0
    %1848 = vmatpush.msra.mxu0 0.0
    %1849 = vmatpush.msra.mxu0 %v1529
    %1850 = vmatmul.f32.gmra.mxu0 %v460
    %v1851 = vpop.f32.mrf.mxu0
    %v1852 = vadd.f32 0.0, %v1851
    %1853 = vmatmul.f32.gmra.mxu0 %v463
    %v1854 = vpop.f32.mrf.mxu0
    %v1855 = vadd.f32 0.0, %v1854
    %1856 = vdwg.mxu0
    %1857 = vmatpush.msra.mxu0 0.0
    %1858 = vmatpush.msra.mxu0 0.0
    %1859 = vmatpush.msra.mxu0 0.0
    %1860 = vmatpush.msra.mxu0 0.0
    %1861 = vmatpush.msra.mxu0 0.0
    %1862 = vmatpush.msra.mxu0 0.0
    %1863 = vmatpush.msra.mxu0 0.0
    %1864 = vmatpush.msra.mxu0 0.0
    %1865 = vmatpush.msra.mxu0 0.0
    %1866 = vmatpush.msra.mxu0 0.0
    %1867 = vmatpush.msra.mxu0 0.0
    %1868 = vmatpush.msra.mxu0 0.0
    %1869 = vmatpush.msra.mxu0 0.0
    %1870 = vmatpush.msra.mxu0 0.0
    %1871 = vmatpush.msra.mxu0 0.0
    %1872 = vmatpush.msra.mxu0 %v1531
    %1873 = vmatmul.f32.gmra.mxu0 %v460
    %v1874 = vpop.f32.mrf.mxu0
    %v1875 = vadd.f32 0.0, %v1874
    %1876 = vmatmul.f32.gmra.mxu0 %v463
    %v1877 = vpop.f32.mrf.mxu0
    %v1878 = vadd.f32 0.0, %v1877
    %1879 = vdwg.mxu0
    %1880 = vmatpush.msra.mxu0 0.0
    %1881 = vmatpush.msra.mxu0 0.0
    %1882 = vmatpush.msra.mxu0 0.0
    %1883 = vmatpush.msra.mxu0 0.0
    %1884 = vmatpush.msra.mxu0 0.0
    %1885 = vmatpush.msra.mxu0 0.0
    %1886 = vmatpush.msra.mxu0 0.0
    %1887 = vmatpush.msra.mxu0 0.0
    %1888 = vmatpush.msra.mxu0 0.0
    %1889 = vmatpush.msra.mxu0 0.0
    %1890 = vmatpush.msra.mxu0 0.0
    %1891 = vmatpush.msra.mxu0 0.0
    %1892 = vmatpush.msra.mxu0 0.0
    %1893 = vmatpush.msra.mxu0 0.0
    %1894 = vmatpush.msra.mxu0 0.0
    %1895 = vmatpush.msra.mxu0 %v1533
    %1896 = vmatmul.f32.gmra.mxu0 %v460
    %v1897 = vpop.f32.mrf.mxu0
    %v1898 = vadd.f32 0.0, %v1897
    %1899 = vmatmul.f32.gmra.mxu0 %v463
    %v1900 = vpop.f32.mrf.mxu0
    %v1901 = vadd.f32 0.0, %v1900
    %1902 = vdwg.mxu0
    %1904 = vset.pattern.permute.xlu0 0
    %1905 = vperm.xlu0 %1904, %v1386
    %v1906 = vpop.permute.xlu0 %1905
    %1909 = vset.pattern.permute.xlu0 0
    %1910 = vperm.xlu0 %1909, %v1387
    %v1911 = vpop.permute.xlu0 %1910
    %v1921 = vperm.slane %v1460, 0
    %v1922 = vperm.slane %v1460, 4
    %v1923 = vperm.slane %v1461, 0
    %v1924 = vperm.slane %v1461, 4
    %v1925 = vperm.slane %v1462, 0
    %v1926 = vperm.slane %v1462, 4
    %v1927 = vperm.slane %v1463, 0
    %v1928 = vperm.slane %v1463, 4
    %v1929 = vperm.slane %v1464, 0
    %v1930 = vperm.slane %v1464, 4
    %v1931 = vperm.slane %v1465, 0
    %v1932 = vperm.slane %v1465, 4
    %v1933 = vperm.slane %v1466, 0
    %v1934 = vperm.slane %v1466, 4
    %v1935 = vperm.slane %v1467, 0
    %v1936 = vperm.slane %v1467, 4
    %v1953 = vperm.slane %v1921, 0
    %v1954 = vperm.slane %v1922, 0
    %v1955 = vperm.slane %v1923, 0
    %v1956 = vperm.slane %v1924, 0
    %v1957 = vperm.slane %v1925, 0
    %v1958 = vperm.slane %v1926, 0
    %v1959 = vperm.slane %v1927, 0
    %v1960 = vperm.slane %v1928, 0
    %v1961 = vperm.slane %v1929, 0
    %v1962 = vperm.slane %v1930, 0
    %v1963 = vperm.slane %v1931, 0
    %v1964 = vperm.slane %v1932, 0
    %v1965 = vperm.slane %v1933, 0
    %v1966 = vperm.slane %v1934, 0
    %v1967 = vperm.slane %v1935, 0
    %v1968 = vperm.slane %v1936, 0
    %v1969 = vadd.f32 %v1906, %v1953
    %v1970 = vadd.f32 %v1906, %v1954
    %v1971 = vadd.f32 %v1906, %v1955
    %v1972 = vadd.f32 %v1906, %v1956
    %v1973 = vadd.f32 %v1906, %v1957
    %v1974 = vadd.f32 %v1906, %v1958
    %v1975 = vadd.f32 %v1906, %v1959
    %v1976 = vadd.f32 %v1906, %v1960
    %v1977 = vadd.f32 %v1906, %v1961
    %v1978 = vadd.f32 %v1906, %v1962
    %v1979 = vadd.f32 %v1906, %v1963
    %v1980 = vadd.f32 %v1906, %v1964
    %v1981 = vadd.f32 %v1906, %v1965
    %v1982 = vadd.f32 %v1906, %v1966
    %v1983 = vadd.f32 %v1906, %v1967
    %v1984 = vadd.f32 %v1906, %v1968
    %v1985 = vadd.f32 %v1911, %v1953
    %v1986 = vadd.f32 %v1911, %v1954
    %v1987 = vadd.f32 %v1911, %v1955
    %v1988 = vadd.f32 %v1911, %v1956
    %v1989 = vadd.f32 %v1911, %v1957
    %v1990 = vadd.f32 %v1911, %v1958
    %v1991 = vadd.f32 %v1911, %v1959
    %v1992 = vadd.f32 %v1911, %v1960
    %v1993 = vadd.f32 %v1911, %v1961
    %v1994 = vadd.f32 %v1911, %v1962
    %v1995 = vadd.f32 %v1911, %v1963
    %v1996 = vadd.f32 %v1911, %v1964
    %v1997 = vadd.f32 %v1911, %v1965
    %v1998 = vadd.f32 %v1911, %v1966
    %v1999 = vadd.f32 %v1911, %v1967
    %v2000 = vadd.f32 %v1911, %v1968
    %v2001 = vmul.f32 %v1553, 2.0
    %v2002 = vmul.f32 %v1576, 2.0
    %v2003 = vmul.f32 %v1599, 2.0
    %v2004 = vmul.f32 %v1622, 2.0
    %v2005 = vmul.f32 %v1645, 2.0
    %v2006 = vmul.f32 %v1668, 2.0
    %v2007 = vmul.f32 %v1691, 2.0
    %v2008 = vmul.f32 %v1714, 2.0
    %v2009 = vmul.f32 %v1737, 2.0
    %v2010 = vmul.f32 %v1760, 2.0
    %v2011 = vmul.f32 %v1783, 2.0
    %v2012 = vmul.f32 %v1806, 2.0
    %v2013 = vmul.f32 %v1829, 2.0
    %v2014 = vmul.f32 %v1852, 2.0
    %v2015 = vmul.f32 %v1875, 2.0
    %v2016 = vmul.f32 %v1898, 2.0
    %v2017 = vmul.f32 %v1556, 2.0
    %v2018 = vmul.f32 %v1579, 2.0
    %v2019 = vmul.f32 %v1602, 2.0
    %v2020 = vmul.f32 %v1625, 2.0
    %v2021 = vmul.f32 %v1648, 2.0
    %v2022 = vmul.f32 %v1671, 2.0
    %v2023 = vmul.f32 %v1694, 2.0
    %v2024 = vmul.f32 %v1717, 2.0
    %v2025 = vmul.f32 %v1740, 2.0
    %v2026 = vmul.f32 %v1763, 2.0
    %v2027 = vmul.f32 %v1786, 2.0
    %v2028 = vmul.f32 %v1809, 2.0
    %v2029 = vmul.f32 %v1832, 2.0
    %v2030 = vmul.f32 %v1855, 2.0
    %v2031 = vmul.f32 %v1878, 2.0
    %v2032 = vmul.f32 %v1901, 2.0
    %v2033 = vsub.f32 %v1969, %v2001
    %v2034 = vsub.f32 %v1970, %v2002
    %v2035 = vsub.f32 %v1971, %v2003
    %v2036 = vsub.f32 %v1972, %v2004
    %v2037 = vsub.f32 %v1973, %v2005
    %v2038 = vsub.f32 %v1974, %v2006
    %v2039 = vsub.f32 %v1975, %v2007
    %v2040 = vsub.f32 %v1976, %v2008
    %v2041 = vsub.f32 %v1977, %v2009
    %v2042 = vsub.f32 %v1978, %v2010
    %v2043 = vsub.f32 %v1979, %v2011
    %v2044 = vsub.f32 %v1980, %v2012
    %v2045 = vsub.f32 %v1981, %v2013
    %v2046 = vsub.f32 %v1982, %v2014
    %v2047 = vsub.f32 %v1983, %v2015
    %v2048 = vsub.f32 %v1984, %v2016
    %v2049 = vsub.f32 %v1985, %v2017
    %v2050 = vsub.f32 %v1986, %v2018
    %v2051 = vsub.f32 %v1987, %v2019
    %v2052 = vsub.f32 %v1988, %v2020
    %v2053 = vsub.f32 %v1989, %v2021
    %v2054 = vsub.f32 %v1990, %v2022
    %v2055 = vsub.f32 %v1991, %v2023
    %v2056 = vsub.f32 %v1992, %v2024
    %v2057 = vsub.f32 %v1993, %v2025
    %v2058 = vsub.f32 %v1994, %v2026
    %v2059 = vsub.f32 %v1995, %v2027
    %v2060 = vsub.f32 %v1996, %v2028
    %v2061 = vsub.f32 %v1997, %v2029
    %v2062 = vsub.f32 %v1998, %v2030
    %v2063 = vsub.f32 %v1999, %v2031
    %v2064 = vsub.f32 %v2000, %v2032
    %v2065 = vmax.f32 %v2033, 0.0
    %v2066 = vmax.f32 %v2034, 0.0
    %v2067 = vmax.f32 %v2035, 0.0
    %v2068 = vmax.f32 %v2036, 0.0
    %v2069 = vmax.f32 %v2037, 0.0
    %v2070 = vmax.f32 %v2038, 0.0
    %v2071 = vmax.f32 %v2039, 0.0
    %v2072 = vmax.f32 %v2040, 0.0
    %v2073 = vmax.f32 %v2041, 0.0
    %v2074 = vmax.f32 %v2042, 0.0
    %v2075 = vmax.f32 %v2043, 0.0
    %v2076 = vmax.f32 %v2044, 0.0
    %v2077 = vmax.f32 %v2045, 0.0
    %v2078 = vmax.f32 %v2046, 0.0
    %v2079 = vmax.f32 %v2047, 0.0
    %v2080 = vmax.f32 %v2048, 0.0
    %v2081 = vmax.f32 %v2049, 0.0
    %v2082 = vmax.f32 %v2050, 0.0
    %v2083 = vmax.f32 %v2051, 0.0
    %v2084 = vmax.f32 %v2052, 0.0
    %v2085 = vmax.f32 %v2053, 0.0
    %v2086 = vmax.f32 %v2054, 0.0
    %v2087 = vmax.f32 %v2055, 0.0
    %v2088 = vmax.f32 %v2056, 0.0
    %v2089 = vmax.f32 %v2057, 0.0
    %v2090 = vmax.f32 %v2058, 0.0
    %v2091 = vmax.f32 %v2059, 0.0
    %v2092 = vmax.f32 %v2060, 0.0
    %v2093 = vmax.f32 %v2061, 0.0
    %v2094 = vmax.f32 %v2062, 0.0
    %v2095 = vmax.f32 %v2063, 0.0
    %v2096 = vmax.f32 %v2064, 0.0
    %v2097 = vrsqrt.pop %v2065
    %v2098 = vmul.f32 %v2097, %v2065
    %v2099 = vmul.f32 %v2098, %v2097
    %v2100 = vmul.f32 0.5, %v2099
    %v2101 = vsub.f32 1.5, %v2100
    %v2102 = vmul.f32 %v2097, %v2101
    %v2103 = vmul.f32 %v2065, %v2102
    %vm2104 = vcmp.eq.f32.partialorder %v2065, inf
    %v2105 = vsel %vm2104, %v2065, %v2103
    %vm2106 = vcmp.eq.f32.partialorder %v2065, 0.0
    %v2107 = vand.u32 %v2065, 2147483648
    %v2108 = vsel %vm2106, %v2107, %v2105
    %v2109 = vrsqrt.pop %v2066
    %v2110 = vmul.f32 %v2109, %v2066
    %v2111 = vmul.f32 %v2110, %v2109
    %v2112 = vmul.f32 0.5, %v2111
    %v2113 = vsub.f32 1.5, %v2112
    %v2114 = vmul.f32 %v2109, %v2113
    %v2115 = vmul.f32 %v2066, %v2114
    %vm2116 = vcmp.eq.f32.partialorder %v2066, inf
    %v2117 = vsel %vm2116, %v2066, %v2115
    %vm2118 = vcmp.eq.f32.partialorder %v2066, 0.0
    %v2119 = vand.u32 %v2066, 2147483648
    %v2120 = vsel %vm2118, %v2119, %v2117
    %v2121 = vrsqrt.pop %v2067
    %v2122 = vmul.f32 %v2121, %v2067
    %v2123 = vmul.f32 %v2122, %v2121
    %v2124 = vmul.f32 0.5, %v2123
    %v2125 = vsub.f32 1.5, %v2124
    %v2126 = vmul.f32 %v2121, %v2125
    %v2127 = vmul.f32 %v2067, %v2126
    %vm2128 = vcmp.eq.f32.partialorder %v2067, inf
    %v2129 = vsel %vm2128, %v2067, %v2127
    %vm2130 = vcmp.eq.f32.partialorder %v2067, 0.0
    %v2131 = vand.u32 %v2067, 2147483648
    %v2132 = vsel %vm2130, %v2131, %v2129
    %v2133 = vrsqrt.pop %v2068
    %v2134 = vmul.f32 %v2133, %v2068
    %v2135 = vmul.f32 %v2134, %v2133
    %v2136 = vmul.f32 0.5, %v2135
    %v2137 = vsub.f32 1.5, %v2136
    %v2138 = vmul.f32 %v2133, %v2137
    %v2139 = vmul.f32 %v2068, %v2138
    %vm2140 = vcmp.eq.f32.partialorder %v2068, inf
    %v2141 = vsel %vm2140, %v2068, %v2139
    %vm2142 = vcmp.eq.f32.partialorder %v2068, 0.0
    %v2143 = vand.u32 %v2068, 2147483648
    %v2144 = vsel %vm2142, %v2143, %v2141
    %v2145 = vrsqrt.pop %v2069
    %v2146 = vmul.f32 %v2145, %v2069
    %v2147 = vmul.f32 %v2146, %v2145
    %v2148 = vmul.f32 0.5, %v2147
    %v2149 = vsub.f32 1.5, %v2148
    %v2150 = vmul.f32 %v2145, %v2149
    %v2151 = vmul.f32 %v2069, %v2150
    %vm2152 = vcmp.eq.f32.partialorder %v2069, inf
    %v2153 = vsel %vm2152, %v2069, %v2151
    %vm2154 = vcmp.eq.f32.partialorder %v2069, 0.0
    %v2155 = vand.u32 %v2069, 2147483648
    %v2156 = vsel %vm2154, %v2155, %v2153
    %v2157 = vrsqrt.pop %v2070
    %v2158 = vmul.f32 %v2157, %v2070
    %v2159 = vmul.f32 %v2158, %v2157
    %v2160 = vmul.f32 0.5, %v2159
    %v2161 = vsub.f32 1.5, %v2160
    %v2162 = vmul.f32 %v2157, %v2161
    %v2163 = vmul.f32 %v2070, %v2162
    %vm2164 = vcmp.eq.f32.partialorder %v2070, inf
    %v2165 = vsel %vm2164, %v2070, %v2163
    %vm2166 = vcmp.eq.f32.partialorder %v2070, 0.0
    %v2167 = vand.u32 %v2070, 2147483648
    %v2168 = vsel %vm2166, %v2167, %v2165
    %v2169 = vrsqrt.pop %v2071
    %v2170 = vmul.f32 %v2169, %v2071
    %v2171 = vmul.f32 %v2170, %v2169
    %v2172 = vmul.f32 0.5, %v2171
    %v2173 = vsub.f32 1.5, %v2172
    %v2174 = vmul.f32 %v2169, %v2173
    %v2175 = vmul.f32 %v2071, %v2174
    %vm2176 = vcmp.eq.f32.partialorder %v2071, inf
    %v2177 = vsel %vm2176, %v2071, %v2175
    %vm2178 = vcmp.eq.f32.partialorder %v2071, 0.0
    %v2179 = vand.u32 %v2071, 2147483648
    %v2180 = vsel %vm2178, %v2179, %v2177
    %v2181 = vrsqrt.pop %v2072
    %v2182 = vmul.f32 %v2181, %v2072
    %v2183 = vmul.f32 %v2182, %v2181
    %v2184 = vmul.f32 0.5, %v2183
    %v2185 = vsub.f32 1.5, %v2184
    %v2186 = vmul.f32 %v2181, %v2185
    %v2187 = vmul.f32 %v2072, %v2186
    %vm2188 = vcmp.eq.f32.partialorder %v2072, inf
    %v2189 = vsel %vm2188, %v2072, %v2187
    %vm2190 = vcmp.eq.f32.partialorder %v2072, 0.0
    %v2191 = vand.u32 %v2072, 2147483648
    %v2192 = vsel %vm2190, %v2191, %v2189
    %v2193 = vrsqrt.pop %v2073
    %v2194 = vmul.f32 %v2193, %v2073
    %v2195 = vmul.f32 %v2194, %v2193
    %v2196 = vmul.f32 0.5, %v2195
    %v2197 = vsub.f32 1.5, %v2196
    %v2198 = vmul.f32 %v2193, %v2197
    %v2199 = vmul.f32 %v2073, %v2198
    %vm2200 = vcmp.eq.f32.partialorder %v2073, inf
    %v2201 = vsel %vm2200, %v2073, %v2199
    %vm2202 = vcmp.eq.f32.partialorder %v2073, 0.0
    %v2203 = vand.u32 %v2073, 2147483648
    %v2204 = vsel %vm2202, %v2203, %v2201
    %v2205 = vrsqrt.pop %v2074
    %v2206 = vmul.f32 %v2205, %v2074
    %v2207 = vmul.f32 %v2206, %v2205
    %v2208 = vmul.f32 0.5, %v2207
    %v2209 = vsub.f32 1.5, %v2208
    %v2210 = vmul.f32 %v2205, %v2209
    %v2211 = vmul.f32 %v2074, %v2210
    %vm2212 = vcmp.eq.f32.partialorder %v2074, inf
    %v2213 = vsel %vm2212, %v2074, %v2211
    %vm2214 = vcmp.eq.f32.partialorder %v2074, 0.0
    %v2215 = vand.u32 %v2074, 2147483648
    %v2216 = vsel %vm2214, %v2215, %v2213
    %v2217 = vrsqrt.pop %v2075
    %v2218 = vmul.f32 %v2217, %v2075
    %v2219 = vmul.f32 %v2218, %v2217
    %v2220 = vmul.f32 0.5, %v2219
    %v2221 = vsub.f32 1.5, %v2220
    %v2222 = vmul.f32 %v2217, %v2221
    %v2223 = vmul.f32 %v2075, %v2222
    %vm2224 = vcmp.eq.f32.partialorder %v2075, inf
    %v2225 = vsel %vm2224, %v2075, %v2223
    %vm2226 = vcmp.eq.f32.partialorder %v2075, 0.0
    %v2227 = vand.u32 %v2075, 2147483648
    %v2228 = vsel %vm2226, %v2227, %v2225
    %v2229 = vrsqrt.pop %v2076
    %v2230 = vmul.f32 %v2229, %v2076
    %v2231 = vmul.f32 %v2230, %v2229
    %v2232 = vmul.f32 0.5, %v2231
    %v2233 = vsub.f32 1.5, %v2232
    %v2234 = vmul.f32 %v2229, %v2233
    %v2235 = vmul.f32 %v2076, %v2234
    %vm2236 = vcmp.eq.f32.partialorder %v2076, inf
    %v2237 = vsel %vm2236, %v2076, %v2235
    %vm2238 = vcmp.eq.f32.partialorder %v2076, 0.0
    %v2239 = vand.u32 %v2076, 2147483648
    %v2240 = vsel %vm2238, %v2239, %v2237
    %v2241 = vrsqrt.pop %v2077
    %v2242 = vmul.f32 %v2241, %v2077
    %v2243 = vmul.f32 %v2242, %v2241
    %v2244 = vmul.f32 0.5, %v2243
    %v2245 = vsub.f32 1.5, %v2244
    %v2246 = vmul.f32 %v2241, %v2245
    %v2247 = vmul.f32 %v2077, %v2246
    %vm2248 = vcmp.eq.f32.partialorder %v2077, inf
    %v2249 = vsel %vm2248, %v2077, %v2247
    %vm2250 = vcmp.eq.f32.partialorder %v2077, 0.0
    %v2251 = vand.u32 %v2077, 2147483648
    %v2252 = vsel %vm2250, %v2251, %v2249
    %v2253 = vrsqrt.pop %v2078
    %v2254 = vmul.f32 %v2253, %v2078
    %v2255 = vmul.f32 %v2254, %v2253
    %v2256 = vmul.f32 0.5, %v2255
    %v2257 = vsub.f32 1.5, %v2256
    %v2258 = vmul.f32 %v2253, %v2257
    %v2259 = vmul.f32 %v2078, %v2258
    %vm2260 = vcmp.eq.f32.partialorder %v2078, inf
    %v2261 = vsel %vm2260, %v2078, %v2259
    %vm2262 = vcmp.eq.f32.partialorder %v2078, 0.0
    %v2263 = vand.u32 %v2078, 2147483648
    %v2264 = vsel %vm2262, %v2263, %v2261
    %v2265 = vrsqrt.pop %v2079
    %v2266 = vmul.f32 %v2265, %v2079
    %v2267 = vmul.f32 %v2266, %v2265
    %v2268 = vmul.f32 0.5, %v2267
    %v2269 = vsub.f32 1.5, %v2268
    %v2270 = vmul.f32 %v2265, %v2269
    %v2271 = vmul.f32 %v2079, %v2270
    %vm2272 = vcmp.eq.f32.partialorder %v2079, inf
    %v2273 = vsel %vm2272, %v2079, %v2271
    %vm2274 = vcmp.eq.f32.partialorder %v2079, 0.0
    %v2275 = vand.u32 %v2079, 2147483648
    %v2276 = vsel %vm2274, %v2275, %v2273
    %v2277 = vrsqrt.pop %v2080
    %v2278 = vmul.f32 %v2277, %v2080
    %v2279 = vmul.f32 %v2278, %v2277
    %v2280 = vmul.f32 0.5, %v2279
    %v2281 = vsub.f32 1.5, %v2280
    %v2282 = vmul.f32 %v2277, %v2281
    %v2283 = vmul.f32 %v2080, %v2282
    %vm2284 = vcmp.eq.f32.partialorder %v2080, inf
    %v2285 = vsel %vm2284, %v2080, %v2283
    %vm2286 = vcmp.eq.f32.partialorder %v2080, 0.0
    %v2287 = vand.u32 %v2080, 2147483648
    %v2288 = vsel %vm2286, %v2287, %v2285
    %v2289 = vrsqrt.pop %v2081
    %v2290 = vmul.f32 %v2289, %v2081
    %v2291 = vmul.f32 %v2290, %v2289
    %v2292 = vmul.f32 0.5, %v2291
    %v2293 = vsub.f32 1.5, %v2292
    %v2294 = vmul.f32 %v2289, %v2293
    %v2295 = vmul.f32 %v2081, %v2294
    %vm2296 = vcmp.eq.f32.partialorder %v2081, inf
    %v2297 = vsel %vm2296, %v2081, %v2295
    %vm2298 = vcmp.eq.f32.partialorder %v2081, 0.0
    %v2299 = vand.u32 %v2081, 2147483648
    %v2300 = vsel %vm2298, %v2299, %v2297
    %v2301 = vrsqrt.pop %v2082
    %v2302 = vmul.f32 %v2301, %v2082
    %v2303 = vmul.f32 %v2302, %v2301
    %v2304 = vmul.f32 0.5, %v2303
    %v2305 = vsub.f32 1.5, %v2304
    %v2306 = vmul.f32 %v2301, %v2305
    %v2307 = vmul.f32 %v2082, %v2306
    %vm2308 = vcmp.eq.f32.partialorder %v2082, inf
    %v2309 = vsel %vm2308, %v2082, %v2307
    %vm2310 = vcmp.eq.f32.partialorder %v2082, 0.0
    %v2311 = vand.u32 %v2082, 2147483648
    %v2312 = vsel %vm2310, %v2311, %v2309
    %v2313 = vrsqrt.pop %v2083
    %v2314 = vmul.f32 %v2313, %v2083
    %v2315 = vmul.f32 %v2314, %v2313
    %v2316 = vmul.f32 0.5, %v2315
    %v2317 = vsub.f32 1.5, %v2316
    %v2318 = vmul.f32 %v2313, %v2317
    %v2319 = vmul.f32 %v2083, %v2318
    %vm2320 = vcmp.eq.f32.partialorder %v2083, inf
    %v2321 = vsel %vm2320, %v2083, %v2319
    %vm2322 = vcmp.eq.f32.partialorder %v2083, 0.0
    %v2323 = vand.u32 %v2083, 2147483648
    %v2324 = vsel %vm2322, %v2323, %v2321
    %v2325 = vrsqrt.pop %v2084
    %v2326 = vmul.f32 %v2325, %v2084
    %v2327 = vmul.f32 %v2326, %v2325
    %v2328 = vmul.f32 0.5, %v2327
    %v2329 = vsub.f32 1.5, %v2328
    %v2330 = vmul.f32 %v2325, %v2329
    %v2331 = vmul.f32 %v2084, %v2330
    %vm2332 = vcmp.eq.f32.partialorder %v2084, inf
    %v2333 = vsel %vm2332, %v2084, %v2331
    %vm2334 = vcmp.eq.f32.partialorder %v2084, 0.0
    %v2335 = vand.u32 %v2084, 2147483648
    %v2336 = vsel %vm2334, %v2335, %v2333
    %v2337 = vrsqrt.pop %v2085
    %v2338 = vmul.f32 %v2337, %v2085
    %v2339 = vmul.f32 %v2338, %v2337
    %v2340 = vmul.f32 0.5, %v2339
    %v2341 = vsub.f32 1.5, %v2340
    %v2342 = vmul.f32 %v2337, %v2341
    %v2343 = vmul.f32 %v2085, %v2342
    %vm2344 = vcmp.eq.f32.partialorder %v2085, inf
    %v2345 = vsel %vm2344, %v2085, %v2343
    %vm2346 = vcmp.eq.f32.partialorder %v2085, 0.0
    %v2347 = vand.u32 %v2085, 2147483648
    %v2348 = vsel %vm2346, %v2347, %v2345
    %v2349 = vrsqrt.pop %v2086
    %v2350 = vmul.f32 %v2349, %v2086
    %v2351 = vmul.f32 %v2350, %v2349
    %v2352 = vmul.f32 0.5, %v2351
    %v2353 = vsub.f32 1.5, %v2352
    %v2354 = vmul.f32 %v2349, %v2353
    %v2355 = vmul.f32 %v2086, %v2354
    %vm2356 = vcmp.eq.f32.partialorder %v2086, inf
    %v2357 = vsel %vm2356, %v2086, %v2355
    %vm2358 = vcmp.eq.f32.partialorder %v2086, 0.0
    %v2359 = vand.u32 %v2086, 2147483648
    %v2360 = vsel %vm2358, %v2359, %v2357
    %v2361 = vrsqrt.pop %v2087
    %v2362 = vmul.f32 %v2361, %v2087
    %v2363 = vmul.f32 %v2362, %v2361
    %v2364 = vmul.f32 0.5, %v2363
    %v2365 = vsub.f32 1.5, %v2364
    %v2366 = vmul.f32 %v2361, %v2365
    %v2367 = vmul.f32 %v2087, %v2366
    %vm2368 = vcmp.eq.f32.partialorder %v2087, inf
    %v2369 = vsel %vm2368, %v2087, %v2367
    %vm2370 = vcmp.eq.f32.partialorder %v2087, 0.0
    %v2371 = vand.u32 %v2087, 2147483648
    %v2372 = vsel %vm2370, %v2371, %v2369
    %v2373 = vrsqrt.pop %v2088
    %v2374 = vmul.f32 %v2373, %v2088
    %v2375 = vmul.f32 %v2374, %v2373
    %v2376 = vmul.f32 0.5, %v2375
    %v2377 = vsub.f32 1.5, %v2376
    %v2378 = vmul.f32 %v2373, %v2377
    %v2379 = vmul.f32 %v2088, %v2378
    %vm2380 = vcmp.eq.f32.partialorder %v2088, inf
    %v2381 = vsel %vm2380, %v2088, %v2379
    %vm2382 = vcmp.eq.f32.partialorder %v2088, 0.0
    %v2383 = vand.u32 %v2088, 2147483648
    %v2384 = vsel %vm2382, %v2383, %v2381
    %v2385 = vrsqrt.pop %v2089
    %v2386 = vmul.f32 %v2385, %v2089
    %v2387 = vmul.f32 %v2386, %v2385
    %v2388 = vmul.f32 0.5, %v2387
    %v2389 = vsub.f32 1.5, %v2388
    %v2390 = vmul.f32 %v2385, %v2389
    %v2391 = vmul.f32 %v2089, %v2390
    %vm2392 = vcmp.eq.f32.partialorder %v2089, inf
    %v2393 = vsel %vm2392, %v2089, %v2391
    %vm2394 = vcmp.eq.f32.partialorder %v2089, 0.0
    %v2395 = vand.u32 %v2089, 2147483648
    %v2396 = vsel %vm2394, %v2395, %v2393
    %v2397 = vrsqrt.pop %v2090
    %v2398 = vmul.f32 %v2397, %v2090
    %v2399 = vmul.f32 %v2398, %v2397
    %v2400 = vmul.f32 0.5, %v2399
    %v2401 = vsub.f32 1.5, %v2400
    %v2402 = vmul.f32 %v2397, %v2401
    %v2403 = vmul.f32 %v2090, %v2402
    %vm2404 = vcmp.eq.f32.partialorder %v2090, inf
    %v2405 = vsel %vm2404, %v2090, %v2403
    %vm2406 = vcmp.eq.f32.partialorder %v2090, 0.0
    %v2407 = vand.u32 %v2090, 2147483648
    %v2408 = vsel %vm2406, %v2407, %v2405
    %v2409 = vrsqrt.pop %v2091
    %v2410 = vmul.f32 %v2409, %v2091
    %v2411 = vmul.f32 %v2410, %v2409
    %v2412 = vmul.f32 0.5, %v2411
    %v2413 = vsub.f32 1.5, %v2412
    %v2414 = vmul.f32 %v2409, %v2413
    %v2415 = vmul.f32 %v2091, %v2414
    %vm2416 = vcmp.eq.f32.partialorder %v2091, inf
    %v2417 = vsel %vm2416, %v2091, %v2415
    %vm2418 = vcmp.eq.f32.partialorder %v2091, 0.0
    %v2419 = vand.u32 %v2091, 2147483648
    %v2420 = vsel %vm2418, %v2419, %v2417
    %v2421 = vrsqrt.pop %v2092
    %v2422 = vmul.f32 %v2421, %v2092
    %v2423 = vmul.f32 %v2422, %v2421
    %v2424 = vmul.f32 0.5, %v2423
    %v2425 = vsub.f32 1.5, %v2424
    %v2426 = vmul.f32 %v2421, %v2425
    %v2427 = vmul.f32 %v2092, %v2426
    %vm2428 = vcmp.eq.f32.partialorder %v2092, inf
    %v2429 = vsel %vm2428, %v2092, %v2427
    %vm2430 = vcmp.eq.f32.partialorder %v2092, 0.0
    %v2431 = vand.u32 %v2092, 2147483648
    %v2432 = vsel %vm2430, %v2431, %v2429
    %v2433 = vrsqrt.pop %v2093
    %v2434 = vmul.f32 %v2433, %v2093
    %v2435 = vmul.f32 %v2434, %v2433
    %v2436 = vmul.f32 0.5, %v2435
    %v2437 = vsub.f32 1.5, %v2436
    %v2438 = vmul.f32 %v2433, %v2437
    %v2439 = vmul.f32 %v2093, %v2438
    %vm2440 = vcmp.eq.f32.partialorder %v2093, inf
    %v2441 = vsel %vm2440, %v2093, %v2439
    %vm2442 = vcmp.eq.f32.partialorder %v2093, 0.0
    %v2443 = vand.u32 %v2093, 2147483648
    %v2444 = vsel %vm2442, %v2443, %v2441
    %v2445 = vrsqrt.pop %v2094
    %v2446 = vmul.f32 %v2445, %v2094
    %v2447 = vmul.f32 %v2446, %v2445
    %v2448 = vmul.f32 0.5, %v2447
    %v2449 = vsub.f32 1.5, %v2448
    %v2450 = vmul.f32 %v2445, %v2449
    %v2451 = vmul.f32 %v2094, %v2450
    %vm2452 = vcmp.eq.f32.partialorder %v2094, inf
    %v2453 = vsel %vm2452, %v2094, %v2451
    %vm2454 = vcmp.eq.f32.partialorder %v2094, 0.0
    %v2455 = vand.u32 %v2094, 2147483648
    %v2456 = vsel %vm2454, %v2455, %v2453
    %v2457 = vrsqrt.pop %v2095
    %v2458 = vmul.f32 %v2457, %v2095
    %v2459 = vmul.f32 %v2458, %v2457
    %v2460 = vmul.f32 0.5, %v2459
    %v2461 = vsub.f32 1.5, %v2460
    %v2462 = vmul.f32 %v2457, %v2461
    %v2463 = vmul.f32 %v2095, %v2462
    %vm2464 = vcmp.eq.f32.partialorder %v2095, inf
    %v2465 = vsel %vm2464, %v2095, %v2463
    %vm2466 = vcmp.eq.f32.partialorder %v2095, 0.0
    %v2467 = vand.u32 %v2095, 2147483648
    %v2468 = vsel %vm2466, %v2467, %v2465
    %v2469 = vrsqrt.pop %v2096
    %v2470 = vmul.f32 %v2469, %v2096
    %v2471 = vmul.f32 %v2470, %v2469
    %v2472 = vmul.f32 0.5, %v2471
    %v2473 = vsub.f32 1.5, %v2472
    %v2474 = vmul.f32 %v2469, %v2473
    %v2475 = vmul.f32 %v2096, %v2474
    %vm2476 = vcmp.eq.f32.partialorder %v2096, inf
    %v2477 = vsel %vm2476, %v2096, %v2475
    %vm2478 = vcmp.eq.f32.partialorder %v2096, 0.0
    %v2479 = vand.u32 %v2096, 2147483648
    %v2480 = vsel %vm2478, %v2479, %v2477
    %v2481 = vsub.f32 0.0, %v2108
    %v2482 = vsub.f32 0.0, %v2120
    %v2483 = vsub.f32 0.0, %v2132
    %v2484 = vsub.f32 0.0, %v2144
    %v2485 = vsub.f32 0.0, %v2156
    %v2486 = vsub.f32 0.0, %v2168
    %v2487 = vsub.f32 0.0, %v2180
    %v2488 = vsub.f32 0.0, %v2192
    %v2489 = vsub.f32 0.0, %v2204
    %v2490 = vsub.f32 0.0, %v2216
    %v2491 = vsub.f32 0.0, %v2228
    %v2492 = vsub.f32 0.0, %v2240
    %v2493 = vsub.f32 0.0, %v2252
    %v2494 = vsub.f32 0.0, %v2264
    %v2495 = vsub.f32 0.0, %v2276
    %v2496 = vsub.f32 0.0, %v2288
    %v2497 = vsub.f32 0.0, %v2300
    %v2498 = vsub.f32 0.0, %v2312
    %v2499 = vsub.f32 0.0, %v2324
    %v2500 = vsub.f32 0.0, %v2336
    %v2501 = vsub.f32 0.0, %v2348
    %v2502 = vsub.f32 0.0, %v2360
    %v2503 = vsub.f32 0.0, %v2372
    %v2504 = vsub.f32 0.0, %v2384
    %v2505 = vsub.f32 0.0, %v2396
    %v2506 = vsub.f32 0.0, %v2408
    %v2507 = vsub.f32 0.0, %v2420
    %v2508 = vsub.f32 0.0, %v2432
    %v2509 = vsub.f32 0.0, %v2444
    %v2510 = vsub.f32 0.0, %v2456
    %v2511 = vsub.f32 0.0, %v2468
    %v2512 = vsub.f32 0.0, %v2480
    %v2513 = vld [vmem:[%s47] sm:$0xff]
    %v2514 = vld [vmem:[%s47 + $0x8] sm:$0xff]
    %v2517 = vperm.slane %v2513, 0
    %v2518 = vperm.slane %v2513, 1
    %v2519 = vperm.slane %v2513, 2
    %v2520 = vperm.slane %v2513, 3
    %v2521 = vperm.slane %v2513, 4
    %v2522 = vperm.slane %v2513, 5
    %v2523 = vperm.slane %v2513, 6
    %v2524 = vperm.slane %v2513, 7
    %v2525 = vperm.slane %v2514, 0
    %v2526 = vperm.slane %v2514, 1
    %v2527 = vperm.slane %v2514, 2
    %v2528 = vperm.slane %v2514, 3
    %v2529 = vperm.slane %v2514, 4
    %v2530 = vperm.slane %v2514, 5
    %v2531 = vperm.slane %v2514, 6
    %v2532 = vperm.slane %v2514, 7
    %v2549 = vmul.f32 %v2481, %v2517
    %v2550 = vmul.f32 %v2482, %v2518
    %v2551 = vmul.f32 %v2483, %v2519
    %v2552 = vmul.f32 %v2484, %v2520
    %v2553 = vmul.f32 %v2485, %v2521
    %v2554 = vmul.f32 %v2486, %v2522
    %v2555 = vmul.f32 %v2487, %v2523
    %v2556 = vmul.f32 %v2488, %v2524
    %v2557 = vmul.f32 %v2489, %v2525
    %v2558 = vmul.f32 %v2490, %v2526
    %v2559 = vmul.f32 %v2491, %v2527
    %v2560 = vmul.f32 %v2492, %v2528
    %v2561 = vmul.f32 %v2493, %v2529
    %v2562 = vmul.f32 %v2494, %v2530
    %v2563 = vmul.f32 %v2495, %v2531
    %v2564 = vmul.f32 %v2496, %v2532
    %v2565 = vmul.f32 %v2497, %v2517
    %v2566 = vmul.f32 %v2498, %v2518
    %v2567 = vmul.f32 %v2499, %v2519
    %v2568 = vmul.f32 %v2500, %v2520
    %v2569 = vmul.f32 %v2501, %v2521
    %v2570 = vmul.f32 %v2502, %v2522
    %v2571 = vmul.f32 %v2503, %v2523
    %v2572 = vmul.f32 %v2504, %v2524
    %v2573 = vmul.f32 %v2505, %v2525
    %v2574 = vmul.f32 %v2506, %v2526
    %v2575 = vmul.f32 %v2507, %v2527
    %v2576 = vmul.f32 %v2508, %v2528
    %v2577 = vmul.f32 %v2509, %v2529
    %v2578 = vmul.f32 %v2510, %v2530
    %v2579 = vmul.f32 %v2511, %v2531
    %v2580 = vmul.f32 %v2512, %v2532
    %v2581 = vmul.f32 %v2549, 1.442695
    %v2582 = vpow.pop %v2581
    %v2583 = vmul.f32 %v2550, 1.442695
    %v2584 = vpow.pop %v2583
    %v2585 = vmul.f32 %v2551, 1.442695
    %v2586 = vpow.pop %v2585
    %v2587 = vmul.f32 %v2552, 1.442695
    %v2588 = vpow.pop %v2587
    %v2589 = vmul.f32 %v2553, 1.442695
    %v2590 = vpow.pop %v2589
    %v2591 = vmul.f32 %v2554, 1.442695
    %v2592 = vpow.pop %v2591
    %v2593 = vmul.f32 %v2555, 1.442695
    %v2594 = vpow.pop %v2593
    %v2595 = vmul.f32 %v2556, 1.442695
    %v2596 = vpow.pop %v2595
    %v2597 = vmul.f32 %v2557, 1.442695
    %v2598 = vpow.pop %v2597
    %v2599 = vmul.f32 %v2558, 1.442695
    %v2600 = vpow.pop %v2599
    %v2601 = vmul.f32 %v2559, 1.442695
    %v2602 = vpow.pop %v2601
    %v2603 = vmul.f32 %v2560, 1.442695
    %v2604 = vpow.pop %v2603
    %v2605 = vmul.f32 %v2561, 1.442695
    %v2606 = vpow.pop %v2605
    %v2607 = vmul.f32 %v2562, 1.442695
    %v2608 = vpow.pop %v2607
    %v2609 = vmul.f32 %v2563, 1.442695
    %v2610 = vpow.pop %v2609
    %v2611 = vmul.f32 %v2564, 1.442695
    %v2612 = vpow.pop %v2611
    %v2613 = vmul.f32 %v2565, 1.442695
    %v2614 = vpow.pop %v2613
    %v2615 = vmul.f32 %v2566, 1.442695
    %v2616 = vpow.pop %v2615
    %v2617 = vmul.f32 %v2567, 1.442695
    %v2618 = vpow.pop %v2617
    %v2619 = vmul.f32 %v2568, 1.442695
    %v2620 = vpow.pop %v2619
    %v2621 = vmul.f32 %v2569, 1.442695
    %v2622 = vpow.pop %v2621
    %v2623 = vmul.f32 %v2570, 1.442695
    %v2624 = vpow.pop %v2623
    %v2625 = vmul.f32 %v2571, 1.442695
    %v2626 = vpow.pop %v2625
    %v2627 = vmul.f32 %v2572, 1.442695
    %v2628 = vpow.pop %v2627
    %v2629 = vmul.f32 %v2573, 1.442695
    %v2630 = vpow.pop %v2629
    %v2631 = vmul.f32 %v2574, 1.442695
    %v2632 = vpow.pop %v2631
    %v2633 = vmul.f32 %v2575, 1.442695
    %v2634 = vpow.pop %v2633
    %v2635 = vmul.f32 %v2576, 1.442695
    %v2636 = vpow.pop %v2635
    %v2637 = vmul.f32 %v2577, 1.442695
    %v2638 = vpow.pop %v2637
    %v2639 = vmul.f32 %v2578, 1.442695
    %v2640 = vpow.pop %v2639
    %v2641 = vmul.f32 %v2579, 1.442695
    %v2642 = vpow.pop %v2641
    %v2643 = vmul.f32 %v2580, 1.442695
    %v2644 = vpow.pop %v2643
    %v2645 = vld [vmem:[%s49] sm:$0xff]
    %v2646 = vld [vmem:[%s49 + $0x8] sm:$0xff]
    %v2649 = vperm.slane %v2645, 0
    %v2650 = vperm.slane %v2645, 1
    %v2651 = vperm.slane %v2645, 2
    %v2652 = vperm.slane %v2645, 3
    %v2653 = vperm.slane %v2645, 4
    %v2654 = vperm.slane %v2645, 5
    %v2655 = vperm.slane %v2645, 6
    %v2656 = vperm.slane %v2645, 7
    %v2657 = vperm.slane %v2646, 0
    %v2658 = vperm.slane %v2646, 1
    %v2659 = vperm.slane %v2646, 2
    %v2660 = vperm.slane %v2646, 3
    %v2661 = vperm.slane %v2646, 4
    %v2662 = vperm.slane %v2646, 5
    %v2663 = vperm.slane %v2646, 6
    %v2664 = vperm.slane %v2646, 7
    %v2681 = vmul.f32 %v1010, %v2649
    %v2682 = vmul.f32 %v1033, %v2650
    %v2683 = vmul.f32 %v1056, %v2651
    %v2684 = vmul.f32 %v1079, %v2652
    %v2685 = vmul.f32 %v1102, %v2653
    %v2686 = vmul.f32 %v1125, %v2654
    %v2687 = vmul.f32 %v1148, %v2655
    %v2688 = vmul.f32 %v1171, %v2656
    %v2689 = vmul.f32 %v1194, %v2657
    %v2690 = vmul.f32 %v1217, %v2658
    %v2691 = vmul.f32 %v1240, %v2659
    %v2692 = vmul.f32 %v1263, %v2660
    %v2693 = vmul.f32 %v1286, %v2661
    %v2694 = vmul.f32 %v1309, %v2662
    %v2695 = vmul.f32 %v1332, %v2663
    %v2696 = vmul.f32 %v1355, %v2664
    %v2697 = vmul.f32 %v1013, %v2649
    %v2698 = vmul.f32 %v1036, %v2650
    %v2699 = vmul.f32 %v1059, %v2651
    %v2700 = vmul.f32 %v1082, %v2652
    %v2701 = vmul.f32 %v1105, %v2653
    %v2702 = vmul.f32 %v1128, %v2654
    %v2703 = vmul.f32 %v1151, %v2655
    %v2704 = vmul.f32 %v1174, %v2656
    %v2705 = vmul.f32 %v1197, %v2657
    %v2706 = vmul.f32 %v1220, %v2658
    %v2707 = vmul.f32 %v1243, %v2659
    %v2708 = vmul.f32 %v1266, %v2660
    %v2709 = vmul.f32 %v1289, %v2661
    %v2710 = vmul.f32 %v1312, %v2662
    %v2711 = vmul.f32 %v1335, %v2663
    %v2712 = vmul.f32 %v1358, %v2664
    %2713 = vmatpush.msra.mxu0 %v549
    %2714 = vmatpush.msra.mxu0 %v548
    %2715 = vmatpush.msra.mxu0 %v547
    %2716 = vmatpush.msra.mxu0 %v546
    %2717 = vmatpush.msra.mxu0 %v545
    %2718 = vmatpush.msra.mxu0 %v544
    %2719 = vmatpush.msra.mxu0 %v543
    %2720 = vmatpush.msra.mxu0 %v542
    %2721 = vmatpush.msra.mxu0 %v541
    %2722 = vmatpush.msra.mxu0 %v540
    %2723 = vmatpush.msra.mxu0 %v539
    %2724 = vmatpush.msra.mxu0 %v538
    %2725 = vmatpush.msra.mxu0 %v537
    %2726 = vmatpush.msra.mxu0 %v536
    %2727 = vmatpush.msra.mxu0 %v535
    %2728 = vmatpush.msra.mxu0 %v534
    %2729 = vmatmul.f32.gmra.mxu0 %v2681
    %v2730 = vpop.f32.mrf.mxu0
    %v2731 = vadd.f32 0.0, %v2730
    %2732 = vmatmul.f32.gmra.mxu0 %v2697
    %v2733 = vpop.f32.mrf.mxu0
    %v2734 = vadd.f32 0.0, %v2733
    %2735 = vdwg.mxu0
    %2736 = vmatpush.msra.mxu0 %v565
    %2737 = vmatpush.msra.mxu0 %v564
    %2738 = vmatpush.msra.mxu0 %v563
    %2739 = vmatpush.msra.mxu0 %v562
    %2740 = vmatpush.msra.mxu0 %v561
    %2741 = vmatpush.msra.mxu0 %v560
    %2742 = vmatpush.msra.mxu0 %v559
    %2743 = vmatpush.msra.mxu0 %v558
    %2744 = vmatpush.msra.mxu0 %v557
    %2745 = vmatpush.msra.mxu0 %v556
    %2746 = vmatpush.msra.mxu0 %v555
    %2747 = vmatpush.msra.mxu0 %v554
    %2748 = vmatpush.msra.mxu0 %v553
    %2749 = vmatpush.msra.mxu0 %v552
    %2750 = vmatpush.msra.mxu0 %v551
    %2751 = vmatpush.msra.mxu0 %v550
    %2752 = vmatmul.f32.gmra.mxu0 %v2682
    %v2753 = vpop.f32.mrf.mxu0
    %v2754 = vadd.f32 %v2731, %v2753
    %2755 = vmatmul.f32.gmra.mxu0 %v2698
    %v2756 = vpop.f32.mrf.mxu0
    %v2757 = vadd.f32 %v2734, %v2756
    %2758 = vdwg.mxu0
    %2759 = vmatpush.msra.mxu0 %v581
    %2760 = vmatpush.msra.mxu0 %v580
    %2761 = vmatpush.msra.mxu0 %v579
    %2762 = vmatpush.msra.mxu0 %v578
    %2763 = vmatpush.msra.mxu0 %v577
    %2764 = vmatpush.msra.mxu0 %v576
    %2765 = vmatpush.msra.mxu0 %v575
    %2766 = vmatpush.msra.mxu0 %v574
    %2767 = vmatpush.msra.mxu0 %v573
    %2768 = vmatpush.msra.mxu0 %v572
    %2769 = vmatpush.msra.mxu0 %v571
    %2770 = vmatpush.msra.mxu0 %v570
    %2771 = vmatpush.msra.mxu0 %v569
    %2772 = vmatpush.msra.mxu0 %v568
    %2773 = vmatpush.msra.mxu0 %v567
    %2774 = vmatpush.msra.mxu0 %v566
    %2775 = vmatmul.f32.gmra.mxu0 %v2683
    %v2776 = vpop.f32.mrf.mxu0
    %v2777 = vadd.f32 %v2754, %v2776
    %2778 = vmatmul.f32.gmra.mxu0 %v2699
    %v2779 = vpop.f32.mrf.mxu0
    %v2780 = vadd.f32 %v2757, %v2779
    %2781 = vdwg.mxu0
    %2782 = vmatpush.msra.mxu0 %v597
    %2783 = vmatpush.msra.mxu0 %v596
    %2784 = vmatpush.msra.mxu0 %v595
    %2785 = vmatpush.msra.mxu0 %v594
    %2786 = vmatpush.msra.mxu0 %v593
    %2787 = vmatpush.msra.mxu0 %v592
    %2788 = vmatpush.msra.mxu0 %v591
    %2789 = vmatpush.msra.mxu0 %v590
    %2790 = vmatpush.msra.mxu0 %v589
    %2791 = vmatpush.msra.mxu0 %v588
    %2792 = vmatpush.msra.mxu0 %v587
    %2793 = vmatpush.msra.mxu0 %v586
    %2794 = vmatpush.msra.mxu0 %v585
    %2795 = vmatpush.msra.mxu0 %v584
    %2796 = vmatpush.msra.mxu0 %v583
    %2797 = vmatpush.msra.mxu0 %v582
    %2798 = vmatmul.f32.gmra.mxu0 %v2684
    %v2799 = vpop.f32.mrf.mxu0
    %v2800 = vadd.f32 %v2777, %v2799
    %2801 = vmatmul.f32.gmra.mxu0 %v2700
    %v2802 = vpop.f32.mrf.mxu0
    %v2803 = vadd.f32 %v2780, %v2802
    %2804 = vdwg.mxu0
    %2805 = vmatpush.msra.mxu0 %v613
    %2806 = vmatpush.msra.mxu0 %v612
    %2807 = vmatpush.msra.mxu0 %v611
    %2808 = vmatpush.msra.mxu0 %v610
    %2809 = vmatpush.msra.mxu0 %v609
    %2810 = vmatpush.msra.mxu0 %v608
    %2811 = vmatpush.msra.mxu0 %v607
    %2812 = vmatpush.msra.mxu0 %v606
    %2813 = vmatpush.msra.mxu0 %v605
    %2814 = vmatpush.msra.mxu0 %v604
    %2815 = vmatpush.msra.mxu0 %v603
    %2816 = vmatpush.msra.mxu0 %v602
    %2817 = vmatpush.msra.mxu0 %v601
    %2818 = vmatpush.msra.mxu0 %v600
    %2819 = vmatpush.msra.mxu0 %v599
    %2820 = vmatpush.msra.mxu0 %v598
    %2821 = vmatmul.f32.gmra.mxu0 %v2685
    %v2822 = vpop.f32.mrf.mxu0
    %v2823 = vadd.f32 %v2800, %v2822
    %2824 = vmatmul.f32.gmra.mxu0 %v2701
    %v2825 = vpop.f32.mrf.mxu0
    %v2826 = vadd.f32 %v2803, %v2825
    %2827 = vdwg.mxu0
    %2828 = vmatpush.msra.mxu0 %v629
    %2829 = vmatpush.msra.mxu0 %v628
    %2830 = vmatpush.msra.mxu0 %v627
    %2831 = vmatpush.msra.mxu0 %v626
    %2832 = vmatpush.msra.mxu0 %v625
    %2833 = vmatpush.msra.mxu0 %v624
    %2834 = vmatpush.msra.mxu0 %v623
    %2835 = vmatpush.msra.mxu0 %v622
    %2836 = vmatpush.msra.mxu0 %v621
    %2837 = vmatpush.msra.mxu0 %v620
    %2838 = vmatpush.msra.mxu0 %v619
    %2839 = vmatpush.msra.mxu0 %v618
    %2840 = vmatpush.msra.mxu0 %v617
    %2841 = vmatpush.msra.mxu0 %v616
    %2842 = vmatpush.msra.mxu0 %v615
    %2843 = vmatpush.msra.mxu0 %v614
    %2844 = vmatmul.f32.gmra.mxu0 %v2686
    %v2845 = vpop.f32.mrf.mxu0
    %v2846 = vadd.f32 %v2823, %v2845
    %2847 = vmatmul.f32.gmra.mxu0 %v2702
    %v2848 = vpop.f32.mrf.mxu0
    %v2849 = vadd.f32 %v2826, %v2848
    %2850 = vdwg.mxu0
    %2851 = vmatpush.msra.mxu0 %v645
    %2852 = vmatpush.msra.mxu0 %v644
    %2853 = vmatpush.msra.mxu0 %v643
    %2854 = vmatpush.msra.mxu0 %v642
    %2855 = vmatpush.msra.mxu0 %v641
    %2856 = vmatpush.msra.mxu0 %v640
    %2857 = vmatpush.msra.mxu0 %v639
    %2858 = vmatpush.msra.mxu0 %v638
    %2859 = vmatpush.msra.mxu0 %v637
    %2860 = vmatpush.msra.mxu0 %v636
    %2861 = vmatpush.msra.mxu0 %v635
    %2862 = vmatpush.msra.mxu0 %v634
    %2863 = vmatpush.msra.mxu0 %v633
    %2864 = vmatpush.msra.mxu0 %v632
    %2865 = vmatpush.msra.mxu0 %v631
    %2866 = vmatpush.msra.mxu0 %v630
    %2867 = vmatmul.f32.gmra.mxu0 %v2687
    %v2868 = vpop.f32.mrf.mxu0
    %v2869 = vadd.f32 %v2846, %v2868
    %2870 = vmatmul.f32.gmra.mxu0 %v2703
    %v2871 = vpop.f32.mrf.mxu0
    %v2872 = vadd.f32 %v2849, %v2871
    %2873 = vdwg.mxu0
    %2874 = vmatpush.msra.mxu0 %v661
    %2875 = vmatpush.msra.mxu0 %v660
    %2876 = vmatpush.msra.mxu0 %v659
    %2877 = vmatpush.msra.mxu0 %v658
    %2878 = vmatpush.msra.mxu0 %v657
    %2879 = vmatpush.msra.mxu0 %v656
    %2880 = vmatpush.msra.mxu0 %v655
    %2881 = vmatpush.msra.mxu0 %v654
    %2882 = vmatpush.msra.mxu0 %v653
    %2883 = vmatpush.msra.mxu0 %v652
    %2884 = vmatpush.msra.mxu0 %v651
    %2885 = vmatpush.msra.mxu0 %v650
    %2886 = vmatpush.msra.mxu0 %v649
    %2887 = vmatpush.msra.mxu0 %v648
    %2888 = vmatpush.msra.mxu0 %v647
    %2889 = vmatpush.msra.mxu0 %v646
    %2890 = vmatmul.f32.gmra.mxu0 %v2688
    %v2891 = vpop.f32.mrf.mxu0
    %v2892 = vadd.f32 %v2869, %v2891
    %2893 = vmatmul.f32.gmra.mxu0 %v2704
    %v2894 = vpop.f32.mrf.mxu0
    %v2895 = vadd.f32 %v2872, %v2894
    %2896 = vdwg.mxu0
    %2897 = vmatpush.msra.mxu0 %v677
    %2898 = vmatpush.msra.mxu0 %v676
    %2899 = vmatpush.msra.mxu0 %v675
    %2900 = vmatpush.msra.mxu0 %v674
    %2901 = vmatpush.msra.mxu0 %v673
    %2902 = vmatpush.msra.mxu0 %v672
    %2903 = vmatpush.msra.mxu0 %v671
    %2904 = vmatpush.msra.mxu0 %v670
    %2905 = vmatpush.msra.mxu0 %v669
    %2906 = vmatpush.msra.mxu0 %v668
    %2907 = vmatpush.msra.mxu0 %v667
    %2908 = vmatpush.msra.mxu0 %v666
    %2909 = vmatpush.msra.mxu0 %v665
    %2910 = vmatpush.msra.mxu0 %v664
    %2911 = vmatpush.msra.mxu0 %v663
    %2912 = vmatpush.msra.mxu0 %v662
    %2913 = vmatmul.f32.gmra.mxu0 %v2689
    %v2914 = vpop.f32.mrf.mxu0
    %v2915 = vadd.f32 %v2892, %v2914
    %2916 = vmatmul.f32.gmra.mxu0 %v2705
    %v2917 = vpop.f32.mrf.mxu0
    %v2918 = vadd.f32 %v2895, %v2917
    %2919 = vdwg.mxu0
    %2920 = vmatpush.msra.mxu0 %v693
    %2921 = vmatpush.msra.mxu0 %v692
    %2922 = vmatpush.msra.mxu0 %v691
    %2923 = vmatpush.msra.mxu0 %v690
    %2924 = vmatpush.msra.mxu0 %v689
    %2925 = vmatpush.msra.mxu0 %v688
    %2926 = vmatpush.msra.mxu0 %v687
    %2927 = vmatpush.msra.mxu0 %v686
    %2928 = vmatpush.msra.mxu0 %v685
    %2929 = vmatpush.msra.mxu0 %v684
    %2930 = vmatpush.msra.mxu0 %v683
    %2931 = vmatpush.msra.mxu0 %v682
    %2932 = vmatpush.msra.mxu0 %v681
    %2933 = vmatpush.msra.mxu0 %v680
    %2934 = vmatpush.msra.mxu0 %v679
    %2935 = vmatpush.msra.mxu0 %v678
    %2936 = vmatmul.f32.gmra.mxu0 %v2690
    %v2937 = vpop.f32.mrf.mxu0
    %v2938 = vadd.f32 %v2915, %v2937
    %2939 = vmatmul.f32.gmra.mxu0 %v2706
    %v2940 = vpop.f32.mrf.mxu0
    %v2941 = vadd.f32 %v2918, %v2940
    %2942 = vdwg.mxu0
    %2943 = vmatpush.msra.mxu0 %v709
    %2944 = vmatpush.msra.mxu0 %v708
    %2945 = vmatpush.msra.mxu0 %v707
    %2946 = vmatpush.msra.mxu0 %v706
    %2947 = vmatpush.msra.mxu0 %v705
    %2948 = vmatpush.msra.mxu0 %v704
    %2949 = vmatpush.msra.mxu0 %v703
    %2950 = vmatpush.msra.mxu0 %v702
    %2951 = vmatpush.msra.mxu0 %v701
    %2952 = vmatpush.msra.mxu0 %v700
    %2953 = vmatpush.msra.mxu0 %v699
    %2954 = vmatpush.msra.mxu0 %v698
    %2955 = vmatpush.msra.mxu0 %v697
    %2956 = vmatpush.msra.mxu0 %v696
    %2957 = vmatpush.msra.mxu0 %v695
    %2958 = vmatpush.msra.mxu0 %v694
    %2959 = vmatmul.f32.gmra.mxu0 %v2691
    %v2960 = vpop.f32.mrf.mxu0
    %v2961 = vadd.f32 %v2938, %v2960
    %2962 = vmatmul.f32.gmra.mxu0 %v2707
    %v2963 = vpop.f32.mrf.mxu0
    %v2964 = vadd.f32 %v2941, %v2963
    %2965 = vdwg.mxu0
    %2966 = vmatpush.msra.mxu0 %v725
    %2967 = vmatpush.msra.mxu0 %v724
    %2968 = vmatpush.msra.mxu0 %v723
    %2969 = vmatpush.msra.mxu0 %v722
    %2970 = vmatpush.msra.mxu0 %v721
    %2971 = vmatpush.msra.mxu0 %v720
    %2972 = vmatpush.msra.mxu0 %v719
    %2973 = vmatpush.msra.mxu0 %v718
    %2974 = vmatpush.msra.mxu0 %v717
    %2975 = vmatpush.msra.mxu0 %v716
    %2976 = vmatpush.msra.mxu0 %v715
    %2977 = vmatpush.msra.mxu0 %v714
    %2978 = vmatpush.msra.mxu0 %v713
    %2979 = vmatpush.msra.mxu0 %v712
    %2980 = vmatpush.msra.mxu0 %v711
    %2981 = vmatpush.msra.mxu0 %v710
    %2982 = vmatmul.f32.gmra.mxu0 %v2692
    %v2983 = vpop.f32.mrf.mxu0
    %v2984 = vadd.f32 %v2961, %v2983
    %2985 = vmatmul.f32.gmra.mxu0 %v2708
    %v2986 = vpop.f32.mrf.mxu0
    %v2987 = vadd.f32 %v2964, %v2986
    %2988 = vdwg.mxu0
    %2989 = vmatpush.msra.mxu0 %v741
    %2990 = vmatpush.msra.mxu0 %v740
    %2991 = vmatpush.msra.mxu0 %v739
    %2992 = vmatpush.msra.mxu0 %v738
    %2993 = vmatpush.msra.mxu0 %v737
    %2994 = vmatpush.msra.mxu0 %v736
    %2995 = vmatpush.msra.mxu0 %v735
    %2996 = vmatpush.msra.mxu0 %v734
    %2997 = vmatpush.msra.mxu0 %v733
    %2998 = vmatpush.msra.mxu0 %v732
    %2999 = vmatpush.msra.mxu0 %v731
    %3000 = vmatpush.msra.mxu0 %v730
    %3001 = vmatpush.msra.mxu0 %v729
    %3002 = vmatpush.msra.mxu0 %v728
    %3003 = vmatpush.msra.mxu0 %v727
    %3004 = vmatpush.msra.mxu0 %v726
    %3005 = vmatmul.f32.gmra.mxu0 %v2693
    %v3006 = vpop.f32.mrf.mxu0
    %v3007 = vadd.f32 %v2984, %v3006
    %3008 = vmatmul.f32.gmra.mxu0 %v2709
    %v3009 = vpop.f32.mrf.mxu0
    %v3010 = vadd.f32 %v2987, %v3009
    %3011 = vdwg.mxu0
    %3012 = vmatpush.msra.mxu0 %v757
    %3013 = vmatpush.msra.mxu0 %v756
    %3014 = vmatpush.msra.mxu0 %v755
    %3015 = vmatpush.msra.mxu0 %v754
    %3016 = vmatpush.msra.mxu0 %v753
    %3017 = vmatpush.msra.mxu0 %v752
    %3018 = vmatpush.msra.mxu0 %v751
    %3019 = vmatpush.msra.mxu0 %v750
    %3020 = vmatpush.msra.mxu0 %v749
    %3021 = vmatpush.msra.mxu0 %v748
    %3022 = vmatpush.msra.mxu0 %v747
    %3023 = vmatpush.msra.mxu0 %v746
    %3024 = vmatpush.msra.mxu0 %v745
    %3025 = vmatpush.msra.mxu0 %v744
    %3026 = vmatpush.msra.mxu0 %v743
    %3027 = vmatpush.msra.mxu0 %v742
    %3028 = vmatmul.f32.gmra.mxu0 %v2694
    %v3029 = vpop.f32.mrf.mxu0
    %v3030 = vadd.f32 %v3007, %v3029
    %3031 = vmatmul.f32.gmra.mxu0 %v2710
    %v3032 = vpop.f32.mrf.mxu0
    %v3033 = vadd.f32 %v3010, %v3032
    %3034 = vdwg.mxu0
    %3035 = vmatpush.msra.mxu0 %v773
    %3036 = vmatpush.msra.mxu0 %v772
    %3037 = vmatpush.msra.mxu0 %v771
    %3038 = vmatpush.msra.mxu0 %v770
    %3039 = vmatpush.msra.mxu0 %v769
    %3040 = vmatpush.msra.mxu0 %v768
    %3041 = vmatpush.msra.mxu0 %v767
    %3042 = vmatpush.msra.mxu0 %v766
    %3043 = vmatpush.msra.mxu0 %v765
    %3044 = vmatpush.msra.mxu0 %v764
    %3045 = vmatpush.msra.mxu0 %v763
    %3046 = vmatpush.msra.mxu0 %v762
    %3047 = vmatpush.msra.mxu0 %v761
    %3048 = vmatpush.msra.mxu0 %v760
    %3049 = vmatpush.msra.mxu0 %v759
    %3050 = vmatpush.msra.mxu0 %v758
    %3051 = vmatmul.f32.gmra.mxu0 %v2695
    %v3052 = vpop.f32.mrf.mxu0
    %v3053 = vadd.f32 %v3030, %v3052
    %3054 = vmatmul.f32.gmra.mxu0 %v2711
    %v3055 = vpop.f32.mrf.mxu0
    %v3056 = vadd.f32 %v3033, %v3055
    %3057 = vdwg.mxu0
    %3058 = vmatpush.msra.mxu0 %v789
    %3059 = vmatpush.msra.mxu0 %v788
    %3060 = vmatpush.msra.mxu0 %v787
    %3061 = vmatpush.msra.mxu0 %v786
    %3062 = vmatpush.msra.mxu0 %v785
    %3063 = vmatpush.msra.mxu0 %v784
    %3064 = vmatpush.msra.mxu0 %v783
    %3065 = vmatpush.msra.mxu0 %v782
    %3066 = vmatpush.msra.mxu0 %v781
    %3067 = vmatpush.msra.mxu0 %v780
    %3068 = vmatpush.msra.mxu0 %v779
    %3069 = vmatpush.msra.mxu0 %v778
    %3070 = vmatpush.msra.mxu0 %v777
    %3071 = vmatpush.msra.mxu0 %v776
    %3072 = vmatpush.msra.mxu0 %v775
    %3073 = vmatpush.msra.mxu0 %v774
    %3074 = vmatmul.f32.gmra.mxu0 %v2696
    %v3075 = vpop.f32.mrf.mxu0
    %v3076 = vadd.f32 %v3053, %v3075
    %3077 = vmatmul.f32.gmra.mxu0 %v2712
    %v3078 = vpop.f32.mrf.mxu0
    %v3079 = vadd.f32 %v3056, %v3078
    %3080 = vdwg.mxu0
    %vm3081 = vcmask 523264
    %v3083 = vsel %vm3081, %v3076, 0
    %v3086 = vsel %vm3081, %v3079, 0
    %3088 = vmatpush.msra.mxu0 0.0
    %3089 = vmatpush.msra.mxu0 0.0
    %3090 = vmatpush.msra.mxu0 0.0
    %3091 = vmatpush.msra.mxu0 0.0
    %3092 = vmatpush.msra.mxu0 0.0
    %3093 = vmatpush.msra.mxu0 0.0
    %3094 = vmatpush.msra.mxu0 0.0
    %3095 = vmatpush.msra.mxu0 0.0
    %3096 = vmatpush.msra.mxu0 %v902
    %3097 = vmatpush.msra.mxu0 %v886
    %3098 = vmatpush.msra.mxu0 %v870
    %3099 = vmatpush.msra.mxu0 %v854
    %3100 = vmatpush.msra.mxu0 %v838
    %3101 = vmatpush.msra.mxu0 %v822
    %3102 = vmatpush.msra.mxu0 %v806
    %3103 = vmatpush.msra.mxu0 %v790
    %3104 = vmatmul.f32.gmra.mxu0 %v3083
    %v3105 = vpop.f32.mrf.mxu0
    %v3106 = vadd.f32 0.0, %v3105
    %3107 = vmatmul.f32.gmra.mxu0 %v3086
    %v3108 = vpop.f32.mrf.mxu0
    %v3109 = vadd.f32 0.0, %v3108
    %3110 = vdwg.mxu0
    %3111 = vmatpush.msra.mxu0 0.0
    %3112 = vmatpush.msra.mxu0 0.0
    %3113 = vmatpush.msra.mxu0 0.0
    %3114 = vmatpush.msra.mxu0 0.0
    %3115 = vmatpush.msra.mxu0 0.0
    %3116 = vmatpush.msra.mxu0 0.0
    %3117 = vmatpush.msra.mxu0 0.0
    %3118 = vmatpush.msra.mxu0 0.0
    %3119 = vmatpush.msra.mxu0 %v903
    %3120 = vmatpush.msra.mxu0 %v887
    %3121 = vmatpush.msra.mxu0 %v871
    %3122 = vmatpush.msra.mxu0 %v855
    %3123 = vmatpush.msra.mxu0 %v839
    %3124 = vmatpush.msra.mxu0 %v823
    %3125 = vmatpush.msra.mxu0 %v807
    %3126 = vmatpush.msra.mxu0 %v791
    %3127 = vmatmul.f32.gmra.mxu0 %v3083
    %v3128 = vpop.f32.mrf.mxu0
    %v3129 = vadd.f32 0.0, %v3128
    %3130 = vmatmul.f32.gmra.mxu0 %v3086
    %v3131 = vpop.f32.mrf.mxu0
    %v3132 = vadd.f32 0.0, %v3131
    %3133 = vdwg.mxu0
    %3134 = vmatpush.msra.mxu0 0.0
    %3135 = vmatpush.msra.mxu0 0.0
    %3136 = vmatpush.msra.mxu0 0.0
    %3137 = vmatpush.msra.mxu0 0.0
    %3138 = vmatpush.msra.mxu0 0.0
    %3139 = vmatpush.msra.mxu0 0.0
    %3140 = vmatpush.msra.mxu0 0.0
    %3141 = vmatpush.msra.mxu0 0.0
    %3142 = vmatpush.msra.mxu0 %v904
    %3143 = vmatpush.msra.mxu0 %v888
    %3144 = vmatpush.msra.mxu0 %v872
    %3145 = vmatpush.msra.mxu0 %v856
    %3146 = vmatpush.msra.mxu0 %v840
    %3147 = vmatpush.msra.mxu0 %v824
    %3148 = vmatpush.msra.mxu0 %v808
    %3149 = vmatpush.msra.mxu0 %v792
    %3150 = vmatmul.f32.gmra.mxu0 %v3083
    %v3151 = vpop.f32.mrf.mxu0
    %v3152 = vadd.f32 0.0, %v3151
    %3153 = vmatmul.f32.gmra.mxu0 %v3086
    %v3154 = vpop.f32.mrf.mxu0
    %v3155 = vadd.f32 0.0, %v3154
    %3156 = vdwg.mxu0
    %3157 = vmatpush.msra.mxu0 0.0
    %3158 = vmatpush.msra.mxu0 0.0
    %3159 = vmatpush.msra.mxu0 0.0
    %3160 = vmatpush.msra.mxu0 0.0
    %3161 = vmatpush.msra.mxu0 0.0
    %3162 = vmatpush.msra.mxu0 0.0
    %3163 = vmatpush.msra.mxu0 0.0
    %3164 = vmatpush.msra.mxu0 0.0
    %3165 = vmatpush.msra.mxu0 %v905
    %3166 = vmatpush.msra.mxu0 %v889
    %3167 = vmatpush.msra.mxu0 %v873
    %3168 = vmatpush.msra.mxu0 %v857
    %3169 = vmatpush.msra.mxu0 %v841
    %3170 = vmatpush.msra.mxu0 %v825
    %3171 = vmatpush.msra.mxu0 %v809
    %3172 = vmatpush.msra.mxu0 %v793
    %3173 = vmatmul.f32.gmra.mxu0 %v3083
    %v3174 = vpop.f32.mrf.mxu0
    %v3175 = vadd.f32 0.0, %v3174
    %3176 = vmatmul.f32.gmra.mxu0 %v3086
    %v3177 = vpop.f32.mrf.mxu0
    %v3178 = vadd.f32 0.0, %v3177
    %3179 = vdwg.mxu0
    %3180 = vmatpush.msra.mxu0 0.0
    %3181 = vmatpush.msra.mxu0 0.0
    %3182 = vmatpush.msra.mxu0 0.0
    %3183 = vmatpush.msra.mxu0 0.0
    %3184 = vmatpush.msra.mxu0 0.0
    %3185 = vmatpush.msra.mxu0 0.0
    %3186 = vmatpush.msra.mxu0 0.0
    %3187 = vmatpush.msra.mxu0 0.0
    %3188 = vmatpush.msra.mxu0 %v906
    %3189 = vmatpush.msra.mxu0 %v890
    %3190 = vmatpush.msra.mxu0 %v874
    %3191 = vmatpush.msra.mxu0 %v858
    %3192 = vmatpush.msra.mxu0 %v842
    %3193 = vmatpush.msra.mxu0 %v826
    %3194 = vmatpush.msra.mxu0 %v810
    %3195 = vmatpush.msra.mxu0 %v794
    %3196 = vmatmul.f32.gmra.mxu0 %v3083
    %v3197 = vpop.f32.mrf.mxu0
    %v3198 = vadd.f32 0.0, %v3197
    %3199 = vmatmul.f32.gmra.mxu0 %v3086
    %v3200 = vpop.f32.mrf.mxu0
    %v3201 = vadd.f32 0.0, %v3200
    %3202 = vdwg.mxu0
    %3203 = vmatpush.msra.mxu0 0.0
    %3204 = vmatpush.msra.mxu0 0.0
    %3205 = vmatpush.msra.mxu0 0.0
    %3206 = vmatpush.msra.mxu0 0.0
    %3207 = vmatpush.msra.mxu0 0.0
    %3208 = vmatpush.msra.mxu0 0.0
    %3209 = vmatpush.msra.mxu0 0.0
    %3210 = vmatpush.msra.mxu0 0.0
    %3211 = vmatpush.msra.mxu0 %v907
    %3212 = vmatpush.msra.mxu0 %v891
    %3213 = vmatpush.msra.mxu0 %v875
    %3214 = vmatpush.msra.mxu0 %v859
    %3215 = vmatpush.msra.mxu0 %v843
    %3216 = vmatpush.msra.mxu0 %v827
    %3217 = vmatpush.msra.mxu0 %v811
    %3218 = vmatpush.msra.mxu0 %v795
    %3219 = vmatmul.f32.gmra.mxu0 %v3083
    %v3220 = vpop.f32.mrf.mxu0
    %v3221 = vadd.f32 0.0, %v3220
    %3222 = vmatmul.f32.gmra.mxu0 %v3086
    %v3223 = vpop.f32.mrf.mxu0
    %v3224 = vadd.f32 0.0, %v3223
    %3225 = vdwg.mxu0
    %3226 = vmatpush.msra.mxu0 0.0
    %3227 = vmatpush.msra.mxu0 0.0
    %3228 = vmatpush.msra.mxu0 0.0
    %3229 = vmatpush.msra.mxu0 0.0
    %3230 = vmatpush.msra.mxu0 0.0
    %3231 = vmatpush.msra.mxu0 0.0
    %3232 = vmatpush.msra.mxu0 0.0
    %3233 = vmatpush.msra.mxu0 0.0
    %3234 = vmatpush.msra.mxu0 %v908
    %3235 = vmatpush.msra.mxu0 %v892
    %3236 = vmatpush.msra.mxu0 %v876
    %3237 = vmatpush.msra.mxu0 %v860
    %3238 = vmatpush.msra.mxu0 %v844
    %3239 = vmatpush.msra.mxu0 %v828
    %3240 = vmatpush.msra.mxu0 %v812
    %3241 = vmatpush.msra.mxu0 %v796
    %3242 = vmatmul.f32.gmra.mxu0 %v3083
    %v3243 = vpop.f32.mrf.mxu0
    %v3244 = vadd.f32 0.0, %v3243
    %3245 = vmatmul.f32.gmra.mxu0 %v3086
    %v3246 = vpop.f32.mrf.mxu0
    %v3247 = vadd.f32 0.0, %v3246
    %3248 = vdwg.mxu0
    %3249 = vmatpush.msra.mxu0 0.0
    %3250 = vmatpush.msra.mxu0 0.0
    %3251 = vmatpush.msra.mxu0 0.0
    %3252 = vmatpush.msra.mxu0 0.0
    %3253 = vmatpush.msra.mxu0 0.0
    %3254 = vmatpush.msra.mxu0 0.0
    %3255 = vmatpush.msra.mxu0 0.0
    %3256 = vmatpush.msra.mxu0 0.0
    %3257 = vmatpush.msra.mxu0 %v909
    %3258 = vmatpush.msra.mxu0 %v893
    %3259 = vmatpush.msra.mxu0 %v877
    %3260 = vmatpush.msra.mxu0 %v861
    %3261 = vmatpush.msra.mxu0 %v845
    %3262 = vmatpush.msra.mxu0 %v829
    %3263 = vmatpush.msra.mxu0 %v813
    %3264 = vmatpush.msra.mxu0 %v797
    %3265 = vmatmul.f32.gmra.mxu0 %v3083
    %v3266 = vpop.f32.mrf.mxu0
    %v3267 = vadd.f32 0.0, %v3266
    %3268 = vmatmul.f32.gmra.mxu0 %v3086
    %v3269 = vpop.f32.mrf.mxu0
    %v3270 = vadd.f32 0.0, %v3269
    %3271 = vdwg.mxu0
    %3272 = vmatpush.msra.mxu0 0.0
    %3273 = vmatpush.msra.mxu0 0.0
    %3274 = vmatpush.msra.mxu0 0.0
    %3275 = vmatpush.msra.mxu0 0.0
    %3276 = vmatpush.msra.mxu0 0.0
    %3277 = vmatpush.msra.mxu0 0.0
    %3278 = vmatpush.msra.mxu0 0.0
    %3279 = vmatpush.msra.mxu0 0.0
    %3280 = vmatpush.msra.mxu0 %v910
    %3281 = vmatpush.msra.mxu0 %v894
    %3282 = vmatpush.msra.mxu0 %v878
    %3283 = vmatpush.msra.mxu0 %v862
    %3284 = vmatpush.msra.mxu0 %v846
    %3285 = vmatpush.msra.mxu0 %v830
    %3286 = vmatpush.msra.mxu0 %v814
    %3287 = vmatpush.msra.mxu0 %v798
    %3288 = vmatmul.f32.gmra.mxu0 %v3083
    %v3289 = vpop.f32.mrf.mxu0
    %v3290 = vadd.f32 0.0, %v3289
    %3291 = vmatmul.f32.gmra.mxu0 %v3086
    %v3292 = vpop.f32.mrf.mxu0
    %v3293 = vadd.f32 0.0, %v3292
    %3294 = vdwg.mxu0
    %3295 = vmatpush.msra.mxu0 0.0
    %3296 = vmatpush.msra.mxu0 0.0
    %3297 = vmatpush.msra.mxu0 0.0
    %3298 = vmatpush.msra.mxu0 0.0
    %3299 = vmatpush.msra.mxu0 0.0
    %3300 = vmatpush.msra.mxu0 0.0
    %3301 = vmatpush.msra.mxu0 0.0
    %3302 = vmatpush.msra.mxu0 0.0
    %3303 = vmatpush.msra.mxu0 %v911
    %3304 = vmatpush.msra.mxu0 %v895
    %3305 = vmatpush.msra.mxu0 %v879
    %3306 = vmatpush.msra.mxu0 %v863
    %3307 = vmatpush.msra.mxu0 %v847
    %3308 = vmatpush.msra.mxu0 %v831
    %3309 = vmatpush.msra.mxu0 %v815
    %3310 = vmatpush.msra.mxu0 %v799
    %3311 = vmatmul.f32.gmra.mxu0 %v3083
    %v3312 = vpop.f32.mrf.mxu0
    %v3313 = vadd.f32 0.0, %v3312
    %3314 = vmatmul.f32.gmra.mxu0 %v3086
    %v3315 = vpop.f32.mrf.mxu0
    %v3316 = vadd.f32 0.0, %v3315
    %3317 = vdwg.mxu0
    %3318 = vmatpush.msra.mxu0 0.0
    %3319 = vmatpush.msra.mxu0 0.0
    %3320 = vmatpush.msra.mxu0 0.0
    %3321 = vmatpush.msra.mxu0 0.0
    %3322 = vmatpush.msra.mxu0 0.0
    %3323 = vmatpush.msra.mxu0 0.0
    %3324 = vmatpush.msra.mxu0 0.0
    %3325 = vmatpush.msra.mxu0 0.0
    %3326 = vmatpush.msra.mxu0 %v912
    %3327 = vmatpush.msra.mxu0 %v896
    %3328 = vmatpush.msra.mxu0 %v880
    %3329 = vmatpush.msra.mxu0 %v864
    %3330 = vmatpush.msra.mxu0 %v848
    %3331 = vmatpush.msra.mxu0 %v832
    %3332 = vmatpush.msra.mxu0 %v816
    %3333 = vmatpush.msra.mxu0 %v800
    %3334 = vmatmul.f32.gmra.mxu0 %v3083
    %v3335 = vpop.f32.mrf.mxu0
    %v3336 = vadd.f32 0.0, %v3335
    %3337 = vmatmul.f32.gmra.mxu0 %v3086
    %v3338 = vpop.f32.mrf.mxu0
    %v3339 = vadd.f32 0.0, %v3338
    %3340 = vdwg.mxu0
    %3341 = vmatpush.msra.mxu0 0.0
    %3342 = vmatpush.msra.mxu0 0.0
    %3343 = vmatpush.msra.mxu0 0.0
    %3344 = vmatpush.msra.mxu0 0.0
    %3345 = vmatpush.msra.mxu0 0.0
    %3346 = vmatpush.msra.mxu0 0.0
    %3347 = vmatpush.msra.mxu0 0.0
    %3348 = vmatpush.msra.mxu0 0.0
    %3349 = vmatpush.msra.mxu0 %v913
    %3350 = vmatpush.msra.mxu0 %v897
    %3351 = vmatpush.msra.mxu0 %v881
    %3352 = vmatpush.msra.mxu0 %v865
    %3353 = vmatpush.msra.mxu0 %v849
    %3354 = vmatpush.msra.mxu0 %v833
    %3355 = vmatpush.msra.mxu0 %v817
    %3356 = vmatpush.msra.mxu0 %v801
    %3357 = vmatmul.f32.gmra.mxu0 %v3083
    %v3358 = vpop.f32.mrf.mxu0
    %v3359 = vadd.f32 0.0, %v3358
    %3360 = vmatmul.f32.gmra.mxu0 %v3086
    %v3361 = vpop.f32.mrf.mxu0
    %v3362 = vadd.f32 0.0, %v3361
    %3363 = vdwg.mxu0
    %3364 = vmatpush.msra.mxu0 0.0
    %3365 = vmatpush.msra.mxu0 0.0
    %3366 = vmatpush.msra.mxu0 0.0
    %3367 = vmatpush.msra.mxu0 0.0
    %3368 = vmatpush.msra.mxu0 0.0
    %3369 = vmatpush.msra.mxu0 0.0
    %3370 = vmatpush.msra.mxu0 0.0
    %3371 = vmatpush.msra.mxu0 0.0
    %3372 = vmatpush.msra.mxu0 %v914
    %3373 = vmatpush.msra.mxu0 %v898
    %3374 = vmatpush.msra.mxu0 %v882
    %3375 = vmatpush.msra.mxu0 %v866
    %3376 = vmatpush.msra.mxu0 %v850
    %3377 = vmatpush.msra.mxu0 %v834
    %3378 = vmatpush.msra.mxu0 %v818
    %3379 = vmatpush.msra.mxu0 %v802
    %3380 = vmatmul.f32.gmra.mxu0 %v3083
    %v3381 = vpop.f32.mrf.mxu0
    %v3382 = vadd.f32 0.0, %v3381
    %3383 = vmatmul.f32.gmra.mxu0 %v3086
    %v3384 = vpop.f32.mrf.mxu0
    %v3385 = vadd.f32 0.0, %v3384
    %3386 = vdwg.mxu0
    %3387 = vmatpush.msra.mxu0 0.0
    %3388 = vmatpush.msra.mxu0 0.0
    %3389 = vmatpush.msra.mxu0 0.0
    %3390 = vmatpush.msra.mxu0 0.0
    %3391 = vmatpush.msra.mxu0 0.0
    %3392 = vmatpush.msra.mxu0 0.0
    %3393 = vmatpush.msra.mxu0 0.0
    %3394 = vmatpush.msra.mxu0 0.0
    %3395 = vmatpush.msra.mxu0 %v915
    %3396 = vmatpush.msra.mxu0 %v899
    %3397 = vmatpush.msra.mxu0 %v883
    %3398 = vmatpush.msra.mxu0 %v867
    %3399 = vmatpush.msra.mxu0 %v851
    %3400 = vmatpush.msra.mxu0 %v835
    %3401 = vmatpush.msra.mxu0 %v819
    %3402 = vmatpush.msra.mxu0 %v803
    %3403 = vmatmul.f32.gmra.mxu0 %v3083
    %v3404 = vpop.f32.mrf.mxu0
    %v3405 = vadd.f32 0.0, %v3404
    %3406 = vmatmul.f32.gmra.mxu0 %v3086
    %v3407 = vpop.f32.mrf.mxu0
    %v3408 = vadd.f32 0.0, %v3407
    %3409 = vdwg.mxu0
    %3410 = vmatpush.msra.mxu0 0.0
    %3411 = vmatpush.msra.mxu0 0.0
    %3412 = vmatpush.msra.mxu0 0.0
    %3413 = vmatpush.msra.mxu0 0.0
    %3414 = vmatpush.msra.mxu0 0.0
    %3415 = vmatpush.msra.mxu0 0.0
    %3416 = vmatpush.msra.mxu0 0.0
    %3417 = vmatpush.msra.mxu0 0.0
    %3418 = vmatpush.msra.mxu0 %v916
    %3419 = vmatpush.msra.mxu0 %v900
    %3420 = vmatpush.msra.mxu0 %v884
    %3421 = vmatpush.msra.mxu0 %v868
    %3422 = vmatpush.msra.mxu0 %v852
    %3423 = vmatpush.msra.mxu0 %v836
    %3424 = vmatpush.msra.mxu0 %v820
    %3425 = vmatpush.msra.mxu0 %v804
    %3426 = vmatmul.f32.gmra.mxu0 %v3083
    %v3427 = vpop.f32.mrf.mxu0
    %v3428 = vadd.f32 0.0, %v3427
    %3429 = vmatmul.f32.gmra.mxu0 %v3086
    %v3430 = vpop.f32.mrf.mxu0
    %v3431 = vadd.f32 0.0, %v3430
    %3432 = vdwg.mxu0
    %3433 = vmatpush.msra.mxu0 0.0
    %3434 = vmatpush.msra.mxu0 0.0
    %3435 = vmatpush.msra.mxu0 0.0
    %3436 = vmatpush.msra.mxu0 0.0
    %3437 = vmatpush.msra.mxu0 0.0
    %3438 = vmatpush.msra.mxu0 0.0
    %3439 = vmatpush.msra.mxu0 0.0
    %3440 = vmatpush.msra.mxu0 0.0
    %3441 = vmatpush.msra.mxu0 %v917
    %3442 = vmatpush.msra.mxu0 %v901
    %3443 = vmatpush.msra.mxu0 %v885
    %3444 = vmatpush.msra.mxu0 %v869
    %3445 = vmatpush.msra.mxu0 %v853
    %3446 = vmatpush.msra.mxu0 %v837
    %3447 = vmatpush.msra.mxu0 %v821
    %3448 = vmatpush.msra.mxu0 %v805
    %3449 = vmatmul.f32.gmra.mxu0 %v3083
    %v3450 = vpop.f32.mrf.mxu0
    %v3451 = vadd.f32 0.0, %v3450
    %3452 = vmatmul.f32.gmra.mxu0 %v3086
    %v3453 = vpop.f32.mrf.mxu0
    %v3454 = vadd.f32 0.0, %v3453
    %3455 = vdwg.mxu0
    %v3456 = vmul.f32 %v2582, %v3106
    %v3457 = vmul.f32 %v2584, %v3129
    %v3458 = vmul.f32 %v2586, %v3152
    %v3459 = vmul.f32 %v2588, %v3175
    %v3460 = vmul.f32 %v2590, %v3198
    %v3461 = vmul.f32 %v2592, %v3221
    %v3462 = vmul.f32 %v2594, %v3244
    %v3463 = vmul.f32 %v2596, %v3267
    %v3464 = vmul.f32 %v2598, %v3290
    %v3465 = vmul.f32 %v2600, %v3313
    %v3466 = vmul.f32 %v2602, %v3336
    %v3467 = vmul.f32 %v2604, %v3359
    %v3468 = vmul.f32 %v2606, %v3382
    %v3469 = vmul.f32 %v2608, %v3405
    %v3470 = vmul.f32 %v2610, %v3428
    %v3471 = vmul.f32 %v2612, %v3451
    %v3472 = vmul.f32 %v2614, %v3109
    %v3473 = vmul.f32 %v2616, %v3132
    %v3474 = vmul.f32 %v2618, %v3155
    %v3475 = vmul.f32 %v2620, %v3178
    %v3476 = vmul.f32 %v2622, %v3201
    %v3477 = vmul.f32 %v2624, %v3224
    %v3478 = vmul.f32 %v2626, %v3247
    %v3479 = vmul.f32 %v2628, %v3270
    %v3480 = vmul.f32 %v2630, %v3293
    %v3481 = vmul.f32 %v2632, %v3316
    %v3482 = vmul.f32 %v2634, %v3339
    %v3483 = vmul.f32 %v2636, %v3362
    %v3484 = vmul.f32 %v2638, %v3385
    %v3485 = vmul.f32 %v2640, %v3408
    %v3486 = vmul.f32 %v2642, %v3431
    %v3487 = vmul.f32 %v2644, %v3454
    %v3488 = vld [vmem:[%s51] sm:$0xff]
    %v3489 = vld [vmem:[%s51 + $0x8] sm:$0xff]
    %v3492 = vperm.slane %v3488, 0
    %v3493 = vperm.slane %v3488, 1
    %v3494 = vperm.slane %v3488, 2
    %v3495 = vperm.slane %v3488, 3
    %v3496 = vperm.slane %v3488, 4
    %v3497 = vperm.slane %v3488, 5
    %v3498 = vperm.slane %v3488, 6
    %v3499 = vperm.slane %v3488, 7
    %v3500 = vperm.slane %v3489, 0
    %v3501 = vperm.slane %v3489, 1
    %v3502 = vperm.slane %v3489, 2
    %v3503 = vperm.slane %v3489, 3
    %v3504 = vperm.slane %v3489, 4
    %v3505 = vperm.slane %v3489, 5
    %v3506 = vperm.slane %v3489, 6
    %v3507 = vperm.slane %v3489, 7
    %v3525 = vsel %vm259, %v531, 0
    %3527 = vmatpush.msra.mxu0 0.0
    %3528 = vmatpush.msra.mxu0 0.0
    %3529 = vmatpush.msra.mxu0 0.0
    %3530 = vmatpush.msra.mxu0 0.0
    %3531 = vmatpush.msra.mxu0 0.0
    %3532 = vmatpush.msra.mxu0 0.0
    %3533 = vmatpush.msra.mxu0 0.0
    %3534 = vmatpush.msra.mxu0 0.0
    %3535 = vmatpush.msra.mxu0 0.0
    %3536 = vmatpush.msra.mxu0 0.0
    %3537 = vmatpush.msra.mxu0 0.0
    %3538 = vmatpush.msra.mxu0 0.0
    %3539 = vmatpush.msra.mxu0 0.0
    %3540 = vmatpush.msra.mxu0 0.0
    %3541 = vmatpush.msra.mxu0 %v3472
    %3542 = vmatpush.msra.mxu0 %v3456
    %3543 = vmatmul.f32.gmra.mxu0 %v3525
    %v3544 = vpop.f32.mrf.mxu0
    %v3545 = vadd.f32 %v3492, %v3544
    %3546 = vdwg.mxu0
    %3547 = vmatpush.msra.mxu0 0.0
    %3548 = vmatpush.msra.mxu0 0.0
    %3549 = vmatpush.msra.mxu0 0.0
    %3550 = vmatpush.msra.mxu0 0.0
    %3551 = vmatpush.msra.mxu0 0.0
    %3552 = vmatpush.msra.mxu0 0.0
    %3553 = vmatpush.msra.mxu0 0.0
    %3554 = vmatpush.msra.mxu0 0.0
    %3555 = vmatpush.msra.mxu0 0.0
    %3556 = vmatpush.msra.mxu0 0.0
    %3557 = vmatpush.msra.mxu0 0.0
    %3558 = vmatpush.msra.mxu0 0.0
    %3559 = vmatpush.msra.mxu0 0.0
    %3560 = vmatpush.msra.mxu0 0.0
    %3561 = vmatpush.msra.mxu0 %v3473
    %3562 = vmatpush.msra.mxu0 %v3457
    %3563 = vmatmul.f32.gmra.mxu0 %v3525
    %v3564 = vpop.f32.mrf.mxu0
    %v3565 = vadd.f32 %v3493, %v3564
    %3566 = vdwg.mxu0
    %3567 = vmatpush.msra.mxu0 0.0
    %3568 = vmatpush.msra.mxu0 0.0
    %3569 = vmatpush.msra.mxu0 0.0
    %3570 = vmatpush.msra.mxu0 0.0
    %3571 = vmatpush.msra.mxu0 0.0
    %3572 = vmatpush.msra.mxu0 0.0
    %3573 = vmatpush.msra.mxu0 0.0
    %3574 = vmatpush.msra.mxu0 0.0
    %3575 = vmatpush.msra.mxu0 0.0
    %3576 = vmatpush.msra.mxu0 0.0
    %3577 = vmatpush.msra.mxu0 0.0
    %3578 = vmatpush.msra.mxu0 0.0
    %3579 = vmatpush.msra.mxu0 0.0
    %3580 = vmatpush.msra.mxu0 0.0
    %3581 = vmatpush.msra.mxu0 %v3474
    %3582 = vmatpush.msra.mxu0 %v3458
    %3583 = vmatmul.f32.gmra.mxu0 %v3525
    %v3584 = vpop.f32.mrf.mxu0
    %v3585 = vadd.f32 %v3494, %v3584
    %3586 = vdwg.mxu0
    %3587 = vmatpush.msra.mxu0 0.0
    %3588 = vmatpush.msra.mxu0 0.0
    %3589 = vmatpush.msra.mxu0 0.0
    %3590 = vmatpush.msra.mxu0 0.0
    %3591 = vmatpush.msra.mxu0 0.0
    %3592 = vmatpush.msra.mxu0 0.0
    %3593 = vmatpush.msra.mxu0 0.0
    %3594 = vmatpush.msra.mxu0 0.0
    %3595 = vmatpush.msra.mxu0 0.0
    %3596 = vmatpush.msra.mxu0 0.0
    %3597 = vmatpush.msra.mxu0 0.0
    %3598 = vmatpush.msra.mxu0 0.0
    %3599 = vmatpush.msra.mxu0 0.0
    %3600 = vmatpush.msra.mxu0 0.0
    %3601 = vmatpush.msra.mxu0 %v3475
    %3602 = vmatpush.msra.mxu0 %v3459
    %3603 = vmatmul.f32.gmra.mxu0 %v3525
    %v3604 = vpop.f32.mrf.mxu0
    %v3605 = vadd.f32 %v3495, %v3604
    %3606 = vdwg.mxu0
    %3607 = vmatpush.msra.mxu0 0.0
    %3608 = vmatpush.msra.mxu0 0.0
    %3609 = vmatpush.msra.mxu0 0.0
    %3610 = vmatpush.msra.mxu0 0.0
    %3611 = vmatpush.msra.mxu0 0.0
    %3612 = vmatpush.msra.mxu0 0.0
    %3613 = vmatpush.msra.mxu0 0.0
    %3614 = vmatpush.msra.mxu0 0.0
    %3615 = vmatpush.msra.mxu0 0.0
    %3616 = vmatpush.msra.mxu0 0.0
    %3617 = vmatpush.msra.mxu0 0.0
    %3618 = vmatpush.msra.mxu0 0.0
    %3619 = vmatpush.msra.mxu0 0.0
    %3620 = vmatpush.msra.mxu0 0.0
    %3621 = vmatpush.msra.mxu0 %v3476
    %3622 = vmatpush.msra.mxu0 %v3460
    %3623 = vmatmul.f32.gmra.mxu0 %v3525
    %v3624 = vpop.f32.mrf.mxu0
    %v3625 = vadd.f32 %v3496, %v3624
    %3626 = vdwg.mxu0
    %3627 = vmatpush.msra.mxu0 0.0
    %3628 = vmatpush.msra.mxu0 0.0
    %3629 = vmatpush.msra.mxu0 0.0
    %3630 = vmatpush.msra.mxu0 0.0
    %3631 = vmatpush.msra.mxu0 0.0
    %3632 = vmatpush.msra.mxu0 0.0
    %3633 = vmatpush.msra.mxu0 0.0
    %3634 = vmatpush.msra.mxu0 0.0
    %3635 = vmatpush.msra.mxu0 0.0
    %3636 = vmatpush.msra.mxu0 0.0
    %3637 = vmatpush.msra.mxu0 0.0
    %3638 = vmatpush.msra.mxu0 0.0
    %3639 = vmatpush.msra.mxu0 0.0
    %3640 = vmatpush.msra.mxu0 0.0
    %3641 = vmatpush.msra.mxu0 %v3477
    %3642 = vmatpush.msra.mxu0 %v3461
    %3643 = vmatmul.f32.gmra.mxu0 %v3525
    %v3644 = vpop.f32.mrf.mxu0
    %v3645 = vadd.f32 %v3497, %v3644
    %3646 = vdwg.mxu0
    %3647 = vmatpush.msra.mxu0 0.0
    %3648 = vmatpush.msra.mxu0 0.0
    %3649 = vmatpush.msra.mxu0 0.0
    %3650 = vmatpush.msra.mxu0 0.0
    %3651 = vmatpush.msra.mxu0 0.0
    %3652 = vmatpush.msra.mxu0 0.0
    %3653 = vmatpush.msra.mxu0 0.0
    %3654 = vmatpush.msra.mxu0 0.0
    %3655 = vmatpush.msra.mxu0 0.0
    %3656 = vmatpush.msra.mxu0 0.0
    %3657 = vmatpush.msra.mxu0 0.0
    %3658 = vmatpush.msra.mxu0 0.0
    %3659 = vmatpush.msra.mxu0 0.0
    %3660 = vmatpush.msra.mxu0 0.0
    %3661 = vmatpush.msra.mxu0 %v3478
    %3662 = vmatpush.msra.mxu0 %v3462
    %3663 = vmatmul.f32.gmra.mxu0 %v3525
    %v3664 = vpop.f32.mrf.mxu0
    %v3665 = vadd.f32 %v3498, %v3664
    %3666 = vdwg.mxu0
    %3667 = vmatpush.msra.mxu0 0.0
    %3668 = vmatpush.msra.mxu0 0.0
    %3669 = vmatpush.msra.mxu0 0.0
    %3670 = vmatpush.msra.mxu0 0.0
    %3671 = vmatpush.msra.mxu0 0.0
    %3672 = vmatpush.msra.mxu0 0.0
    %3673 = vmatpush.msra.mxu0 0.0
    %3674 = vmatpush.msra.mxu0 0.0
    %3675 = vmatpush.msra.mxu0 0.0
    %3676 = vmatpush.msra.mxu0 0.0
    %3677 = vmatpush.msra.mxu0 0.0
    %3678 = vmatpush.msra.mxu0 0.0
    %3679 = vmatpush.msra.mxu0 0.0
    %3680 = vmatpush.msra.mxu0 0.0
    %3681 = vmatpush.msra.mxu0 %v3479
    %3682 = vmatpush.msra.mxu0 %v3463
    %3683 = vmatmul.f32.gmra.mxu0 %v3525
    %v3684 = vpop.f32.mrf.mxu0
    %v3685 = vadd.f32 %v3499, %v3684
    %3686 = vdwg.mxu0
    %3687 = vmatpush.msra.mxu0 0.0
    %3688 = vmatpush.msra.mxu0 0.0
    %3689 = vmatpush.msra.mxu0 0.0
    %3690 = vmatpush.msra.mxu0 0.0
    %3691 = vmatpush.msra.mxu0 0.0
    %3692 = vmatpush.msra.mxu0 0.0
    %3693 = vmatpush.msra.mxu0 0.0
    %3694 = vmatpush.msra.mxu0 0.0
    %3695 = vmatpush.msra.mxu0 0.0
    %3696 = vmatpush.msra.mxu0 0.0
    %3697 = vmatpush.msra.mxu0 0.0
    %3698 = vmatpush.msra.mxu0 0.0
    %3699 = vmatpush.msra.mxu0 0.0
    %3700 = vmatpush.msra.mxu0 0.0
    %3701 = vmatpush.msra.mxu0 %v3480
    %3702 = vmatpush.msra.mxu0 %v3464
    %3703 = vmatmul.f32.gmra.mxu0 %v3525
    %v3704 = vpop.f32.mrf.mxu0
    %v3705 = vadd.f32 %v3500, %v3704
    %3706 = vdwg.mxu0
    %3707 = vmatpush.msra.mxu0 0.0
    %3708 = vmatpush.msra.mxu0 0.0
    %3709 = vmatpush.msra.mxu0 0.0
    %3710 = vmatpush.msra.mxu0 0.0
    %3711 = vmatpush.msra.mxu0 0.0
    %3712 = vmatpush.msra.mxu0 0.0
    %3713 = vmatpush.msra.mxu0 0.0
    %3714 = vmatpush.msra.mxu0 0.0
    %3715 = vmatpush.msra.mxu0 0.0
    %3716 = vmatpush.msra.mxu0 0.0
    %3717 = vmatpush.msra.mxu0 0.0
    %3718 = vmatpush.msra.mxu0 0.0
    %3719 = vmatpush.msra.mxu0 0.0
    %3720 = vmatpush.msra.mxu0 0.0
    %3721 = vmatpush.msra.mxu0 %v3481
    %3722 = vmatpush.msra.mxu0 %v3465
    %3723 = vmatmul.f32.gmra.mxu0 %v3525
    %v3724 = vpop.f32.mrf.mxu0
    %v3725 = vadd.f32 %v3501, %v3724
    %3726 = vdwg.mxu0
    %3727 = vmatpush.msra.mxu0 0.0
    %3728 = vmatpush.msra.mxu0 0.0
    %3729 = vmatpush.msra.mxu0 0.0
    %3730 = vmatpush.msra.mxu0 0.0
    %3731 = vmatpush.msra.mxu0 0.0
    %3732 = vmatpush.msra.mxu0 0.0
    %3733 = vmatpush.msra.mxu0 0.0
    %3734 = vmatpush.msra.mxu0 0.0
    %3735 = vmatpush.msra.mxu0 0.0
    %3736 = vmatpush.msra.mxu0 0.0
    %3737 = vmatpush.msra.mxu0 0.0
    %3738 = vmatpush.msra.mxu0 0.0
    %3739 = vmatpush.msra.mxu0 0.0
    %3740 = vmatpush.msra.mxu0 0.0
    %3741 = vmatpush.msra.mxu0 %v3482
    %3742 = vmatpush.msra.mxu0 %v3466
    %3743 = vmatmul.f32.gmra.mxu0 %v3525
    %v3744 = vpop.f32.mrf.mxu0
    %v3745 = vadd.f32 %v3502, %v3744
    %3746 = vdwg.mxu0
    %3747 = vmatpush.msra.mxu0 0.0
    %3748 = vmatpush.msra.mxu0 0.0
    %3749 = vmatpush.msra.mxu0 0.0
    %3750 = vmatpush.msra.mxu0 0.0
    %3751 = vmatpush.msra.mxu0 0.0
    %3752 = vmatpush.msra.mxu0 0.0
    %3753 = vmatpush.msra.mxu0 0.0
    %3754 = vmatpush.msra.mxu0 0.0
    %3755 = vmatpush.msra.mxu0 0.0
    %3756 = vmatpush.msra.mxu0 0.0
    %3757 = vmatpush.msra.mxu0 0.0
    %3758 = vmatpush.msra.mxu0 0.0
    %3759 = vmatpush.msra.mxu0 0.0
    %3760 = vmatpush.msra.mxu0 0.0
    %3761 = vmatpush.msra.mxu0 %v3483
    %3762 = vmatpush.msra.mxu0 %v3467
    %3763 = vmatmul.f32.gmra.mxu0 %v3525
    %v3764 = vpop.f32.mrf.mxu0
    %v3765 = vadd.f32 %v3503, %v3764
    %3766 = vdwg.mxu0
    %3767 = vmatpush.msra.mxu0 0.0
    %3768 = vmatpush.msra.mxu0 0.0
    %3769 = vmatpush.msra.mxu0 0.0
    %3770 = vmatpush.msra.mxu0 0.0
    %3771 = vmatpush.msra.mxu0 0.0
    %3772 = vmatpush.msra.mxu0 0.0
    %3773 = vmatpush.msra.mxu0 0.0
    %3774 = vmatpush.msra.mxu0 0.0
    %3775 = vmatpush.msra.mxu0 0.0
    %3776 = vmatpush.msra.mxu0 0.0
    %3777 = vmatpush.msra.mxu0 0.0
    %3778 = vmatpush.msra.mxu0 0.0
    %3779 = vmatpush.msra.mxu0 0.0
    %3780 = vmatpush.msra.mxu0 0.0
    %3781 = vmatpush.msra.mxu0 %v3484
    %3782 = vmatpush.msra.mxu0 %v3468
    %3783 = vmatmul.f32.gmra.mxu0 %v3525
    %v3784 = vpop.f32.mrf.mxu0
    %v3785 = vadd.f32 %v3504, %v3784
    %3786 = vdwg.mxu0
    %3787 = vmatpush.msra.mxu0 0.0
    %3788 = vmatpush.msra.mxu0 0.0
    %3789 = vmatpush.msra.mxu0 0.0
    %3790 = vmatpush.msra.mxu0 0.0
    %3791 = vmatpush.msra.mxu0 0.0
    %3792 = vmatpush.msra.mxu0 0.0
    %3793 = vmatpush.msra.mxu0 0.0
    %3794 = vmatpush.msra.mxu0 0.0
    %3795 = vmatpush.msra.mxu0 0.0
    %3796 = vmatpush.msra.mxu0 0.0
    %3797 = vmatpush.msra.mxu0 0.0
    %3798 = vmatpush.msra.mxu0 0.0
    %3799 = vmatpush.msra.mxu0 0.0
    %3800 = vmatpush.msra.mxu0 0.0
    %3801 = vmatpush.msra.mxu0 %v3485
    %3802 = vmatpush.msra.mxu0 %v3469
    %3803 = vmatmul.f32.gmra.mxu0 %v3525
    %v3804 = vpop.f32.mrf.mxu0
    %v3805 = vadd.f32 %v3505, %v3804
    %3806 = vdwg.mxu0
    %3807 = vmatpush.msra.mxu0 0.0
    %3808 = vmatpush.msra.mxu0 0.0
    %3809 = vmatpush.msra.mxu0 0.0
    %3810 = vmatpush.msra.mxu0 0.0
    %3811 = vmatpush.msra.mxu0 0.0
    %3812 = vmatpush.msra.mxu0 0.0
    %3813 = vmatpush.msra.mxu0 0.0
    %3814 = vmatpush.msra.mxu0 0.0
    %3815 = vmatpush.msra.mxu0 0.0
    %3816 = vmatpush.msra.mxu0 0.0
    %3817 = vmatpush.msra.mxu0 0.0
    %3818 = vmatpush.msra.mxu0 0.0
    %3819 = vmatpush.msra.mxu0 0.0
    %3820 = vmatpush.msra.mxu0 0.0
    %3821 = vmatpush.msra.mxu0 %v3486
    %3822 = vmatpush.msra.mxu0 %v3470
    %3823 = vmatmul.f32.gmra.mxu0 %v3525
    %v3824 = vpop.f32.mrf.mxu0
    %v3825 = vadd.f32 %v3506, %v3824
    %3826 = vdwg.mxu0
    %3827 = vmatpush.msra.mxu0 0.0
    %3828 = vmatpush.msra.mxu0 0.0
    %3829 = vmatpush.msra.mxu0 0.0
    %3830 = vmatpush.msra.mxu0 0.0
    %3831 = vmatpush.msra.mxu0 0.0
    %3832 = vmatpush.msra.mxu0 0.0
    %3833 = vmatpush.msra.mxu0 0.0
    %3834 = vmatpush.msra.mxu0 0.0
    %3835 = vmatpush.msra.mxu0 0.0
    %3836 = vmatpush.msra.mxu0 0.0
    %3837 = vmatpush.msra.mxu0 0.0
    %3838 = vmatpush.msra.mxu0 0.0
    %3839 = vmatpush.msra.mxu0 0.0
    %3840 = vmatpush.msra.mxu0 0.0
    %3841 = vmatpush.msra.mxu0 %v3487
    %3842 = vmatpush.msra.mxu0 %v3471
    %3843 = vmatmul.f32.gmra.mxu0 %v3525
    %v3844 = vpop.f32.mrf.mxu0
    %v3845 = vadd.f32 %v3507, %v3844
    %3846 = vdwg.mxu0
    %vm3847 = vcmask 1041408
    %v3848 = vsel %vm3847, %v3545, -inf
    %v3849 = vsel %vm3847, %v3565, -inf
    %v3850 = vsel %vm3847, %v3585, -inf
    %v3851 = vsel %vm3847, %v3605, -inf
    %v3852 = vsel %vm3847, %v3625, -inf
    %v3853 = vmax.f32 %v3848, %v3852
    %v3854 = vsel %vm3847, %v3645, -inf
    %v3855 = vmax.f32 %v3849, %v3854
    %v3856 = vsel %vm3847, %v3665, -inf
    %v3857 = vmax.f32 %v3850, %v3856
    %v3858 = vsel %vm3847, %v3685, -inf
    %v3859 = vmax.f32 %v3851, %v3858
    %v3860 = vsel %vm3847, %v3705, -inf
    %v3861 = vmax.f32 %v3853, %v3860
    %v3862 = vsel %vm3847, %v3725, -inf
    %v3863 = vmax.f32 %v3855, %v3862
    %v3864 = vsel %vm3847, %v3745, -inf
    %v3865 = vmax.f32 %v3857, %v3864
    %v3866 = vsel %vm3847, %v3765, -inf
    %v3867 = vmax.f32 %v3859, %v3866
    %v3868 = vsel %vm3847, %v3785, -inf
    %v3869 = vmax.f32 %v3861, %v3868
    %v3870 = vsel %vm3847, %v3805, -inf
    %v3871 = vmax.f32 %v3863, %v3870
    %v3872 = vsel %vm3847, %v3825, -inf
    %v3873 = vmax.f32 %v3865, %v3872
    %v3874 = vsel %vm3847, %v3845, -inf
    %v3875 = vmax.f32 %v3867, %v3874
    %v3876 = vmax.f32 %v3869, %v3871
    %v3877 = vmax.f32 %v3873, %v3875
    %v3878 = vmax.f32 %v3876, %v3877
    %3879 = vmax.xlane.f32.xlu0 %v3878
    %v3880 = vpop.xlane.xlu0 %3879
    %v3881 = vsub.f32 %v3545, %v3880
    %v3882 = vsub.f32 %v3565, %v3880
    %v3883 = vsub.f32 %v3585, %v3880
    %v3884 = vsub.f32 %v3605, %v3880
    %v3885 = vsub.f32 %v3625, %v3880
    %v3886 = vsub.f32 %v3645, %v3880
    %v3887 = vsub.f32 %v3665, %v3880
    %v3888 = vsub.f32 %v3685, %v3880
    %v3889 = vsub.f32 %v3705, %v3880
    %v3890 = vsub.f32 %v3725, %v3880
    %v3891 = vsub.f32 %v3745, %v3880
    %v3892 = vsub.f32 %v3765, %v3880
    %v3893 = vsub.f32 %v3785, %v3880
    %v3894 = vsub.f32 %v3805, %v3880
    %v3895 = vsub.f32 %v3825, %v3880
    %v3896 = vsub.f32 %v3845, %v3880
    %v3897 = vmul.f32 %v3881, 1.442695
    %v3898 = vpow.pop %v3897
    %v3899 = vmul.f32 %v3882, 1.442695
    %v3900 = vpow.pop %v3899
    %v3901 = vmul.f32 %v3883, 1.442695
    %v3902 = vpow.pop %v3901
    %v3903 = vmul.f32 %v3884, 1.442695
    %v3904 = vpow.pop %v3903
    %v3905 = vmul.f32 %v3885, 1.442695
    %v3906 = vpow.pop %v3905
    %v3907 = vmul.f32 %v3886, 1.442695
    %v3908 = vpow.pop %v3907
    %v3909 = vmul.f32 %v3887, 1.442695
    %v3910 = vpow.pop %v3909
    %v3911 = vmul.f32 %v3888, 1.442695
    %v3912 = vpow.pop %v3911
    %v3913 = vmul.f32 %v3889, 1.442695
    %v3914 = vpow.pop %v3913
    %v3915 = vmul.f32 %v3890, 1.442695
    %v3916 = vpow.pop %v3915
    %v3917 = vmul.f32 %v3891, 1.442695
    %v3918 = vpow.pop %v3917
    %v3919 = vmul.f32 %v3892, 1.442695
    %v3920 = vpow.pop %v3919
    %v3921 = vmul.f32 %v3893, 1.442695
    %v3922 = vpow.pop %v3921
    %v3923 = vmul.f32 %v3894, 1.442695
    %v3924 = vpow.pop %v3923
    %v3925 = vmul.f32 %v3895, 1.442695
    %v3926 = vpow.pop %v3925
    %v3927 = vmul.f32 %v3896, 1.442695
    %v3928 = vpow.pop %v3927
    %3929 = vmatpush.msra.mxu0 %v549
    %3930 = vmatpush.msra.mxu0 %v548
    %3931 = vmatpush.msra.mxu0 %v547
    %3932 = vmatpush.msra.mxu0 %v546
    %3933 = vmatpush.msra.mxu0 %v545
    %3934 = vmatpush.msra.mxu0 %v544
    %3935 = vmatpush.msra.mxu0 %v543
    %3936 = vmatpush.msra.mxu0 %v542
    %3937 = vmatpush.msra.mxu0 %v541
    %3938 = vmatpush.msra.mxu0 %v540
    %3939 = vmatpush.msra.mxu0 %v539
    %3940 = vmatpush.msra.mxu0 %v538
    %3941 = vmatpush.msra.mxu0 %v537
    %3942 = vmatpush.msra.mxu0 %v536
    %3943 = vmatpush.msra.mxu0 %v535
    %3944 = vmatpush.msra.mxu0 %v534
    %3945 = vmatmul.f32.gmra.mxu0 %v3898
    %v3946 = vpop.f32.mrf.mxu0
    %v3947 = vadd.f32 0.0, %v3946
    %3948 = vdwg.mxu0
    %3949 = vmatpush.msra.mxu0 %v565
    %3950 = vmatpush.msra.mxu0 %v564
    %3951 = vmatpush.msra.mxu0 %v563
    %3952 = vmatpush.msra.mxu0 %v562
    %3953 = vmatpush.msra.mxu0 %v561
    %3954 = vmatpush.msra.mxu0 %v560
    %3955 = vmatpush.msra.mxu0 %v559
    %3956 = vmatpush.msra.mxu0 %v558
    %3957 = vmatpush.msra.mxu0 %v557
    %3958 = vmatpush.msra.mxu0 %v556
    %3959 = vmatpush.msra.mxu0 %v555
    %3960 = vmatpush.msra.mxu0 %v554
    %3961 = vmatpush.msra.mxu0 %v553
    %3962 = vmatpush.msra.mxu0 %v552
    %3963 = vmatpush.msra.mxu0 %v551
    %3964 = vmatpush.msra.mxu0 %v550
    %3965 = vmatmul.f32.gmra.mxu0 %v3900
    %v3966 = vpop.f32.mrf.mxu0
    %v3967 = vadd.f32 %v3947, %v3966
    %3968 = vdwg.mxu0
    %3969 = vmatpush.msra.mxu0 %v581
    %3970 = vmatpush.msra.mxu0 %v580
    %3971 = vmatpush.msra.mxu0 %v579
    %3972 = vmatpush.msra.mxu0 %v578
    %3973 = vmatpush.msra.mxu0 %v577
    %3974 = vmatpush.msra.mxu0 %v576
    %3975 = vmatpush.msra.mxu0 %v575
    %3976 = vmatpush.msra.mxu0 %v574
    %3977 = vmatpush.msra.mxu0 %v573
    %3978 = vmatpush.msra.mxu0 %v572
    %3979 = vmatpush.msra.mxu0 %v571
    %3980 = vmatpush.msra.mxu0 %v570
    %3981 = vmatpush.msra.mxu0 %v569
    %3982 = vmatpush.msra.mxu0 %v568
    %3983 = vmatpush.msra.mxu0 %v567
    %3984 = vmatpush.msra.mxu0 %v566
    %3985 = vmatmul.f32.gmra.mxu0 %v3902
    %v3986 = vpop.f32.mrf.mxu0
    %v3987 = vadd.f32 %v3967, %v3986
    %3988 = vdwg.mxu0
    %3989 = vmatpush.msra.mxu0 %v597
    %3990 = vmatpush.msra.mxu0 %v596
    %3991 = vmatpush.msra.mxu0 %v595
    %3992 = vmatpush.msra.mxu0 %v594
    %3993 = vmatpush.msra.mxu0 %v593
    %3994 = vmatpush.msra.mxu0 %v592
    %3995 = vmatpush.msra.mxu0 %v591
    %3996 = vmatpush.msra.mxu0 %v590
    %3997 = vmatpush.msra.mxu0 %v589
    %3998 = vmatpush.msra.mxu0 %v588
    %3999 = vmatpush.msra.mxu0 %v587
    %4000 = vmatpush.msra.mxu0 %v586
    %4001 = vmatpush.msra.mxu0 %v585
    %4002 = vmatpush.msra.mxu0 %v584
    %4003 = vmatpush.msra.mxu0 %v583
    %4004 = vmatpush.msra.mxu0 %v582
    %4005 = vmatmul.f32.gmra.mxu0 %v3904
    %v4006 = vpop.f32.mrf.mxu0
    %v4007 = vadd.f32 %v3987, %v4006
    %4008 = vdwg.mxu0
    %4009 = vmatpush.msra.mxu0 %v613
    %4010 = vmatpush.msra.mxu0 %v612
    %4011 = vmatpush.msra.mxu0 %v611
    %4012 = vmatpush.msra.mxu0 %v610
    %4013 = vmatpush.msra.mxu0 %v609
    %4014 = vmatpush.msra.mxu0 %v608
    %4015 = vmatpush.msra.mxu0 %v607
    %4016 = vmatpush.msra.mxu0 %v606
    %4017 = vmatpush.msra.mxu0 %v605
    %4018 = vmatpush.msra.mxu0 %v604
    %4019 = vmatpush.msra.mxu0 %v603
    %4020 = vmatpush.msra.mxu0 %v602
    %4021 = vmatpush.msra.mxu0 %v601
    %4022 = vmatpush.msra.mxu0 %v600
    %4023 = vmatpush.msra.mxu0 %v599
    %4024 = vmatpush.msra.mxu0 %v598
    %4025 = vmatmul.f32.gmra.mxu0 %v3906
    %v4026 = vpop.f32.mrf.mxu0
    %v4027 = vadd.f32 %v4007, %v4026
    %4028 = vdwg.mxu0
    %4029 = vmatpush.msra.mxu0 %v629
    %4030 = vmatpush.msra.mxu0 %v628
    %4031 = vmatpush.msra.mxu0 %v627
    %4032 = vmatpush.msra.mxu0 %v626
    %4033 = vmatpush.msra.mxu0 %v625
    %4034 = vmatpush.msra.mxu0 %v624
    %4035 = vmatpush.msra.mxu0 %v623
    %4036 = vmatpush.msra.mxu0 %v622
    %4037 = vmatpush.msra.mxu0 %v621
    %4038 = vmatpush.msra.mxu0 %v620
    %4039 = vmatpush.msra.mxu0 %v619
    %4040 = vmatpush.msra.mxu0 %v618
    %4041 = vmatpush.msra.mxu0 %v617
    %4042 = vmatpush.msra.mxu0 %v616
    %4043 = vmatpush.msra.mxu0 %v615
    %4044 = vmatpush.msra.mxu0 %v614
    %4045 = vmatmul.f32.gmra.mxu0 %v3908
    %v4046 = vpop.f32.mrf.mxu0
    %v4047 = vadd.f32 %v4027, %v4046
    %4048 = vdwg.mxu0
    %4049 = vmatpush.msra.mxu0 %v645
    %4050 = vmatpush.msra.mxu0 %v644
    %4051 = vmatpush.msra.mxu0 %v643
    %4052 = vmatpush.msra.mxu0 %v642
    %4053 = vmatpush.msra.mxu0 %v641
    %4054 = vmatpush.msra.mxu0 %v640
    %4055 = vmatpush.msra.mxu0 %v639
    %4056 = vmatpush.msra.mxu0 %v638
    %4057 = vmatpush.msra.mxu0 %v637
    %4058 = vmatpush.msra.mxu0 %v636
    %4059 = vmatpush.msra.mxu0 %v635
    %4060 = vmatpush.msra.mxu0 %v634
    %4061 = vmatpush.msra.mxu0 %v633
    %4062 = vmatpush.msra.mxu0 %v632
    %4063 = vmatpush.msra.mxu0 %v631
    %4064 = vmatpush.msra.mxu0 %v630
    %4065 = vmatmul.f32.gmra.mxu0 %v3910
    %v4066 = vpop.f32.mrf.mxu0
    %v4067 = vadd.f32 %v4047, %v4066
    %4068 = vdwg.mxu0
    %4069 = vmatpush.msra.mxu0 %v661
    %4070 = vmatpush.msra.mxu0 %v660
    %4071 = vmatpush.msra.mxu0 %v659
    %4072 = vmatpush.msra.mxu0 %v658
    %4073 = vmatpush.msra.mxu0 %v657
    %4074 = vmatpush.msra.mxu0 %v656
    %4075 = vmatpush.msra.mxu0 %v655
    %4076 = vmatpush.msra.mxu0 %v654
    %4077 = vmatpush.msra.mxu0 %v653
    %4078 = vmatpush.msra.mxu0 %v652
    %4079 = vmatpush.msra.mxu0 %v651
    %4080 = vmatpush.msra.mxu0 %v650
    %4081 = vmatpush.msra.mxu0 %v649
    %4082 = vmatpush.msra.mxu0 %v648
    %4083 = vmatpush.msra.mxu0 %v647
    %4084 = vmatpush.msra.mxu0 %v646
    %4085 = vmatmul.f32.gmra.mxu0 %v3912
    %v4086 = vpop.f32.mrf.mxu0
    %v4087 = vadd.f32 %v4067, %v4086
    %4088 = vdwg.mxu0
    %4089 = vmatpush.msra.mxu0 %v677
    %4090 = vmatpush.msra.mxu0 %v676
    %4091 = vmatpush.msra.mxu0 %v675
    %4092 = vmatpush.msra.mxu0 %v674
    %4093 = vmatpush.msra.mxu0 %v673
    %4094 = vmatpush.msra.mxu0 %v672
    %4095 = vmatpush.msra.mxu0 %v671
    %4096 = vmatpush.msra.mxu0 %v670
    %4097 = vmatpush.msra.mxu0 %v669
    %4098 = vmatpush.msra.mxu0 %v668
    %4099 = vmatpush.msra.mxu0 %v667
    %4100 = vmatpush.msra.mxu0 %v666
    %4101 = vmatpush.msra.mxu0 %v665
    %4102 = vmatpush.msra.mxu0 %v664
    %4103 = vmatpush.msra.mxu0 %v663
    %4104 = vmatpush.msra.mxu0 %v662
    %4105 = vmatmul.f32.gmra.mxu0 %v3914
    %v4106 = vpop.f32.mrf.mxu0
    %v4107 = vadd.f32 %v4087, %v4106
    %4108 = vdwg.mxu0
    %4109 = vmatpush.msra.mxu0 %v693
    %4110 = vmatpush.msra.mxu0 %v692
    %4111 = vmatpush.msra.mxu0 %v691
    %4112 = vmatpush.msra.mxu0 %v690
    %4113 = vmatpush.msra.mxu0 %v689
    %4114 = vmatpush.msra.mxu0 %v688
    %4115 = vmatpush.msra.mxu0 %v687
    %4116 = vmatpush.msra.mxu0 %v686
    %4117 = vmatpush.msra.mxu0 %v685
    %4118 = vmatpush.msra.mxu0 %v684
    %4119 = vmatpush.msra.mxu0 %v683
    %4120 = vmatpush.msra.mxu0 %v682
    %4121 = vmatpush.msra.mxu0 %v681
    %4122 = vmatpush.msra.mxu0 %v680
    %4123 = vmatpush.msra.mxu0 %v679
    %4124 = vmatpush.msra.mxu0 %v678
    %4125 = vmatmul.f32.gmra.mxu0 %v3916
    %v4126 = vpop.f32.mrf.mxu0
    %v4127 = vadd.f32 %v4107, %v4126
    %4128 = vdwg.mxu0
    %4129 = vmatpush.msra.mxu0 %v709
    %4130 = vmatpush.msra.mxu0 %v708
    %4131 = vmatpush.msra.mxu0 %v707
    %4132 = vmatpush.msra.mxu0 %v706
    %4133 = vmatpush.msra.mxu0 %v705
    %4134 = vmatpush.msra.mxu0 %v704
    %4135 = vmatpush.msra.mxu0 %v703
    %4136 = vmatpush.msra.mxu0 %v702
    %4137 = vmatpush.msra.mxu0 %v701
    %4138 = vmatpush.msra.mxu0 %v700
    %4139 = vmatpush.msra.mxu0 %v699
    %4140 = vmatpush.msra.mxu0 %v698
    %4141 = vmatpush.msra.mxu0 %v697
    %4142 = vmatpush.msra.mxu0 %v696
    %4143 = vmatpush.msra.mxu0 %v695
    %4144 = vmatpush.msra.mxu0 %v694
    %4145 = vmatmul.f32.gmra.mxu0 %v3918
    %v4146 = vpop.f32.mrf.mxu0
    %v4147 = vadd.f32 %v4127, %v4146
    %4148 = vdwg.mxu0
    %4149 = vmatpush.msra.mxu0 %v725
    %4150 = vmatpush.msra.mxu0 %v724
    %4151 = vmatpush.msra.mxu0 %v723
    %4152 = vmatpush.msra.mxu0 %v722
    %4153 = vmatpush.msra.mxu0 %v721
    %4154 = vmatpush.msra.mxu0 %v720
    %4155 = vmatpush.msra.mxu0 %v719
    %4156 = vmatpush.msra.mxu0 %v718
    %4157 = vmatpush.msra.mxu0 %v717
    %4158 = vmatpush.msra.mxu0 %v716
    %4159 = vmatpush.msra.mxu0 %v715
    %4160 = vmatpush.msra.mxu0 %v714
    %4161 = vmatpush.msra.mxu0 %v713
    %4162 = vmatpush.msra.mxu0 %v712
    %4163 = vmatpush.msra.mxu0 %v711
    %4164 = vmatpush.msra.mxu0 %v710
    %4165 = vmatmul.f32.gmra.mxu0 %v3920
    %v4166 = vpop.f32.mrf.mxu0
    %v4167 = vadd.f32 %v4147, %v4166
    %4168 = vdwg.mxu0
    %4169 = vmatpush.msra.mxu0 %v741
    %4170 = vmatpush.msra.mxu0 %v740
    %4171 = vmatpush.msra.mxu0 %v739
    %4172 = vmatpush.msra.mxu0 %v738
    %4173 = vmatpush.msra.mxu0 %v737
    %4174 = vmatpush.msra.mxu0 %v736
    %4175 = vmatpush.msra.mxu0 %v735
    %4176 = vmatpush.msra.mxu0 %v734
    %4177 = vmatpush.msra.mxu0 %v733
    %4178 = vmatpush.msra.mxu0 %v732
    %4179 = vmatpush.msra.mxu0 %v731
    %4180 = vmatpush.msra.mxu0 %v730
    %4181 = vmatpush.msra.mxu0 %v729
    %4182 = vmatpush.msra.mxu0 %v728
    %4183 = vmatpush.msra.mxu0 %v727
    %4184 = vmatpush.msra.mxu0 %v726
    %4185 = vmatmul.f32.gmra.mxu0 %v3922
    %v4186 = vpop.f32.mrf.mxu0
    %v4187 = vadd.f32 %v4167, %v4186
    %4188 = vdwg.mxu0
    %4189 = vmatpush.msra.mxu0 %v757
    %4190 = vmatpush.msra.mxu0 %v756
    %4191 = vmatpush.msra.mxu0 %v755
    %4192 = vmatpush.msra.mxu0 %v754
    %4193 = vmatpush.msra.mxu0 %v753
    %4194 = vmatpush.msra.mxu0 %v752
    %4195 = vmatpush.msra.mxu0 %v751
    %4196 = vmatpush.msra.mxu0 %v750
    %4197 = vmatpush.msra.mxu0 %v749
    %4198 = vmatpush.msra.mxu0 %v748
    %4199 = vmatpush.msra.mxu0 %v747
    %4200 = vmatpush.msra.mxu0 %v746
    %4201 = vmatpush.msra.mxu0 %v745
    %4202 = vmatpush.msra.mxu0 %v744
    %4203 = vmatpush.msra.mxu0 %v743
    %4204 = vmatpush.msra.mxu0 %v742
    %4205 = vmatmul.f32.gmra.mxu0 %v3924
    %v4206 = vpop.f32.mrf.mxu0
    %v4207 = vadd.f32 %v4187, %v4206
    %4208 = vdwg.mxu0
    %4209 = vmatpush.msra.mxu0 %v773
    %4210 = vmatpush.msra.mxu0 %v772
    %4211 = vmatpush.msra.mxu0 %v771
    %4212 = vmatpush.msra.mxu0 %v770
    %4213 = vmatpush.msra.mxu0 %v769
    %4214 = vmatpush.msra.mxu0 %v768
    %4215 = vmatpush.msra.mxu0 %v767
    %4216 = vmatpush.msra.mxu0 %v766
    %4217 = vmatpush.msra.mxu0 %v765
    %4218 = vmatpush.msra.mxu0 %v764
    %4219 = vmatpush.msra.mxu0 %v763
    %4220 = vmatpush.msra.mxu0 %v762
    %4221 = vmatpush.msra.mxu0 %v761
    %4222 = vmatpush.msra.mxu0 %v760
    %4223 = vmatpush.msra.mxu0 %v759
    %4224 = vmatpush.msra.mxu0 %v758
    %4225 = vmatmul.f32.gmra.mxu0 %v3926
    %v4226 = vpop.f32.mrf.mxu0
    %v4227 = vadd.f32 %v4207, %v4226
    %4228 = vdwg.mxu0
    %4229 = vmatpush.msra.mxu0 %v789
    %4230 = vmatpush.msra.mxu0 %v788
    %4231 = vmatpush.msra.mxu0 %v787
    %4232 = vmatpush.msra.mxu0 %v786
    %4233 = vmatpush.msra.mxu0 %v785
    %4234 = vmatpush.msra.mxu0 %v784
    %4235 = vmatpush.msra.mxu0 %v783
    %4236 = vmatpush.msra.mxu0 %v782
    %4237 = vmatpush.msra.mxu0 %v781
    %4238 = vmatpush.msra.mxu0 %v780
    %4239 = vmatpush.msra.mxu0 %v779
    %4240 = vmatpush.msra.mxu0 %v778
    %4241 = vmatpush.msra.mxu0 %v777
    %4242 = vmatpush.msra.mxu0 %v776
    %4243 = vmatpush.msra.mxu0 %v775
    %4244 = vmatpush.msra.mxu0 %v774
    %4245 = vmatmul.f32.gmra.mxu0 %v3928
    %v4246 = vpop.f32.mrf.mxu0
    %v4247 = vadd.f32 %v4227, %v4246
    %4248 = vdwg.mxu0
    %v4250 = vsel %vm3081, %v4247, 0
    %4252 = vmatpush.msra.mxu0 0.0
    %4253 = vmatpush.msra.mxu0 0.0
    %4254 = vmatpush.msra.mxu0 0.0
    %4255 = vmatpush.msra.mxu0 0.0
    %4256 = vmatpush.msra.mxu0 0.0
    %4257 = vmatpush.msra.mxu0 0.0
    %4258 = vmatpush.msra.mxu0 0.0
    %4259 = vmatpush.msra.mxu0 0.0
    %4260 = vmatpush.msra.mxu0 %v902
    %4261 = vmatpush.msra.mxu0 %v886
    %4262 = vmatpush.msra.mxu0 %v870
    %4263 = vmatpush.msra.mxu0 %v854
    %4264 = vmatpush.msra.mxu0 %v838
    %4265 = vmatpush.msra.mxu0 %v822
    %4266 = vmatpush.msra.mxu0 %v806
    %4267 = vmatpush.msra.mxu0 %v790
    %4268 = vmatmul.f32.gmra.mxu0 %v4250
    %v4269 = vpop.f32.mrf.mxu0
    %v4270 = vadd.f32 0.0, %v4269
    %4271 = vdwg.mxu0
    %4272 = vmatpush.msra.mxu0 0.0
    %4273 = vmatpush.msra.mxu0 0.0
    %4274 = vmatpush.msra.mxu0 0.0
    %4275 = vmatpush.msra.mxu0 0.0
    %4276 = vmatpush.msra.mxu0 0.0
    %4277 = vmatpush.msra.mxu0 0.0
    %4278 = vmatpush.msra.mxu0 0.0
    %4279 = vmatpush.msra.mxu0 0.0
    %4280 = vmatpush.msra.mxu0 %v903
    %4281 = vmatpush.msra.mxu0 %v887
    %4282 = vmatpush.msra.mxu0 %v871
    %4283 = vmatpush.msra.mxu0 %v855
    %4284 = vmatpush.msra.mxu0 %v839
    %4285 = vmatpush.msra.mxu0 %v823
    %4286 = vmatpush.msra.mxu0 %v807
    %4287 = vmatpush.msra.mxu0 %v791
    %4288 = vmatmul.f32.gmra.mxu0 %v4250
    %v4289 = vpop.f32.mrf.mxu0
    %v4290 = vadd.f32 0.0, %v4289
    %4291 = vdwg.mxu0
    %4292 = vmatpush.msra.mxu0 0.0
    %4293 = vmatpush.msra.mxu0 0.0
    %4294 = vmatpush.msra.mxu0 0.0
    %4295 = vmatpush.msra.mxu0 0.0
    %4296 = vmatpush.msra.mxu0 0.0
    %4297 = vmatpush.msra.mxu0 0.0
    %4298 = vmatpush.msra.mxu0 0.0
    %4299 = vmatpush.msra.mxu0 0.0
    %4300 = vmatpush.msra.mxu0 %v904
    %4301 = vmatpush.msra.mxu0 %v888
    %4302 = vmatpush.msra.mxu0 %v872
    %4303 = vmatpush.msra.mxu0 %v856
    %4304 = vmatpush.msra.mxu0 %v840
    %4305 = vmatpush.msra.mxu0 %v824
    %4306 = vmatpush.msra.mxu0 %v808
    %4307 = vmatpush.msra.mxu0 %v792
    %4308 = vmatmul.f32.gmra.mxu0 %v4250
    %v4309 = vpop.f32.mrf.mxu0
    %v4310 = vadd.f32 0.0, %v4309
    %4311 = vdwg.mxu0
    %4312 = vmatpush.msra.mxu0 0.0
    %4313 = vmatpush.msra.mxu0 0.0
    %4314 = vmatpush.msra.mxu0 0.0
    %4315 = vmatpush.msra.mxu0 0.0
    %4316 = vmatpush.msra.mxu0 0.0
    %4317 = vmatpush.msra.mxu0 0.0
    %4318 = vmatpush.msra.mxu0 0.0
    %4319 = vmatpush.msra.mxu0 0.0
    %4320 = vmatpush.msra.mxu0 %v905
    %4321 = vmatpush.msra.mxu0 %v889
    %4322 = vmatpush.msra.mxu0 %v873
    %4323 = vmatpush.msra.mxu0 %v857
    %4324 = vmatpush.msra.mxu0 %v841
    %4325 = vmatpush.msra.mxu0 %v825
    %4326 = vmatpush.msra.mxu0 %v809
    %4327 = vmatpush.msra.mxu0 %v793
    %4328 = vmatmul.f32.gmra.mxu0 %v4250
    %v4329 = vpop.f32.mrf.mxu0
    %v4330 = vadd.f32 0.0, %v4329
    %4331 = vdwg.mxu0
    %4332 = vmatpush.msra.mxu0 0.0
    %4333 = vmatpush.msra.mxu0 0.0
    %4334 = vmatpush.msra.mxu0 0.0
    %4335 = vmatpush.msra.mxu0 0.0
    %4336 = vmatpush.msra.mxu0 0.0
    %4337 = vmatpush.msra.mxu0 0.0
    %4338 = vmatpush.msra.mxu0 0.0
    %4339 = vmatpush.msra.mxu0 0.0
    %4340 = vmatpush.msra.mxu0 %v906
    %4341 = vmatpush.msra.mxu0 %v890
    %4342 = vmatpush.msra.mxu0 %v874
    %4343 = vmatpush.msra.mxu0 %v858
    %4344 = vmatpush.msra.mxu0 %v842
    %4345 = vmatpush.msra.mxu0 %v826
    %4346 = vmatpush.msra.mxu0 %v810
    %4347 = vmatpush.msra.mxu0 %v794
    %4348 = vmatmul.f32.gmra.mxu0 %v4250
    %v4349 = vpop.f32.mrf.mxu0
    %v4350 = vadd.f32 0.0, %v4349
    %4351 = vdwg.mxu0
    %4352 = vmatpush.msra.mxu0 0.0
    %4353 = vmatpush.msra.mxu0 0.0
    %4354 = vmatpush.msra.mxu0 0.0
    %4355 = vmatpush.msra.mxu0 0.0
    %4356 = vmatpush.msra.mxu0 0.0
    %4357 = vmatpush.msra.mxu0 0.0
    %4358 = vmatpush.msra.mxu0 0.0
    %4359 = vmatpush.msra.mxu0 0.0
    %4360 = vmatpush.msra.mxu0 %v907
    %4361 = vmatpush.msra.mxu0 %v891
    %4362 = vmatpush.msra.mxu0 %v875
    %4363 = vmatpush.msra.mxu0 %v859
    %4364 = vmatpush.msra.mxu0 %v843
    %4365 = vmatpush.msra.mxu0 %v827
    %4366 = vmatpush.msra.mxu0 %v811
    %4367 = vmatpush.msra.mxu0 %v795
    %4368 = vmatmul.f32.gmra.mxu0 %v4250
    %v4369 = vpop.f32.mrf.mxu0
    %v4370 = vadd.f32 0.0, %v4369
    %4371 = vdwg.mxu0
    %4372 = vmatpush.msra.mxu0 0.0
    %4373 = vmatpush.msra.mxu0 0.0
    %4374 = vmatpush.msra.mxu0 0.0
    %4375 = vmatpush.msra.mxu0 0.0
    %4376 = vmatpush.msra.mxu0 0.0
    %4377 = vmatpush.msra.mxu0 0.0
    %4378 = vmatpush.msra.mxu0 0.0
    %4379 = vmatpush.msra.mxu0 0.0
    %4380 = vmatpush.msra.mxu0 %v908
    %4381 = vmatpush.msra.mxu0 %v892
    %4382 = vmatpush.msra.mxu0 %v876
    %4383 = vmatpush.msra.mxu0 %v860
    %4384 = vmatpush.msra.mxu0 %v844
    %4385 = vmatpush.msra.mxu0 %v828
    %4386 = vmatpush.msra.mxu0 %v812
    %4387 = vmatpush.msra.mxu0 %v796
    %4388 = vmatmul.f32.gmra.mxu0 %v4250
    %v4389 = vpop.f32.mrf.mxu0
    %v4390 = vadd.f32 0.0, %v4389
    %4391 = vdwg.mxu0
    %4392 = vmatpush.msra.mxu0 0.0
    %4393 = vmatpush.msra.mxu0 0.0
    %4394 = vmatpush.msra.mxu0 0.0
    %4395 = vmatpush.msra.mxu0 0.0
    %4396 = vmatpush.msra.mxu0 0.0
    %4397 = vmatpush.msra.mxu0 0.0
    %4398 = vmatpush.msra.mxu0 0.0
    %4399 = vmatpush.msra.mxu0 0.0
    %4400 = vmatpush.msra.mxu0 %v909
    %4401 = vmatpush.msra.mxu0 %v893
    %4402 = vmatpush.msra.mxu0 %v877
    %4403 = vmatpush.msra.mxu0 %v861
    %4404 = vmatpush.msra.mxu0 %v845
    %4405 = vmatpush.msra.mxu0 %v829
    %4406 = vmatpush.msra.mxu0 %v813
    %4407 = vmatpush.msra.mxu0 %v797
    %4408 = vmatmul.f32.gmra.mxu0 %v4250
    %v4409 = vpop.f32.mrf.mxu0
    %v4410 = vadd.f32 0.0, %v4409
    %4411 = vdwg.mxu0
    %4412 = vmatpush.msra.mxu0 0.0
    %4413 = vmatpush.msra.mxu0 0.0
    %4414 = vmatpush.msra.mxu0 0.0
    %4415 = vmatpush.msra.mxu0 0.0
    %4416 = vmatpush.msra.mxu0 0.0
    %4417 = vmatpush.msra.mxu0 0.0
    %4418 = vmatpush.msra.mxu0 0.0
    %4419 = vmatpush.msra.mxu0 0.0
    %4420 = vmatpush.msra.mxu0 %v910
    %4421 = vmatpush.msra.mxu0 %v894
    %4422 = vmatpush.msra.mxu0 %v878
    %4423 = vmatpush.msra.mxu0 %v862
    %4424 = vmatpush.msra.mxu0 %v846
    %4425 = vmatpush.msra.mxu0 %v830
    %4426 = vmatpush.msra.mxu0 %v814
    %4427 = vmatpush.msra.mxu0 %v798
    %4428 = vmatmul.f32.gmra.mxu0 %v4250
    %v4429 = vpop.f32.mrf.mxu0
    %v4430 = vadd.f32 0.0, %v4429
    %4431 = vdwg.mxu0
    %4432 = vmatpush.msra.mxu0 0.0
    %4433 = vmatpush.msra.mxu0 0.0
    %4434 = vmatpush.msra.mxu0 0.0
    %4435 = vmatpush.msra.mxu0 0.0
    %4436 = vmatpush.msra.mxu0 0.0
    %4437 = vmatpush.msra.mxu0 0.0
    %4438 = vmatpush.msra.mxu0 0.0
    %4439 = vmatpush.msra.mxu0 0.0
    %4440 = vmatpush.msra.mxu0 %v911
    %4441 = vmatpush.msra.mxu0 %v895
    %4442 = vmatpush.msra.mxu0 %v879
    %4443 = vmatpush.msra.mxu0 %v863
    %4444 = vmatpush.msra.mxu0 %v847
    %4445 = vmatpush.msra.mxu0 %v831
    %4446 = vmatpush.msra.mxu0 %v815
    %4447 = vmatpush.msra.mxu0 %v799
    %4448 = vmatmul.f32.gmra.mxu0 %v4250
    %v4449 = vpop.f32.mrf.mxu0
    %v4450 = vadd.f32 0.0, %v4449
    %4451 = vdwg.mxu0
    %4452 = vmatpush.msra.mxu0 0.0
    %4453 = vmatpush.msra.mxu0 0.0
    %4454 = vmatpush.msra.mxu0 0.0
    %4455 = vmatpush.msra.mxu0 0.0
    %4456 = vmatpush.msra.mxu0 0.0
    %4457 = vmatpush.msra.mxu0 0.0
    %4458 = vmatpush.msra.mxu0 0.0
    %4459 = vmatpush.msra.mxu0 0.0
    %4460 = vmatpush.msra.mxu0 %v912
    %4461 = vmatpush.msra.mxu0 %v896
    %4462 = vmatpush.msra.mxu0 %v880
    %4463 = vmatpush.msra.mxu0 %v864
    %4464 = vmatpush.msra.mxu0 %v848
    %4465 = vmatpush.msra.mxu0 %v832
    %4466 = vmatpush.msra.mxu0 %v816
    %4467 = vmatpush.msra.mxu0 %v800
    %4468 = vmatmul.f32.gmra.mxu0 %v4250
    %v4469 = vpop.f32.mrf.mxu0
    %v4470 = vadd.f32 0.0, %v4469
    %4471 = vdwg.mxu0
    %4472 = vmatpush.msra.mxu0 0.0
    %4473 = vmatpush.msra.mxu0 0.0
    %4474 = vmatpush.msra.mxu0 0.0
    %4475 = vmatpush.msra.mxu0 0.0
    %4476 = vmatpush.msra.mxu0 0.0
    %4477 = vmatpush.msra.mxu0 0.0
    %4478 = vmatpush.msra.mxu0 0.0
    %4479 = vmatpush.msra.mxu0 0.0
    %4480 = vmatpush.msra.mxu0 %v913
    %4481 = vmatpush.msra.mxu0 %v897
    %4482 = vmatpush.msra.mxu0 %v881
    %4483 = vmatpush.msra.mxu0 %v865
    %4484 = vmatpush.msra.mxu0 %v849
    %4485 = vmatpush.msra.mxu0 %v833
    %4486 = vmatpush.msra.mxu0 %v817
    %4487 = vmatpush.msra.mxu0 %v801
    %4488 = vmatmul.f32.gmra.mxu0 %v4250
    %v4489 = vpop.f32.mrf.mxu0
    %v4490 = vadd.f32 0.0, %v4489
    %4491 = vdwg.mxu0
    %4492 = vmatpush.msra.mxu0 0.0
    %4493 = vmatpush.msra.mxu0 0.0
    %4494 = vmatpush.msra.mxu0 0.0
    %4495 = vmatpush.msra.mxu0 0.0
    %4496 = vmatpush.msra.mxu0 0.0
    %4497 = vmatpush.msra.mxu0 0.0
    %4498 = vmatpush.msra.mxu0 0.0
    %4499 = vmatpush.msra.mxu0 0.0
    %4500 = vmatpush.msra.mxu0 %v914
    %4501 = vmatpush.msra.mxu0 %v898
    %4502 = vmatpush.msra.mxu0 %v882
    %4503 = vmatpush.msra.mxu0 %v866
    %4504 = vmatpush.msra.mxu0 %v850
    %4505 = vmatpush.msra.mxu0 %v834
    %4506 = vmatpush.msra.mxu0 %v818
    %4507 = vmatpush.msra.mxu0 %v802
    %4508 = vmatmul.f32.gmra.mxu0 %v4250
    %v4509 = vpop.f32.mrf.mxu0
    %v4510 = vadd.f32 0.0, %v4509
    %4511 = vdwg.mxu0
    %4512 = vmatpush.msra.mxu0 0.0
    %4513 = vmatpush.msra.mxu0 0.0
    %4514 = vmatpush.msra.mxu0 0.0
    %4515 = vmatpush.msra.mxu0 0.0
    %4516 = vmatpush.msra.mxu0 0.0
    %4517 = vmatpush.msra.mxu0 0.0
    %4518 = vmatpush.msra.mxu0 0.0
    %4519 = vmatpush.msra.mxu0 0.0
    %4520 = vmatpush.msra.mxu0 %v915
    %4521 = vmatpush.msra.mxu0 %v899
    %4522 = vmatpush.msra.mxu0 %v883
    %4523 = vmatpush.msra.mxu0 %v867
    %4524 = vmatpush.msra.mxu0 %v851
    %4525 = vmatpush.msra.mxu0 %v835
    %4526 = vmatpush.msra.mxu0 %v819
    %4527 = vmatpush.msra.mxu0 %v803
    %4528 = vmatmul.f32.gmra.mxu0 %v4250
    %v4529 = vpop.f32.mrf.mxu0
    %v4530 = vadd.f32 0.0, %v4529
    %4531 = vdwg.mxu0
    %4532 = vmatpush.msra.mxu0 0.0
    %4533 = vmatpush.msra.mxu0 0.0
    %4534 = vmatpush.msra.mxu0 0.0
    %4535 = vmatpush.msra.mxu0 0.0
    %4536 = vmatpush.msra.mxu0 0.0
    %4537 = vmatpush.msra.mxu0 0.0
    %4538 = vmatpush.msra.mxu0 0.0
    %4539 = vmatpush.msra.mxu0 0.0
    %4540 = vmatpush.msra.mxu0 %v916
    %4541 = vmatpush.msra.mxu0 %v900
    %4542 = vmatpush.msra.mxu0 %v884
    %4543 = vmatpush.msra.mxu0 %v868
    %4544 = vmatpush.msra.mxu0 %v852
    %4545 = vmatpush.msra.mxu0 %v836
    %4546 = vmatpush.msra.mxu0 %v820
    %4547 = vmatpush.msra.mxu0 %v804
    %4548 = vmatmul.f32.gmra.mxu0 %v4250
    %v4549 = vpop.f32.mrf.mxu0
    %v4550 = vadd.f32 0.0, %v4549
    %4551 = vdwg.mxu0
    %4552 = vmatpush.msra.mxu0 0.0
    %4553 = vmatpush.msra.mxu0 0.0
    %4554 = vmatpush.msra.mxu0 0.0
    %4555 = vmatpush.msra.mxu0 0.0
    %4556 = vmatpush.msra.mxu0 0.0
    %4557 = vmatpush.msra.mxu0 0.0
    %4558 = vmatpush.msra.mxu0 0.0
    %4559 = vmatpush.msra.mxu0 0.0
    %4560 = vmatpush.msra.mxu0 %v917
    %4561 = vmatpush.msra.mxu0 %v901
    %4562 = vmatpush.msra.mxu0 %v885
    %4563 = vmatpush.msra.mxu0 %v869
    %4564 = vmatpush.msra.mxu0 %v853
    %4565 = vmatpush.msra.mxu0 %v837
    %4566 = vmatpush.msra.mxu0 %v821
    %4567 = vmatpush.msra.mxu0 %v805
    %4568 = vmatmul.f32.gmra.mxu0 %v4250
    %v4569 = vpop.f32.mrf.mxu0
    %v4570 = vadd.f32 0.0, %v4569
    %4571 = vdwg.mxu0
    %v4572 = vrcp.pop %v4270
    %v4573 = vmul.f32 %v4270, %v4572
    %v4574 = vsub.f32 1.0, %v4573
    %v4575 = vmul.f32 %v4572, %v4574
    %v4576 = vadd.f32 %v4572, %v4575
    %vm4577 = vweird.f32 %v4270
    %vm4578 = vweird.f32 %v4572
    %vm4579 = vmor %vm4577, %vm4578
    %v4580 = vsel %vm4579, %v4572, %v4576
    %v4581 = vand.u32 2147483647, %v4270
    %vm4582 = vcmp.eq.f32.partialorder %v4581, 8.507059e+37
    %v4583 = vand.u32 %v4270, 2147483648
    %v4584 = vor.u32 1.1754944e-38, %v4583
    %v4585 = vsel %vm4582, %v4584, %v4580
    %v4586 = vmul.f32 %v3898, %v4585
    %v4587 = vrcp.pop %v4290
    %v4588 = vmul.f32 %v4290, %v4587
    %v4589 = vsub.f32 1.0, %v4588
    %v4590 = vmul.f32 %v4587, %v4589
    %v4591 = vadd.f32 %v4587, %v4590
    %vm4592 = vweird.f32 %v4290
    %vm4593 = vweird.f32 %v4587
    %vm4594 = vmor %vm4592, %vm4593
    %v4595 = vsel %vm4594, %v4587, %v4591
    %v4596 = vand.u32 2147483647, %v4290
    %vm4597 = vcmp.eq.f32.partialorder %v4596, 8.507059e+37
    %v4598 = vand.u32 %v4290, 2147483648
    %v4599 = vor.u32 1.1754944e-38, %v4598
    %v4600 = vsel %vm4597, %v4599, %v4595
    %v4601 = vmul.f32 %v3900, %v4600
    %v4602 = vrcp.pop %v4310
    %v4603 = vmul.f32 %v4310, %v4602
    %v4604 = vsub.f32 1.0, %v4603
    %v4605 = vmul.f32 %v4602, %v4604
    %v4606 = vadd.f32 %v4602, %v4605
    %vm4607 = vweird.f32 %v4310
    %vm4608 = vweird.f32 %v4602
    %vm4609 = vmor %vm4607, %vm4608
    %v4610 = vsel %vm4609, %v4602, %v4606
    %v4611 = vand.u32 2147483647, %v4310
    %vm4612 = vcmp.eq.f32.partialorder %v4611, 8.507059e+37
    %v4613 = vand.u32 %v4310, 2147483648
    %v4614 = vor.u32 1.1754944e-38, %v4613
    %v4615 = vsel %vm4612, %v4614, %v4610
    %v4616 = vmul.f32 %v3902, %v4615
    %v4617 = vrcp.pop %v4330
    %v4618 = vmul.f32 %v4330, %v4617
    %v4619 = vsub.f32 1.0, %v4618
    %v4620 = vmul.f32 %v4617, %v4619
    %v4621 = vadd.f32 %v4617, %v4620
    %vm4622 = vweird.f32 %v4330
    %vm4623 = vweird.f32 %v4617
    %vm4624 = vmor %vm4622, %vm4623
    %v4625 = vsel %vm4624, %v4617, %v4621
    %v4626 = vand.u32 2147483647, %v4330
    %vm4627 = vcmp.eq.f32.partialorder %v4626, 8.507059e+37
    %v4628 = vand.u32 %v4330, 2147483648
    %v4629 = vor.u32 1.1754944e-38, %v4628
    %v4630 = vsel %vm4627, %v4629, %v4625
    %v4631 = vmul.f32 %v3904, %v4630
    %v4632 = vrcp.pop %v4350
    %v4633 = vmul.f32 %v4350, %v4632
    %v4634 = vsub.f32 1.0, %v4633
    %v4635 = vmul.f32 %v4632, %v4634
    %v4636 = vadd.f32 %v4632, %v4635
    %vm4637 = vweird.f32 %v4350
    %vm4638 = vweird.f32 %v4632
    %vm4639 = vmor %vm4637, %vm4638
    %v4640 = vsel %vm4639, %v4632, %v4636
    %v4641 = vand.u32 2147483647, %v4350
    %vm4642 = vcmp.eq.f32.partialorder %v4641, 8.507059e+37
    %v4643 = vand.u32 %v4350, 2147483648
    %v4644 = vor.u32 1.1754944e-38, %v4643
    %v4645 = vsel %vm4642, %v4644, %v4640
    %v4646 = vmul.f32 %v3906, %v4645
    %v4647 = vrcp.pop %v4370
    %v4648 = vmul.f32 %v4370, %v4647
    %v4649 = vsub.f32 1.0, %v4648
    %v4650 = vmul.f32 %v4647, %v4649
    %v4651 = vadd.f32 %v4647, %v4650
    %vm4652 = vweird.f32 %v4370
    %vm4653 = vweird.f32 %v4647
    %vm4654 = vmor %vm4652, %vm4653
    %v4655 = vsel %vm4654, %v4647, %v4651
    %v4656 = vand.u32 2147483647, %v4370
    %vm4657 = vcmp.eq.f32.partialorder %v4656, 8.507059e+37
    %v4658 = vand.u32 %v4370, 2147483648
    %v4659 = vor.u32 1.1754944e-38, %v4658
    %v4660 = vsel %vm4657, %v4659, %v4655
    %v4661 = vmul.f32 %v3908, %v4660
    %v4662 = vrcp.pop %v4390
    %v4663 = vmul.f32 %v4390, %v4662
    %v4664 = vsub.f32 1.0, %v4663
    %v4665 = vmul.f32 %v4662, %v4664
    %v4666 = vadd.f32 %v4662, %v4665
    %vm4667 = vweird.f32 %v4390
    %vm4668 = vweird.f32 %v4662
    %vm4669 = vmor %vm4667, %vm4668
    %v4670 = vsel %vm4669, %v4662, %v4666
    %v4671 = vand.u32 2147483647, %v4390
    %vm4672 = vcmp.eq.f32.partialorder %v4671, 8.507059e+37
    %v4673 = vand.u32 %v4390, 2147483648
    %v4674 = vor.u32 1.1754944e-38, %v4673
    %v4675 = vsel %vm4672, %v4674, %v4670
    %v4676 = vmul.f32 %v3910, %v4675
    %v4677 = vrcp.pop %v4410
    %v4678 = vmul.f32 %v4410, %v4677
    %v4679 = vsub.f32 1.0, %v4678
    %v4680 = vmul.f32 %v4677, %v4679
    %v4681 = vadd.f32 %v4677, %v4680
    %vm4682 = vweird.f32 %v4410
    %vm4683 = vweird.f32 %v4677
    %vm4684 = vmor %vm4682, %vm4683
    %v4685 = vsel %vm4684, %v4677, %v4681
    %v4686 = vand.u32 2147483647, %v4410
    %vm4687 = vcmp.eq.f32.partialorder %v4686, 8.507059e+37
    %v4688 = vand.u32 %v4410, 2147483648
    %v4689 = vor.u32 1.1754944e-38, %v4688
    %v4690 = vsel %vm4687, %v4689, %v4685
    %v4691 = vmul.f32 %v3912, %v4690
    %v4692 = vrcp.pop %v4430
    %v4693 = vmul.f32 %v4430, %v4692
    %v4694 = vsub.f32 1.0, %v4693
    %v4695 = vmul.f32 %v4692, %v4694
    %v4696 = vadd.f32 %v4692, %v4695
    %vm4697 = vweird.f32 %v4430
    %vm4698 = vweird.f32 %v4692
    %vm4699 = vmor %vm4697, %vm4698
    %v4700 = vsel %vm4699, %v4692, %v4696
    %v4701 = vand.u32 2147483647, %v4430
    %vm4702 = vcmp.eq.f32.partialorder %v4701, 8.507059e+37
    %v4703 = vand.u32 %v4430, 2147483648
    %v4704 = vor.u32 1.1754944e-38, %v4703
    %v4705 = vsel %vm4702, %v4704, %v4700
    %v4706 = vmul.f32 %v3914, %v4705
    %v4707 = vrcp.pop %v4450
    %v4708 = vmul.f32 %v4450, %v4707
    %v4709 = vsub.f32 1.0, %v4708
    %v4710 = vmul.f32 %v4707, %v4709
    %v4711 = vadd.f32 %v4707, %v4710
    %vm4712 = vweird.f32 %v4450
    %vm4713 = vweird.f32 %v4707
    %vm4714 = vmor %vm4712, %vm4713
    %v4715 = vsel %vm4714, %v4707, %v4711
    %v4716 = vand.u32 2147483647, %v4450
    %vm4717 = vcmp.eq.f32.partialorder %v4716, 8.507059e+37
    %v4718 = vand.u32 %v4450, 2147483648
    %v4719 = vor.u32 1.1754944e-38, %v4718
    %v4720 = vsel %vm4717, %v4719, %v4715
    %v4721 = vmul.f32 %v3916, %v4720
    %v4722 = vrcp.pop %v4470
    %v4723 = vmul.f32 %v4470, %v4722
    %v4724 = vsub.f32 1.0, %v4723
    %v4725 = vmul.f32 %v4722, %v4724
    %v4726 = vadd.f32 %v4722, %v4725
    %vm4727 = vweird.f32 %v4470
    %vm4728 = vweird.f32 %v4722
    %vm4729 = vmor %vm4727, %vm4728
    %v4730 = vsel %vm4729, %v4722, %v4726
    %v4731 = vand.u32 2147483647, %v4470
    %vm4732 = vcmp.eq.f32.partialorder %v4731, 8.507059e+37
    %v4733 = vand.u32 %v4470, 2147483648
    %v4734 = vor.u32 1.1754944e-38, %v4733
    %v4735 = vsel %vm4732, %v4734, %v4730
    %v4736 = vmul.f32 %v3918, %v4735
    %v4737 = vrcp.pop %v4490
    %v4738 = vmul.f32 %v4490, %v4737
    %v4739 = vsub.f32 1.0, %v4738
    %v4740 = vmul.f32 %v4737, %v4739
    %v4741 = vadd.f32 %v4737, %v4740
    %vm4742 = vweird.f32 %v4490
    %vm4743 = vweird.f32 %v4737
    %vm4744 = vmor %vm4742, %vm4743
    %v4745 = vsel %vm4744, %v4737, %v4741
    %v4746 = vand.u32 2147483647, %v4490
    %vm4747 = vcmp.eq.f32.partialorder %v4746, 8.507059e+37
    %v4748 = vand.u32 %v4490, 2147483648
    %v4749 = vor.u32 1.1754944e-38, %v4748
    %v4750 = vsel %vm4747, %v4749, %v4745
    %v4751 = vmul.f32 %v3920, %v4750
    %v4752 = vrcp.pop %v4510
    %v4753 = vmul.f32 %v4510, %v4752
    %v4754 = vsub.f32 1.0, %v4753
    %v4755 = vmul.f32 %v4752, %v4754
    %v4756 = vadd.f32 %v4752, %v4755
    %vm4757 = vweird.f32 %v4510
    %vm4758 = vweird.f32 %v4752
    %vm4759 = vmor %vm4757, %vm4758
    %v4760 = vsel %vm4759, %v4752, %v4756
    %v4761 = vand.u32 2147483647, %v4510
    %vm4762 = vcmp.eq.f32.partialorder %v4761, 8.507059e+37
    %v4763 = vand.u32 %v4510, 2147483648
    %v4764 = vor.u32 1.1754944e-38, %v4763
    %v4765 = vsel %vm4762, %v4764, %v4760
    %v4766 = vmul.f32 %v3922, %v4765
    %v4767 = vrcp.pop %v4530
    %v4768 = vmul.f32 %v4530, %v4767
    %v4769 = vsub.f32 1.0, %v4768
    %v4770 = vmul.f32 %v4767, %v4769
    %v4771 = vadd.f32 %v4767, %v4770
    %vm4772 = vweird.f32 %v4530
    %vm4773 = vweird.f32 %v4767
    %vm4774 = vmor %vm4772, %vm4773
    %v4775 = vsel %vm4774, %v4767, %v4771
    %v4776 = vand.u32 2147483647, %v4530
    %vm4777 = vcmp.eq.f32.partialorder %v4776, 8.507059e+37
    %v4778 = vand.u32 %v4530, 2147483648
    %v4779 = vor.u32 1.1754944e-38, %v4778
    %v4780 = vsel %vm4777, %v4779, %v4775
    %v4781 = vmul.f32 %v3924, %v4780
    %v4782 = vrcp.pop %v4550
    %v4783 = vmul.f32 %v4550, %v4782
    %v4784 = vsub.f32 1.0, %v4783
    %v4785 = vmul.f32 %v4782, %v4784
    %v4786 = vadd.f32 %v4782, %v4785
    %vm4787 = vweird.f32 %v4550
    %vm4788 = vweird.f32 %v4782
    %vm4789 = vmor %vm4787, %vm4788
    %v4790 = vsel %vm4789, %v4782, %v4786
    %v4791 = vand.u32 2147483647, %v4550
    %vm4792 = vcmp.eq.f32.partialorder %v4791, 8.507059e+37
    %v4793 = vand.u32 %v4550, 2147483648
    %v4794 = vor.u32 1.1754944e-38, %v4793
    %v4795 = vsel %vm4792, %v4794, %v4790
    %v4796 = vmul.f32 %v3926, %v4795
    %v4797 = vrcp.pop %v4570
    %v4798 = vmul.f32 %v4570, %v4797
    %v4799 = vsub.f32 1.0, %v4798
    %v4800 = vmul.f32 %v4797, %v4799
    %v4801 = vadd.f32 %v4797, %v4800
    %vm4802 = vweird.f32 %v4570
    %vm4803 = vweird.f32 %v4797
    %vm4804 = vmor %vm4802, %vm4803
    %v4805 = vsel %vm4804, %v4797, %v4801
    %v4806 = vand.u32 2147483647, %v4570
    %vm4807 = vcmp.eq.f32.partialorder %v4806, 8.507059e+37
    %v4808 = vand.u32 %v4570, 2147483648
    %v4809 = vor.u32 1.1754944e-38, %v4808
    %v4810 = vsel %vm4807, %v4809, %v4805
    %v4811 = vmul.f32 %v3928, %v4810
    %v4812 = vld [vmem:[%s53] sm:$0xff]
    %v4813 = vld [vmem:[%s53 + $0x8] sm:$0xff]
    %v4814 = vld [vmem:[%s53 + $0x10] sm:$0xff]
    %v4815 = vld [vmem:[%s53 + $0x18] sm:$0xff]
    %v4816 = vld [vmem:[%s53 + $0x20] sm:$0xff]
    %v4817 = vld [vmem:[%s53 + $0x28] sm:$0xff]
    %v4818 = vld [vmem:[%s53 + $0x30] sm:$0xff]
    %v4819 = vld [vmem:[%s53 + $0x38] sm:$0xff]
    %v4820 = vld [vmem:[%s53 + $0x40] sm:$0xff]
    %v4821 = vld [vmem:[%s53 + $0x48] sm:$0xff]
    %v4822 = vld [vmem:[%s53 + $0x50] sm:$0xff]
    %v4823 = vld [vmem:[%s53 + $0x58] sm:$0xff]
    %v4824 = vld [vmem:[%s53 + $0x60] sm:$0xff]
    %v4825 = vld [vmem:[%s53 + $0x68] sm:$0xff]
    %v4826 = vld [vmem:[%s53 + $0x70] sm:$0xff]
    %v4827 = vld [vmem:[%s53 + $0x78] sm:$0xff]
    %v4828 = vld [vmem:[%s53 + $0x80] sm:$0xff]
    %v4829 = vld [vmem:[%s53 + $0x88] sm:$0xff]
    %v4830 = vld [vmem:[%s53 + $0x90] sm:$0xff]
    %v4831 = vld [vmem:[%s53 + $0x98] sm:$0xff]
    %v4832 = vld [vmem:[%s53 + $0xa0] sm:$0xff]
    %v4833 = vld [vmem:[%s53 + $0xa8] sm:$0xff]
    %v4834 = vld [vmem:[%s53 + $0xb0] sm:$0xff]
    %v4835 = vld [vmem:[%s53 + $0xb8] sm:$0xff]
    %v4836 = vld [vmem:[%s53 + $0xc0] sm:$0xff]
    %v4837 = vld [vmem:[%s53 + $0xc8] sm:$0xff]
    %v4838 = vld [vmem:[%s53 + $0xd0] sm:$0xff]
    %v4839 = vld [vmem:[%s53 + $0xd8] sm:$0xff]
    %v4840 = vld [vmem:[%s53 + $0xe0] sm:$0xff]
    %v4841 = vld [vmem:[%s53 + $0xe8] sm:$0xff]
    %v4842 = vld [vmem:[%s53 + $0xf0] sm:$0xff]
    %v4843 = vld [vmem:[%s53 + $0xf8] sm:$0xff]
    %v4844 = vld [vmem:[%s55] sm:$0xff]
    %v4845 = vld [vmem:[%s55 + $0x8] sm:$0xff]
    %v4846 = vld [vmem:[%s57] sm:$0xff]
    %v4847 = vld [vmem:[%s57 + $0x8] sm:$0xff]
    %v4848 = vld [vmem:[%s59] sm:$0xff]
    %v4849 = vld [vmem:[%s59 + $0x8] sm:$0xff]
    %v4850 = vld [vmem:[%s61] sm:$0xff]
    %v4851 = vld [vmem:[%s61 + $0x8] sm:$0xff]
    %v4852 = vld [vmem:[%s63] sm:$0x1]
    %v4853 = vperm.slane %v4586, 0
    %v4854 = vperm.slane %v4601, 0
    %v4855 = vperm.slane %v4616, 0
    %v4856 = vperm.slane %v4631, 0
    %v4857 = vperm.slane %v4646, 0
    %v4858 = vperm.slane %v4661, 0
    %v4859 = vperm.slane %v4676, 0
    %v4860 = vperm.slane %v4691, 0
    %v4861 = vperm.slane %v4706, 0
    %v4862 = vperm.slane %v4721, 0
    %v4863 = vperm.slane %v4736, 0
    %v4864 = vperm.slane %v4751, 0
    %v4865 = vperm.slane %v4766, 0
    %v4866 = vperm.slane %v4781, 0
    %v4867 = vperm.slane %v4796, 0
    %v4868 = vperm.slane %v4811, 0
    %v4869 = vmul.f32 %v2582, %v4853
    %v4870 = vmul.f32 %v2584, %v4854
    %v4871 = vmul.f32 %v2586, %v4855
    %v4872 = vmul.f32 %v2588, %v4856
    %v4873 = vmul.f32 %v2590, %v4857
    %v4874 = vmul.f32 %v2592, %v4858
    %v4875 = vmul.f32 %v2594, %v4859
    %v4876 = vmul.f32 %v2596, %v4860
    %v4877 = vmul.f32 %v2598, %v4861
    %v4878 = vmul.f32 %v2600, %v4862
    %v4879 = vmul.f32 %v2602, %v4863
    %v4880 = vmul.f32 %v2604, %v4864
    %v4881 = vmul.f32 %v2606, %v4865
    %v4882 = vmul.f32 %v2608, %v4866
    %v4883 = vmul.f32 %v2610, %v4867
    %v4884 = vmul.f32 %v2612, %v4868
    %v4885 = vmul.f32 %v2614, %v4853
    %v4886 = vmul.f32 %v2616, %v4854
    %v4887 = vmul.f32 %v2618, %v4855
    %v4888 = vmul.f32 %v2620, %v4856
    %v4889 = vmul.f32 %v2622, %v4857
    %v4890 = vmul.f32 %v2624, %v4858
    %v4891 = vmul.f32 %v2626, %v4859
    %v4892 = vmul.f32 %v2628, %v4860
    %v4893 = vmul.f32 %v2630, %v4861
    %v4894 = vmul.f32 %v2632, %v4862
    %v4895 = vmul.f32 %v2634, %v4863
    %v4896 = vmul.f32 %v2636, %v4864
    %v4897 = vmul.f32 %v2638, %v4865
    %v4898 = vmul.f32 %v2640, %v4866
    %v4899 = vmul.f32 %v2642, %v4867
    %v4900 = vmul.f32 %v2644, %v4868
    %4901 = vmatpush.msra.mxu0 %v549
    %4902 = vmatpush.msra.mxu0 %v548
    %4903 = vmatpush.msra.mxu0 %v547
    %4904 = vmatpush.msra.mxu0 %v546
    %4905 = vmatpush.msra.mxu0 %v545
    %4906 = vmatpush.msra.mxu0 %v544
    %4907 = vmatpush.msra.mxu0 %v543
    %4908 = vmatpush.msra.mxu0 %v542
    %4909 = vmatpush.msra.mxu0 %v541
    %4910 = vmatpush.msra.mxu0 %v540
    %4911 = vmatpush.msra.mxu0 %v539
    %4912 = vmatpush.msra.mxu0 %v538
    %4913 = vmatpush.msra.mxu0 %v537
    %4914 = vmatpush.msra.mxu0 %v536
    %4915 = vmatpush.msra.mxu0 %v535
    %4916 = vmatpush.msra.mxu0 %v534
    %4917 = vmatmul.f32.gmra.mxu0 %v4869
    %v4918 = vpop.f32.mrf.mxu0
    %v4919 = vadd.f32 0.0, %v4918
    %4920 = vmatmul.f32.gmra.mxu0 %v4885
    %v4921 = vpop.f32.mrf.mxu0
    %v4922 = vadd.f32 0.0, %v4921
    %4923 = vdwg.mxu0
    %4924 = vmatpush.msra.mxu0 %v565
    %4925 = vmatpush.msra.mxu0 %v564
    %4926 = vmatpush.msra.mxu0 %v563
    %4927 = vmatpush.msra.mxu0 %v562
    %4928 = vmatpush.msra.mxu0 %v561
    %4929 = vmatpush.msra.mxu0 %v560
    %4930 = vmatpush.msra.mxu0 %v559
    %4931 = vmatpush.msra.mxu0 %v558
    %4932 = vmatpush.msra.mxu0 %v557
    %4933 = vmatpush.msra.mxu0 %v556
    %4934 = vmatpush.msra.mxu0 %v555
    %4935 = vmatpush.msra.mxu0 %v554
    %4936 = vmatpush.msra.mxu0 %v553
    %4937 = vmatpush.msra.mxu0 %v552
    %4938 = vmatpush.msra.mxu0 %v551
    %4939 = vmatpush.msra.mxu0 %v550
    %4940 = vmatmul.f32.gmra.mxu0 %v4870
    %v4941 = vpop.f32.mrf.mxu0
    %v4942 = vadd.f32 %v4919, %v4941
    %4943 = vmatmul.f32.gmra.mxu0 %v4886
    %v4944 = vpop.f32.mrf.mxu0
    %v4945 = vadd.f32 %v4922, %v4944
    %4946 = vdwg.mxu0
    %4947 = vmatpush.msra.mxu0 %v581
    %4948 = vmatpush.msra.mxu0 %v580
    %4949 = vmatpush.msra.mxu0 %v579
    %4950 = vmatpush.msra.mxu0 %v578
    %4951 = vmatpush.msra.mxu0 %v577
    %4952 = vmatpush.msra.mxu0 %v576
    %4953 = vmatpush.msra.mxu0 %v575
    %4954 = vmatpush.msra.mxu0 %v574
    %4955 = vmatpush.msra.mxu0 %v573
    %4956 = vmatpush.msra.mxu0 %v572
    %4957 = vmatpush.msra.mxu0 %v571
    %4958 = vmatpush.msra.mxu0 %v570
    %4959 = vmatpush.msra.mxu0 %v569
    %4960 = vmatpush.msra.mxu0 %v568
    %4961 = vmatpush.msra.mxu0 %v567
    %4962 = vmatpush.msra.mxu0 %v566
    %4963 = vmatmul.f32.gmra.mxu0 %v4871
    %v4964 = vpop.f32.mrf.mxu0
    %v4965 = vadd.f32 %v4942, %v4964
    %4966 = vmatmul.f32.gmra.mxu0 %v4887
    %v4967 = vpop.f32.mrf.mxu0
    %v4968 = vadd.f32 %v4945, %v4967
    %4969 = vdwg.mxu0
    %4970 = vmatpush.msra.mxu0 %v597
    %4971 = vmatpush.msra.mxu0 %v596
    %4972 = vmatpush.msra.mxu0 %v595
    %4973 = vmatpush.msra.mxu0 %v594
    %4974 = vmatpush.msra.mxu0 %v593
    %4975 = vmatpush.msra.mxu0 %v592
    %4976 = vmatpush.msra.mxu0 %v591
    %4977 = vmatpush.msra.mxu0 %v590
    %4978 = vmatpush.msra.mxu0 %v589
    %4979 = vmatpush.msra.mxu0 %v588
    %4980 = vmatpush.msra.mxu0 %v587
    %4981 = vmatpush.msra.mxu0 %v586
    %4982 = vmatpush.msra.mxu0 %v585
    %4983 = vmatpush.msra.mxu0 %v584
    %4984 = vmatpush.msra.mxu0 %v583
    %4985 = vmatpush.msra.mxu0 %v582
    %4986 = vmatmul.f32.gmra.mxu0 %v4872
    %v4987 = vpop.f32.mrf.mxu0
    %v4988 = vadd.f32 %v4965, %v4987
    %4989 = vmatmul.f32.gmra.mxu0 %v4888
    %v4990 = vpop.f32.mrf.mxu0
    %v4991 = vadd.f32 %v4968, %v4990
    %4992 = vdwg.mxu0
    %4993 = vmatpush.msra.mxu0 %v613
    %4994 = vmatpush.msra.mxu0 %v612
    %4995 = vmatpush.msra.mxu0 %v611
    %4996 = vmatpush.msra.mxu0 %v610
    %4997 = vmatpush.msra.mxu0 %v609
    %4998 = vmatpush.msra.mxu0 %v608
    %4999 = vmatpush.msra.mxu0 %v607
    %5000 = vmatpush.msra.mxu0 %v606
    %5001 = vmatpush.msra.mxu0 %v605
    %5002 = vmatpush.msra.mxu0 %v604
    %5003 = vmatpush.msra.mxu0 %v603
    %5004 = vmatpush.msra.mxu0 %v602
    %5005 = vmatpush.msra.mxu0 %v601
    %5006 = vmatpush.msra.mxu0 %v600
    %5007 = vmatpush.msra.mxu0 %v599
    %5008 = vmatpush.msra.mxu0 %v598
    %5009 = vmatmul.f32.gmra.mxu0 %v4873
    %v5010 = vpop.f32.mrf.mxu0
    %v5011 = vadd.f32 %v4988, %v5010
    %5012 = vmatmul.f32.gmra.mxu0 %v4889
    %v5013 = vpop.f32.mrf.mxu0
    %v5014 = vadd.f32 %v4991, %v5013
    %5015 = vdwg.mxu0
    %5016 = vmatpush.msra.mxu0 %v629
    %5017 = vmatpush.msra.mxu0 %v628
    %5018 = vmatpush.msra.mxu0 %v627
    %5019 = vmatpush.msra.mxu0 %v626
    %5020 = vmatpush.msra.mxu0 %v625
    %5021 = vmatpush.msra.mxu0 %v624
    %5022 = vmatpush.msra.mxu0 %v623
    %5023 = vmatpush.msra.mxu0 %v622
    %5024 = vmatpush.msra.mxu0 %v621
    %5025 = vmatpush.msra.mxu0 %v620
    %5026 = vmatpush.msra.mxu0 %v619
    %5027 = vmatpush.msra.mxu0 %v618
    %5028 = vmatpush.msra.mxu0 %v617
    %5029 = vmatpush.msra.mxu0 %v616
    %5030 = vmatpush.msra.mxu0 %v615
    %5031 = vmatpush.msra.mxu0 %v614
    %5032 = vmatmul.f32.gmra.mxu0 %v4874
    %v5033 = vpop.f32.mrf.mxu0
    %v5034 = vadd.f32 %v5011, %v5033
    %5035 = vmatmul.f32.gmra.mxu0 %v4890
    %v5036 = vpop.f32.mrf.mxu0
    %v5037 = vadd.f32 %v5014, %v5036
    %5038 = vdwg.mxu0
    %5039 = vmatpush.msra.mxu0 %v645
    %5040 = vmatpush.msra.mxu0 %v644
    %5041 = vmatpush.msra.mxu0 %v643
    %5042 = vmatpush.msra.mxu0 %v642
    %5043 = vmatpush.msra.mxu0 %v641
    %5044 = vmatpush.msra.mxu0 %v640
    %5045 = vmatpush.msra.mxu0 %v639
    %5046 = vmatpush.msra.mxu0 %v638
    %5047 = vmatpush.msra.mxu0 %v637
    %5048 = vmatpush.msra.mxu0 %v636
    %5049 = vmatpush.msra.mxu0 %v635
    %5050 = vmatpush.msra.mxu0 %v634
    %5051 = vmatpush.msra.mxu0 %v633
    %5052 = vmatpush.msra.mxu0 %v632
    %5053 = vmatpush.msra.mxu0 %v631
    %5054 = vmatpush.msra.mxu0 %v630
    %5055 = vmatmul.f32.gmra.mxu0 %v4875
    %v5056 = vpop.f32.mrf.mxu0
    %v5057 = vadd.f32 %v5034, %v5056
    %5058 = vmatmul.f32.gmra.mxu0 %v4891
    %v5059 = vpop.f32.mrf.mxu0
    %v5060 = vadd.f32 %v5037, %v5059
    %5061 = vdwg.mxu0
    %5062 = vmatpush.msra.mxu0 %v661
    %5063 = vmatpush.msra.mxu0 %v660
    %5064 = vmatpush.msra.mxu0 %v659
    %5065 = vmatpush.msra.mxu0 %v658
    %5066 = vmatpush.msra.mxu0 %v657
    %5067 = vmatpush.msra.mxu0 %v656
    %5068 = vmatpush.msra.mxu0 %v655
    %5069 = vmatpush.msra.mxu0 %v654
    %5070 = vmatpush.msra.mxu0 %v653
    %5071 = vmatpush.msra.mxu0 %v652
    %5072 = vmatpush.msra.mxu0 %v651
    %5073 = vmatpush.msra.mxu0 %v650
    %5074 = vmatpush.msra.mxu0 %v649
    %5075 = vmatpush.msra.mxu0 %v648
    %5076 = vmatpush.msra.mxu0 %v647
    %5077 = vmatpush.msra.mxu0 %v646
    %5078 = vmatmul.f32.gmra.mxu0 %v4876
    %v5079 = vpop.f32.mrf.mxu0
    %v5080 = vadd.f32 %v5057, %v5079
    %5081 = vmatmul.f32.gmra.mxu0 %v4892
    %v5082 = vpop.f32.mrf.mxu0
    %v5083 = vadd.f32 %v5060, %v5082
    %5084 = vdwg.mxu0
    %5085 = vmatpush.msra.mxu0 %v677
    %5086 = vmatpush.msra.mxu0 %v676
    %5087 = vmatpush.msra.mxu0 %v675
    %5088 = vmatpush.msra.mxu0 %v674
    %5089 = vmatpush.msra.mxu0 %v673
    %5090 = vmatpush.msra.mxu0 %v672
    %5091 = vmatpush.msra.mxu0 %v671
    %5092 = vmatpush.msra.mxu0 %v670
    %5093 = vmatpush.msra.mxu0 %v669
    %5094 = vmatpush.msra.mxu0 %v668
    %5095 = vmatpush.msra.mxu0 %v667
    %5096 = vmatpush.msra.mxu0 %v666
    %5097 = vmatpush.msra.mxu0 %v665
    %5098 = vmatpush.msra.mxu0 %v664
    %5099 = vmatpush.msra.mxu0 %v663
    %5100 = vmatpush.msra.mxu0 %v662
    %5101 = vmatmul.f32.gmra.mxu0 %v4877
    %v5102 = vpop.f32.mrf.mxu0
    %v5103 = vadd.f32 %v5080, %v5102
    %5104 = vmatmul.f32.gmra.mxu0 %v4893
    %v5105 = vpop.f32.mrf.mxu0
    %v5106 = vadd.f32 %v5083, %v5105
    %5107 = vdwg.mxu0
    %5108 = vmatpush.msra.mxu0 %v693
    %5109 = vmatpush.msra.mxu0 %v692
    %5110 = vmatpush.msra.mxu0 %v691
    %5111 = vmatpush.msra.mxu0 %v690
    %5112 = vmatpush.msra.mxu0 %v689
    %5113 = vmatpush.msra.mxu0 %v688
    %5114 = vmatpush.msra.mxu0 %v687
    %5115 = vmatpush.msra.mxu0 %v686
    %5116 = vmatpush.msra.mxu0 %v685
    %5117 = vmatpush.msra.mxu0 %v684
    %5118 = vmatpush.msra.mxu0 %v683
    %5119 = vmatpush.msra.mxu0 %v682
    %5120 = vmatpush.msra.mxu0 %v681
    %5121 = vmatpush.msra.mxu0 %v680
    %5122 = vmatpush.msra.mxu0 %v679
    %5123 = vmatpush.msra.mxu0 %v678
    %5124 = vmatmul.f32.gmra.mxu0 %v4878
    %v5125 = vpop.f32.mrf.mxu0
    %v5126 = vadd.f32 %v5103, %v5125
    %5127 = vmatmul.f32.gmra.mxu0 %v4894
    %v5128 = vpop.f32.mrf.mxu0
    %v5129 = vadd.f32 %v5106, %v5128
    %5130 = vdwg.mxu0
    %5131 = vmatpush.msra.mxu0 %v709
    %5132 = vmatpush.msra.mxu0 %v708
    %5133 = vmatpush.msra.mxu0 %v707
    %5134 = vmatpush.msra.mxu0 %v706
    %5135 = vmatpush.msra.mxu0 %v705
    %5136 = vmatpush.msra.mxu0 %v704
    %5137 = vmatpush.msra.mxu0 %v703
    %5138 = vmatpush.msra.mxu0 %v702
    %5139 = vmatpush.msra.mxu0 %v701
    %5140 = vmatpush.msra.mxu0 %v700
    %5141 = vmatpush.msra.mxu0 %v699
    %5142 = vmatpush.msra.mxu0 %v698
    %5143 = vmatpush.msra.mxu0 %v697
    %5144 = vmatpush.msra.mxu0 %v696
    %5145 = vmatpush.msra.mxu0 %v695
    %5146 = vmatpush.msra.mxu0 %v694
    %5147 = vmatmul.f32.gmra.mxu0 %v4879
    %v5148 = vpop.f32.mrf.mxu0
    %v5149 = vadd.f32 %v5126, %v5148
    %5150 = vmatmul.f32.gmra.mxu0 %v4895
    %v5151 = vpop.f32.mrf.mxu0
    %v5152 = vadd.f32 %v5129, %v5151
    %5153 = vdwg.mxu0
    %5154 = vmatpush.msra.mxu0 %v725
    %5155 = vmatpush.msra.mxu0 %v724
    %5156 = vmatpush.msra.mxu0 %v723
    %5157 = vmatpush.msra.mxu0 %v722
    %5158 = vmatpush.msra.mxu0 %v721
    %5159 = vmatpush.msra.mxu0 %v720
    %5160 = vmatpush.msra.mxu0 %v719
    %5161 = vmatpush.msra.mxu0 %v718
    %5162 = vmatpush.msra.mxu0 %v717
    %5163 = vmatpush.msra.mxu0 %v716
    %5164 = vmatpush.msra.mxu0 %v715
    %5165 = vmatpush.msra.mxu0 %v714
    %5166 = vmatpush.msra.mxu0 %v713
    %5167 = vmatpush.msra.mxu0 %v712
    %5168 = vmatpush.msra.mxu0 %v711
    %5169 = vmatpush.msra.mxu0 %v710
    %5170 = vmatmul.f32.gmra.mxu0 %v4880
    %v5171 = vpop.f32.mrf.mxu0
    %v5172 = vadd.f32 %v5149, %v5171
    %5173 = vmatmul.f32.gmra.mxu0 %v4896
    %v5174 = vpop.f32.mrf.mxu0
    %v5175 = vadd.f32 %v5152, %v5174
    %5176 = vdwg.mxu0
    %5177 = vmatpush.msra.mxu0 %v741
    %5178 = vmatpush.msra.mxu0 %v740
    %5179 = vmatpush.msra.mxu0 %v739
    %5180 = vmatpush.msra.mxu0 %v738
    %5181 = vmatpush.msra.mxu0 %v737
    %5182 = vmatpush.msra.mxu0 %v736
    %5183 = vmatpush.msra.mxu0 %v735
    %5184 = vmatpush.msra.mxu0 %v734
    %5185 = vmatpush.msra.mxu0 %v733
    %5186 = vmatpush.msra.mxu0 %v732
    %5187 = vmatpush.msra.mxu0 %v731
    %5188 = vmatpush.msra.mxu0 %v730
    %5189 = vmatpush.msra.mxu0 %v729
    %5190 = vmatpush.msra.mxu0 %v728
    %5191 = vmatpush.msra.mxu0 %v727
    %5192 = vmatpush.msra.mxu0 %v726
    %5193 = vmatmul.f32.gmra.mxu0 %v4881
    %v5194 = vpop.f32.mrf.mxu0
    %v5195 = vadd.f32 %v5172, %v5194
    %5196 = vmatmul.f32.gmra.mxu0 %v4897
    %v5197 = vpop.f32.mrf.mxu0
    %v5198 = vadd.f32 %v5175, %v5197
    %5199 = vdwg.mxu0
    %5200 = vmatpush.msra.mxu0 %v757
    %5201 = vmatpush.msra.mxu0 %v756
    %5202 = vmatpush.msra.mxu0 %v755
    %5203 = vmatpush.msra.mxu0 %v754
    %5204 = vmatpush.msra.mxu0 %v753
    %5205 = vmatpush.msra.mxu0 %v752
    %5206 = vmatpush.msra.mxu0 %v751
    %5207 = vmatpush.msra.mxu0 %v750
    %5208 = vmatpush.msra.mxu0 %v749
    %5209 = vmatpush.msra.mxu0 %v748
    %5210 = vmatpush.msra.mxu0 %v747
    %5211 = vmatpush.msra.mxu0 %v746
    %5212 = vmatpush.msra.mxu0 %v745
    %5213 = vmatpush.msra.mxu0 %v744
    %5214 = vmatpush.msra.mxu0 %v743
    %5215 = vmatpush.msra.mxu0 %v742
    %5216 = vmatmul.f32.gmra.mxu0 %v4882
    %v5217 = vpop.f32.mrf.mxu0
    %v5218 = vadd.f32 %v5195, %v5217
    %5219 = vmatmul.f32.gmra.mxu0 %v4898
    %v5220 = vpop.f32.mrf.mxu0
    %v5221 = vadd.f32 %v5198, %v5220
    %5222 = vdwg.mxu0
    %5223 = vmatpush.msra.mxu0 %v773
    %5224 = vmatpush.msra.mxu0 %v772
    %5225 = vmatpush.msra.mxu0 %v771
    %5226 = vmatpush.msra.mxu0 %v770
    %5227 = vmatpush.msra.mxu0 %v769
    %5228 = vmatpush.msra.mxu0 %v768
    %5229 = vmatpush.msra.mxu0 %v767
    %5230 = vmatpush.msra.mxu0 %v766
    %5231 = vmatpush.msra.mxu0 %v765
    %5232 = vmatpush.msra.mxu0 %v764
    %5233 = vmatpush.msra.mxu0 %v763
    %5234 = vmatpush.msra.mxu0 %v762
    %5235 = vmatpush.msra.mxu0 %v761
    %5236 = vmatpush.msra.mxu0 %v760
    %5237 = vmatpush.msra.mxu0 %v759
    %5238 = vmatpush.msra.mxu0 %v758
    %5239 = vmatmul.f32.gmra.mxu0 %v4883
    %v5240 = vpop.f32.mrf.mxu0
    %v5241 = vadd.f32 %v5218, %v5240
    %5242 = vmatmul.f32.gmra.mxu0 %v4899
    %v5243 = vpop.f32.mrf.mxu0
    %v5244 = vadd.f32 %v5221, %v5243
    %5245 = vdwg.mxu0
    %5246 = vmatpush.msra.mxu0 %v789
    %5247 = vmatpush.msra.mxu0 %v788
    %5248 = vmatpush.msra.mxu0 %v787
    %5249 = vmatpush.msra.mxu0 %v786
    %5250 = vmatpush.msra.mxu0 %v785
    %5251 = vmatpush.msra.mxu0 %v784
    %5252 = vmatpush.msra.mxu0 %v783
    %5253 = vmatpush.msra.mxu0 %v782
    %5254 = vmatpush.msra.mxu0 %v781
    %5255 = vmatpush.msra.mxu0 %v780
    %5256 = vmatpush.msra.mxu0 %v779
    %5257 = vmatpush.msra.mxu0 %v778
    %5258 = vmatpush.msra.mxu0 %v777
    %5259 = vmatpush.msra.mxu0 %v776
    %5260 = vmatpush.msra.mxu0 %v775
    %5261 = vmatpush.msra.mxu0 %v774
    %5262 = vmatmul.f32.gmra.mxu0 %v4884
    %v5263 = vpop.f32.mrf.mxu0
    %v5264 = vadd.f32 %v5241, %v5263
    %5265 = vmatmul.f32.gmra.mxu0 %v4900
    %v5266 = vpop.f32.mrf.mxu0
    %v5267 = vadd.f32 %v5244, %v5266
    %5268 = vdwg.mxu0
    %5270 = vset.pattern.permute.xlu0 0
    %5271 = vperm.xlu0 %5270, %v532
    %v5272 = vpop.permute.xlu0 %5271
    %5275 = vset.pattern.permute.xlu0 0
    %5276 = vperm.xlu0 %5275, %v533
    %v5277 = vpop.permute.xlu0 %5276
    %v5279 = vmul.f32 %v5264, %v5272
    %v5280 = vmul.f32 %v5267, %v5277
    %v5282 = vsel %vm3081, %v5279, 0
    %v5285 = vsel %vm3081, %v5280, 0
    %5287 = vmatpush.msra.mxu0 0.0
    %5288 = vmatpush.msra.mxu0 0.0
    %5289 = vmatpush.msra.mxu0 0.0
    %5290 = vmatpush.msra.mxu0 0.0
    %5291 = vmatpush.msra.mxu0 0.0
    %5292 = vmatpush.msra.mxu0 0.0
    %5293 = vmatpush.msra.mxu0 0.0
    %5294 = vmatpush.msra.mxu0 0.0
    %5295 = vmatpush.msra.mxu0 %v902
    %5296 = vmatpush.msra.mxu0 %v886
    %5297 = vmatpush.msra.mxu0 %v870
    %5298 = vmatpush.msra.mxu0 %v854
    %5299 = vmatpush.msra.mxu0 %v838
    %5300 = vmatpush.msra.mxu0 %v822
    %5301 = vmatpush.msra.mxu0 %v806
    %5302 = vmatpush.msra.mxu0 %v790
    %5303 = vmatmul.f32.gmra.mxu0 %v5282
    %v5304 = vpop.f32.mrf.mxu0
    %v5305 = vadd.f32 0.0, %v5304
    %5306 = vmatmul.f32.gmra.mxu0 %v5285
    %v5307 = vpop.f32.mrf.mxu0
    %v5308 = vadd.f32 0.0, %v5307
    %5309 = vdwg.mxu0
    %5310 = vmatpush.msra.mxu0 0.0
    %5311 = vmatpush.msra.mxu0 0.0
    %5312 = vmatpush.msra.mxu0 0.0
    %5313 = vmatpush.msra.mxu0 0.0
    %5314 = vmatpush.msra.mxu0 0.0
    %5315 = vmatpush.msra.mxu0 0.0
    %5316 = vmatpush.msra.mxu0 0.0
    %5317 = vmatpush.msra.mxu0 0.0
    %5318 = vmatpush.msra.mxu0 %v903
    %5319 = vmatpush.msra.mxu0 %v887
    %5320 = vmatpush.msra.mxu0 %v871
    %5321 = vmatpush.msra.mxu0 %v855
    %5322 = vmatpush.msra.mxu0 %v839
    %5323 = vmatpush.msra.mxu0 %v823
    %5324 = vmatpush.msra.mxu0 %v807
    %5325 = vmatpush.msra.mxu0 %v791
    %5326 = vmatmul.f32.gmra.mxu0 %v5282
    %v5327 = vpop.f32.mrf.mxu0
    %v5328 = vadd.f32 0.0, %v5327
    %5329 = vmatmul.f32.gmra.mxu0 %v5285
    %v5330 = vpop.f32.mrf.mxu0
    %v5331 = vadd.f32 0.0, %v5330
    %5332 = vdwg.mxu0
    %5333 = vmatpush.msra.mxu0 0.0
    %5334 = vmatpush.msra.mxu0 0.0
    %5335 = vmatpush.msra.mxu0 0.0
    %5336 = vmatpush.msra.mxu0 0.0
    %5337 = vmatpush.msra.mxu0 0.0
    %5338 = vmatpush.msra.mxu0 0.0
    %5339 = vmatpush.msra.mxu0 0.0
    %5340 = vmatpush.msra.mxu0 0.0
    %5341 = vmatpush.msra.mxu0 %v904
    %5342 = vmatpush.msra.mxu0 %v888
    %5343 = vmatpush.msra.mxu0 %v872
    %5344 = vmatpush.msra.mxu0 %v856
    %5345 = vmatpush.msra.mxu0 %v840
    %5346 = vmatpush.msra.mxu0 %v824
    %5347 = vmatpush.msra.mxu0 %v808
    %5348 = vmatpush.msra.mxu0 %v792
    %5349 = vmatmul.f32.gmra.mxu0 %v5282
    %v5350 = vpop.f32.mrf.mxu0
    %v5351 = vadd.f32 0.0, %v5350
    %5352 = vmatmul.f32.gmra.mxu0 %v5285
    %v5353 = vpop.f32.mrf.mxu0
    %v5354 = vadd.f32 0.0, %v5353
    %5355 = vdwg.mxu0
    %5356 = vmatpush.msra.mxu0 0.0
    %5357 = vmatpush.msra.mxu0 0.0
    %5358 = vmatpush.msra.mxu0 0.0
    %5359 = vmatpush.msra.mxu0 0.0
    %5360 = vmatpush.msra.mxu0 0.0
    %5361 = vmatpush.msra.mxu0 0.0
    %5362 = vmatpush.msra.mxu0 0.0
    %5363 = vmatpush.msra.mxu0 0.0
    %5364 = vmatpush.msra.mxu0 %v905
    %5365 = vmatpush.msra.mxu0 %v889
    %5366 = vmatpush.msra.mxu0 %v873
    %5367 = vmatpush.msra.mxu0 %v857
    %5368 = vmatpush.msra.mxu0 %v841
    %5369 = vmatpush.msra.mxu0 %v825
    %5370 = vmatpush.msra.mxu0 %v809
    %5371 = vmatpush.msra.mxu0 %v793
    %5372 = vmatmul.f32.gmra.mxu0 %v5282
    %v5373 = vpop.f32.mrf.mxu0
    %v5374 = vadd.f32 0.0, %v5373
    %5375 = vmatmul.f32.gmra.mxu0 %v5285
    %v5376 = vpop.f32.mrf.mxu0
    %v5377 = vadd.f32 0.0, %v5376
    %5378 = vdwg.mxu0
    %5379 = vmatpush.msra.mxu0 0.0
    %5380 = vmatpush.msra.mxu0 0.0
    %5381 = vmatpush.msra.mxu0 0.0
    %5382 = vmatpush.msra.mxu0 0.0
    %5383 = vmatpush.msra.mxu0 0.0
    %5384 = vmatpush.msra.mxu0 0.0
    %5385 = vmatpush.msra.mxu0 0.0
    %5386 = vmatpush.msra.mxu0 0.0
    %5387 = vmatpush.msra.mxu0 %v906
    %5388 = vmatpush.msra.mxu0 %v890
    %5389 = vmatpush.msra.mxu0 %v874
    %5390 = vmatpush.msra.mxu0 %v858
    %5391 = vmatpush.msra.mxu0 %v842
    %5392 = vmatpush.msra.mxu0 %v826
    %5393 = vmatpush.msra.mxu0 %v810
    %5394 = vmatpush.msra.mxu0 %v794
    %5395 = vmatmul.f32.gmra.mxu0 %v5282
    %v5396 = vpop.f32.mrf.mxu0
    %v5397 = vadd.f32 0.0, %v5396
    %5398 = vmatmul.f32.gmra.mxu0 %v5285
    %v5399 = vpop.f32.mrf.mxu0
    %v5400 = vadd.f32 0.0, %v5399
    %5401 = vdwg.mxu0
    %5402 = vmatpush.msra.mxu0 0.0
    %5403 = vmatpush.msra.mxu0 0.0
    %5404 = vmatpush.msra.mxu0 0.0
    %5405 = vmatpush.msra.mxu0 0.0
    %5406 = vmatpush.msra.mxu0 0.0
    %5407 = vmatpush.msra.mxu0 0.0
    %5408 = vmatpush.msra.mxu0 0.0
    %5409 = vmatpush.msra.mxu0 0.0
    %5410 = vmatpush.msra.mxu0 %v907
    %5411 = vmatpush.msra.mxu0 %v891
    %5412 = vmatpush.msra.mxu0 %v875
    %5413 = vmatpush.msra.mxu0 %v859
    %5414 = vmatpush.msra.mxu0 %v843
    %5415 = vmatpush.msra.mxu0 %v827
    %5416 = vmatpush.msra.mxu0 %v811
    %5417 = vmatpush.msra.mxu0 %v795
    %5418 = vmatmul.f32.gmra.mxu0 %v5282
    %v5419 = vpop.f32.mrf.mxu0
    %v5420 = vadd.f32 0.0, %v5419
    %5421 = vmatmul.f32.gmra.mxu0 %v5285
    %v5422 = vpop.f32.mrf.mxu0
    %v5423 = vadd.f32 0.0, %v5422
    %5424 = vdwg.mxu0
    %5425 = vmatpush.msra.mxu0 0.0
    %5426 = vmatpush.msra.mxu0 0.0
    %5427 = vmatpush.msra.mxu0 0.0
    %5428 = vmatpush.msra.mxu0 0.0
    %5429 = vmatpush.msra.mxu0 0.0
    %5430 = vmatpush.msra.mxu0 0.0
    %5431 = vmatpush.msra.mxu0 0.0
    %5432 = vmatpush.msra.mxu0 0.0
    %5433 = vmatpush.msra.mxu0 %v908
    %5434 = vmatpush.msra.mxu0 %v892
    %5435 = vmatpush.msra.mxu0 %v876
    %5436 = vmatpush.msra.mxu0 %v860
    %5437 = vmatpush.msra.mxu0 %v844
    %5438 = vmatpush.msra.mxu0 %v828
    %5439 = vmatpush.msra.mxu0 %v812
    %5440 = vmatpush.msra.mxu0 %v796
    %5441 = vmatmul.f32.gmra.mxu0 %v5282
    %v5442 = vpop.f32.mrf.mxu0
    %v5443 = vadd.f32 0.0, %v5442
    %5444 = vmatmul.f32.gmra.mxu0 %v5285
    %v5445 = vpop.f32.mrf.mxu0
    %v5446 = vadd.f32 0.0, %v5445
    %5447 = vdwg.mxu0
    %5448 = vmatpush.msra.mxu0 0.0
    %5449 = vmatpush.msra.mxu0 0.0
    %5450 = vmatpush.msra.mxu0 0.0
    %5451 = vmatpush.msra.mxu0 0.0
    %5452 = vmatpush.msra.mxu0 0.0
    %5453 = vmatpush.msra.mxu0 0.0
    %5454 = vmatpush.msra.mxu0 0.0
    %5455 = vmatpush.msra.mxu0 0.0
    %5456 = vmatpush.msra.mxu0 %v909
    %5457 = vmatpush.msra.mxu0 %v893
    %5458 = vmatpush.msra.mxu0 %v877
    %5459 = vmatpush.msra.mxu0 %v861
    %5460 = vmatpush.msra.mxu0 %v845
    %5461 = vmatpush.msra.mxu0 %v829
    %5462 = vmatpush.msra.mxu0 %v813
    %5463 = vmatpush.msra.mxu0 %v797
    %5464 = vmatmul.f32.gmra.mxu0 %v5282
    %v5465 = vpop.f32.mrf.mxu0
    %v5466 = vadd.f32 0.0, %v5465
    %5467 = vmatmul.f32.gmra.mxu0 %v5285
    %v5468 = vpop.f32.mrf.mxu0
    %v5469 = vadd.f32 0.0, %v5468
    %5470 = vdwg.mxu0
    %5471 = vmatpush.msra.mxu0 0.0
    %5472 = vmatpush.msra.mxu0 0.0
    %5473 = vmatpush.msra.mxu0 0.0
    %5474 = vmatpush.msra.mxu0 0.0
    %5475 = vmatpush.msra.mxu0 0.0
    %5476 = vmatpush.msra.mxu0 0.0
    %5477 = vmatpush.msra.mxu0 0.0
    %5478 = vmatpush.msra.mxu0 0.0
    %5479 = vmatpush.msra.mxu0 %v910
    %5480 = vmatpush.msra.mxu0 %v894
    %5481 = vmatpush.msra.mxu0 %v878
    %5482 = vmatpush.msra.mxu0 %v862
    %5483 = vmatpush.msra.mxu0 %v846
    %5484 = vmatpush.msra.mxu0 %v830
    %5485 = vmatpush.msra.mxu0 %v814
    %5486 = vmatpush.msra.mxu0 %v798
    %5487 = vmatmul.f32.gmra.mxu0 %v5282
    %v5488 = vpop.f32.mrf.mxu0
    %v5489 = vadd.f32 0.0, %v5488
    %5490 = vmatmul.f32.gmra.mxu0 %v5285
    %v5491 = vpop.f32.mrf.mxu0
    %v5492 = vadd.f32 0.0, %v5491
    %5493 = vdwg.mxu0
    %5494 = vmatpush.msra.mxu0 0.0
    %5495 = vmatpush.msra.mxu0 0.0
    %5496 = vmatpush.msra.mxu0 0.0
    %5497 = vmatpush.msra.mxu0 0.0
    %5498 = vmatpush.msra.mxu0 0.0
    %5499 = vmatpush.msra.mxu0 0.0
    %5500 = vmatpush.msra.mxu0 0.0
    %5501 = vmatpush.msra.mxu0 0.0
    %5502 = vmatpush.msra.mxu0 %v911
    %5503 = vmatpush.msra.mxu0 %v895
    %5504 = vmatpush.msra.mxu0 %v879
    %5505 = vmatpush.msra.mxu0 %v863
    %5506 = vmatpush.msra.mxu0 %v847
    %5507 = vmatpush.msra.mxu0 %v831
    %5508 = vmatpush.msra.mxu0 %v815
    %5509 = vmatpush.msra.mxu0 %v799
    %5510 = vmatmul.f32.gmra.mxu0 %v5282
    %v5511 = vpop.f32.mrf.mxu0
    %v5512 = vadd.f32 0.0, %v5511
    %5513 = vmatmul.f32.gmra.mxu0 %v5285
    %v5514 = vpop.f32.mrf.mxu0
    %v5515 = vadd.f32 0.0, %v5514
    %5516 = vdwg.mxu0
    %5517 = vmatpush.msra.mxu0 0.0
    %5518 = vmatpush.msra.mxu0 0.0
    %5519 = vmatpush.msra.mxu0 0.0
    %5520 = vmatpush.msra.mxu0 0.0
    %5521 = vmatpush.msra.mxu0 0.0
    %5522 = vmatpush.msra.mxu0 0.0
    %5523 = vmatpush.msra.mxu0 0.0
    %5524 = vmatpush.msra.mxu0 0.0
    %5525 = vmatpush.msra.mxu0 %v912
    %5526 = vmatpush.msra.mxu0 %v896
    %5527 = vmatpush.msra.mxu0 %v880
    %5528 = vmatpush.msra.mxu0 %v864
    %5529 = vmatpush.msra.mxu0 %v848
    %5530 = vmatpush.msra.mxu0 %v832
    %5531 = vmatpush.msra.mxu0 %v816
    %5532 = vmatpush.msra.mxu0 %v800
    %5533 = vmatmul.f32.gmra.mxu0 %v5282
    %v5534 = vpop.f32.mrf.mxu0
    %v5535 = vadd.f32 0.0, %v5534
    %5536 = vmatmul.f32.gmra.mxu0 %v5285
    %v5537 = vpop.f32.mrf.mxu0
    %v5538 = vadd.f32 0.0, %v5537
    %5539 = vdwg.mxu0
    %5540 = vmatpush.msra.mxu0 0.0
    %5541 = vmatpush.msra.mxu0 0.0
    %5542 = vmatpush.msra.mxu0 0.0
    %5543 = vmatpush.msra.mxu0 0.0
    %5544 = vmatpush.msra.mxu0 0.0
    %5545 = vmatpush.msra.mxu0 0.0
    %5546 = vmatpush.msra.mxu0 0.0
    %5547 = vmatpush.msra.mxu0 0.0
    %5548 = vmatpush.msra.mxu0 %v913
    %5549 = vmatpush.msra.mxu0 %v897
    %5550 = vmatpush.msra.mxu0 %v881
    %5551 = vmatpush.msra.mxu0 %v865
    %5552 = vmatpush.msra.mxu0 %v849
    %5553 = vmatpush.msra.mxu0 %v833
    %5554 = vmatpush.msra.mxu0 %v817
    %5555 = vmatpush.msra.mxu0 %v801
    %5556 = vmatmul.f32.gmra.mxu0 %v5282
    %v5557 = vpop.f32.mrf.mxu0
    %v5558 = vadd.f32 0.0, %v5557
    %5559 = vmatmul.f32.gmra.mxu0 %v5285
    %v5560 = vpop.f32.mrf.mxu0
    %v5561 = vadd.f32 0.0, %v5560
    %5562 = vdwg.mxu0
    %5563 = vmatpush.msra.mxu0 0.0
    %5564 = vmatpush.msra.mxu0 0.0
    %5565 = vmatpush.msra.mxu0 0.0
    %5566 = vmatpush.msra.mxu0 0.0
    %5567 = vmatpush.msra.mxu0 0.0
    %5568 = vmatpush.msra.mxu0 0.0
    %5569 = vmatpush.msra.mxu0 0.0
    %5570 = vmatpush.msra.mxu0 0.0
    %5571 = vmatpush.msra.mxu0 %v914
    %5572 = vmatpush.msra.mxu0 %v898
    %5573 = vmatpush.msra.mxu0 %v882
    %5574 = vmatpush.msra.mxu0 %v866
    %5575 = vmatpush.msra.mxu0 %v850
    %5576 = vmatpush.msra.mxu0 %v834
    %5577 = vmatpush.msra.mxu0 %v818
    %5578 = vmatpush.msra.mxu0 %v802
    %5579 = vmatmul.f32.gmra.mxu0 %v5282
    %v5580 = vpop.f32.mrf.mxu0
    %v5581 = vadd.f32 0.0, %v5580
    %5582 = vmatmul.f32.gmra.mxu0 %v5285
    %v5583 = vpop.f32.mrf.mxu0
    %v5584 = vadd.f32 0.0, %v5583
    %5585 = vdwg.mxu0
    %5586 = vmatpush.msra.mxu0 0.0
    %5587 = vmatpush.msra.mxu0 0.0
    %5588 = vmatpush.msra.mxu0 0.0
    %5589 = vmatpush.msra.mxu0 0.0
    %5590 = vmatpush.msra.mxu0 0.0
    %5591 = vmatpush.msra.mxu0 0.0
    %5592 = vmatpush.msra.mxu0 0.0
    %5593 = vmatpush.msra.mxu0 0.0
    %5594 = vmatpush.msra.mxu0 %v915
    %5595 = vmatpush.msra.mxu0 %v899
    %5596 = vmatpush.msra.mxu0 %v883
    %5597 = vmatpush.msra.mxu0 %v867
    %5598 = vmatpush.msra.mxu0 %v851
    %5599 = vmatpush.msra.mxu0 %v835
    %5600 = vmatpush.msra.mxu0 %v819
    %5601 = vmatpush.msra.mxu0 %v803
    %5602 = vmatmul.f32.gmra.mxu0 %v5282
    %v5603 = vpop.f32.mrf.mxu0
    %v5604 = vadd.f32 0.0, %v5603
    %5605 = vmatmul.f32.gmra.mxu0 %v5285
    %v5606 = vpop.f32.mrf.mxu0
    %v5607 = vadd.f32 0.0, %v5606
    %5608 = vdwg.mxu0
    %5609 = vmatpush.msra.mxu0 0.0
    %5610 = vmatpush.msra.mxu0 0.0
    %5611 = vmatpush.msra.mxu0 0.0
    %5612 = vmatpush.msra.mxu0 0.0
    %5613 = vmatpush.msra.mxu0 0.0
    %5614 = vmatpush.msra.mxu0 0.0
    %5615 = vmatpush.msra.mxu0 0.0
    %5616 = vmatpush.msra.mxu0 0.0
    %5617 = vmatpush.msra.mxu0 %v916
    %5618 = vmatpush.msra.mxu0 %v900
    %5619 = vmatpush.msra.mxu0 %v884
    %5620 = vmatpush.msra.mxu0 %v868
    %5621 = vmatpush.msra.mxu0 %v852
    %5622 = vmatpush.msra.mxu0 %v836
    %5623 = vmatpush.msra.mxu0 %v820
    %5624 = vmatpush.msra.mxu0 %v804
    %5625 = vmatmul.f32.gmra.mxu0 %v5282
    %v5626 = vpop.f32.mrf.mxu0
    %v5627 = vadd.f32 0.0, %v5626
    %5628 = vmatmul.f32.gmra.mxu0 %v5285
    %v5629 = vpop.f32.mrf.mxu0
    %v5630 = vadd.f32 0.0, %v5629
    %5631 = vdwg.mxu0
    %5632 = vmatpush.msra.mxu0 0.0
    %5633 = vmatpush.msra.mxu0 0.0
    %5634 = vmatpush.msra.mxu0 0.0
    %5635 = vmatpush.msra.mxu0 0.0
    %5636 = vmatpush.msra.mxu0 0.0
    %5637 = vmatpush.msra.mxu0 0.0
    %5638 = vmatpush.msra.mxu0 0.0
    %5639 = vmatpush.msra.mxu0 0.0
    %5640 = vmatpush.msra.mxu0 %v917
    %5641 = vmatpush.msra.mxu0 %v901
    %5642 = vmatpush.msra.mxu0 %v885
    %5643 = vmatpush.msra.mxu0 %v869
    %5644 = vmatpush.msra.mxu0 %v853
    %5645 = vmatpush.msra.mxu0 %v837
    %5646 = vmatpush.msra.mxu0 %v821
    %5647 = vmatpush.msra.mxu0 %v805
    %5648 = vmatmul.f32.gmra.mxu0 %v5282
    %v5649 = vpop.f32.mrf.mxu0
    %v5650 = vadd.f32 0.0, %v5649
    %5651 = vmatmul.f32.gmra.mxu0 %v5285
    %v5652 = vpop.f32.mrf.mxu0
    %v5653 = vadd.f32 0.0, %v5652
    %5654 = vdwg.mxu0
    %v5655 = vmul.f32 %v1010, %v5305
    %v5656 = vmul.f32 %v1033, %v5328
    %v5657 = vmul.f32 %v1056, %v5351
    %v5658 = vmul.f32 %v1079, %v5374
    %v5659 = vmul.f32 %v1102, %v5397
    %v5660 = vmul.f32 %v1125, %v5420
    %v5661 = vmul.f32 %v1148, %v5443
    %v5662 = vmul.f32 %v1171, %v5466
    %v5663 = vmul.f32 %v1194, %v5489
    %v5664 = vmul.f32 %v1217, %v5512
    %v5665 = vmul.f32 %v1240, %v5535
    %v5666 = vmul.f32 %v1263, %v5558
    %v5667 = vmul.f32 %v1286, %v5581
    %v5668 = vmul.f32 %v1309, %v5604
    %v5669 = vmul.f32 %v1332, %v5627
    %v5670 = vmul.f32 %v1355, %v5650
    %v5671 = vmul.f32 %v1013, %v5308
    %v5672 = vmul.f32 %v1036, %v5331
    %v5673 = vmul.f32 %v1059, %v5354
    %v5674 = vmul.f32 %v1082, %v5377
    %v5675 = vmul.f32 %v1105, %v5400
    %v5676 = vmul.f32 %v1128, %v5423
    %v5677 = vmul.f32 %v1151, %v5446
    %v5678 = vmul.f32 %v1174, %v5469
    %v5679 = vmul.f32 %v1197, %v5492
    %v5680 = vmul.f32 %v1220, %v5515
    %v5681 = vmul.f32 %v1243, %v5538
    %v5682 = vmul.f32 %v1266, %v5561
    %v5683 = vmul.f32 %v1289, %v5584
    %v5684 = vmul.f32 %v1312, %v5607
    %v5685 = vmul.f32 %v1335, %v5630
    %v5686 = vmul.f32 %v1358, %v5653
    %v5687 = vadd.f32 %v5655, %v5671
    %v5688 = vrot.slane %v5687, 4
    %v5689 = vadd.f32 %v5687, %v5688
    %v5690 = vrot.slane %v5689, 2
    %v5691 = vadd.f32 %v5689, %v5690
    %v5692 = vrot.slane %v5691, 1
    %v5693 = vadd.f32 %v5691, %v5692
    %v5694 = vadd.f32 %v5656, %v5672
    %v5695 = vrot.slane %v5694, 4
    %v5696 = vadd.f32 %v5694, %v5695
    %v5697 = vrot.slane %v5696, 2
    %v5698 = vadd.f32 %v5696, %v5697
    %v5699 = vrot.slane %v5698, 1
    %v5700 = vadd.f32 %v5698, %v5699
    %v5701 = vadd.f32 %v5657, %v5673
    %v5702 = vrot.slane %v5701, 4
    %v5703 = vadd.f32 %v5701, %v5702
    %v5704 = vrot.slane %v5703, 2
    %v5705 = vadd.f32 %v5703, %v5704
    %v5706 = vrot.slane %v5705, 1
    %v5707 = vadd.f32 %v5705, %v5706
    %v5708 = vadd.f32 %v5658, %v5674
    %v5709 = vrot.slane %v5708, 4
    %v5710 = vadd.f32 %v5708, %v5709
    %v5711 = vrot.slane %v5710, 2
    %v5712 = vadd.f32 %v5710, %v5711
    %v5713 = vrot.slane %v5712, 1
    %v5714 = vadd.f32 %v5712, %v5713
    %v5715 = vadd.f32 %v5659, %v5675
    %v5716 = vrot.slane %v5715, 4
    %v5717 = vadd.f32 %v5715, %v5716
    %v5718 = vrot.slane %v5717, 2
    %v5719 = vadd.f32 %v5717, %v5718
    %v5720 = vrot.slane %v5719, 1
    %v5721 = vadd.f32 %v5719, %v5720
    %v5722 = vadd.f32 %v5660, %v5676
    %v5723 = vrot.slane %v5722, 4
    %v5724 = vadd.f32 %v5722, %v5723
    %v5725 = vrot.slane %v5724, 2
    %v5726 = vadd.f32 %v5724, %v5725
    %v5727 = vrot.slane %v5726, 1
    %v5728 = vadd.f32 %v5726, %v5727
    %v5729 = vadd.f32 %v5661, %v5677
    %v5730 = vrot.slane %v5729, 4
    %v5731 = vadd.f32 %v5729, %v5730
    %v5732 = vrot.slane %v5731, 2
    %v5733 = vadd.f32 %v5731, %v5732
    %v5734 = vrot.slane %v5733, 1
    %v5735 = vadd.f32 %v5733, %v5734
    %v5736 = vadd.f32 %v5662, %v5678
    %v5737 = vrot.slane %v5736, 4
    %v5738 = vadd.f32 %v5736, %v5737
    %v5739 = vrot.slane %v5738, 2
    %v5740 = vadd.f32 %v5738, %v5739
    %v5741 = vrot.slane %v5740, 1
    %v5742 = vadd.f32 %v5740, %v5741
    %v5743 = vadd.f32 %v5663, %v5679
    %v5744 = vrot.slane %v5743, 4
    %v5745 = vadd.f32 %v5743, %v5744
    %v5746 = vrot.slane %v5745, 2
    %v5747 = vadd.f32 %v5745, %v5746
    %v5748 = vrot.slane %v5747, 1
    %v5749 = vadd.f32 %v5747, %v5748
    %v5750 = vadd.f32 %v5664, %v5680
    %v5751 = vrot.slane %v5750, 4
    %v5752 = vadd.f32 %v5750, %v5751
    %v5753 = vrot.slane %v5752, 2
    %v5754 = vadd.f32 %v5752, %v5753
    %v5755 = vrot.slane %v5754, 1
    %v5756 = vadd.f32 %v5754, %v5755
    %v5757 = vadd.f32 %v5665, %v5681
    %v5758 = vrot.slane %v5757, 4
    %v5759 = vadd.f32 %v5757, %v5758
    %v5760 = vrot.slane %v5759, 2
    %v5761 = vadd.f32 %v5759, %v5760
    %v5762 = vrot.slane %v5761, 1
    %v5763 = vadd.f32 %v5761, %v5762
    %v5764 = vadd.f32 %v5666, %v5682
    %v5765 = vrot.slane %v5764, 4
    %v5766 = vadd.f32 %v5764, %v5765
    %v5767 = vrot.slane %v5766, 2
    %v5768 = vadd.f32 %v5766, %v5767
    %v5769 = vrot.slane %v5768, 1
    %v5770 = vadd.f32 %v5768, %v5769
    %v5771 = vadd.f32 %v5667, %v5683
    %v5772 = vrot.slane %v5771, 4
    %v5773 = vadd.f32 %v5771, %v5772
    %v5774 = vrot.slane %v5773, 2
    %v5775 = vadd.f32 %v5773, %v5774
    %v5776 = vrot.slane %v5775, 1
    %v5777 = vadd.f32 %v5775, %v5776
    %v5778 = vadd.f32 %v5668, %v5684
    %v5779 = vrot.slane %v5778, 4
    %v5780 = vadd.f32 %v5778, %v5779
    %v5781 = vrot.slane %v5780, 2
    %v5782 = vadd.f32 %v5780, %v5781
    %v5783 = vrot.slane %v5782, 1
    %v5784 = vadd.f32 %v5782, %v5783
    %v5785 = vadd.f32 %v5669, %v5685
    %v5786 = vrot.slane %v5785, 4
    %v5787 = vadd.f32 %v5785, %v5786
    %v5788 = vrot.slane %v5787, 2
    %v5789 = vadd.f32 %v5787, %v5788
    %v5790 = vrot.slane %v5789, 1
    %v5791 = vadd.f32 %v5789, %v5790
    %v5792 = vadd.f32 %v5670, %v5686
    %v5793 = vrot.slane %v5792, 4
    %v5794 = vadd.f32 %v5792, %v5793
    %v5795 = vrot.slane %v5794, 2
    %v5796 = vadd.f32 %v5794, %v5795
    %v5797 = vrot.slane %v5796, 1
    %v5798 = vadd.f32 %v5796, %v5797
    %v5799 = vmul.f32 %v4812, %v5693
    %v5800 = vmul.f32 %v4813, %v5700
    %v5801 = vmul.f32 %v4814, %v5707
    %v5802 = vmul.f32 %v4815, %v5714
    %v5803 = vmul.f32 %v4816, %v5721
    %v5804 = vmul.f32 %v4817, %v5728
    %v5805 = vmul.f32 %v4818, %v5735
    %v5806 = vmul.f32 %v4819, %v5742
    %v5807 = vmul.f32 %v4820, %v5749
    %v5808 = vmul.f32 %v4821, %v5756
    %v5809 = vmul.f32 %v4822, %v5763
    %v5810 = vmul.f32 %v4823, %v5770
    %v5811 = vmul.f32 %v4824, %v5777
    %v5812 = vmul.f32 %v4825, %v5784
    %v5813 = vmul.f32 %v4826, %v5791
    %v5814 = vmul.f32 %v4827, %v5798
    %v5815 = vmul.f32 %v4828, %v5693
    %v5816 = vmul.f32 %v4829, %v5700
    %v5817 = vmul.f32 %v4830, %v5707
    %v5818 = vmul.f32 %v4831, %v5714
    %v5819 = vmul.f32 %v4832, %v5721
    %v5820 = vmul.f32 %v4833, %v5728
    %v5821 = vmul.f32 %v4834, %v5735
    %v5822 = vmul.f32 %v4835, %v5742
    %v5823 = vmul.f32 %v4836, %v5749
    %v5824 = vmul.f32 %v4837, %v5756
    %v5825 = vmul.f32 %v4838, %v5763
    %v5826 = vmul.f32 %v4839, %v5770
    %v5827 = vmul.f32 %v4840, %v5777
    %v5828 = vmul.f32 %v4841, %v5784
    %v5829 = vmul.f32 %v4842, %v5791
    %v5830 = vmul.f32 %v4843, %v5798
    %5831 = vmatpush.msra.mxu0 %v549
    %5832 = vmatpush.msra.mxu0 %v548
    %5833 = vmatpush.msra.mxu0 %v547
    %5834 = vmatpush.msra.mxu0 %v546
    %5835 = vmatpush.msra.mxu0 %v545
    %5836 = vmatpush.msra.mxu0 %v544
    %5837 = vmatpush.msra.mxu0 %v543
    %5838 = vmatpush.msra.mxu0 %v542
    %5839 = vmatpush.msra.mxu0 %v541
    %5840 = vmatpush.msra.mxu0 %v540
    %5841 = vmatpush.msra.mxu0 %v539
    %5842 = vmatpush.msra.mxu0 %v538
    %5843 = vmatpush.msra.mxu0 %v537
    %5844 = vmatpush.msra.mxu0 %v536
    %5845 = vmatpush.msra.mxu0 %v535
    %5846 = vmatpush.msra.mxu0 %v534
    %5847 = vmatmul.f32.gmra.mxu0 %v5799
    %v5848 = vpop.f32.mrf.mxu0
    %v5849 = vadd.f32 %v4844, %v5848
    %5850 = vmatmul.f32.gmra.mxu0 %v5815
    %v5851 = vpop.f32.mrf.mxu0
    %v5852 = vadd.f32 %v4845, %v5851
    %5853 = vdwg.mxu0
    %5854 = vmatpush.msra.mxu0 %v565
    %5855 = vmatpush.msra.mxu0 %v564
    %5856 = vmatpush.msra.mxu0 %v563
    %5857 = vmatpush.msra.mxu0 %v562
    %5858 = vmatpush.msra.mxu0 %v561
    %5859 = vmatpush.msra.mxu0 %v560
    %5860 = vmatpush.msra.mxu0 %v559
    %5861 = vmatpush.msra.mxu0 %v558
    %5862 = vmatpush.msra.mxu0 %v557
    %5863 = vmatpush.msra.mxu0 %v556
    %5864 = vmatpush.msra.mxu0 %v555
    %5865 = vmatpush.msra.mxu0 %v554
    %5866 = vmatpush.msra.mxu0 %v553
    %5867 = vmatpush.msra.mxu0 %v552
    %5868 = vmatpush.msra.mxu0 %v551
    %5869 = vmatpush.msra.mxu0 %v550
    %5870 = vmatmul.f32.gmra.mxu0 %v5800
    %v5871 = vpop.f32.mrf.mxu0
    %v5872 = vadd.f32 %v5849, %v5871
    %5873 = vmatmul.f32.gmra.mxu0 %v5816
    %v5874 = vpop.f32.mrf.mxu0
    %v5875 = vadd.f32 %v5852, %v5874
    %5876 = vdwg.mxu0
    %5877 = vmatpush.msra.mxu0 %v581
    %5878 = vmatpush.msra.mxu0 %v580
    %5879 = vmatpush.msra.mxu0 %v579
    %5880 = vmatpush.msra.mxu0 %v578
    %5881 = vmatpush.msra.mxu0 %v577
    %5882 = vmatpush.msra.mxu0 %v576
    %5883 = vmatpush.msra.mxu0 %v575
    %5884 = vmatpush.msra.mxu0 %v574
    %5885 = vmatpush.msra.mxu0 %v573
    %5886 = vmatpush.msra.mxu0 %v572
    %5887 = vmatpush.msra.mxu0 %v571
    %5888 = vmatpush.msra.mxu0 %v570
    %5889 = vmatpush.msra.mxu0 %v569
    %5890 = vmatpush.msra.mxu0 %v568
    %5891 = vmatpush.msra.mxu0 %v567
    %5892 = vmatpush.msra.mxu0 %v566
    %5893 = vmatmul.f32.gmra.mxu0 %v5801
    %v5894 = vpop.f32.mrf.mxu0
    %v5895 = vadd.f32 %v5872, %v5894
    %5896 = vmatmul.f32.gmra.mxu0 %v5817
    %v5897 = vpop.f32.mrf.mxu0
    %v5898 = vadd.f32 %v5875, %v5897
    %5899 = vdwg.mxu0
    %5900 = vmatpush.msra.mxu0 %v597
    %5901 = vmatpush.msra.mxu0 %v596
    %5902 = vmatpush.msra.mxu0 %v595
    %5903 = vmatpush.msra.mxu0 %v594
    %5904 = vmatpush.msra.mxu0 %v593
    %5905 = vmatpush.msra.mxu0 %v592
    %5906 = vmatpush.msra.mxu0 %v591
    %5907 = vmatpush.msra.mxu0 %v590
    %5908 = vmatpush.msra.mxu0 %v589
    %5909 = vmatpush.msra.mxu0 %v588
    %5910 = vmatpush.msra.mxu0 %v587
    %5911 = vmatpush.msra.mxu0 %v586
    %5912 = vmatpush.msra.mxu0 %v585
    %5913 = vmatpush.msra.mxu0 %v584
    %5914 = vmatpush.msra.mxu0 %v583
    %5915 = vmatpush.msra.mxu0 %v582
    %5916 = vmatmul.f32.gmra.mxu0 %v5802
    %v5917 = vpop.f32.mrf.mxu0
    %v5918 = vadd.f32 %v5895, %v5917
    %5919 = vmatmul.f32.gmra.mxu0 %v5818
    %v5920 = vpop.f32.mrf.mxu0
    %v5921 = vadd.f32 %v5898, %v5920
    %5922 = vdwg.mxu0
    %5923 = vmatpush.msra.mxu0 %v613
    %5924 = vmatpush.msra.mxu0 %v612
    %5925 = vmatpush.msra.mxu0 %v611
    %5926 = vmatpush.msra.mxu0 %v610
    %5927 = vmatpush.msra.mxu0 %v609
    %5928 = vmatpush.msra.mxu0 %v608
    %5929 = vmatpush.msra.mxu0 %v607
    %5930 = vmatpush.msra.mxu0 %v606
    %5931 = vmatpush.msra.mxu0 %v605
    %5932 = vmatpush.msra.mxu0 %v604
    %5933 = vmatpush.msra.mxu0 %v603
    %5934 = vmatpush.msra.mxu0 %v602
    %5935 = vmatpush.msra.mxu0 %v601
    %5936 = vmatpush.msra.mxu0 %v600
    %5937 = vmatpush.msra.mxu0 %v599
    %5938 = vmatpush.msra.mxu0 %v598
    %5939 = vmatmul.f32.gmra.mxu0 %v5803
    %v5940 = vpop.f32.mrf.mxu0
    %v5941 = vadd.f32 %v5918, %v5940
    %5942 = vmatmul.f32.gmra.mxu0 %v5819
    %v5943 = vpop.f32.mrf.mxu0
    %v5944 = vadd.f32 %v5921, %v5943
    %5945 = vdwg.mxu0
    %5946 = vmatpush.msra.mxu0 %v629
    %5947 = vmatpush.msra.mxu0 %v628
    %5948 = vmatpush.msra.mxu0 %v627
    %5949 = vmatpush.msra.mxu0 %v626
    %5950 = vmatpush.msra.mxu0 %v625
    %5951 = vmatpush.msra.mxu0 %v624
    %5952 = vmatpush.msra.mxu0 %v623
    %5953 = vmatpush.msra.mxu0 %v622
    %5954 = vmatpush.msra.mxu0 %v621
    %5955 = vmatpush.msra.mxu0 %v620
    %5956 = vmatpush.msra.mxu0 %v619
    %5957 = vmatpush.msra.mxu0 %v618
    %5958 = vmatpush.msra.mxu0 %v617
    %5959 = vmatpush.msra.mxu0 %v616
    %5960 = vmatpush.msra.mxu0 %v615
    %5961 = vmatpush.msra.mxu0 %v614
    %5962 = vmatmul.f32.gmra.mxu0 %v5804
    %v5963 = vpop.f32.mrf.mxu0
    %v5964 = vadd.f32 %v5941, %v5963
    %5965 = vmatmul.f32.gmra.mxu0 %v5820
    %v5966 = vpop.f32.mrf.mxu0
    %v5967 = vadd.f32 %v5944, %v5966
    %5968 = vdwg.mxu0
    %5969 = vmatpush.msra.mxu0 %v645
    %5970 = vmatpush.msra.mxu0 %v644
    %5971 = vmatpush.msra.mxu0 %v643
    %5972 = vmatpush.msra.mxu0 %v642
    %5973 = vmatpush.msra.mxu0 %v641
    %5974 = vmatpush.msra.mxu0 %v640
    %5975 = vmatpush.msra.mxu0 %v639
    %5976 = vmatpush.msra.mxu0 %v638
    %5977 = vmatpush.msra.mxu0 %v637
    %5978 = vmatpush.msra.mxu0 %v636
    %5979 = vmatpush.msra.mxu0 %v635
    %5980 = vmatpush.msra.mxu0 %v634
    %5981 = vmatpush.msra.mxu0 %v633
    %5982 = vmatpush.msra.mxu0 %v632
    %5983 = vmatpush.msra.mxu0 %v631
    %5984 = vmatpush.msra.mxu0 %v630
    %5985 = vmatmul.f32.gmra.mxu0 %v5805
    %v5986 = vpop.f32.mrf.mxu0
    %v5987 = vadd.f32 %v5964, %v5986
    %5988 = vmatmul.f32.gmra.mxu0 %v5821
    %v5989 = vpop.f32.mrf.mxu0
    %v5990 = vadd.f32 %v5967, %v5989
    %5991 = vdwg.mxu0
    %5992 = vmatpush.msra.mxu0 %v661
    %5993 = vmatpush.msra.mxu0 %v660
    %5994 = vmatpush.msra.mxu0 %v659
    %5995 = vmatpush.msra.mxu0 %v658
    %5996 = vmatpush.msra.mxu0 %v657
    %5997 = vmatpush.msra.mxu0 %v656
    %5998 = vmatpush.msra.mxu0 %v655
    %5999 = vmatpush.msra.mxu0 %v654
    %6000 = vmatpush.msra.mxu0 %v653
    %6001 = vmatpush.msra.mxu0 %v652
    %6002 = vmatpush.msra.mxu0 %v651
    %6003 = vmatpush.msra.mxu0 %v650
    %6004 = vmatpush.msra.mxu0 %v649
    %6005 = vmatpush.msra.mxu0 %v648
    %6006 = vmatpush.msra.mxu0 %v647
    %6007 = vmatpush.msra.mxu0 %v646
    %6008 = vmatmul.f32.gmra.mxu0 %v5806
    %v6009 = vpop.f32.mrf.mxu0
    %v6010 = vadd.f32 %v5987, %v6009
    %6011 = vmatmul.f32.gmra.mxu0 %v5822
    %v6012 = vpop.f32.mrf.mxu0
    %v6013 = vadd.f32 %v5990, %v6012
    %6014 = vdwg.mxu0
    %6015 = vmatpush.msra.mxu0 %v677
    %6016 = vmatpush.msra.mxu0 %v676
    %6017 = vmatpush.msra.mxu0 %v675
    %6018 = vmatpush.msra.mxu0 %v674
    %6019 = vmatpush.msra.mxu0 %v673
    %6020 = vmatpush.msra.mxu0 %v672
    %6021 = vmatpush.msra.mxu0 %v671
    %6022 = vmatpush.msra.mxu0 %v670
    %6023 = vmatpush.msra.mxu0 %v669
    %6024 = vmatpush.msra.mxu0 %v668
    %6025 = vmatpush.msra.mxu0 %v667
    %6026 = vmatpush.msra.mxu0 %v666
    %6027 = vmatpush.msra.mxu0 %v665
    %6028 = vmatpush.msra.mxu0 %v664
    %6029 = vmatpush.msra.mxu0 %v663
    %6030 = vmatpush.msra.mxu0 %v662
    %6031 = vmatmul.f32.gmra.mxu0 %v5807
    %v6032 = vpop.f32.mrf.mxu0
    %v6033 = vadd.f32 %v6010, %v6032
    %6034 = vmatmul.f32.gmra.mxu0 %v5823
    %v6035 = vpop.f32.mrf.mxu0
    %v6036 = vadd.f32 %v6013, %v6035
    %6037 = vdwg.mxu0
    %6038 = vmatpush.msra.mxu0 %v693
    %6039 = vmatpush.msra.mxu0 %v692
    %6040 = vmatpush.msra.mxu0 %v691
    %6041 = vmatpush.msra.mxu0 %v690
    %6042 = vmatpush.msra.mxu0 %v689
    %6043 = vmatpush.msra.mxu0 %v688
    %6044 = vmatpush.msra.mxu0 %v687
    %6045 = vmatpush.msra.mxu0 %v686
    %6046 = vmatpush.msra.mxu0 %v685
    %6047 = vmatpush.msra.mxu0 %v684
    %6048 = vmatpush.msra.mxu0 %v683
    %6049 = vmatpush.msra.mxu0 %v682
    %6050 = vmatpush.msra.mxu0 %v681
    %6051 = vmatpush.msra.mxu0 %v680
    %6052 = vmatpush.msra.mxu0 %v679
    %6053 = vmatpush.msra.mxu0 %v678
    %6054 = vmatmul.f32.gmra.mxu0 %v5808
    %v6055 = vpop.f32.mrf.mxu0
    %v6056 = vadd.f32 %v6033, %v6055
    %6057 = vmatmul.f32.gmra.mxu0 %v5824
    %v6058 = vpop.f32.mrf.mxu0
    %v6059 = vadd.f32 %v6036, %v6058
    %6060 = vdwg.mxu0
    %6061 = vmatpush.msra.mxu0 %v709
    %6062 = vmatpush.msra.mxu0 %v708
    %6063 = vmatpush.msra.mxu0 %v707
    %6064 = vmatpush.msra.mxu0 %v706
    %6065 = vmatpush.msra.mxu0 %v705
    %6066 = vmatpush.msra.mxu0 %v704
    %6067 = vmatpush.msra.mxu0 %v703
    %6068 = vmatpush.msra.mxu0 %v702
    %6069 = vmatpush.msra.mxu0 %v701
    %6070 = vmatpush.msra.mxu0 %v700
    %6071 = vmatpush.msra.mxu0 %v699
    %6072 = vmatpush.msra.mxu0 %v698
    %6073 = vmatpush.msra.mxu0 %v697
    %6074 = vmatpush.msra.mxu0 %v696
    %6075 = vmatpush.msra.mxu0 %v695
    %6076 = vmatpush.msra.mxu0 %v694
    %6077 = vmatmul.f32.gmra.mxu0 %v5809
    %v6078 = vpop.f32.mrf.mxu0
    %v6079 = vadd.f32 %v6056, %v6078
    %6080 = vmatmul.f32.gmra.mxu0 %v5825
    %v6081 = vpop.f32.mrf.mxu0
    %v6082 = vadd.f32 %v6059, %v6081
    %6083 = vdwg.mxu0
    %6084 = vmatpush.msra.mxu0 %v725
    %6085 = vmatpush.msra.mxu0 %v724
    %6086 = vmatpush.msra.mxu0 %v723
    %6087 = vmatpush.msra.mxu0 %v722
    %6088 = vmatpush.msra.mxu0 %v721
    %6089 = vmatpush.msra.mxu0 %v720
    %6090 = vmatpush.msra.mxu0 %v719
    %6091 = vmatpush.msra.mxu0 %v718
    %6092 = vmatpush.msra.mxu0 %v717
    %6093 = vmatpush.msra.mxu0 %v716
    %6094 = vmatpush.msra.mxu0 %v715
    %6095 = vmatpush.msra.mxu0 %v714
    %6096 = vmatpush.msra.mxu0 %v713
    %6097 = vmatpush.msra.mxu0 %v712
    %6098 = vmatpush.msra.mxu0 %v711
    %6099 = vmatpush.msra.mxu0 %v710
    %6100 = vmatmul.f32.gmra.mxu0 %v5810
    %v6101 = vpop.f32.mrf.mxu0
    %v6102 = vadd.f32 %v6079, %v6101
    %6103 = vmatmul.f32.gmra.mxu0 %v5826
    %v6104 = vpop.f32.mrf.mxu0
    %v6105 = vadd.f32 %v6082, %v6104
    %6106 = vdwg.mxu0
    %6107 = vmatpush.msra.mxu0 %v741
    %6108 = vmatpush.msra.mxu0 %v740
    %6109 = vmatpush.msra.mxu0 %v739
    %6110 = vmatpush.msra.mxu0 %v738
    %6111 = vmatpush.msra.mxu0 %v737
    %6112 = vmatpush.msra.mxu0 %v736
    %6113 = vmatpush.msra.mxu0 %v735
    %6114 = vmatpush.msra.mxu0 %v734
    %6115 = vmatpush.msra.mxu0 %v733
    %6116 = vmatpush.msra.mxu0 %v732
    %6117 = vmatpush.msra.mxu0 %v731
    %6118 = vmatpush.msra.mxu0 %v730
    %6119 = vmatpush.msra.mxu0 %v729
    %6120 = vmatpush.msra.mxu0 %v728
    %6121 = vmatpush.msra.mxu0 %v727
    %6122 = vmatpush.msra.mxu0 %v726
    %6123 = vmatmul.f32.gmra.mxu0 %v5811
    %v6124 = vpop.f32.mrf.mxu0
    %v6125 = vadd.f32 %v6102, %v6124
    %6126 = vmatmul.f32.gmra.mxu0 %v5827
    %v6127 = vpop.f32.mrf.mxu0
    %v6128 = vadd.f32 %v6105, %v6127
    %6129 = vdwg.mxu0
    %6130 = vmatpush.msra.mxu0 %v757
    %6131 = vmatpush.msra.mxu0 %v756
    %6132 = vmatpush.msra.mxu0 %v755
    %6133 = vmatpush.msra.mxu0 %v754
    %6134 = vmatpush.msra.mxu0 %v753
    %6135 = vmatpush.msra.mxu0 %v752
    %6136 = vmatpush.msra.mxu0 %v751
    %6137 = vmatpush.msra.mxu0 %v750
    %6138 = vmatpush.msra.mxu0 %v749
    %6139 = vmatpush.msra.mxu0 %v748
    %6140 = vmatpush.msra.mxu0 %v747
    %6141 = vmatpush.msra.mxu0 %v746
    %6142 = vmatpush.msra.mxu0 %v745
    %6143 = vmatpush.msra.mxu0 %v744
    %6144 = vmatpush.msra.mxu0 %v743
    %6145 = vmatpush.msra.mxu0 %v742
    %6146 = vmatmul.f32.gmra.mxu0 %v5812
    %v6147 = vpop.f32.mrf.mxu0
    %v6148 = vadd.f32 %v6125, %v6147
    %6149 = vmatmul.f32.gmra.mxu0 %v5828
    %v6150 = vpop.f32.mrf.mxu0
    %v6151 = vadd.f32 %v6128, %v6150
    %6152 = vdwg.mxu0
    %6153 = vmatpush.msra.mxu0 %v773
    %6154 = vmatpush.msra.mxu0 %v772
    %6155 = vmatpush.msra.mxu0 %v771
    %6156 = vmatpush.msra.mxu0 %v770
    %6157 = vmatpush.msra.mxu0 %v769
    %6158 = vmatpush.msra.mxu0 %v768
    %6159 = vmatpush.msra.mxu0 %v767
    %6160 = vmatpush.msra.mxu0 %v766
    %6161 = vmatpush.msra.mxu0 %v765
    %6162 = vmatpush.msra.mxu0 %v764
    %6163 = vmatpush.msra.mxu0 %v763
    %6164 = vmatpush.msra.mxu0 %v762
    %6165 = vmatpush.msra.mxu0 %v761
    %6166 = vmatpush.msra.mxu0 %v760
    %6167 = vmatpush.msra.mxu0 %v759
    %6168 = vmatpush.msra.mxu0 %v758
    %6169 = vmatmul.f32.gmra.mxu0 %v5813
    %v6170 = vpop.f32.mrf.mxu0
    %v6171 = vadd.f32 %v6148, %v6170
    %6172 = vmatmul.f32.gmra.mxu0 %v5829
    %v6173 = vpop.f32.mrf.mxu0
    %v6174 = vadd.f32 %v6151, %v6173
    %6175 = vdwg.mxu0
    %6176 = vmatpush.msra.mxu0 %v789
    %6177 = vmatpush.msra.mxu0 %v788
    %6178 = vmatpush.msra.mxu0 %v787
    %6179 = vmatpush.msra.mxu0 %v786
    %6180 = vmatpush.msra.mxu0 %v785
    %6181 = vmatpush.msra.mxu0 %v784
    %6182 = vmatpush.msra.mxu0 %v783
    %6183 = vmatpush.msra.mxu0 %v782
    %6184 = vmatpush.msra.mxu0 %v781
    %6185 = vmatpush.msra.mxu0 %v780
    %6186 = vmatpush.msra.mxu0 %v779
    %6187 = vmatpush.msra.mxu0 %v778
    %6188 = vmatpush.msra.mxu0 %v777
    %6189 = vmatpush.msra.mxu0 %v776
    %6190 = vmatpush.msra.mxu0 %v775
    %6191 = vmatpush.msra.mxu0 %v774
    %6192 = vmatmul.f32.gmra.mxu0 %v5814
    %v6193 = vpop.f32.mrf.mxu0
    %v6194 = vadd.f32 %v6171, %v6193
    %6195 = vmatmul.f32.gmra.mxu0 %v5830
    %v6196 = vpop.f32.mrf.mxu0
    %v6197 = vadd.f32 %v6174, %v6196
    %6198 = vdwg.mxu0
    %vm6199 = vcmp.gt.f32.partialorder %v6194, 0.0
    %vm6200 = vcmp.gt.f32.partialorder %v6197, 0.0
    %v6201 = vmul.f32 %v6194, 0.2
    %v6202 = vmul.f32 %v6197, 0.2
    %v6203 = vsel %vm6199, %v6194, %v6201
    %v6204 = vsel %vm6200, %v6197, %v6202
    %v6205 = vsel %vm3081, %v6203, 0.0
    %v6206 = vsel %vm3081, %v6204, 0.0
    %v6207 = vadd.f32 %v6205, %v6206
    %v6208 = vrot.slane %v6207, 4
    %v6209 = vadd.f32 %v6207, %v6208
    %v6210 = vrot.slane %v6209, 2
    %v6211 = vadd.f32 %v6209, %v6210
    %v6212 = vrot.slane %v6211, 1
    %v6213 = vadd.f32 %v6211, %v6212
    %v6214 = vrcp.pop 16.0
    %v6215 = vmul.f32 16.0, %v6214
    %v6216 = vsub.f32 1.0, %v6215
    %v6217 = vmul.f32 %v6214, %v6216
    %v6218 = vadd.f32 %v6214, %v6217
    %vm6219 = vweird.f32 %v6214
    %v6220 = vsel %vm6219, %v6214, %v6218
    %v6221 = vmul.f32 %v6213, %v6220
    %v6222 = vsub.f32 %v6203, %v6221
    %v6223 = vsub.f32 %v6204, %v6221
    %v6224 = vmul.f32 %v6222, %v6222
    %v6225 = vmul.f32 %v6223, %v6223
    %v6226 = vsel %vm3081, %v6224, 0.0
    %v6227 = vsel %vm3081, %v6225, 0.0
    %v6228 = vadd.f32 %v6226, %v6227
    %v6229 = vrot.slane %v6228, 4
    %v6230 = vadd.f32 %v6228, %v6229
    %v6231 = vrot.slane %v6230, 2
    %v6232 = vadd.f32 %v6230, %v6231
    %v6233 = vrot.slane %v6232, 1
    %v6234 = vadd.f32 %v6232, %v6233
    %v6235 = vmul.f32 %v6234, %v6220
    %v6236 = vadd.f32 %v6235, 1e-05
    %v6237 = vrsqrt.pop %v6236
    %v6238 = vmul.f32 %v6237, %v6236
    %v6239 = vmul.f32 %v6238, %v6237
    %v6240 = vmul.f32 0.5, %v6239
    %v6241 = vsub.f32 1.5, %v6240
    %v6242 = vmul.f32 %v6237, %v6241
    %vm6243 = vweird.f32 %v6236
    %vm6244 = vweird.f32 %v6237
    %vm6245 = vmor %vm6243, %vm6244
    %v6246 = vsel %vm6245, %v6237, %v6242
    %v6247 = vmul.f32 %v6222, %v6246
    %v6248 = vmul.f32 %v6223, %v6246
    %v6249 = vmul.f32 %v6247, %v4846
    %v6250 = vmul.f32 %v6248, %v4847
    %v6251 = vadd.f32 %v6249, %v4848
    %v6252 = vadd.f32 %v6250, %v4849
    %v6253 = vmul.f32 %v6251, %v4850
    %v6254 = vmul.f32 %v6252, %v4851
    %v6255 = vsel %vm3081, %v6253, 0.0
    %v6256 = vsel %vm3081, %v6254, 0.0
    %v6257 = vadd.f32 %v6255, %v6256
    %v6258 = vrot.slane %v6257, 4
    %v6259 = vadd.f32 %v6257, %v6258
    %v6260 = vrot.slane %v6259, 2
    %v6261 = vadd.f32 %v6259, %v6260
    %v6262 = vrot.slane %v6261, 1
    %v6263 = vadd.f32 %v6261, %v6262
    %v6264 = vadd.f32 %v6263, %v4852
    %v6265 = vperm.slane %v4586, 1
    %v6266 = vperm.slane %v4601, 1
    %v6267 = vperm.slane %v4616, 1
    %v6268 = vperm.slane %v4631, 1
    %v6269 = vperm.slane %v4646, 1
    %v6270 = vperm.slane %v4661, 1
    %v6271 = vperm.slane %v4676, 1
    %v6272 = vperm.slane %v4691, 1
    %v6273 = vperm.slane %v4706, 1
    %v6274 = vperm.slane %v4721, 1
    %v6275 = vperm.slane %v4736, 1
    %v6276 = vperm.slane %v4751, 1
    %v6277 = vperm.slane %v4766, 1
    %v6278 = vperm.slane %v4781, 1
    %v6279 = vperm.slane %v4796, 1
    %v6280 = vperm.slane %v4811, 1
    %v6281 = vmul.f32 %v2582, %v6265
    %v6282 = vmul.f32 %v2584, %v6266
    %v6283 = vmul.f32 %v2586, %v6267
    %v6284 = vmul.f32 %v2588, %v6268
    %v6285 = vmul.f32 %v2590, %v6269
    %v6286 = vmul.f32 %v2592, %v6270
    %v6287 = vmul.f32 %v2594, %v6271
    %v6288 = vmul.f32 %v2596, %v6272
    %v6289 = vmul.f32 %v2598, %v6273
    %v6290 = vmul.f32 %v2600, %v6274
    %v6291 = vmul.f32 %v2602, %v6275
    %v6292 = vmul.f32 %v2604, %v6276
    %v6293 = vmul.f32 %v2606, %v6277
    %v6294 = vmul.f32 %v2608, %v6278
    %v6295 = vmul.f32 %v2610, %v6279
    %v6296 = vmul.f32 %v2612, %v6280
    %v6297 = vmul.f32 %v2614, %v6265
    %v6298 = vmul.f32 %v2616, %v6266
    %v6299 = vmul.f32 %v2618, %v6267
    %v6300 = vmul.f32 %v2620, %v6268
    %v6301 = vmul.f32 %v2622, %v6269
    %v6302 = vmul.f32 %v2624, %v6270
    %v6303 = vmul.f32 %v2626, %v6271
    %v6304 = vmul.f32 %v2628, %v6272
    %v6305 = vmul.f32 %v2630, %v6273
    %v6306 = vmul.f32 %v2632, %v6274
    %v6307 = vmul.f32 %v2634, %v6275
    %v6308 = vmul.f32 %v2636, %v6276
    %v6309 = vmul.f32 %v2638, %v6277
    %v6310 = vmul.f32 %v2640, %v6278
    %v6311 = vmul.f32 %v2642, %v6279
    %v6312 = vmul.f32 %v2644, %v6280
    %6313 = vmatpush.msra.mxu0 %v549
    %6314 = vmatpush.msra.mxu0 %v548
    %6315 = vmatpush.msra.mxu0 %v547
    %6316 = vmatpush.msra.mxu0 %v546
    %6317 = vmatpush.msra.mxu0 %v545
    %6318 = vmatpush.msra.mxu0 %v544
    %6319 = vmatpush.msra.mxu0 %v543
    %6320 = vmatpush.msra.mxu0 %v542
    %6321 = vmatpush.msra.mxu0 %v541
    %6322 = vmatpush.msra.mxu0 %v540
    %6323 = vmatpush.msra.mxu0 %v539
    %6324 = vmatpush.msra.mxu0 %v538
    %6325 = vmatpush.msra.mxu0 %v537
    %6326 = vmatpush.msra.mxu0 %v536
    %6327 = vmatpush.msra.mxu0 %v535
    %6328 = vmatpush.msra.mxu0 %v534
    %6329 = vmatmul.f32.gmra.mxu0 %v6281
    %v6330 = vpop.f32.mrf.mxu0
    %v6331 = vadd.f32 0.0, %v6330
    %6332 = vmatmul.f32.gmra.mxu0 %v6297
    %v6333 = vpop.f32.mrf.mxu0
    %v6334 = vadd.f32 0.0, %v6333
    %6335 = vdwg.mxu0
    %6336 = vmatpush.msra.mxu0 %v565
    %6337 = vmatpush.msra.mxu0 %v564
    %6338 = vmatpush.msra.mxu0 %v563
    %6339 = vmatpush.msra.mxu0 %v562
    %6340 = vmatpush.msra.mxu0 %v561
    %6341 = vmatpush.msra.mxu0 %v560
    %6342 = vmatpush.msra.mxu0 %v559
    %6343 = vmatpush.msra.mxu0 %v558
    %6344 = vmatpush.msra.mxu0 %v557
    %6345 = vmatpush.msra.mxu0 %v556
    %6346 = vmatpush.msra.mxu0 %v555
    %6347 = vmatpush.msra.mxu0 %v554
    %6348 = vmatpush.msra.mxu0 %v553
    %6349 = vmatpush.msra.mxu0 %v552
    %6350 = vmatpush.msra.mxu0 %v551
    %6351 = vmatpush.msra.mxu0 %v550
    %6352 = vmatmul.f32.gmra.mxu0 %v6282
    %v6353 = vpop.f32.mrf.mxu0
    %v6354 = vadd.f32 %v6331, %v6353
    %6355 = vmatmul.f32.gmra.mxu0 %v6298
    %v6356 = vpop.f32.mrf.mxu0
    %v6357 = vadd.f32 %v6334, %v6356
    %6358 = vdwg.mxu0
    %6359 = vmatpush.msra.mxu0 %v581
    %6360 = vmatpush.msra.mxu0 %v580
    %6361 = vmatpush.msra.mxu0 %v579
    %6362 = vmatpush.msra.mxu0 %v578
    %6363 = vmatpush.msra.mxu0 %v577
    %6364 = vmatpush.msra.mxu0 %v576
    %6365 = vmatpush.msra.mxu0 %v575
    %6366 = vmatpush.msra.mxu0 %v574
    %6367 = vmatpush.msra.mxu0 %v573
    %6368 = vmatpush.msra.mxu0 %v572
    %6369 = vmatpush.msra.mxu0 %v571
    %6370 = vmatpush.msra.mxu0 %v570
    %6371 = vmatpush.msra.mxu0 %v569
    %6372 = vmatpush.msra.mxu0 %v568
    %6373 = vmatpush.msra.mxu0 %v567
    %6374 = vmatpush.msra.mxu0 %v566
    %6375 = vmatmul.f32.gmra.mxu0 %v6283
    %v6376 = vpop.f32.mrf.mxu0
    %v6377 = vadd.f32 %v6354, %v6376
    %6378 = vmatmul.f32.gmra.mxu0 %v6299
    %v6379 = vpop.f32.mrf.mxu0
    %v6380 = vadd.f32 %v6357, %v6379
    %6381 = vdwg.mxu0
    %6382 = vmatpush.msra.mxu0 %v597
    %6383 = vmatpush.msra.mxu0 %v596
    %6384 = vmatpush.msra.mxu0 %v595
    %6385 = vmatpush.msra.mxu0 %v594
    %6386 = vmatpush.msra.mxu0 %v593
    %6387 = vmatpush.msra.mxu0 %v592
    %6388 = vmatpush.msra.mxu0 %v591
    %6389 = vmatpush.msra.mxu0 %v590
    %6390 = vmatpush.msra.mxu0 %v589
    %6391 = vmatpush.msra.mxu0 %v588
    %6392 = vmatpush.msra.mxu0 %v587
    %6393 = vmatpush.msra.mxu0 %v586
    %6394 = vmatpush.msra.mxu0 %v585
    %6395 = vmatpush.msra.mxu0 %v584
    %6396 = vmatpush.msra.mxu0 %v583
    %6397 = vmatpush.msra.mxu0 %v582
    %6398 = vmatmul.f32.gmra.mxu0 %v6284
    %v6399 = vpop.f32.mrf.mxu0
    %v6400 = vadd.f32 %v6377, %v6399
    %6401 = vmatmul.f32.gmra.mxu0 %v6300
    %v6402 = vpop.f32.mrf.mxu0
    %v6403 = vadd.f32 %v6380, %v6402
    %6404 = vdwg.mxu0
    %6405 = vmatpush.msra.mxu0 %v613
    %6406 = vmatpush.msra.mxu0 %v612
    %6407 = vmatpush.msra.mxu0 %v611
    %6408 = vmatpush.msra.mxu0 %v610
    %6409 = vmatpush.msra.mxu0 %v609
    %6410 = vmatpush.msra.mxu0 %v608
    %6411 = vmatpush.msra.mxu0 %v607
    %6412 = vmatpush.msra.mxu0 %v606
    %6413 = vmatpush.msra.mxu0 %v605
    %6414 = vmatpush.msra.mxu0 %v604
    %6415 = vmatpush.msra.mxu0 %v603
    %6416 = vmatpush.msra.mxu0 %v602
    %6417 = vmatpush.msra.mxu0 %v601
    %6418 = vmatpush.msra.mxu0 %v600
    %6419 = vmatpush.msra.mxu0 %v599
    %6420 = vmatpush.msra.mxu0 %v598
    %6421 = vmatmul.f32.gmra.mxu0 %v6285
    %v6422 = vpop.f32.mrf.mxu0
    %v6423 = vadd.f32 %v6400, %v6422
    %6424 = vmatmul.f32.gmra.mxu0 %v6301
    %v6425 = vpop.f32.mrf.mxu0
    %v6426 = vadd.f32 %v6403, %v6425
    %6427 = vdwg.mxu0
    %6428 = vmatpush.msra.mxu0 %v629
    %6429 = vmatpush.msra.mxu0 %v628
    %6430 = vmatpush.msra.mxu0 %v627
    %6431 = vmatpush.msra.mxu0 %v626
    %6432 = vmatpush.msra.mxu0 %v625
    %6433 = vmatpush.msra.mxu0 %v624
    %6434 = vmatpush.msra.mxu0 %v623
    %6435 = vmatpush.msra.mxu0 %v622
    %6436 = vmatpush.msra.mxu0 %v621
    %6437 = vmatpush.msra.mxu0 %v620
    %6438 = vmatpush.msra.mxu0 %v619
    %6439 = vmatpush.msra.mxu0 %v618
    %6440 = vmatpush.msra.mxu0 %v617
    %6441 = vmatpush.msra.mxu0 %v616
    %6442 = vmatpush.msra.mxu0 %v615
    %6443 = vmatpush.msra.mxu0 %v614
    %6444 = vmatmul.f32.gmra.mxu0 %v6286
    %v6445 = vpop.f32.mrf.mxu0
    %v6446 = vadd.f32 %v6423, %v6445
    %6447 = vmatmul.f32.gmra.mxu0 %v6302
    %v6448 = vpop.f32.mrf.mxu0
    %v6449 = vadd.f32 %v6426, %v6448
    %6450 = vdwg.mxu0
    %6451 = vmatpush.msra.mxu0 %v645
    %6452 = vmatpush.msra.mxu0 %v644
    %6453 = vmatpush.msra.mxu0 %v643
    %6454 = vmatpush.msra.mxu0 %v642
    %6455 = vmatpush.msra.mxu0 %v641
    %6456 = vmatpush.msra.mxu0 %v640
    %6457 = vmatpush.msra.mxu0 %v639
    %6458 = vmatpush.msra.mxu0 %v638
    %6459 = vmatpush.msra.mxu0 %v637
    %6460 = vmatpush.msra.mxu0 %v636
    %6461 = vmatpush.msra.mxu0 %v635
    %6462 = vmatpush.msra.mxu0 %v634
    %6463 = vmatpush.msra.mxu0 %v633
    %6464 = vmatpush.msra.mxu0 %v632
    %6465 = vmatpush.msra.mxu0 %v631
    %6466 = vmatpush.msra.mxu0 %v630
    %6467 = vmatmul.f32.gmra.mxu0 %v6287
    %v6468 = vpop.f32.mrf.mxu0
    %v6469 = vadd.f32 %v6446, %v6468
    %6470 = vmatmul.f32.gmra.mxu0 %v6303
    %v6471 = vpop.f32.mrf.mxu0
    %v6472 = vadd.f32 %v6449, %v6471
    %6473 = vdwg.mxu0
    %6474 = vmatpush.msra.mxu0 %v661
    %6475 = vmatpush.msra.mxu0 %v660
    %6476 = vmatpush.msra.mxu0 %v659
    %6477 = vmatpush.msra.mxu0 %v658
    %6478 = vmatpush.msra.mxu0 %v657
    %6479 = vmatpush.msra.mxu0 %v656
    %6480 = vmatpush.msra.mxu0 %v655
    %6481 = vmatpush.msra.mxu0 %v654
    %6482 = vmatpush.msra.mxu0 %v653
    %6483 = vmatpush.msra.mxu0 %v652
    %6484 = vmatpush.msra.mxu0 %v651
    %6485 = vmatpush.msra.mxu0 %v650
    %6486 = vmatpush.msra.mxu0 %v649
    %6487 = vmatpush.msra.mxu0 %v648
    %6488 = vmatpush.msra.mxu0 %v647
    %6489 = vmatpush.msra.mxu0 %v646
    %6490 = vmatmul.f32.gmra.mxu0 %v6288
    %v6491 = vpop.f32.mrf.mxu0
    %v6492 = vadd.f32 %v6469, %v6491
    %6493 = vmatmul.f32.gmra.mxu0 %v6304
    %v6494 = vpop.f32.mrf.mxu0
    %v6495 = vadd.f32 %v6472, %v6494
    %6496 = vdwg.mxu0
    %6497 = vmatpush.msra.mxu0 %v677
    %6498 = vmatpush.msra.mxu0 %v676
    %6499 = vmatpush.msra.mxu0 %v675
    %6500 = vmatpush.msra.mxu0 %v674
    %6501 = vmatpush.msra.mxu0 %v673
    %6502 = vmatpush.msra.mxu0 %v672
    %6503 = vmatpush.msra.mxu0 %v671
    %6504 = vmatpush.msra.mxu0 %v670
    %6505 = vmatpush.msra.mxu0 %v669
    %6506 = vmatpush.msra.mxu0 %v668
    %6507 = vmatpush.msra.mxu0 %v667
    %6508 = vmatpush.msra.mxu0 %v666
    %6509 = vmatpush.msra.mxu0 %v665
    %6510 = vmatpush.msra.mxu0 %v664
    %6511 = vmatpush.msra.mxu0 %v663
    %6512 = vmatpush.msra.mxu0 %v662
    %6513 = vmatmul.f32.gmra.mxu0 %v6289
    %v6514 = vpop.f32.mrf.mxu0
    %v6515 = vadd.f32 %v6492, %v6514
    %6516 = vmatmul.f32.gmra.mxu0 %v6305
    %v6517 = vpop.f32.mrf.mxu0
    %v6518 = vadd.f32 %v6495, %v6517
    %6519 = vdwg.mxu0
    %6520 = vmatpush.msra.mxu0 %v693
    %6521 = vmatpush.msra.mxu0 %v692
    %6522 = vmatpush.msra.mxu0 %v691
    %6523 = vmatpush.msra.mxu0 %v690
    %6524 = vmatpush.msra.mxu0 %v689
    %6525 = vmatpush.msra.mxu0 %v688
    %6526 = vmatpush.msra.mxu0 %v687
    %6527 = vmatpush.msra.mxu0 %v686
    %6528 = vmatpush.msra.mxu0 %v685
    %6529 = vmatpush.msra.mxu0 %v684
    %6530 = vmatpush.msra.mxu0 %v683
    %6531 = vmatpush.msra.mxu0 %v682
    %6532 = vmatpush.msra.mxu0 %v681
    %6533 = vmatpush.msra.mxu0 %v680
    %6534 = vmatpush.msra.mxu0 %v679
    %6535 = vmatpush.msra.mxu0 %v678
    %6536 = vmatmul.f32.gmra.mxu0 %v6290
    %v6537 = vpop.f32.mrf.mxu0
    %v6538 = vadd.f32 %v6515, %v6537
    %6539 = vmatmul.f32.gmra.mxu0 %v6306
    %v6540 = vpop.f32.mrf.mxu0
    %v6541 = vadd.f32 %v6518, %v6540
    %6542 = vdwg.mxu0
    %6543 = vmatpush.msra.mxu0 %v709
    %6544 = vmatpush.msra.mxu0 %v708
    %6545 = vmatpush.msra.mxu0 %v707
    %6546 = vmatpush.msra.mxu0 %v706
    %6547 = vmatpush.msra.mxu0 %v705
    %6548 = vmatpush.msra.mxu0 %v704
    %6549 = vmatpush.msra.mxu0 %v703
    %6550 = vmatpush.msra.mxu0 %v702
    %6551 = vmatpush.msra.mxu0 %v701
    %6552 = vmatpush.msra.mxu0 %v700
    %6553 = vmatpush.msra.mxu0 %v699
    %6554 = vmatpush.msra.mxu0 %v698
    %6555 = vmatpush.msra.mxu0 %v697
    %6556 = vmatpush.msra.mxu0 %v696
    %6557 = vmatpush.msra.mxu0 %v695
    %6558 = vmatpush.msra.mxu0 %v694
    %6559 = vmatmul.f32.gmra.mxu0 %v6291
    %v6560 = vpop.f32.mrf.mxu0
    %v6561 = vadd.f32 %v6538, %v6560
    %6562 = vmatmul.f32.gmra.mxu0 %v6307
    %v6563 = vpop.f32.mrf.mxu0
    %v6564 = vadd.f32 %v6541, %v6563
    %6565 = vdwg.mxu0
    %6566 = vmatpush.msra.mxu0 %v725
    %6567 = vmatpush.msra.mxu0 %v724
    %6568 = vmatpush.msra.mxu0 %v723
    %6569 = vmatpush.msra.mxu0 %v722
    %6570 = vmatpush.msra.mxu0 %v721
    %6571 = vmatpush.msra.mxu0 %v720
    %6572 = vmatpush.msra.mxu0 %v719
    %6573 = vmatpush.msra.mxu0 %v718
    %6574 = vmatpush.msra.mxu0 %v717
    %6575 = vmatpush.msra.mxu0 %v716
    %6576 = vmatpush.msra.mxu0 %v715
    %6577 = vmatpush.msra.mxu0 %v714
    %6578 = vmatpush.msra.mxu0 %v713
    %6579 = vmatpush.msra.mxu0 %v712
    %6580 = vmatpush.msra.mxu0 %v711
    %6581 = vmatpush.msra.mxu0 %v710
    %6582 = vmatmul.f32.gmra.mxu0 %v6292
    %v6583 = vpop.f32.mrf.mxu0
    %v6584 = vadd.f32 %v6561, %v6583
    %6585 = vmatmul.f32.gmra.mxu0 %v6308
    %v6586 = vpop.f32.mrf.mxu0
    %v6587 = vadd.f32 %v6564, %v6586
    %6588 = vdwg.mxu0
    %6589 = vmatpush.msra.mxu0 %v741
    %6590 = vmatpush.msra.mxu0 %v740
    %6591 = vmatpush.msra.mxu0 %v739
    %6592 = vmatpush.msra.mxu0 %v738
    %6593 = vmatpush.msra.mxu0 %v737
    %6594 = vmatpush.msra.mxu0 %v736
    %6595 = vmatpush.msra.mxu0 %v735
    %6596 = vmatpush.msra.mxu0 %v734
    %6597 = vmatpush.msra.mxu0 %v733
    %6598 = vmatpush.msra.mxu0 %v732
    %6599 = vmatpush.msra.mxu0 %v731
    %6600 = vmatpush.msra.mxu0 %v730
    %6601 = vmatpush.msra.mxu0 %v729
    %6602 = vmatpush.msra.mxu0 %v728
    %6603 = vmatpush.msra.mxu0 %v727
    %6604 = vmatpush.msra.mxu0 %v726
    %6605 = vmatmul.f32.gmra.mxu0 %v6293
    %v6606 = vpop.f32.mrf.mxu0
    %v6607 = vadd.f32 %v6584, %v6606
    %6608 = vmatmul.f32.gmra.mxu0 %v6309
    %v6609 = vpop.f32.mrf.mxu0
    %v6610 = vadd.f32 %v6587, %v6609
    %6611 = vdwg.mxu0
    %6612 = vmatpush.msra.mxu0 %v757
    %6613 = vmatpush.msra.mxu0 %v756
    %6614 = vmatpush.msra.mxu0 %v755
    %6615 = vmatpush.msra.mxu0 %v754
    %6616 = vmatpush.msra.mxu0 %v753
    %6617 = vmatpush.msra.mxu0 %v752
    %6618 = vmatpush.msra.mxu0 %v751
    %6619 = vmatpush.msra.mxu0 %v750
    %6620 = vmatpush.msra.mxu0 %v749
    %6621 = vmatpush.msra.mxu0 %v748
    %6622 = vmatpush.msra.mxu0 %v747
    %6623 = vmatpush.msra.mxu0 %v746
    %6624 = vmatpush.msra.mxu0 %v745
    %6625 = vmatpush.msra.mxu0 %v744
    %6626 = vmatpush.msra.mxu0 %v743
    %6627 = vmatpush.msra.mxu0 %v742
    %6628 = vmatmul.f32.gmra.mxu0 %v6294
    %v6629 = vpop.f32.mrf.mxu0
    %v6630 = vadd.f32 %v6607, %v6629
    %6631 = vmatmul.f32.gmra.mxu0 %v6310
    %v6632 = vpop.f32.mrf.mxu0
    %v6633 = vadd.f32 %v6610, %v6632
    %6634 = vdwg.mxu0
    %6635 = vmatpush.msra.mxu0 %v773
    %6636 = vmatpush.msra.mxu0 %v772
    %6637 = vmatpush.msra.mxu0 %v771
    %6638 = vmatpush.msra.mxu0 %v770
    %6639 = vmatpush.msra.mxu0 %v769
    %6640 = vmatpush.msra.mxu0 %v768
    %6641 = vmatpush.msra.mxu0 %v767
    %6642 = vmatpush.msra.mxu0 %v766
    %6643 = vmatpush.msra.mxu0 %v765
    %6644 = vmatpush.msra.mxu0 %v764
    %6645 = vmatpush.msra.mxu0 %v763
    %6646 = vmatpush.msra.mxu0 %v762
    %6647 = vmatpush.msra.mxu0 %v761
    %6648 = vmatpush.msra.mxu0 %v760
    %6649 = vmatpush.msra.mxu0 %v759
    %6650 = vmatpush.msra.mxu0 %v758
    %6651 = vmatmul.f32.gmra.mxu0 %v6295
    %v6652 = vpop.f32.mrf.mxu0
    %v6653 = vadd.f32 %v6630, %v6652
    %6654 = vmatmul.f32.gmra.mxu0 %v6311
    %v6655 = vpop.f32.mrf.mxu0
    %v6656 = vadd.f32 %v6633, %v6655
    %6657 = vdwg.mxu0
    %6658 = vmatpush.msra.mxu0 %v789
    %6659 = vmatpush.msra.mxu0 %v788
    %6660 = vmatpush.msra.mxu0 %v787
    %6661 = vmatpush.msra.mxu0 %v786
    %6662 = vmatpush.msra.mxu0 %v785
    %6663 = vmatpush.msra.mxu0 %v784
    %6664 = vmatpush.msra.mxu0 %v783
    %6665 = vmatpush.msra.mxu0 %v782
    %6666 = vmatpush.msra.mxu0 %v781
    %6667 = vmatpush.msra.mxu0 %v780
    %6668 = vmatpush.msra.mxu0 %v779
    %6669 = vmatpush.msra.mxu0 %v778
    %6670 = vmatpush.msra.mxu0 %v777
    %6671 = vmatpush.msra.mxu0 %v776
    %6672 = vmatpush.msra.mxu0 %v775
    %6673 = vmatpush.msra.mxu0 %v774
    %6674 = vmatmul.f32.gmra.mxu0 %v6296
    %v6675 = vpop.f32.mrf.mxu0
    %v6676 = vadd.f32 %v6653, %v6675
    %6677 = vmatmul.f32.gmra.mxu0 %v6312
    %v6678 = vpop.f32.mrf.mxu0
    %v6679 = vadd.f32 %v6656, %v6678
    %6680 = vdwg.mxu0
    %6681 = vset.pattern.permute.xlu0 1
    %6682 = vperm.xlu0 %6681, %v532
    %v6683 = vpop.permute.xlu0 %6682
    %6685 = vset.pattern.permute.xlu0 1
    %6686 = vperm.xlu0 %6685, %v533
    %v6687 = vpop.permute.xlu0 %6686
    %v6689 = vmul.f32 %v6676, %v6683
    %v6690 = vmul.f32 %v6679, %v6687
    %v6692 = vsel %vm3081, %v6689, 0
    %v6695 = vsel %vm3081, %v6690, 0
    %6697 = vmatpush.msra.mxu0 0.0
    %6698 = vmatpush.msra.mxu0 0.0
    %6699 = vmatpush.msra.mxu0 0.0
    %6700 = vmatpush.msra.mxu0 0.0
    %6701 = vmatpush.msra.mxu0 0.0
    %6702 = vmatpush.msra.mxu0 0.0
    %6703 = vmatpush.msra.mxu0 0.0
    %6704 = vmatpush.msra.mxu0 0.0
    %6705 = vmatpush.msra.mxu0 %v902
    %6706 = vmatpush.msra.mxu0 %v886
    %6707 = vmatpush.msra.mxu0 %v870
    %6708 = vmatpush.msra.mxu0 %v854
    %6709 = vmatpush.msra.mxu0 %v838
    %6710 = vmatpush.msra.mxu0 %v822
    %6711 = vmatpush.msra.mxu0 %v806
    %6712 = vmatpush.msra.mxu0 %v790
    %6713 = vmatmul.f32.gmra.mxu0 %v6692
    %v6714 = vpop.f32.mrf.mxu0
    %v6715 = vadd.f32 0.0, %v6714
    %6716 = vmatmul.f32.gmra.mxu0 %v6695
    %v6717 = vpop.f32.mrf.mxu0
    %v6718 = vadd.f32 0.0, %v6717
    %6719 = vdwg.mxu0
    %6720 = vmatpush.msra.mxu0 0.0
    %6721 = vmatpush.msra.mxu0 0.0
    %6722 = vmatpush.msra.mxu0 0.0
    %6723 = vmatpush.msra.mxu0 0.0
    %6724 = vmatpush.msra.mxu0 0.0
    %6725 = vmatpush.msra.mxu0 0.0
    %6726 = vmatpush.msra.mxu0 0.0
    %6727 = vmatpush.msra.mxu0 0.0
    %6728 = vmatpush.msra.mxu0 %v903
    %6729 = vmatpush.msra.mxu0 %v887
    %6730 = vmatpush.msra.mxu0 %v871
    %6731 = vmatpush.msra.mxu0 %v855
    %6732 = vmatpush.msra.mxu0 %v839
    %6733 = vmatpush.msra.mxu0 %v823
    %6734 = vmatpush.msra.mxu0 %v807
    %6735 = vmatpush.msra.mxu0 %v791
    %6736 = vmatmul.f32.gmra.mxu0 %v6692
    %v6737 = vpop.f32.mrf.mxu0
    %v6738 = vadd.f32 0.0, %v6737
    %6739 = vmatmul.f32.gmra.mxu0 %v6695
    %v6740 = vpop.f32.mrf.mxu0
    %v6741 = vadd.f32 0.0, %v6740
    %6742 = vdwg.mxu0
    %6743 = vmatpush.msra.mxu0 0.0
    %6744 = vmatpush.msra.mxu0 0.0
    %6745 = vmatpush.msra.mxu0 0.0
    %6746 = vmatpush.msra.mxu0 0.0
    %6747 = vmatpush.msra.mxu0 0.0
    %6748 = vmatpush.msra.mxu0 0.0
    %6749 = vmatpush.msra.mxu0 0.0
    %6750 = vmatpush.msra.mxu0 0.0
    %6751 = vmatpush.msra.mxu0 %v904
    %6752 = vmatpush.msra.mxu0 %v888
    %6753 = vmatpush.msra.mxu0 %v872
    %6754 = vmatpush.msra.mxu0 %v856
    %6755 = vmatpush.msra.mxu0 %v840
    %6756 = vmatpush.msra.mxu0 %v824
    %6757 = vmatpush.msra.mxu0 %v808
    %6758 = vmatpush.msra.mxu0 %v792
    %6759 = vmatmul.f32.gmra.mxu0 %v6692
    %v6760 = vpop.f32.mrf.mxu0
    %v6761 = vadd.f32 0.0, %v6760
    %6762 = vmatmul.f32.gmra.mxu0 %v6695
    %v6763 = vpop.f32.mrf.mxu0
    %v6764 = vadd.f32 0.0, %v6763
    %6765 = vdwg.mxu0
    %6766 = vmatpush.msra.mxu0 0.0
    %6767 = vmatpush.msra.mxu0 0.0
    %6768 = vmatpush.msra.mxu0 0.0
    %6769 = vmatpush.msra.mxu0 0.0
    %6770 = vmatpush.msra.mxu0 0.0
    %6771 = vmatpush.msra.mxu0 0.0
    %6772 = vmatpush.msra.mxu0 0.0
    %6773 = vmatpush.msra.mxu0 0.0
    %6774 = vmatpush.msra.mxu0 %v905
    %6775 = vmatpush.msra.mxu0 %v889
    %6776 = vmatpush.msra.mxu0 %v873
    %6777 = vmatpush.msra.mxu0 %v857
    %6778 = vmatpush.msra.mxu0 %v841
    %6779 = vmatpush.msra.mxu0 %v825
    %6780 = vmatpush.msra.mxu0 %v809
    %6781 = vmatpush.msra.mxu0 %v793
    %6782 = vmatmul.f32.gmra.mxu0 %v6692
    %v6783 = vpop.f32.mrf.mxu0
    %v6784 = vadd.f32 0.0, %v6783
    %6785 = vmatmul.f32.gmra.mxu0 %v6695
    %v6786 = vpop.f32.mrf.mxu0
    %v6787 = vadd.f32 0.0, %v6786
    %6788 = vdwg.mxu0
    %6789 = vmatpush.msra.mxu0 0.0
    %6790 = vmatpush.msra.mxu0 0.0
    %6791 = vmatpush.msra.mxu0 0.0
    %6792 = vmatpush.msra.mxu0 0.0
    %6793 = vmatpush.msra.mxu0 0.0
    %6794 = vmatpush.msra.mxu0 0.0
    %6795 = vmatpush.msra.mxu0 0.0
    %6796 = vmatpush.msra.mxu0 0.0
    %6797 = vmatpush.msra.mxu0 %v906
    %6798 = vmatpush.msra.mxu0 %v890
    %6799 = vmatpush.msra.mxu0 %v874
    %6800 = vmatpush.msra.mxu0 %v858
    %6801 = vmatpush.msra.mxu0 %v842
    %6802 = vmatpush.msra.mxu0 %v826
    %6803 = vmatpush.msra.mxu0 %v810
    %6804 = vmatpush.msra.mxu0 %v794
    %6805 = vmatmul.f32.gmra.mxu0 %v6692
    %v6806 = vpop.f32.mrf.mxu0
    %v6807 = vadd.f32 0.0, %v6806
    %6808 = vmatmul.f32.gmra.mxu0 %v6695
    %v6809 = vpop.f32.mrf.mxu0
    %v6810 = vadd.f32 0.0, %v6809
    %6811 = vdwg.mxu0
    %6812 = vmatpush.msra.mxu0 0.0
    %6813 = vmatpush.msra.mxu0 0.0
    %6814 = vmatpush.msra.mxu0 0.0
    %6815 = vmatpush.msra.mxu0 0.0
    %6816 = vmatpush.msra.mxu0 0.0
    %6817 = vmatpush.msra.mxu0 0.0
    %6818 = vmatpush.msra.mxu0 0.0
    %6819 = vmatpush.msra.mxu0 0.0
    %6820 = vmatpush.msra.mxu0 %v907
    %6821 = vmatpush.msra.mxu0 %v891
    %6822 = vmatpush.msra.mxu0 %v875
    %6823 = vmatpush.msra.mxu0 %v859
    %6824 = vmatpush.msra.mxu0 %v843
    %6825 = vmatpush.msra.mxu0 %v827
    %6826 = vmatpush.msra.mxu0 %v811
    %6827 = vmatpush.msra.mxu0 %v795
    %6828 = vmatmul.f32.gmra.mxu0 %v6692
    %v6829 = vpop.f32.mrf.mxu0
    %v6830 = vadd.f32 0.0, %v6829
    %6831 = vmatmul.f32.gmra.mxu0 %v6695
    %v6832 = vpop.f32.mrf.mxu0
    %v6833 = vadd.f32 0.0, %v6832
    %6834 = vdwg.mxu0
    %6835 = vmatpush.msra.mxu0 0.0
    %6836 = vmatpush.msra.mxu0 0.0
    %6837 = vmatpush.msra.mxu0 0.0
    %6838 = vmatpush.msra.mxu0 0.0
    %6839 = vmatpush.msra.mxu0 0.0
    %6840 = vmatpush.msra.mxu0 0.0
    %6841 = vmatpush.msra.mxu0 0.0
    %6842 = vmatpush.msra.mxu0 0.0
    %6843 = vmatpush.msra.mxu0 %v908
    %6844 = vmatpush.msra.mxu0 %v892
    %6845 = vmatpush.msra.mxu0 %v876
    %6846 = vmatpush.msra.mxu0 %v860
    %6847 = vmatpush.msra.mxu0 %v844
    %6848 = vmatpush.msra.mxu0 %v828
    %6849 = vmatpush.msra.mxu0 %v812
    %6850 = vmatpush.msra.mxu0 %v796
    %6851 = vmatmul.f32.gmra.mxu0 %v6692
    %v6852 = vpop.f32.mrf.mxu0
    %v6853 = vadd.f32 0.0, %v6852
    %6854 = vmatmul.f32.gmra.mxu0 %v6695
    %v6855 = vpop.f32.mrf.mxu0
    %v6856 = vadd.f32 0.0, %v6855
    %6857 = vdwg.mxu0
    %6858 = vmatpush.msra.mxu0 0.0
    %6859 = vmatpush.msra.mxu0 0.0
    %6860 = vmatpush.msra.mxu0 0.0
    %6861 = vmatpush.msra.mxu0 0.0
    %6862 = vmatpush.msra.mxu0 0.0
    %6863 = vmatpush.msra.mxu0 0.0
    %6864 = vmatpush.msra.mxu0 0.0
    %6865 = vmatpush.msra.mxu0 0.0
    %6866 = vmatpush.msra.mxu0 %v909
    %6867 = vmatpush.msra.mxu0 %v893
    %6868 = vmatpush.msra.mxu0 %v877
    %6869 = vmatpush.msra.mxu0 %v861
    %6870 = vmatpush.msra.mxu0 %v845
    %6871 = vmatpush.msra.mxu0 %v829
    %6872 = vmatpush.msra.mxu0 %v813
    %6873 = vmatpush.msra.mxu0 %v797
    %6874 = vmatmul.f32.gmra.mxu0 %v6692
    %v6875 = vpop.f32.mrf.mxu0
    %v6876 = vadd.f32 0.0, %v6875
    %6877 = vmatmul.f32.gmra.mxu0 %v6695
    %v6878 = vpop.f32.mrf.mxu0
    %v6879 = vadd.f32 0.0, %v6878
    %6880 = vdwg.mxu0
    %6881 = vmatpush.msra.mxu0 0.0
    %6882 = vmatpush.msra.mxu0 0.0
    %6883 = vmatpush.msra.mxu0 0.0
    %6884 = vmatpush.msra.mxu0 0.0
    %6885 = vmatpush.msra.mxu0 0.0
    %6886 = vmatpush.msra.mxu0 0.0
    %6887 = vmatpush.msra.mxu0 0.0
    %6888 = vmatpush.msra.mxu0 0.0
    %6889 = vmatpush.msra.mxu0 %v910
    %6890 = vmatpush.msra.mxu0 %v894
    %6891 = vmatpush.msra.mxu0 %v878
    %6892 = vmatpush.msra.mxu0 %v862
    %6893 = vmatpush.msra.mxu0 %v846
    %6894 = vmatpush.msra.mxu0 %v830
    %6895 = vmatpush.msra.mxu0 %v814
    %6896 = vmatpush.msra.mxu0 %v798
    %6897 = vmatmul.f32.gmra.mxu0 %v6692
    %v6898 = vpop.f32.mrf.mxu0
    %v6899 = vadd.f32 0.0, %v6898
    %6900 = vmatmul.f32.gmra.mxu0 %v6695
    %v6901 = vpop.f32.mrf.mxu0
    %v6902 = vadd.f32 0.0, %v6901
    %6903 = vdwg.mxu0
    %6904 = vmatpush.msra.mxu0 0.0
    %6905 = vmatpush.msra.mxu0 0.0
    %6906 = vmatpush.msra.mxu0 0.0
    %6907 = vmatpush.msra.mxu0 0.0
    %6908 = vmatpush.msra.mxu0 0.0
    %6909 = vmatpush.msra.mxu0 0.0
    %6910 = vmatpush.msra.mxu0 0.0
    %6911 = vmatpush.msra.mxu0 0.0
    %6912 = vmatpush.msra.mxu0 %v911
    %6913 = vmatpush.msra.mxu0 %v895
    %6914 = vmatpush.msra.mxu0 %v879
    %6915 = vmatpush.msra.mxu0 %v863
    %6916 = vmatpush.msra.mxu0 %v847
    %6917 = vmatpush.msra.mxu0 %v831
    %6918 = vmatpush.msra.mxu0 %v815
    %6919 = vmatpush.msra.mxu0 %v799
    %6920 = vmatmul.f32.gmra.mxu0 %v6692
    %v6921 = vpop.f32.mrf.mxu0
    %v6922 = vadd.f32 0.0, %v6921
    %6923 = vmatmul.f32.gmra.mxu0 %v6695
    %v6924 = vpop.f32.mrf.mxu0
    %v6925 = vadd.f32 0.0, %v6924
    %6926 = vdwg.mxu0
    %6927 = vmatpush.msra.mxu0 0.0
    %6928 = vmatpush.msra.mxu0 0.0
    %6929 = vmatpush.msra.mxu0 0.0
    %6930 = vmatpush.msra.mxu0 0.0
    %6931 = vmatpush.msra.mxu0 0.0
    %6932 = vmatpush.msra.mxu0 0.0
    %6933 = vmatpush.msra.mxu0 0.0
    %6934 = vmatpush.msra.mxu0 0.0
    %6935 = vmatpush.msra.mxu0 %v912
    %6936 = vmatpush.msra.mxu0 %v896
    %6937 = vmatpush.msra.mxu0 %v880
    %6938 = vmatpush.msra.mxu0 %v864
    %6939 = vmatpush.msra.mxu0 %v848
    %6940 = vmatpush.msra.mxu0 %v832
    %6941 = vmatpush.msra.mxu0 %v816
    %6942 = vmatpush.msra.mxu0 %v800
    %6943 = vmatmul.f32.gmra.mxu0 %v6692
    %v6944 = vpop.f32.mrf.mxu0
    %v6945 = vadd.f32 0.0, %v6944
    %6946 = vmatmul.f32.gmra.mxu0 %v6695
    %v6947 = vpop.f32.mrf.mxu0
    %v6948 = vadd.f32 0.0, %v6947
    %6949 = vdwg.mxu0
    %6950 = vmatpush.msra.mxu0 0.0
    %6951 = vmatpush.msra.mxu0 0.0
    %6952 = vmatpush.msra.mxu0 0.0
    %6953 = vmatpush.msra.mxu0 0.0
    %6954 = vmatpush.msra.mxu0 0.0
    %6955 = vmatpush.msra.mxu0 0.0
    %6956 = vmatpush.msra.mxu0 0.0
    %6957 = vmatpush.msra.mxu0 0.0
    %6958 = vmatpush.msra.mxu0 %v913
    %6959 = vmatpush.msra.mxu0 %v897
    %6960 = vmatpush.msra.mxu0 %v881
    %6961 = vmatpush.msra.mxu0 %v865
    %6962 = vmatpush.msra.mxu0 %v849
    %6963 = vmatpush.msra.mxu0 %v833
    %6964 = vmatpush.msra.mxu0 %v817
    %6965 = vmatpush.msra.mxu0 %v801
    %6966 = vmatmul.f32.gmra.mxu0 %v6692
    %v6967 = vpop.f32.mrf.mxu0
    %v6968 = vadd.f32 0.0, %v6967
    %6969 = vmatmul.f32.gmra.mxu0 %v6695
    %v6970 = vpop.f32.mrf.mxu0
    %v6971 = vadd.f32 0.0, %v6970
    %6972 = vdwg.mxu0
    %6973 = vmatpush.msra.mxu0 0.0
    %6974 = vmatpush.msra.mxu0 0.0
    %6975 = vmatpush.msra.mxu0 0.0
    %6976 = vmatpush.msra.mxu0 0.0
    %6977 = vmatpush.msra.mxu0 0.0
    %6978 = vmatpush.msra.mxu0 0.0
    %6979 = vmatpush.msra.mxu0 0.0
    %6980 = vmatpush.msra.mxu0 0.0
    %6981 = vmatpush.msra.mxu0 %v914
    %6982 = vmatpush.msra.mxu0 %v898
    %6983 = vmatpush.msra.mxu0 %v882
    %6984 = vmatpush.msra.mxu0 %v866
    %6985 = vmatpush.msra.mxu0 %v850
    %6986 = vmatpush.msra.mxu0 %v834
    %6987 = vmatpush.msra.mxu0 %v818
    %6988 = vmatpush.msra.mxu0 %v802
    %6989 = vmatmul.f32.gmra.mxu0 %v6692
    %v6990 = vpop.f32.mrf.mxu0
    %v6991 = vadd.f32 0.0, %v6990
    %6992 = vmatmul.f32.gmra.mxu0 %v6695
    %v6993 = vpop.f32.mrf.mxu0
    %v6994 = vadd.f32 0.0, %v6993
    %6995 = vdwg.mxu0
    %6996 = vmatpush.msra.mxu0 0.0
    %6997 = vmatpush.msra.mxu0 0.0
    %6998 = vmatpush.msra.mxu0 0.0
    %6999 = vmatpush.msra.mxu0 0.0
    %7000 = vmatpush.msra.mxu0 0.0
    %7001 = vmatpush.msra.mxu0 0.0
    %7002 = vmatpush.msra.mxu0 0.0
    %7003 = vmatpush.msra.mxu0 0.0
    %7004 = vmatpush.msra.mxu0 %v915
    %7005 = vmatpush.msra.mxu0 %v899
    %7006 = vmatpush.msra.mxu0 %v883
    %7007 = vmatpush.msra.mxu0 %v867
    %7008 = vmatpush.msra.mxu0 %v851
    %7009 = vmatpush.msra.mxu0 %v835
    %7010 = vmatpush.msra.mxu0 %v819
    %7011 = vmatpush.msra.mxu0 %v803
    %7012 = vmatmul.f32.gmra.mxu0 %v6692
    %v7013 = vpop.f32.mrf.mxu0
    %v7014 = vadd.f32 0.0, %v7013
    %7015 = vmatmul.f32.gmra.mxu0 %v6695
    %v7016 = vpop.f32.mrf.mxu0
    %v7017 = vadd.f32 0.0, %v7016
    %7018 = vdwg.mxu0
    %7019 = vmatpush.msra.mxu0 0.0
    %7020 = vmatpush.msra.mxu0 0.0
    %7021 = vmatpush.msra.mxu0 0.0
    %7022 = vmatpush.msra.mxu0 0.0
    %7023 = vmatpush.msra.mxu0 0.0
    %7024 = vmatpush.msra.mxu0 0.0
    %7025 = vmatpush.msra.mxu0 0.0
    %7026 = vmatpush.msra.mxu0 0.0
    %7027 = vmatpush.msra.mxu0 %v916
    %7028 = vmatpush.msra.mxu0 %v900
    %7029 = vmatpush.msra.mxu0 %v884
    %7030 = vmatpush.msra.mxu0 %v868
    %7031 = vmatpush.msra.mxu0 %v852
    %7032 = vmatpush.msra.mxu0 %v836
    %7033 = vmatpush.msra.mxu0 %v820
    %7034 = vmatpush.msra.mxu0 %v804
    %7035 = vmatmul.f32.gmra.mxu0 %v6692
    %v7036 = vpop.f32.mrf.mxu0
    %v7037 = vadd.f32 0.0, %v7036
    %7038 = vmatmul.f32.gmra.mxu0 %v6695
    %v7039 = vpop.f32.mrf.mxu0
    %v7040 = vadd.f32 0.0, %v7039
    %7041 = vdwg.mxu0
    %7042 = vmatpush.msra.mxu0 0.0
    %7043 = vmatpush.msra.mxu0 0.0
    %7044 = vmatpush.msra.mxu0 0.0
    %7045 = vmatpush.msra.mxu0 0.0
    %7046 = vmatpush.msra.mxu0 0.0
    %7047 = vmatpush.msra.mxu0 0.0
    %7048 = vmatpush.msra.mxu0 0.0
    %7049 = vmatpush.msra.mxu0 0.0
    %7050 = vmatpush.msra.mxu0 %v917
    %7051 = vmatpush.msra.mxu0 %v901
    %7052 = vmatpush.msra.mxu0 %v885
    %7053 = vmatpush.msra.mxu0 %v869
    %7054 = vmatpush.msra.mxu0 %v853
    %7055 = vmatpush.msra.mxu0 %v837
    %7056 = vmatpush.msra.mxu0 %v821
    %7057 = vmatpush.msra.mxu0 %v805
    %7058 = vmatmul.f32.gmra.mxu0 %v6692
    %v7059 = vpop.f32.mrf.mxu0
    %v7060 = vadd.f32 0.0, %v7059
    %7061 = vmatmul.f32.gmra.mxu0 %v6695
    %v7062 = vpop.f32.mrf.mxu0
    %v7063 = vadd.f32 0.0, %v7062
    %7064 = vdwg.mxu0
    %v7065 = vmul.f32 %v1010, %v6715
    %v7066 = vmul.f32 %v1033, %v6738
    %v7067 = vmul.f32 %v1056, %v6761
    %v7068 = vmul.f32 %v1079, %v6784
    %v7069 = vmul.f32 %v1102, %v6807
    %v7070 = vmul.f32 %v1125, %v6830
    %v7071 = vmul.f32 %v1148, %v6853
    %v7072 = vmul.f32 %v1171, %v6876
    %v7073 = vmul.f32 %v1194, %v6899
    %v7074 = vmul.f32 %v1217, %v6922
    %v7075 = vmul.f32 %v1240, %v6945
    %v7076 = vmul.f32 %v1263, %v6968
    %v7077 = vmul.f32 %v1286, %v6991
    %v7078 = vmul.f32 %v1309, %v7014
    %v7079 = vmul.f32 %v1332, %v7037
    %v7080 = vmul.f32 %v1355, %v7060
    %v7081 = vmul.f32 %v1013, %v6718
    %v7082 = vmul.f32 %v1036, %v6741
    %v7083 = vmul.f32 %v1059, %v6764
    %v7084 = vmul.f32 %v1082, %v6787
    %v7085 = vmul.f32 %v1105, %v6810
    %v7086 = vmul.f32 %v1128, %v6833
    %v7087 = vmul.f32 %v1151, %v6856
    %v7088 = vmul.f32 %v1174, %v6879
    %v7089 = vmul.f32 %v1197, %v6902
    %v7090 = vmul.f32 %v1220, %v6925
    %v7091 = vmul.f32 %v1243, %v6948
    %v7092 = vmul.f32 %v1266, %v6971
    %v7093 = vmul.f32 %v1289, %v6994
    %v7094 = vmul.f32 %v1312, %v7017
    %v7095 = vmul.f32 %v1335, %v7040
    %v7096 = vmul.f32 %v1358, %v7063
    %v7097 = vadd.f32 %v7065, %v7081
    %v7098 = vrot.slane %v7097, 4
    %v7099 = vadd.f32 %v7097, %v7098
    %v7100 = vrot.slane %v7099, 2
    %v7101 = vadd.f32 %v7099, %v7100
    %v7102 = vrot.slane %v7101, 1
    %v7103 = vadd.f32 %v7101, %v7102
    %v7104 = vadd.f32 %v7066, %v7082
    %v7105 = vrot.slane %v7104, 4
    %v7106 = vadd.f32 %v7104, %v7105
    %v7107 = vrot.slane %v7106, 2
    %v7108 = vadd.f32 %v7106, %v7107
    %v7109 = vrot.slane %v7108, 1
    %v7110 = vadd.f32 %v7108, %v7109
    %v7111 = vadd.f32 %v7067, %v7083
    %v7112 = vrot.slane %v7111, 4
    %v7113 = vadd.f32 %v7111, %v7112
    %v7114 = vrot.slane %v7113, 2
    %v7115 = vadd.f32 %v7113, %v7114
    %v7116 = vrot.slane %v7115, 1
    %v7117 = vadd.f32 %v7115, %v7116
    %v7118 = vadd.f32 %v7068, %v7084
    %v7119 = vrot.slane %v7118, 4
    %v7120 = vadd.f32 %v7118, %v7119
    %v7121 = vrot.slane %v7120, 2
    %v7122 = vadd.f32 %v7120, %v7121
    %v7123 = vrot.slane %v7122, 1
    %v7124 = vadd.f32 %v7122, %v7123
    %v7125 = vadd.f32 %v7069, %v7085
    %v7126 = vrot.slane %v7125, 4
    %v7127 = vadd.f32 %v7125, %v7126
    %v7128 = vrot.slane %v7127, 2
    %v7129 = vadd.f32 %v7127, %v7128
    %v7130 = vrot.slane %v7129, 1
    %v7131 = vadd.f32 %v7129, %v7130
    %v7132 = vadd.f32 %v7070, %v7086
    %v7133 = vrot.slane %v7132, 4
    %v7134 = vadd.f32 %v7132, %v7133
    %v7135 = vrot.slane %v7134, 2
    %v7136 = vadd.f32 %v7134, %v7135
    %v7137 = vrot.slane %v7136, 1
    %v7138 = vadd.f32 %v7136, %v7137
    %v7139 = vadd.f32 %v7071, %v7087
    %v7140 = vrot.slane %v7139, 4
    %v7141 = vadd.f32 %v7139, %v7140
    %v7142 = vrot.slane %v7141, 2
    %v7143 = vadd.f32 %v7141, %v7142
    %v7144 = vrot.slane %v7143, 1
    %v7145 = vadd.f32 %v7143, %v7144
    %v7146 = vadd.f32 %v7072, %v7088
    %v7147 = vrot.slane %v7146, 4
    %v7148 = vadd.f32 %v7146, %v7147
    %v7149 = vrot.slane %v7148, 2
    %v7150 = vadd.f32 %v7148, %v7149
    %v7151 = vrot.slane %v7150, 1
    %v7152 = vadd.f32 %v7150, %v7151
    %v7153 = vadd.f32 %v7073, %v7089
    %v7154 = vrot.slane %v7153, 4
    %v7155 = vadd.f32 %v7153, %v7154
    %v7156 = vrot.slane %v7155, 2
    %v7157 = vadd.f32 %v7155, %v7156
    %v7158 = vrot.slane %v7157, 1
    %v7159 = vadd.f32 %v7157, %v7158
    %v7160 = vadd.f32 %v7074, %v7090
    %v7161 = vrot.slane %v7160, 4
    %v7162 = vadd.f32 %v7160, %v7161
    %v7163 = vrot.slane %v7162, 2
    %v7164 = vadd.f32 %v7162, %v7163
    %v7165 = vrot.slane %v7164, 1
    %v7166 = vadd.f32 %v7164, %v7165
    %v7167 = vadd.f32 %v7075, %v7091
    %v7168 = vrot.slane %v7167, 4
    %v7169 = vadd.f32 %v7167, %v7168
    %v7170 = vrot.slane %v7169, 2
    %v7171 = vadd.f32 %v7169, %v7170
    %v7172 = vrot.slane %v7171, 1
    %v7173 = vadd.f32 %v7171, %v7172
    %v7174 = vadd.f32 %v7076, %v7092
    %v7175 = vrot.slane %v7174, 4
    %v7176 = vadd.f32 %v7174, %v7175
    %v7177 = vrot.slane %v7176, 2
    %v7178 = vadd.f32 %v7176, %v7177
    %v7179 = vrot.slane %v7178, 1
    %v7180 = vadd.f32 %v7178, %v7179
    %v7181 = vadd.f32 %v7077, %v7093
    %v7182 = vrot.slane %v7181, 4
    %v7183 = vadd.f32 %v7181, %v7182
    %v7184 = vrot.slane %v7183, 2
    %v7185 = vadd.f32 %v7183, %v7184
    %v7186 = vrot.slane %v7185, 1
    %v7187 = vadd.f32 %v7185, %v7186
    %v7188 = vadd.f32 %v7078, %v7094
    %v7189 = vrot.slane %v7188, 4
    %v7190 = vadd.f32 %v7188, %v7189
    %v7191 = vrot.slane %v7190, 2
    %v7192 = vadd.f32 %v7190, %v7191
    %v7193 = vrot.slane %v7192, 1
    %v7194 = vadd.f32 %v7192, %v7193
    %v7195 = vadd.f32 %v7079, %v7095
    %v7196 = vrot.slane %v7195, 4
    %v7197 = vadd.f32 %v7195, %v7196
    %v7198 = vrot.slane %v7197, 2
    %v7199 = vadd.f32 %v7197, %v7198
    %v7200 = vrot.slane %v7199, 1
    %v7201 = vadd.f32 %v7199, %v7200
    %v7202 = vadd.f32 %v7080, %v7096
    %v7203 = vrot.slane %v7202, 4
    %v7204 = vadd.f32 %v7202, %v7203
    %v7205 = vrot.slane %v7204, 2
    %v7206 = vadd.f32 %v7204, %v7205
    %v7207 = vrot.slane %v7206, 1
    %v7208 = vadd.f32 %v7206, %v7207
    %v7209 = vmul.f32 %v4812, %v7103
    %v7210 = vmul.f32 %v4813, %v7110
    %v7211 = vmul.f32 %v4814, %v7117
    %v7212 = vmul.f32 %v4815, %v7124
    %v7213 = vmul.f32 %v4816, %v7131
    %v7214 = vmul.f32 %v4817, %v7138
    %v7215 = vmul.f32 %v4818, %v7145
    %v7216 = vmul.f32 %v4819, %v7152
    %v7217 = vmul.f32 %v4820, %v7159
    %v7218 = vmul.f32 %v4821, %v7166
    %v7219 = vmul.f32 %v4822, %v7173
    %v7220 = vmul.f32 %v4823, %v7180
    %v7221 = vmul.f32 %v4824, %v7187
    %v7222 = vmul.f32 %v4825, %v7194
    %v7223 = vmul.f32 %v4826, %v7201
    %v7224 = vmul.f32 %v4827, %v7208
    %v7225 = vmul.f32 %v4828, %v7103
    %v7226 = vmul.f32 %v4829, %v7110
    %v7227 = vmul.f32 %v4830, %v7117
    %v7228 = vmul.f32 %v4831, %v7124
    %v7229 = vmul.f32 %v4832, %v7131
    %v7230 = vmul.f32 %v4833, %v7138
    %v7231 = vmul.f32 %v4834, %v7145
    %v7232 = vmul.f32 %v4835, %v7152
    %v7233 = vmul.f32 %v4836, %v7159
    %v7234 = vmul.f32 %v4837, %v7166
    %v7235 = vmul.f32 %v4838, %v7173
    %v7236 = vmul.f32 %v4839, %v7180
    %v7237 = vmul.f32 %v4840, %v7187
    %v7238 = vmul.f32 %v4841, %v7194
    %v7239 = vmul.f32 %v4842, %v7201
    %v7240 = vmul.f32 %v4843, %v7208
    %7241 = vmatpush.msra.mxu0 %v549
    %7242 = vmatpush.msra.mxu0 %v548
    %7243 = vmatpush.msra.mxu0 %v547
    %7244 = vmatpush.msra.mxu0 %v546
    %7245 = vmatpush.msra.mxu0 %v545
    %7246 = vmatpush.msra.mxu0 %v544
    %7247 = vmatpush.msra.mxu0 %v543
    %7248 = vmatpush.msra.mxu0 %v542
    %7249 = vmatpush.msra.mxu0 %v541
    %7250 = vmatpush.msra.mxu0 %v540
    %7251 = vmatpush.msra.mxu0 %v539
    %7252 = vmatpush.msra.mxu0 %v538
    %7253 = vmatpush.msra.mxu0 %v537
    %7254 = vmatpush.msra.mxu0 %v536
    %7255 = vmatpush.msra.mxu0 %v535
    %7256 = vmatpush.msra.mxu0 %v534
    %7257 = vmatmul.f32.gmra.mxu0 %v7209
    %v7258 = vpop.f32.mrf.mxu0
    %v7259 = vadd.f32 %v4844, %v7258
    %7260 = vmatmul.f32.gmra.mxu0 %v7225
    %v7261 = vpop.f32.mrf.mxu0
    %v7262 = vadd.f32 %v4845, %v7261
    %7263 = vdwg.mxu0
    %7264 = vmatpush.msra.mxu0 %v565
    %7265 = vmatpush.msra.mxu0 %v564
    %7266 = vmatpush.msra.mxu0 %v563
    %7267 = vmatpush.msra.mxu0 %v562
    %7268 = vmatpush.msra.mxu0 %v561
    %7269 = vmatpush.msra.mxu0 %v560
    %7270 = vmatpush.msra.mxu0 %v559
    %7271 = vmatpush.msra.mxu0 %v558
    %7272 = vmatpush.msra.mxu0 %v557
    %7273 = vmatpush.msra.mxu0 %v556
    %7274 = vmatpush.msra.mxu0 %v555
    %7275 = vmatpush.msra.mxu0 %v554
    %7276 = vmatpush.msra.mxu0 %v553
    %7277 = vmatpush.msra.mxu0 %v552
    %7278 = vmatpush.msra.mxu0 %v551
    %7279 = vmatpush.msra.mxu0 %v550
    %7280 = vmatmul.f32.gmra.mxu0 %v7210
    %v7281 = vpop.f32.mrf.mxu0
    %v7282 = vadd.f32 %v7259, %v7281
    %7283 = vmatmul.f32.gmra.mxu0 %v7226
    %v7284 = vpop.f32.mrf.mxu0
    %v7285 = vadd.f32 %v7262, %v7284
    %7286 = vdwg.mxu0
    %7287 = vmatpush.msra.mxu0 %v581
    %7288 = vmatpush.msra.mxu0 %v580
    %7289 = vmatpush.msra.mxu0 %v579
    %7290 = vmatpush.msra.mxu0 %v578
    %7291 = vmatpush.msra.mxu0 %v577
    %7292 = vmatpush.msra.mxu0 %v576
    %7293 = vmatpush.msra.mxu0 %v575
    %7294 = vmatpush.msra.mxu0 %v574
    %7295 = vmatpush.msra.mxu0 %v573
    %7296 = vmatpush.msra.mxu0 %v572
    %7297 = vmatpush.msra.mxu0 %v571
    %7298 = vmatpush.msra.mxu0 %v570
    %7299 = vmatpush.msra.mxu0 %v569
    %7300 = vmatpush.msra.mxu0 %v568
    %7301 = vmatpush.msra.mxu0 %v567
    %7302 = vmatpush.msra.mxu0 %v566
    %7303 = vmatmul.f32.gmra.mxu0 %v7211
    %v7304 = vpop.f32.mrf.mxu0
    %v7305 = vadd.f32 %v7282, %v7304
    %7306 = vmatmul.f32.gmra.mxu0 %v7227
    %v7307 = vpop.f32.mrf.mxu0
    %v7308 = vadd.f32 %v7285, %v7307
    %7309 = vdwg.mxu0
    %7310 = vmatpush.msra.mxu0 %v597
    %7311 = vmatpush.msra.mxu0 %v596
    %7312 = vmatpush.msra.mxu0 %v595
    %7313 = vmatpush.msra.mxu0 %v594
    %7314 = vmatpush.msra.mxu0 %v593
    %7315 = vmatpush.msra.mxu0 %v592
    %7316 = vmatpush.msra.mxu0 %v591
    %7317 = vmatpush.msra.mxu0 %v590
    %7318 = vmatpush.msra.mxu0 %v589
    %7319 = vmatpush.msra.mxu0 %v588
    %7320 = vmatpush.msra.mxu0 %v587
    %7321 = vmatpush.msra.mxu0 %v586
    %7322 = vmatpush.msra.mxu0 %v585
    %7323 = vmatpush.msra.mxu0 %v584
    %7324 = vmatpush.msra.mxu0 %v583
    %7325 = vmatpush.msra.mxu0 %v582
    %7326 = vmatmul.f32.gmra.mxu0 %v7212
    %v7327 = vpop.f32.mrf.mxu0
    %v7328 = vadd.f32 %v7305, %v7327
    %7329 = vmatmul.f32.gmra.mxu0 %v7228
    %v7330 = vpop.f32.mrf.mxu0
    %v7331 = vadd.f32 %v7308, %v7330
    %7332 = vdwg.mxu0
    %7333 = vmatpush.msra.mxu0 %v613
    %7334 = vmatpush.msra.mxu0 %v612
    %7335 = vmatpush.msra.mxu0 %v611
    %7336 = vmatpush.msra.mxu0 %v610
    %7337 = vmatpush.msra.mxu0 %v609
    %7338 = vmatpush.msra.mxu0 %v608
    %7339 = vmatpush.msra.mxu0 %v607
    %7340 = vmatpush.msra.mxu0 %v606
    %7341 = vmatpush.msra.mxu0 %v605
    %7342 = vmatpush.msra.mxu0 %v604
    %7343 = vmatpush.msra.mxu0 %v603
    %7344 = vmatpush.msra.mxu0 %v602
    %7345 = vmatpush.msra.mxu0 %v601
    %7346 = vmatpush.msra.mxu0 %v600
    %7347 = vmatpush.msra.mxu0 %v599
    %7348 = vmatpush.msra.mxu0 %v598
    %7349 = vmatmul.f32.gmra.mxu0 %v7213
    %v7350 = vpop.f32.mrf.mxu0
    %v7351 = vadd.f32 %v7328, %v7350
    %7352 = vmatmul.f32.gmra.mxu0 %v7229
    %v7353 = vpop.f32.mrf.mxu0
    %v7354 = vadd.f32 %v7331, %v7353
    %7355 = vdwg.mxu0
    %7356 = vmatpush.msra.mxu0 %v629
    %7357 = vmatpush.msra.mxu0 %v628
    %7358 = vmatpush.msra.mxu0 %v627
    %7359 = vmatpush.msra.mxu0 %v626
    %7360 = vmatpush.msra.mxu0 %v625
    %7361 = vmatpush.msra.mxu0 %v624
    %7362 = vmatpush.msra.mxu0 %v623
    %7363 = vmatpush.msra.mxu0 %v622
    %7364 = vmatpush.msra.mxu0 %v621
    %7365 = vmatpush.msra.mxu0 %v620
    %7366 = vmatpush.msra.mxu0 %v619
    %7367 = vmatpush.msra.mxu0 %v618
    %7368 = vmatpush.msra.mxu0 %v617
    %7369 = vmatpush.msra.mxu0 %v616
    %7370 = vmatpush.msra.mxu0 %v615
    %7371 = vmatpush.msra.mxu0 %v614
    %7372 = vmatmul.f32.gmra.mxu0 %v7214
    %v7373 = vpop.f32.mrf.mxu0
    %v7374 = vadd.f32 %v7351, %v7373
    %7375 = vmatmul.f32.gmra.mxu0 %v7230
    %v7376 = vpop.f32.mrf.mxu0
    %v7377 = vadd.f32 %v7354, %v7376
    %7378 = vdwg.mxu0
    %7379 = vmatpush.msra.mxu0 %v645
    %7380 = vmatpush.msra.mxu0 %v644
    %7381 = vmatpush.msra.mxu0 %v643
    %7382 = vmatpush.msra.mxu0 %v642
    %7383 = vmatpush.msra.mxu0 %v641
    %7384 = vmatpush.msra.mxu0 %v640
    %7385 = vmatpush.msra.mxu0 %v639
    %7386 = vmatpush.msra.mxu0 %v638
    %7387 = vmatpush.msra.mxu0 %v637
    %7388 = vmatpush.msra.mxu0 %v636
    %7389 = vmatpush.msra.mxu0 %v635
    %7390 = vmatpush.msra.mxu0 %v634
    %7391 = vmatpush.msra.mxu0 %v633
    %7392 = vmatpush.msra.mxu0 %v632
    %7393 = vmatpush.msra.mxu0 %v631
    %7394 = vmatpush.msra.mxu0 %v630
    %7395 = vmatmul.f32.gmra.mxu0 %v7215
    %v7396 = vpop.f32.mrf.mxu0
    %v7397 = vadd.f32 %v7374, %v7396
    %7398 = vmatmul.f32.gmra.mxu0 %v7231
    %v7399 = vpop.f32.mrf.mxu0
    %v7400 = vadd.f32 %v7377, %v7399
    %7401 = vdwg.mxu0
    %7402 = vmatpush.msra.mxu0 %v661
    %7403 = vmatpush.msra.mxu0 %v660
    %7404 = vmatpush.msra.mxu0 %v659
    %7405 = vmatpush.msra.mxu0 %v658
    %7406 = vmatpush.msra.mxu0 %v657
    %7407 = vmatpush.msra.mxu0 %v656
    %7408 = vmatpush.msra.mxu0 %v655
    %7409 = vmatpush.msra.mxu0 %v654
    %7410 = vmatpush.msra.mxu0 %v653
    %7411 = vmatpush.msra.mxu0 %v652
    %7412 = vmatpush.msra.mxu0 %v651
    %7413 = vmatpush.msra.mxu0 %v650
    %7414 = vmatpush.msra.mxu0 %v649
    %7415 = vmatpush.msra.mxu0 %v648
    %7416 = vmatpush.msra.mxu0 %v647
    %7417 = vmatpush.msra.mxu0 %v646
    %7418 = vmatmul.f32.gmra.mxu0 %v7216
    %v7419 = vpop.f32.mrf.mxu0
    %v7420 = vadd.f32 %v7397, %v7419
    %7421 = vmatmul.f32.gmra.mxu0 %v7232
    %v7422 = vpop.f32.mrf.mxu0
    %v7423 = vadd.f32 %v7400, %v7422
    %7424 = vdwg.mxu0
    %7425 = vmatpush.msra.mxu0 %v677
    %7426 = vmatpush.msra.mxu0 %v676
    %7427 = vmatpush.msra.mxu0 %v675
    %7428 = vmatpush.msra.mxu0 %v674
    %7429 = vmatpush.msra.mxu0 %v673
    %7430 = vmatpush.msra.mxu0 %v672
    %7431 = vmatpush.msra.mxu0 %v671
    %7432 = vmatpush.msra.mxu0 %v670
    %7433 = vmatpush.msra.mxu0 %v669
    %7434 = vmatpush.msra.mxu0 %v668
    %7435 = vmatpush.msra.mxu0 %v667
    %7436 = vmatpush.msra.mxu0 %v666
    %7437 = vmatpush.msra.mxu0 %v665
    %7438 = vmatpush.msra.mxu0 %v664
    %7439 = vmatpush.msra.mxu0 %v663
    %7440 = vmatpush.msra.mxu0 %v662
    %7441 = vmatmul.f32.gmra.mxu0 %v7217
    %v7442 = vpop.f32.mrf.mxu0
    %v7443 = vadd.f32 %v7420, %v7442
    %7444 = vmatmul.f32.gmra.mxu0 %v7233
    %v7445 = vpop.f32.mrf.mxu0
    %v7446 = vadd.f32 %v7423, %v7445
    %7447 = vdwg.mxu0
    %7448 = vmatpush.msra.mxu0 %v693
    %7449 = vmatpush.msra.mxu0 %v692
    %7450 = vmatpush.msra.mxu0 %v691
    %7451 = vmatpush.msra.mxu0 %v690
    %7452 = vmatpush.msra.mxu0 %v689
    %7453 = vmatpush.msra.mxu0 %v688
    %7454 = vmatpush.msra.mxu0 %v687
    %7455 = vmatpush.msra.mxu0 %v686
    %7456 = vmatpush.msra.mxu0 %v685
    %7457 = vmatpush.msra.mxu0 %v684
    %7458 = vmatpush.msra.mxu0 %v683
    %7459 = vmatpush.msra.mxu0 %v682
    %7460 = vmatpush.msra.mxu0 %v681
    %7461 = vmatpush.msra.mxu0 %v680
    %7462 = vmatpush.msra.mxu0 %v679
    %7463 = vmatpush.msra.mxu0 %v678
    %7464 = vmatmul.f32.gmra.mxu0 %v7218
    %v7465 = vpop.f32.mrf.mxu0
    %v7466 = vadd.f32 %v7443, %v7465
    %7467 = vmatmul.f32.gmra.mxu0 %v7234
    %v7468 = vpop.f32.mrf.mxu0
    %v7469 = vadd.f32 %v7446, %v7468
    %7470 = vdwg.mxu0
    %7471 = vmatpush.msra.mxu0 %v709
    %7472 = vmatpush.msra.mxu0 %v708
    %7473 = vmatpush.msra.mxu0 %v707
    %7474 = vmatpush.msra.mxu0 %v706
    %7475 = vmatpush.msra.mxu0 %v705
    %7476 = vmatpush.msra.mxu0 %v704
    %7477 = vmatpush.msra.mxu0 %v703
    %7478 = vmatpush.msra.mxu0 %v702
    %7479 = vmatpush.msra.mxu0 %v701
    %7480 = vmatpush.msra.mxu0 %v700
    %7481 = vmatpush.msra.mxu0 %v699
    %7482 = vmatpush.msra.mxu0 %v698
    %7483 = vmatpush.msra.mxu0 %v697
    %7484 = vmatpush.msra.mxu0 %v696
    %7485 = vmatpush.msra.mxu0 %v695
    %7486 = vmatpush.msra.mxu0 %v694
    %7487 = vmatmul.f32.gmra.mxu0 %v7219
    %v7488 = vpop.f32.mrf.mxu0
    %v7489 = vadd.f32 %v7466, %v7488
    %7490 = vmatmul.f32.gmra.mxu0 %v7235
    %v7491 = vpop.f32.mrf.mxu0
    %v7492 = vadd.f32 %v7469, %v7491
    %7493 = vdwg.mxu0
    %7494 = vmatpush.msra.mxu0 %v725
    %7495 = vmatpush.msra.mxu0 %v724
    %7496 = vmatpush.msra.mxu0 %v723
    %7497 = vmatpush.msra.mxu0 %v722
    %7498 = vmatpush.msra.mxu0 %v721
    %7499 = vmatpush.msra.mxu0 %v720
    %7500 = vmatpush.msra.mxu0 %v719
    %7501 = vmatpush.msra.mxu0 %v718
    %7502 = vmatpush.msra.mxu0 %v717
    %7503 = vmatpush.msra.mxu0 %v716
    %7504 = vmatpush.msra.mxu0 %v715
    %7505 = vmatpush.msra.mxu0 %v714
    %7506 = vmatpush.msra.mxu0 %v713
    %7507 = vmatpush.msra.mxu0 %v712
    %7508 = vmatpush.msra.mxu0 %v711
    %7509 = vmatpush.msra.mxu0 %v710
    %7510 = vmatmul.f32.gmra.mxu0 %v7220
    %v7511 = vpop.f32.mrf.mxu0
    %v7512 = vadd.f32 %v7489, %v7511
    %7513 = vmatmul.f32.gmra.mxu0 %v7236
    %v7514 = vpop.f32.mrf.mxu0
    %v7515 = vadd.f32 %v7492, %v7514
    %7516 = vdwg.mxu0
    %7517 = vmatpush.msra.mxu0 %v741
    %7518 = vmatpush.msra.mxu0 %v740
    %7519 = vmatpush.msra.mxu0 %v739
    %7520 = vmatpush.msra.mxu0 %v738
    %7521 = vmatpush.msra.mxu0 %v737
    %7522 = vmatpush.msra.mxu0 %v736
    %7523 = vmatpush.msra.mxu0 %v735
    %7524 = vmatpush.msra.mxu0 %v734
    %7525 = vmatpush.msra.mxu0 %v733
    %7526 = vmatpush.msra.mxu0 %v732
    %7527 = vmatpush.msra.mxu0 %v731
    %7528 = vmatpush.msra.mxu0 %v730
    %7529 = vmatpush.msra.mxu0 %v729
    %7530 = vmatpush.msra.mxu0 %v728
    %7531 = vmatpush.msra.mxu0 %v727
    %7532 = vmatpush.msra.mxu0 %v726
    %7533 = vmatmul.f32.gmra.mxu0 %v7221
    %v7534 = vpop.f32.mrf.mxu0
    %v7535 = vadd.f32 %v7512, %v7534
    %7536 = vmatmul.f32.gmra.mxu0 %v7237
    %v7537 = vpop.f32.mrf.mxu0
    %v7538 = vadd.f32 %v7515, %v7537
    %7539 = vdwg.mxu0
    %7540 = vmatpush.msra.mxu0 %v757
    %7541 = vmatpush.msra.mxu0 %v756
    %7542 = vmatpush.msra.mxu0 %v755
    %7543 = vmatpush.msra.mxu0 %v754
    %7544 = vmatpush.msra.mxu0 %v753
    %7545 = vmatpush.msra.mxu0 %v752
    %7546 = vmatpush.msra.mxu0 %v751
    %7547 = vmatpush.msra.mxu0 %v750
    %7548 = vmatpush.msra.mxu0 %v749
    %7549 = vmatpush.msra.mxu0 %v748
    %7550 = vmatpush.msra.mxu0 %v747
    %7551 = vmatpush.msra.mxu0 %v746
    %7552 = vmatpush.msra.mxu0 %v745
    %7553 = vmatpush.msra.mxu0 %v744
    %7554 = vmatpush.msra.mxu0 %v743
    %7555 = vmatpush.msra.mxu0 %v742
    %7556 = vmatmul.f32.gmra.mxu0 %v7222
    %v7557 = vpop.f32.mrf.mxu0
    %v7558 = vadd.f32 %v7535, %v7557
    %7559 = vmatmul.f32.gmra.mxu0 %v7238
    %v7560 = vpop.f32.mrf.mxu0
    %v7561 = vadd.f32 %v7538, %v7560
    %7562 = vdwg.mxu0
    %7563 = vmatpush.msra.mxu0 %v773
    %7564 = vmatpush.msra.mxu0 %v772
    %7565 = vmatpush.msra.mxu0 %v771
    %7566 = vmatpush.msra.mxu0 %v770
    %7567 = vmatpush.msra.mxu0 %v769
    %7568 = vmatpush.msra.mxu0 %v768
    %7569 = vmatpush.msra.mxu0 %v767
    %7570 = vmatpush.msra.mxu0 %v766
    %7571 = vmatpush.msra.mxu0 %v765
    %7572 = vmatpush.msra.mxu0 %v764
    %7573 = vmatpush.msra.mxu0 %v763
    %7574 = vmatpush.msra.mxu0 %v762
    %7575 = vmatpush.msra.mxu0 %v761
    %7576 = vmatpush.msra.mxu0 %v760
    %7577 = vmatpush.msra.mxu0 %v759
    %7578 = vmatpush.msra.mxu0 %v758
    %7579 = vmatmul.f32.gmra.mxu0 %v7223
    %v7580 = vpop.f32.mrf.mxu0
    %v7581 = vadd.f32 %v7558, %v7580
    %7582 = vmatmul.f32.gmra.mxu0 %v7239
    %v7583 = vpop.f32.mrf.mxu0
    %v7584 = vadd.f32 %v7561, %v7583
    %7585 = vdwg.mxu0
    %7586 = vmatpush.msra.mxu0 %v789
    %7587 = vmatpush.msra.mxu0 %v788
    %7588 = vmatpush.msra.mxu0 %v787
    %7589 = vmatpush.msra.mxu0 %v786
    %7590 = vmatpush.msra.mxu0 %v785
    %7591 = vmatpush.msra.mxu0 %v784
    %7592 = vmatpush.msra.mxu0 %v783
    %7593 = vmatpush.msra.mxu0 %v782
    %7594 = vmatpush.msra.mxu0 %v781
    %7595 = vmatpush.msra.mxu0 %v780
    %7596 = vmatpush.msra.mxu0 %v779
    %7597 = vmatpush.msra.mxu0 %v778
    %7598 = vmatpush.msra.mxu0 %v777
    %7599 = vmatpush.msra.mxu0 %v776
    %7600 = vmatpush.msra.mxu0 %v775
    %7601 = vmatpush.msra.mxu0 %v774
    %7602 = vmatmul.f32.gmra.mxu0 %v7224
    %v7603 = vpop.f32.mrf.mxu0
    %v7604 = vadd.f32 %v7581, %v7603
    %7605 = vmatmul.f32.gmra.mxu0 %v7240
    %v7606 = vpop.f32.mrf.mxu0
    %v7607 = vadd.f32 %v7584, %v7606
    %7608 = vdwg.mxu0
    %vm7609 = vcmp.gt.f32.partialorder %v7604, 0.0
    %vm7610 = vcmp.gt.f32.partialorder %v7607, 0.0
    %v7611 = vmul.f32 %v7604, 0.2
    %v7612 = vmul.f32 %v7607, 0.2
    %v7613 = vsel %vm7609, %v7604, %v7611
    %v7614 = vsel %vm7610, %v7607, %v7612
    %v7615 = vsel %vm3081, %v7613, 0.0
    %v7616 = vsel %vm3081, %v7614, 0.0
    %v7617 = vadd.f32 %v7615, %v7616
    %v7618 = vrot.slane %v7617, 4
    %v7619 = vadd.f32 %v7617, %v7618
    %v7620 = vrot.slane %v7619, 2
    %v7621 = vadd.f32 %v7619, %v7620
    %v7622 = vrot.slane %v7621, 1
    %v7623 = vadd.f32 %v7621, %v7622
    %v7624 = vmul.f32 %v7623, %v6220
    %v7625 = vsub.f32 %v7613, %v7624
    %v7626 = vsub.f32 %v7614, %v7624
    %v7627 = vmul.f32 %v7625, %v7625
    %v7628 = vmul.f32 %v7626, %v7626
    %v7629 = vsel %vm3081, %v7627, 0.0
    %v7630 = vsel %vm3081, %v7628, 0.0
    %v7631 = vadd.f32 %v7629, %v7630
    %v7632 = vrot.slane %v7631, 4
    %v7633 = vadd.f32 %v7631, %v7632
    %v7634 = vrot.slane %v7633, 2
    %v7635 = vadd.f32 %v7633, %v7634
    %v7636 = vrot.slane %v7635, 1
    %v7637 = vadd.f32 %v7635, %v7636
    %v7638 = vmul.f32 %v7637, %v6220
    %v7639 = vadd.f32 %v7638, 1e-05
    %v7640 = vrsqrt.pop %v7639
    %v7641 = vmul.f32 %v7640, %v7639
    %v7642 = vmul.f32 %v7641, %v7640
    %v7643 = vmul.f32 0.5, %v7642
    %v7644 = vsub.f32 1.5, %v7643
    %v7645 = vmul.f32 %v7640, %v7644
    %vm7646 = vweird.f32 %v7639
    %vm7647 = vweird.f32 %v7640
    %vm7648 = vmor %vm7646, %vm7647
    %v7649 = vsel %vm7648, %v7640, %v7645
    %v7650 = vmul.f32 %v7625, %v7649
    %v7651 = vmul.f32 %v7626, %v7649
    %v7652 = vmul.f32 %v7650, %v4846
    %v7653 = vmul.f32 %v7651, %v4847
    %v7654 = vadd.f32 %v7652, %v4848
    %v7655 = vadd.f32 %v7653, %v4849
    %v7656 = vmul.f32 %v7654, %v4850
    %v7657 = vmul.f32 %v7655, %v4851
    %v7658 = vsel %vm3081, %v7656, 0.0
    %v7659 = vsel %vm3081, %v7657, 0.0
    %v7660 = vadd.f32 %v7658, %v7659
    %v7661 = vrot.slane %v7660, 4
    %v7662 = vadd.f32 %v7660, %v7661
    %v7663 = vrot.slane %v7662, 2
    %v7664 = vadd.f32 %v7662, %v7663
    %v7665 = vrot.slane %v7664, 1
    %v7666 = vadd.f32 %v7664, %v7665
    %v7667 = vadd.f32 %v7666, %v4852
    %v7669 = vrot.slane %v7667, 7
    %vm7671 = vcmask 1040384
    %v7672 = vsel %vm7671, %v6264, %v7669
    %v7673 = vld [vmem:[%s69] sm:$0xff]
    %v7674 = vld [vmem:[%s69 + $0x8] sm:$0xff]
    %v7675 = vld [vmem:[%s69 + $0x10] sm:$0xff]
    %v7676 = vld [vmem:[%s69 + $0x18] sm:$0xff]
    %v7677 = vld [vmem:[%s69 + $0x20] sm:$0xff]
    %v7678 = vld [vmem:[%s69 + $0x28] sm:$0xff]
    %v7679 = vld [vmem:[%s69 + $0x30] sm:$0xff]
    %v7680 = vld [vmem:[%s69 + $0x38] sm:$0xff]
    %v7681 = vld [vmem:[%s71] sm:$0x1]
    %v7683 = vperm.slane %v7681, 0
    %v7686 = vsel %vm3081, %v7672, 0
    %7688 = vmatpush.msra.mxu0 0.0
    %7689 = vmatpush.msra.mxu0 0.0
    %7690 = vmatpush.msra.mxu0 0.0
    %7691 = vmatpush.msra.mxu0 0.0
    %7692 = vmatpush.msra.mxu0 0.0
    %7693 = vmatpush.msra.mxu0 0.0
    %7694 = vmatpush.msra.mxu0 0.0
    %7695 = vmatpush.msra.mxu0 0.0
    %7696 = vmatpush.msra.mxu0 %v7680
    %7697 = vmatpush.msra.mxu0 %v7679
    %7698 = vmatpush.msra.mxu0 %v7678
    %7699 = vmatpush.msra.mxu0 %v7677
    %7700 = vmatpush.msra.mxu0 %v7676
    %7701 = vmatpush.msra.mxu0 %v7675
    %7702 = vmatpush.msra.mxu0 %v7674
    %7703 = vmatpush.msra.mxu0 %v7673
    %7704 = vmatmul.f32.gmra.mxu0 %v7686
    %v7705 = vpop.f32.mrf.mxu0
    %v7706 = vadd.f32 %v7683, %v7705
    %7707 = vdwg.mxu0
    %vm7708 = vcmp.gt.f32.partialorder %v7706, 0.0
    %v7709 = vmul.f32 %v7706, 0.2
    %v7710 = vsel %vm7708, %v7706, %v7709
    %v7711 = vld [vmem:[%s73] sm:$0xff]
    %v7712 = vld [vmem:[%s73 + $0x8] sm:$0xff]
    %v7713 = vld [vmem:[%s75] sm:$0x1]
    %v7715 = vperm.slane %v7713, 0
    %v7718 = vsel %vm259, %v7710, 0
    %7720 = vmatpush.msra.mxu0 0.0
    %7721 = vmatpush.msra.mxu0 0.0
    %7722 = vmatpush.msra.mxu0 0.0
    %7723 = vmatpush.msra.mxu0 0.0
    %7724 = vmatpush.msra.mxu0 0.0
    %7725 = vmatpush.msra.mxu0 0.0
    %7726 = vmatpush.msra.mxu0 0.0
    %7727 = vmatpush.msra.mxu0 0.0
    %7728 = vmatpush.msra.mxu0 0.0
    %7729 = vmatpush.msra.mxu0 0.0
    %7730 = vmatpush.msra.mxu0 0.0
    %7731 = vmatpush.msra.mxu0 0.0
    %7732 = vmatpush.msra.mxu0 0.0
    %7733 = vmatpush.msra.mxu0 0.0
    %7734 = vmatpush.msra.mxu0 %v7712
    %7735 = vmatpush.msra.mxu0 %v7711
    %7736 = vmatmul.f32.gmra.mxu0 %v7718
    %v7737 = vpop.f32.mrf.mxu0
    %v7738 = vadd.f32 %v7715, %v7737
    %7739 = vdwg.mxu0
    %7740 = vmatpush.msra.mxu0 0.0
    %7741 = vmatpush.msra.mxu0 0.0
    %7742 = vmatpush.msra.mxu0 0.0
    %7743 = vmatpush.msra.mxu0 0.0
    %7744 = vmatpush.msra.mxu0 0.0
    %7745 = vmatpush.msra.mxu0 0.0
    %7746 = vmatpush.msra.mxu0 0.0
    %7747 = vmatpush.msra.mxu0 0.0
    %7748 = vmatpush.msra.mxu0 0.0
    %7749 = vmatpush.msra.mxu0 0.0
    %7750 = vmatpush.msra.mxu0 0.0
    %7751 = vmatpush.msra.mxu0 0.0
    %7752 = vmatpush.msra.mxu0 0.0
    %7753 = vmatpush.msra.mxu0 0.0
    %7754 = vmatpush.msra.mxu0 %v447
    %7755 = vmatpush.msra.mxu0 %v444
    %7756 = vmatmul.f32.gmra.mxu0 %v3525
    %v7757 = vpop.f32.mrf.mxu0
    %v7758 = vadd.f32 0.0, %v7757
    %7759 = vdwg.mxu0
    %v7760 = vld [vmem:[%s13] sm:$0x3]
    %v7761 = vld [vmem:[%s77] sm:$0x3f]
    %v7762 = vld [vmem:[%s79] sm:$0xff]
    %v7763 = vld [vmem:[%s79 + $0x8] sm:$0xff]
    %v7765 = vsel %vm259, %v7738, 0
    %7767 = vmatpush.msra.mxu0 0.0
    %7768 = vmatpush.msra.mxu0 0.0
    %7769 = vmatpush.msra.mxu0 0.0
    %7770 = vmatpush.msra.mxu0 0.0
    %7771 = vmatpush.msra.mxu0 0.0
    %7772 = vmatpush.msra.mxu0 0.0
    %7773 = vmatpush.msra.mxu0 0.0
    %7774 = vmatpush.msra.mxu0 0.0
    %7775 = vmatpush.msra.mxu0 0.0
    %7776 = vmatpush.msra.mxu0 0.0
    %7777 = vmatpush.msra.mxu0 0.0
    %7778 = vmatpush.msra.mxu0 0.0
    %7779 = vmatpush.msra.mxu0 0.0
    %7780 = vmatpush.msra.mxu0 0.0
    %7781 = vmatpush.msra.mxu0 %v7763
    %7782 = vmatpush.msra.mxu0 %v7762
    %7783 = vmatmul.f32.gmra.mxu0 %v7765
    %v7784 = vpop.f32.mrf.mxu0
    %v7785 = vadd.f32 0.0, %v7784
    %7786 = vdwg.mxu0
    %vm7787 = vcmask 48128
    %v7789 = vsel %vm7787, %v7760, 0
    %vm7791 = vcmask 1045504
    %v7793 = vsel %vm7791, %v7761, 0
    %7795 = vmatpush.msra.mxu0 0.0
    %7796 = vmatpush.msra.mxu0 0.0
    %7797 = vmatpush.msra.mxu0 0.0
    %7798 = vmatpush.msra.mxu0 0.0
    %7799 = vmatpush.msra.mxu0 0.0
    %7800 = vmatpush.msra.mxu0 0.0
    %7801 = vmatpush.msra.mxu0 0.0
    %7802 = vmatpush.msra.mxu0 0.0
    %7803 = vmatpush.msra.mxu0 0.0
    %7804 = vmatpush.msra.mxu0 0.0
    %7805 = vmatpush.msra.mxu0 0.0
    %7806 = vmatpush.msra.mxu0 0.0
    %7807 = vmatpush.msra.mxu0 0.0
    %7808 = vmatpush.msra.mxu0 0.0
    %7809 = vmatpush.msra.mxu0 0.0
    %7810 = vmatpush.msra.mxu0 %v7793
    %7811 = vmatmul.f32.gmra.mxu0 %v7789
    %v7812 = vpop.f32.mrf.mxu0
    %v7813 = vadd.f32 %v7785, %v7812
    %7814 = vdwg.mxu0
    %v7815 = vld [vmem:[%s81] sm:$0xff]
    %v7816 = vld [vmem:[%s81 + $0x8] sm:$0xff]
    %v7818 = vsel %vm259, %v7758, 0
    %7820 = vmatpush.msra.mxu0 0.0
    %7821 = vmatpush.msra.mxu0 0.0
    %7822 = vmatpush.msra.mxu0 0.0
    %7823 = vmatpush.msra.mxu0 0.0
    %7824 = vmatpush.msra.mxu0 0.0
    %7825 = vmatpush.msra.mxu0 0.0
    %7826 = vmatpush.msra.mxu0 0.0
    %7827 = vmatpush.msra.mxu0 0.0
    %7828 = vmatpush.msra.mxu0 0.0
    %7829 = vmatpush.msra.mxu0 0.0
    %7830 = vmatpush.msra.mxu0 0.0
    %7831 = vmatpush.msra.mxu0 0.0
    %7832 = vmatpush.msra.mxu0 0.0
    %7833 = vmatpush.msra.mxu0 0.0
    %7834 = vmatpush.msra.mxu0 %v7816
    %7835 = vmatpush.msra.mxu0 %v7815
    %7836 = vmatmul.f32.gmra.mxu0 %v7818
    %v7837 = vpop.f32.mrf.mxu0
    %v7838 = vadd.f32 0.0, %v7837
    %7839 = vdwg.mxu0
    %v7840 = vadd.f32 %v7813, %v7838
    %v7841 = vld [vmem:[%s83] sm:$0x1]
    %v7843 = vperm.slane %v7841, 0
    %v7845 = vadd.f32 %v7840, %v7843
    %v7846 = vmax.f32 %v7845, 0.0
    %v7847 = vld [vmem:[%s85] sm:$0xff]
    %v7848 = vld [vmem:[%s85 + $0x8] sm:$0xff]
    %v7849 = vld [vmem:[%s87] sm:$0x1]
    %v7851 = vperm.slane %v7849, 0
    %v7854 = vsel %vm259, %v7846, 0
    %7856 = vmatpush.msra.mxu0 0.0
    %7857 = vmatpush.msra.mxu0 0.0
    %7858 = vmatpush.msra.mxu0 0.0
    %7859 = vmatpush.msra.mxu0 0.0
    %7860 = vmatpush.msra.mxu0 0.0
    %7861 = vmatpush.msra.mxu0 0.0
    %7862 = vmatpush.msra.mxu0 0.0
    %7863 = vmatpush.msra.mxu0 0.0
    %7864 = vmatpush.msra.mxu0 0.0
    %7865 = vmatpush.msra.mxu0 0.0
    %7866 = vmatpush.msra.mxu0 0.0
    %7867 = vmatpush.msra.mxu0 0.0
    %7868 = vmatpush.msra.mxu0 0.0
    %7869 = vmatpush.msra.mxu0 0.0
    %7870 = vmatpush.msra.mxu0 %v7848
    %7871 = vmatpush.msra.mxu0 %v7847
    %7872 = vmatmul.f32.gmra.mxu0 %v7854
    %v7873 = vpop.f32.mrf.mxu0
    %v7874 = vadd.f32 %v7851, %v7873
    %7875 = vdwg.mxu0
    %vm7876 = vcmask 123904
    %7877 = vst.msk [vmem:[#allocation4] sm:$0x3] %vm7876, %v7874
    // Predicated region
    $region178: #{enpg_forward.1} parent=1 // pred_check
      _
    $region179: #{enpg_forward.1} parent=1 // pred_check_branch
      %7879 = sbr.rel (0) target = $region181
    $region180: #{enpg_forward.1} parent=1 // pred_region
      %7881 = vsyncadd [#allocation3], 0
      %s7882 = sshll.u32 [#allocation2], 4
      %s7883 = int_to_ptr.vmem [resolvable:$true] %s7882
      %s7884 = sshll.u32 %s89, 4
      %s7885 = int_to_ptr.hbm [resolvable:$true] %s7884
      %7890 = dma.vmem_to_hbm [thread:$0]  %s7883, 256, %s7885, [#allocation3], 128, 128, 8
    $region181: #{enpg_forward.1} parent=1 // pred_fallthru
      _
    // Predicated region
    $region182: #{enpg_forward.1} parent=1 // pred_check
      _
    $region183: #{enpg_forward.1} parent=1 // pred_check_branch
      %7892 = sbr.rel (0) target = $region185
    $region184: #{enpg_forward.1} parent=1 // pred_region
      _
    $region185: #{enpg_forward.1} parent=1 // pred_fallthru
      _
    // Predicated region
    $region186: #{enpg_forward.1} parent=1 // pred_check
      _
    $region187: #{enpg_forward.1} parent=1 // pred_check_branch
      %7894 = sbr.rel (0) target = $region189
    $region188: #{enpg_forward.1} parent=1 // pred_region
      %7896 = vsyncadd [#allocation5], 0
      %s7898 = sshll.u32 [#allocation4], 4
      %s7899 = int_to_ptr.vmem [resolvable:$true] %s7898
      %s7900 = sshll.u32 %s93, 4
      %s7901 = int_to_ptr.hbm [resolvable:$true] %s7900
      %7903 = dma.vmem_to_hbm [thread:$0]  %s7899, 32, %s7901, [#allocation5]
    $region189: #{enpg_forward.1} parent=1 // pred_fallthru
      _
    // Predicated region
    $region190: #{enpg_forward.1} parent=1 // pred_check
      _
    $region191: #{enpg_forward.1} parent=1 // pred_check_branch
      %7905 = sbr.rel (0) target = $region193
    $region192: #{enpg_forward.1} parent=1 // pred_region
      _
    $region193: #{enpg_forward.1} parent=1 // pred_fallthru
      _
    // Predicated region
    $region194: #{enpg_forward.1} parent=1 // pred_check
      _
    $region195: #{enpg_forward.1} parent=1 // pred_check_branch
      %7907 = sbr.rel (0) target = $region197
    $region196: #{enpg_forward.1} parent=1 // pred_region
      %7909 = dma.done [#allocation3], 256
    $region197: #{enpg_forward.1} parent=1 // pred_fallthru
      _
    // Predicated region
    $region198: #{enpg_forward.1} parent=1 // pred_check
      _
    $region199: #{enpg_forward.1} parent=1 // pred_check_branch
      %7911 = sbr.rel (0) target = $region201
    $region200: #{enpg_forward.1} parent=1 // pred_region
      _
    $region201: #{enpg_forward.1} parent=1 // pred_fallthru
      _
    // Predicated region
    $region202: #{enpg_forward.1} parent=1 // pred_check
      _
    $region203: #{enpg_forward.1} parent=1 // pred_check_branch
      %7913 = sbr.rel (0) target = $region205
    $region204: #{enpg_forward.1} parent=1 // pred_region
      %7915 = dma.done [#allocation5], 32
    $region205: #{enpg_forward.1} parent=1 // pred_fallthru
      _
    // Predicated region
    $region206: #{enpg_forward.1} parent=1 // pred_check
      _
    $region207: #{enpg_forward.1} parent=1 // pred_check_branch
      %7917 = sbr.rel (0) target = $region209
    $region208: #{enpg_forward.1} parent=1 // pred_region
      _
    $region209: #{enpg_forward.1} parent=1 // pred_fallthru
      _
    %7918 = vsyncpa [#allocation3], 1
    %7919 = vsyncpa [#allocation5], 1

</llo_original>
